<compile_context>
chip_gen: v5e
topology: v5e:2x2
jax: 0.10.0
libtpu: 0.0.40
codegen_flags: <defaults>
</compile_context>

<pallas_src>
import jax
import jax.numpy as jnp
from jax.experimental import pallas as pl
from jax.experimental.pallas import tpu as pltpu

CIN, COUT, K = 3, 18, 3
H = W = 32                   # spatial size implied by fc1 = 18 * 16 * 16
PH = PW = H // 2             # 16 after 2x2 maxpool
FC_IN = COUT * PH * PW       # 4608 (torch CHW-flatten order)
FC_HID, FC_OUT = 64, 10

CP = 20                      # cout padded 18 -> 20 so lanes are 5 full vregs
LANES_IN = (W + 2) * CIN     # 102 : padded width * cin, folded into lanes
K_IM2COL = K * LANES_IN      # 306 : 3 input rows concatenated in lanes
LANES_P = W * CP             # 640 : conv output lanes, (w, co) order


def fused_cnn_kernel(x_ref, wc_ref, bc_ref, w1_ref, b1_ref, w2_ref, b2_ref,
                     o_ref, acc_ref, pool_ref):
    """conv3x3 + bias + ReLU + 2x2 maxpool + fc1 + ReLU + fc2 for BT images.

    x_ref   : (32, BT, 306)  rows = (h_parity*16 + h2), lanes = im2col'd input
    wc_ref  : (306, 640)     banded im2col conv weight
    bc_ref  : (1, 640)       conv bias broadcast over w (padded channels = 0)
    w1_ref  : (16, 640, 64)  fc1 weights, zero-expanded to the pooled layout
    b1_ref  : (1, 64)        fc1 bias
    w2_ref  : (64, 10)       fc2 weights
    b2_ref  : (1, 10)        fc2 bias
    o_ref   : (BT, 10)       logits
    acc_ref : (32*BT, 640)   conv matmul result (f32 scratch)
    pool_ref: (16*BT, 640)   pooled + ReLU activations (f32 scratch)
    """
    BT = o_ref.shape[0]
    rows = 2 * PH * BT
    half = PH * BT

    # --- conv as ONE matmul (no accumulator read-modify-write) --------------
    x2d = x_ref[...].reshape(rows, K_IM2COL)
    acc_ref[...] = jnp.dot(x2d, wc_ref[...], preferred_element_type=jnp.float32)

    # --- 2x2 maxpool + bias + ReLU ------------------------------------------
    # H-pool: even-h slab vs odd-h slab (contiguous rows, no strided reads).
    hmax = jnp.maximum(acc_ref[pl.ds(0, half), :], acc_ref[pl.ds(half, half), :])
    # W-pool: partner lane is +CP away; full-width via an XLU lane roll, so the
    # epilogue stays lane-dense (invalid lanes are finite and hit zero weights).
    wmax = jnp.maximum(hmax, pltpu.roll(hmax, shift=LANES_P - CP, axis=1))
    # bias add + ReLU commute with both maxes (bias depends only on channel).
    pool_ref[...] = jnp.maximum(wmax + bc_ref[...], 0.0)

    # --- fused MLP: fc1 (per pooled-row accumulation) + ReLU + fc2 ----------
    h1 = jnp.zeros((BT, FC_HID), jnp.float32)
    for h2 in range(PH):                                   # 16 small matmuls
        h1 = h1 + jnp.dot(pool_ref[pl.ds(h2 * BT, BT), :], w1_ref[h2],
                          preferred_element_type=jnp.float32)
    h1 = jnp.maximum(h1 + b1_ref[...], 0.0)
    o_ref[...] = (jnp.dot(h1, w2_ref[...], preferred_element_type=jnp.float32)
                  + b2_ref[...])


def _conv_matrix(conv_w):
    # conv_w: (18, 3, 3, 3) OIHW -> (306, 640) banded im2col weight with
    # wc[kh*102 + wpad*3 + ci, w*20 + co] = conv_w[co, ci, kh, wpad - w]
    # whenever 0 <= wpad - w < 3 and co < 18, else 0.
    wk = jnp.transpose(conv_w.astype(jnp.float32), (2, 3, 1, 0))
    wk = wk.reshape(K, K * CIN, COUT)                       # (kh, kw*3+ci, co)
    wk = jnp.pad(wk, ((0, 0), (0, 0), (0, CP - COUT)))      # (3, 9, 20)
    m = jnp.arange(LANES_IN)[None, :] - CIN * jnp.arange(W)[:, None]  # l - 3w
    valid = (m >= 0) & (m < K * CIN)
    g = jnp.where(valid[None, :, :, None],
                  wk[:, jnp.clip(m, 0, K * CIN - 1), :], 0.0)  # (3,32,102,20)
    return jnp.transpose(g, (0, 2, 1, 3)).reshape(K_IM2COL, LANES_P)


def _fc1_tensor(fc1_w):
    # fc1_w: (4608, 64) in torch CHW-flatten order (c*256 + h2*16 + j).
    # Scatter into (16, 640, 64) at [h2, 2*CP*j + c]; untouched rows stay 0 so
    # the invalid (odd-w / padded-channel) pooled lanes contribute nothing.
    h2, j, c = jnp.meshgrid(jnp.arange(PH), jnp.arange(PW), jnp.arange(COUT),
                            indexing="ij")
    src = (c * (PH * PW) + h2 * PW + j).reshape(-1)
    lane = (2 * CP * j + c).reshape(-1)
    w = jnp.zeros((PH, LANES_P, FC_HID), jnp.float32)
    return w.at[h2.reshape(-1), lane].set(fc1_w.astype(jnp.float32)[src])


@jax.jit
def cnn_forward(x_nchw, conv_w, conv_b, fc1_w, fc1_b, fc2_w, fc2_b):
    B = x_nchw.shape[0]
    BT = 8 if B <= 8 else 16                    # images per step (multiple of 8)
    n_steps = max(2, pl.cdiv(B, BT))            # >= 2 steps for v7x's 2 TCs
    Bp = n_steps * BT

    # glue (trace-time, tiny): NCHW -> padded NHWC, fold (w, cin) into lanes,
    # im2col the 3 conv rows into lanes, split h into (parity, h2) slabs and
    # put the image index second-minor:
    #   x_in[p*16 + h2, b, :] = concat_k xpad[b, 2*h2 + p + kh, :, :]
    x_nhwc = jnp.transpose(x_nchw, (0, 2, 3, 1)).astype(jnp.float32)
    x_pad = jnp.pad(x_nhwc, ((0, 0), (1, 1), (1, 1), (0, 0)))
    x_rows = x_pad.reshape(B, H + 2, LANES_IN)
    im2col = jnp.concatenate([x_rows[:, kh:kh + H, :] for kh in range(K)],
                             axis=2)                        # (B, 32, 306)
    x_in = jnp.transpose(im2col.reshape(B, PH, 2, K_IM2COL), (2, 1, 0, 3))
    x_in = x_in.reshape(2 * PH, B, K_IM2COL)                # (32, B, 306)
    if Bp != B:
        x_in = jnp.pad(x_in, ((0, 0), (0, Bp - B), (0, 0)))

    wc = _conv_matrix(conv_w)
    bc = jnp.tile(jnp.pad(conv_b.astype(jnp.float32), (0, CP - COUT)),
                  W).reshape(1, LANES_P)
    w1 = _fc1_tensor(fc1_w)
    b1 = fc1_b.reshape(1, FC_HID).astype(jnp.float32)
    w2 = fc2_w.astype(jnp.float32)
    b2 = fc2_b.reshape(1, FC_OUT).astype(jnp.float32)

    out = pl.pallas_call(
        fused_cnn_kernel,
        out_shape=jax.ShapeDtypeStruct((Bp, FC_OUT), jnp.float32),
        grid_spec=pltpu.PrefetchScalarGridSpec(
            num_scalar_prefetch=0,
            grid=(n_steps,),
            in_specs=[
                pl.BlockSpec((2 * PH, BT, K_IM2COL), lambda i: (0, i, 0)),
                pl.BlockSpec((K_IM2COL, LANES_P), lambda i: (0, 0)),
                pl.BlockSpec((1, LANES_P), lambda i: (0, 0)),
                pl.BlockSpec((PH, LANES_P, FC_HID), lambda i: (0, 0, 0)),
                pl.BlockSpec((1, FC_HID), lambda i: (0, 0)),
                pl.BlockSpec((FC_HID, FC_OUT), lambda i: (0, 0)),
                pl.BlockSpec((1, FC_OUT), lambda i: (0, 0)),
            ],
            out_specs=pl.BlockSpec((BT, FC_OUT), lambda i: (i, 0)),
            scratch_shapes=[
                pltpu.VMEM((2 * PH * BT, LANES_P), jnp.float32),
                pltpu.VMEM((PH * BT, LANES_P), jnp.float32),
            ],
        ),
        compiler_params=pltpu.CompilerParams(
            dimension_semantics=("parallel",)),
    )(x_in, wc, bc, w1, b1, w2, b2)
    return out[:B]


def reference(x_nchw, conv_w, conv_b, fc1_w, fc1_b, fc2_w, fc2_b):
    B = x_nchw.shape[0]
    y = jax.lax.conv_general_dilated(
        x_nchw.astype(jnp.float32), conv_w.astype(jnp.float32),
        window_strides=(1, 1), padding=((1, 1), (1, 1)),
        dimension_numbers=("NCHW", "OIHW", "NCHW"))
    y = jax.nn.relu(y + conv_b[None, :, None, None])
    y = y.reshape(B, COUT, PH, 2, PW, 2).max(axis=(3, 5))
    y = y.reshape(B, FC_IN)
    h = jax.nn.relu(y @ fc1_w + fc1_b)
    return h @ fc2_w + fc2_b


if __name__ == "__main__":
    key = jax.random.PRNGKey(0)
    kx, k1, k2, k3, k4, k5, k6 = jax.random.split(key, 7)
    B = 2
    x = jax.random.normal(kx, (B, CIN, H, W), jnp.float32)
    conv_w = jax.random.normal(k1, (COUT, CIN, K, K), jnp.float32) * 0.1
    conv_b = jax.random.normal(k2, (COUT,), jnp.float32) * 0.1
    fc1_w = jax.random.normal(k3, (FC_IN, FC_HID), jnp.float32) * 0.02
    fc1_b = jax.random.normal(k4, (FC_HID,), jnp.float32) * 0.02
    fc2_w = jax.random.normal(k5, (FC_HID, FC_OUT), jnp.float32) * 0.1
    fc2_b = jax.random.normal(k6, (FC_OUT,), jnp.float32) * 0.1

    out = cnn_forward(x, conv_w, conv_b, fc1_w, fc1_b, fc2_w, fc2_b)
    out = jax.block_until_ready(out)

    ref = reference(x, conv_w, conv_b, fc1_w, fc1_b, fc2_w, fc2_b)
    assert out.shape == (B, FC_OUT)
    assert jnp.allclose(out, ref, rtol=1e-2, atol=1e-2), (out, ref)
    print("KERNEL_OK")
</pallas_src>

<mosaic_0001>
module attributes {stable_mosaic.version = 11 : i64} {
  func.func @fused_cnn_kernel(%arg0: i32, %arg1: memref<32x8x306xf32, #tpu.memory_space<vmem>>, %arg2: memref<306x640xf32, #tpu.memory_space<vmem>>, %arg3: memref<1x640xf32, #tpu.memory_space<vmem>>, %arg4: memref<16x640x64xf32, #tpu.memory_space<vmem>>, %arg5: memref<1x64xf32, #tpu.memory_space<vmem>>, %arg6: memref<64x10xf32, #tpu.memory_space<vmem>>, %arg7: memref<1x10xf32, #tpu.memory_space<vmem>>, %arg8: memref<8x10xf32, #tpu.memory_space<vmem>>, %arg9: memref<256x640xf32, #tpu.memory_space<vmem>>, %arg10: memref<128x640xf32, #tpu.memory_space<vmem>>) attributes {dimension_semantics = [#tpu.dimension_semantics<parallel>], iteration_bounds = array<i64: 2>, scalar_prefetch = 0 : i64, scratch_operands = 2 : i64, tpu.core_type = #tpu.core_type<tc>, window_params = [{transform_indices = @transform_0, window_bounds = array<i64: 32, 8, 306>}, {pipeline_mode = #tpu.pipeline_mode<synchronous>, transform_indices = @transform_1, window_bounds = array<i64: 306, 640>}, {pipeline_mode = #tpu.pipeline_mode<synchronous>, transform_indices = @transform_2, window_bounds = array<i64: 1, 640>}, {pipeline_mode = #tpu.pipeline_mode<synchronous>, transform_indices = @transform_3, window_bounds = array<i64: 16, 640, 64>}, {pipeline_mode = #tpu.pipeline_mode<synchronous>, transform_indices = @transform_4, window_bounds = array<i64: 1, 64>}, {pipeline_mode = #tpu.pipeline_mode<synchronous>, transform_indices = @transform_5, window_bounds = array<i64: 64, 10>}, {pipeline_mode = #tpu.pipeline_mode<synchronous>, transform_indices = @transform_6, window_bounds = array<i64: 1, 10>}, {transform_indices = @transform_7, window_bounds = array<i64: 8, 10>}]} {
    %c0 = arith.constant 0 : index
    %c0_0 = arith.constant 0 : index
    %c0_1 = arith.constant 0 : index
    %0 = vector.load %arg1[%c0, %c0_0, %c0_1] : memref<32x8x306xf32, #tpu.memory_space<vmem>>, vector<32x8x306xf32>
    %1 = vector.shape_cast %0 : vector<32x8x306xf32> to vector<256x306xf32>
    %c0_2 = arith.constant 0 : index
    %c0_3 = arith.constant 0 : index
    %2 = vector.load %arg2[%c0_2, %c0_3] : memref<306x640xf32, #tpu.memory_space<vmem>>, vector<306x640xf32>
    %cst = arith.constant dense<0.000000e+00> : vector<256x640xf32>
    %3 = tpu.matmul %1, %2, %cst {dimension_numbers = #tpu.dot_dimension_numbers<[1], [0], [0], [1], [0, 0, 1, 1], [], []>} : vector<256x306xf32>, vector<306x640xf32>, vector<256x640xf32> -> vector<256x640xf32>
    %c0_4 = arith.constant 0 : index
    %c0_5 = arith.constant 0 : index
    %4 = vector.load %arg9[%c0_4, %c0_5] : memref<256x640xf32, #tpu.memory_space<vmem>>, vector<256x640xf32>
    tpu.vector_store %arg9[%c0_4, %c0_5], %3 {strides = array<i32>} : memref<256x640xf32, #tpu.memory_space<vmem>>, vector<256x640xf32>,
    %c0_6 = arith.constant 0 : index
    %c0_7 = arith.constant 0 : index
    %5 = vector.load %arg9[%c0_6, %c0_7] : memref<256x640xf32, #tpu.memory_space<vmem>>, vector<128x640xf32>
    %c128 = arith.constant 128 : index
    %c0_8 = arith.constant 0 : index
    %6 = vector.load %arg9[%c128, %c0_8] : memref<256x640xf32, #tpu.memory_space<vmem>>, vector<128x640xf32>
    %7 = arith.maximumf %5, %6 : vector<128x640xf32>
    %c620_i32 = arith.constant 620 : i32
    %8 = tpu.dynamic_rotate %7 by %c620_i32 dim 1 : vector<128x640xf32>, i32 -> vector<128x640xf32>
    %9 = arith.maximumf %7, %8 : vector<128x640xf32>
    %c0_9 = arith.constant 0 : index
    %c0_10 = arith.constant 0 : index
    %10 = vector.load %arg3[%c0_9, %c0_10] : memref<1x640xf32, #tpu.memory_space<vmem>>, vector<1x640xf32>
    %11 = vector.broadcast %10 : vector<1x640xf32> to vector<128x640xf32>
    %12 = arith.addf %9, %11 : vector<128x640xf32>
    %cst_11 = arith.constant 0.000000e+00 : f32
    %13 = vector.broadcast %cst_11 : f32 to vector<128x640xf32>
    %14 = arith.maximumf %12, %13 : vector<128x640xf32>
    %c0_12 = arith.constant 0 : index
    %c0_13 = arith.constant 0 : index
    %15 = vector.load %arg10[%c0_12, %c0_13] : memref<128x640xf32, #tpu.memory_space<vmem>>, vector<128x640xf32>
    tpu.vector_store %arg10[%c0_12, %c0_13], %14 {strides = array<i32>} : memref<128x640xf32, #tpu.memory_space<vmem>>, vector<128x640xf32>,
    %cst_14 = arith.constant 0.000000e+00 : f32
    %16 = vector.broadcast %cst_14 : f32 to vector<8x64xf32>
    %c0_15 = arith.constant 0 : index
    %c0_16 = arith.constant 0 : index
    %17 = vector.load %arg10[%c0_15, %c0_16] : memref<128x640xf32, #tpu.memory_space<vmem>>, vector<8x640xf32>
    %c0_17 = arith.constant 0 : index
    %c0_18 = arith.constant 0 : index
    %c0_19 = arith.constant 0 : index
    %18 = vector.load %arg4[%c0_17, %c0_18, %c0_19] : memref<16x640x64xf32, #tpu.memory_space<vmem>>, vector<1x640x64xf32>
    %19 = vector.shape_cast %18 : vector<1x640x64xf32> to vector<640x64xf32>
    %cst_20 = arith.constant dense<0.000000e+00> : vector<8x64xf32>
    %20 = tpu.matmul %17, %19, %cst_20 {dimension_numbers = #tpu.dot_dimension_numbers<[1], [0], [0], [1], [0, 0, 1, 1], [], []>} : vector<8x640xf32>, vector<640x64xf32>, vector<8x64xf32> -> vector<8x64xf32>
    %21 = arith.addf %16, %20 : vector<8x64xf32>
    %c8 = arith.constant 8 : index
    %c0_21 = arith.constant 0 : index
    %22 = vector.load %arg10[%c8, %c0_21] : memref<128x640xf32, #tpu.memory_space<vmem>>, vector<8x640xf32>
    %c1 = arith.constant 1 : index
    %c0_22 = arith.constant 0 : index
    %c0_23 = arith.constant 0 : index
    %23 = vector.load %arg4[%c1, %c0_22, %c0_23] : memref<16x640x64xf32, #tpu.memory_space<vmem>>, vector<1x640x64xf32>
    %24 = vector.shape_cast %23 : vector<1x640x64xf32> to vector<640x64xf32>
    %cst_24 = arith.constant dense<0.000000e+00> : vector<8x64xf32>
    %25 = tpu.matmul %22, %24, %cst_24 {dimension_numbers = #tpu.dot_dimension_numbers<[1], [0], [0], [1], [0, 0, 1, 1], [], []>} : vector<8x640xf32>, vector<640x64xf32>, vector<8x64xf32> -> vector<8x64xf32>
    %26 = arith.addf %21, %25 : vector<8x64xf32>
    %c16 = arith.constant 16 : index
    %c0_25 = arith.constant 0 : index
    %27 = vector.load %arg10[%c16, %c0_25] : memref<128x640xf32, #tpu.memory_space<vmem>>, vector<8x640xf32>
    %c2 = arith.constant 2 : index
    %c0_26 = arith.constant 0 : index
    %c0_27 = arith.constant 0 : index
    %28 = vector.load %arg4[%c2, %c0_26, %c0_27] : memref<16x640x64xf32, #tpu.memory_space<vmem>>, vector<1x640x64xf32>
    %29 = vector.shape_cast %28 : vector<1x640x64xf32> to vector<640x64xf32>
    %cst_28 = arith.constant dense<0.000000e+00> : vector<8x64xf32>
    %30 = tpu.matmul %27, %29, %cst_28 {dimension_numbers = #tpu.dot_dimension_numbers<[1], [0], [0], [1], [0, 0, 1, 1], [], []>} : vector<8x640xf32>, vector<640x64xf32>, vector<8x64xf32> -> vector<8x64xf32>
    %31 = arith.addf %26, %30 : vector<8x64xf32>
    %c24 = arith.constant 24 : index
    %c0_29 = arith.constant 0 : index
    %32 = vector.load %arg10[%c24, %c0_29] : memref<128x640xf32, #tpu.memory_space<vmem>>, vector<8x640xf32>
    %c3 = arith.constant 3 : index
    %c0_30 = arith.constant 0 : index
    %c0_31 = arith.constant 0 : index
    %33 = vector.load %arg4[%c3, %c0_30, %c0_31] : memref<16x640x64xf32, #tpu.memory_space<vmem>>, vector<1x640x64xf32>
    %34 = vector.shape_cast %33 : vector<1x640x64xf32> to vector<640x64xf32>
    %cst_32 = arith.constant dense<0.000000e+00> : vector<8x64xf32>
    %35 = tpu.matmul %32, %34, %cst_32 {dimension_numbers = #tpu.dot_dimension_numbers<[1], [0], [0], [1], [0, 0, 1, 1], [], []>} : vector<8x640xf32>, vector<640x64xf32>, vector<8x64xf32> -> vector<8x64xf32>
    %36 = arith.addf %31, %35 : vector<8x64xf32>
    %c32 = arith.constant 32 : index
    %c0_33 = arith.constant 0 : index
    %37 = vector.load %arg10[%c32, %c0_33] : memref<128x640xf32, #tpu.memory_space<vmem>>, vector<8x640xf32>
    %c4 = arith.constant 4 : index
    %c0_34 = arith.constant 0 : index
    %c0_35 = arith.constant 0 : index
    %38 = vector.load %arg4[%c4, %c0_34, %c0_35] : memref<16x640x64xf32, #tpu.memory_space<vmem>>, vector<1x640x64xf32>
    %39 = vector.shape_cast %38 : vector<1x640x64xf32> to vector<640x64xf32>
    %cst_36 = arith.constant dense<0.000000e+00> : vector<8x64xf32>
    %40 = tpu.matmul %37, %39, %cst_36 {dimension_numbers = #tpu.dot_dimension_numbers<[1], [0], [0], [1], [0, 0, 1, 1], [], []>} : vector<8x640xf32>, vector<640x64xf32>, vector<8x64xf32> -> vector<8x64xf32>
    %41 = arith.addf %36, %40 : vector<8x64xf32>
    %c40 = arith.constant 40 : index
    %c0_37 = arith.constant 0 : index
    %42 = vector.load %arg10[%c40, %c0_37] : memref<128x640xf32, #tpu.memory_space<vmem>>, vector<8x640xf32>
    %c5 = arith.constant 5 : index
    %c0_38 = arith.constant 0 : index
    %c0_39 = arith.constant 0 : index
    %43 = vector.load %arg4[%c5, %c0_38, %c0_39] : memref<16x640x64xf32, #tpu.memory_space<vmem>>, vector<1x640x64xf32>
    %44 = vector.shape_cast %43 : vector<1x640x64xf32> to vector<640x64xf32>
    %cst_40 = arith.constant dense<0.000000e+00> : vector<8x64xf32>
    %45 = tpu.matmul %42, %44, %cst_40 {dimension_numbers = #tpu.dot_dimension_numbers<[1], [0], [0], [1], [0, 0, 1, 1], [], []>} : vector<8x640xf32>, vector<640x64xf32>, vector<8x64xf32> -> vector<8x64xf32>
    %46 = arith.addf %41, %45 : vector<8x64xf32>
    %c48 = arith.constant 48 : index
    %c0_41 = arith.constant 0 : index
    %47 = vector.load %arg10[%c48, %c0_41] : memref<128x640xf32, #tpu.memory_space<vmem>>, vector<8x640xf32>
    %c6 = arith.constant 6 : index
    %c0_42 = arith.constant 0 : index
    %c0_43 = arith.constant 0 : index
    %48 = vector.load %arg4[%c6, %c0_42, %c0_43] : memref<16x640x64xf32, #tpu.memory_space<vmem>>, vector<1x640x64xf32>
    %49 = vector.shape_cast %48 : vector<1x640x64xf32> to vector<640x64xf32>
    %cst_44 = arith.constant dense<0.000000e+00> : vector<8x64xf32>
    %50 = tpu.matmul %47, %49, %cst_44 {dimension_numbers = #tpu.dot_dimension_numbers<[1], [0], [0], [1], [0, 0, 1, 1], [], []>} : vector<8x640xf32>, vector<640x64xf32>, vector<8x64xf32> -> vector<8x64xf32>
    %51 = arith.addf %46, %50 : vector<8x64xf32>
    %c56 = arith.constant 56 : index
    %c0_45 = arith.constant 0 : index
    %52 = vector.load %arg10[%c56, %c0_45] : memref<128x640xf32, #tpu.memory_space<vmem>>, vector<8x640xf32>
    %c7 = arith.constant 7 : index
    %c0_46 = arith.constant 0 : index
    %c0_47 = arith.constant 0 : index
    %53 = vector.load %arg4[%c7, %c0_46, %c0_47] : memref<16x640x64xf32, #tpu.memory_space<vmem>>, vector<1x640x64xf32>
    %54 = vector.shape_cast %53 : vector<1x640x64xf32> to vector<640x64xf32>
    %cst_48 = arith.constant dense<0.000000e+00> : vector<8x64xf32>
    %55 = tpu.matmul %52, %54, %cst_48 {dimension_numbers = #tpu.dot_dimension_numbers<[1], [0], [0], [1], [0, 0, 1, 1], [], []>} : vector<8x640xf32>, vector<640x64xf32>, vector<8x64xf32> -> vector<8x64xf32>
    %56 = arith.addf %51, %55 : vector<8x64xf32>
    %c64 = arith.constant 64 : index
    %c0_49 = arith.constant 0 : index
    %57 = vector.load %arg10[%c64, %c0_49] : memref<128x640xf32, #tpu.memory_space<vmem>>, vector<8x640xf32>
    %c8_50 = arith.constant 8 : index
    %c0_51 = arith.constant 0 : index
    %c0_52 = arith.constant 0 : index
    %58 = vector.load %arg4[%c8_50, %c0_51, %c0_52] : memref<16x640x64xf32, #tpu.memory_space<vmem>>, vector<1x640x64xf32>
    %59 = vector.shape_cast %58 : vector<1x640x64xf32> to vector<640x64xf32>
    %cst_53 = arith.constant dense<0.000000e+00> : vector<8x64xf32>
    %60 = tpu.matmul %57, %59, %cst_53 {dimension_numbers = #tpu.dot_dimension_numbers<[1], [0], [0], [1], [0, 0, 1, 1], [], []>} : vector<8x640xf32>, vector<640x64xf32>, vector<8x64xf32> -> vector<8x64xf32>
    %61 = arith.addf %56, %60 : vector<8x64xf32>
    %c72 = arith.constant 72 : index
    %c0_54 = arith.constant 0 : index
    %62 = vector.load %arg10[%c72, %c0_54] : memref<128x640xf32, #tpu.memory_space<vmem>>, vector<8x640xf32>
    %c9 = arith.constant 9 : index
    %c0_55 = arith.constant 0 : index
    %c0_56 = arith.constant 0 : index
    %63 = vector.load %arg4[%c9, %c0_55, %c0_56] : memref<16x640x64xf32, #tpu.memory_space<vmem>>, vector<1x640x64xf32>
    %64 = vector.shape_cast %63 : vector<1x640x64xf32> to vector<640x64xf32>
    %cst_57 = arith.constant dense<0.000000e+00> : vector<8x64xf32>
    %65 = tpu.matmul %62, %64, %cst_57 {dimension_numbers = #tpu.dot_dimension_numbers<[1], [0], [0], [1], [0, 0, 1, 1], [], []>} : vector<8x640xf32>, vector<640x64xf32>, vector<8x64xf32> -> vector<8x64xf32>
    %66 = arith.addf %61, %65 : vector<8x64xf32>
    %c80 = arith.constant 80 : index
    %c0_58 = arith.constant 0 : index
    %67 = vector.load %arg10[%c80, %c0_58] : memref<128x640xf32, #tpu.memory_space<vmem>>, vector<8x640xf32>
    %c10 = arith.constant 10 : index
    %c0_59 = arith.constant 0 : index
    %c0_60 = arith.constant 0 : index
    %68 = vector.load %arg4[%c10, %c0_59, %c0_60] : memref<16x640x64xf32, #tpu.memory_space<vmem>>, vector<1x640x64xf32>
    %69 = vector.shape_cast %68 : vector<1x640x64xf32> to vector<640x64xf32>
    %cst_61 = arith.constant dense<0.000000e+00> : vector<8x64xf32>
    %70 = tpu.matmul %67, %69, %cst_61 {dimension_numbers = #tpu.dot_dimension_numbers<[1], [0], [0], [1], [0, 0, 1, 1], [], []>} : vector<8x640xf32>, vector<640x64xf32>, vector<8x64xf32> -> vector<8x64xf32>
    %71 = arith.addf %66, %70 : vector<8x64xf32>
    %c88 = arith.constant 88 : index
    %c0_62 = arith.constant 0 : index
    %72 = vector.load %arg10[%c88, %c0_62] : memref<128x640xf32, #tpu.memory_space<vmem>>, vector<8x640xf32>
    %c11 = arith.constant 11 : index
    %c0_63 = arith.constant 0 : index
    %c0_64 = arith.constant 0 : index
    %73 = vector.load %arg4[%c11, %c0_63, %c0_64] : memref<16x640x64xf32, #tpu.memory_space<vmem>>, vector<1x640x64xf32>
    %74 = vector.shape_cast %73 : vector<1x640x64xf32> to vector<640x64xf32>
    %cst_65 = arith.constant dense<0.000000e+00> : vector<8x64xf32>
    %75 = tpu.matmul %72, %74, %cst_65 {dimension_numbers = #tpu.dot_dimension_numbers<[1], [0], [0], [1], [0, 0, 1, 1], [], []>} : vector<8x640xf32>, vector<640x64xf32>, vector<8x64xf32> -> vector<8x64xf32>
    %76 = arith.addf %71, %75 : vector<8x64xf32>
    %c96 = arith.constant 96 : index
    %c0_66 = arith.constant 0 : index
    %77 = vector.load %arg10[%c96, %c0_66] : memref<128x640xf32, #tpu.memory_space<vmem>>, vector<8x640xf32>
    %c12 = arith.constant 12 : index
    %c0_67 = arith.constant 0 : index
    %c0_68 = arith.constant 0 : index
    %78 = vector.load %arg4[%c12, %c0_67, %c0_68] : memref<16x640x64xf32, #tpu.memory_space<vmem>>, vector<1x640x64xf32>
    %79 = vector.shape_cast %78 : vector<1x640x64xf32> to vector<640x64xf32>
    %cst_69 = arith.constant dense<0.000000e+00> : vector<8x64xf32>
    %80 = tpu.matmul %77, %79, %cst_69 {dimension_numbers = #tpu.dot_dimension_numbers<[1], [0], [0], [1], [0, 0, 1, 1], [], []>} : vector<8x640xf32>, vector<640x64xf32>, vector<8x64xf32> -> vector<8x64xf32>
    %81 = arith.addf %76, %80 : vector<8x64xf32>
    %c104 = arith.constant 104 : index
    %c0_70 = arith.constant 0 : index
    %82 = vector.load %arg10[%c104, %c0_70] : memref<128x640xf32, #tpu.memory_space<vmem>>, vector<8x640xf32>
    %c13 = arith.constant 13 : index
    %c0_71 = arith.constant 0 : index
    %c0_72 = arith.constant 0 : index
    %83 = vector.load %arg4[%c13, %c0_71, %c0_72] : memref<16x640x64xf32, #tpu.memory_space<vmem>>, vector<1x640x64xf32>
    %84 = vector.shape_cast %83 : vector<1x640x64xf32> to vector<640x64xf32>
    %cst_73 = arith.constant dense<0.000000e+00> : vector<8x64xf32>
    %85 = tpu.matmul %82, %84, %cst_73 {dimension_numbers = #tpu.dot_dimension_numbers<[1], [0], [0], [1], [0, 0, 1, 1], [], []>} : vector<8x640xf32>, vector<640x64xf32>, vector<8x64xf32> -> vector<8x64xf32>
    %86 = arith.addf %81, %85 : vector<8x64xf32>
    %c112 = arith.constant 112 : index
    %c0_74 = arith.constant 0 : index
    %87 = vector.load %arg10[%c112, %c0_74] : memref<128x640xf32, #tpu.memory_space<vmem>>, vector<8x640xf32>
    %c14 = arith.constant 14 : index
    %c0_75 = arith.constant 0 : index
    %c0_76 = arith.constant 0 : index
    %88 = vector.load %arg4[%c14, %c0_75, %c0_76] : memref<16x640x64xf32, #tpu.memory_space<vmem>>, vector<1x640x64xf32>
    %89 = vector.shape_cast %88 : vector<1x640x64xf32> to vector<640x64xf32>
    %cst_77 = arith.constant dense<0.000000e+00> : vector<8x64xf32>
    %90 = tpu.matmul %87, %89, %cst_77 {dimension_numbers = #tpu.dot_dimension_numbers<[1], [0], [0], [1], [0, 0, 1, 1], [], []>} : vector<8x640xf32>, vector<640x64xf32>, vector<8x64xf32> -> vector<8x64xf32>
    %91 = arith.addf %86, %90 : vector<8x64xf32>
    %c120 = arith.constant 120 : index
    %c0_78 = arith.constant 0 : index
    %92 = vector.load %arg10[%c120, %c0_78] : memref<128x640xf32, #tpu.memory_space<vmem>>, vector<8x640xf32>
    %c15 = arith.constant 15 : index
    %c0_79 = arith.constant 0 : index
    %c0_80 = arith.constant 0 : index
    %93 = vector.load %arg4[%c15, %c0_79, %c0_80] : memref<16x640x64xf32, #tpu.memory_space<vmem>>, vector<1x640x64xf32>
    %94 = vector.shape_cast %93 : vector<1x640x64xf32> to vector<640x64xf32>
    %cst_81 = arith.constant dense<0.000000e+00> : vector<8x64xf32>
    %95 = tpu.matmul %92, %94, %cst_81 {dimension_numbers = #tpu.dot_dimension_numbers<[1], [0], [0], [1], [0, 0, 1, 1], [], []>} : vector<8x640xf32>, vector<640x64xf32>, vector<8x64xf32> -> vector<8x64xf32>
    %96 = arith.addf %91, %95 : vector<8x64xf32>
    %c0_82 = arith.constant 0 : index
    %c0_83 = arith.constant 0 : index
    %97 = vector.load %arg5[%c0_82, %c0_83] : memref<1x64xf32, #tpu.memory_space<vmem>>, vector<1x64xf32>
    %98 = vector.broadcast %97 : vector<1x64xf32> to vector<8x64xf32>
    %99 = arith.addf %96, %98 : vector<8x64xf32>
    %cst_84 = arith.constant 0.000000e+00 : f32
    %100 = vector.broadcast %cst_84 : f32 to vector<8x64xf32>
    %101 = arith.maximumf %99, %100 : vector<8x64xf32>
    %c0_85 = arith.constant 0 : index
    %c0_86 = arith.constant 0 : index
    %102 = vector.load %arg6[%c0_85, %c0_86] : memref<64x10xf32, #tpu.memory_space<vmem>>, vector<64x10xf32>
    %cst_87 = arith.constant dense<0.000000e+00> : vector<8x10xf32>
    %103 = tpu.matmul %101, %102, %cst_87 {dimension_numbers = #tpu.dot_dimension_numbers<[1], [0], [0], [1], [0, 0, 1, 1], [], []>} : vector<8x64xf32>, vector<64x10xf32>, vector<8x10xf32> -> vector<8x10xf32>
    %c0_88 = arith.constant 0 : index
    %c0_89 = arith.constant 0 : index
    %104 = vector.load %arg7[%c0_88, %c0_89] : memref<1x10xf32, #tpu.memory_space<vmem>>, vector<1x10xf32>
    %105 = vector.broadcast %104 : vector<1x10xf32> to vector<8x10xf32>
    %106 = arith.addf %103, %105 : vector<8x10xf32>
    %c0_90 = arith.constant 0 : index
    %c0_91 = arith.constant 0 : index
    %107 = vector.load %arg8[%c0_90, %c0_91] : memref<8x10xf32, #tpu.memory_space<vmem>>, vector<8x10xf32>
    tpu.vector_store %arg8[%c0_90, %c0_91], %106 {strides = array<i32>} : memref<8x10xf32, #tpu.memory_space<vmem>>, vector<8x10xf32>,
    return
  }
  func.func @transform_0(%arg0: i32) -> (i32, i32, i32) {
    %c0_i32 = arith.constant 0 : i32
    %c0_i32_0 = arith.constant 0 : i32
    %c0_i32_1 = arith.constant 0 : i32
    return %c0_i32, %arg0, %c0_i32_0 : i32, i32, i32
  }
  func.func @transform_1(%arg0: i32) -> (i32, i32) {
    %c0_i32 = arith.constant 0 : i32
    %c0_i32_0 = arith.constant 0 : i32
    %c0_i32_1 = arith.constant 0 : i32
    return %c0_i32, %c0_i32_0 : i32, i32
  }
  func.func @transform_2(%arg0: i32) -> (i32, i32) {
    %c0_i32 = arith.constant 0 : i32
    %c0_i32_0 = arith.constant 0 : i32
    %c0_i32_1 = arith.constant 0 : i32
    return %c0_i32, %c0_i32_0 : i32, i32
  }
  func.func @transform_3(%arg0: i32) -> (i32, i32, i32) {
    %c0_i32 = arith.constant 0 : i32
    %c0_i32_0 = arith.constant 0 : i32
    %c0_i32_1 = arith.constant 0 : i32
    %c0_i32_2 = arith.constant 0 : i32
    return %c0_i32, %c0_i32_0, %c0_i32_1 : i32, i32, i32
  }
  func.func @transform_4(%arg0: i32) -> (i32, i32) {
    %c0_i32 = arith.constant 0 : i32
    %c0_i32_0 = arith.constant 0 : i32
    %c0_i32_1 = arith.constant 0 : i32
    return %c0_i32, %c0_i32_0 : i32, i32
  }
  func.func @transform_5(%arg0: i32) -> (i32, i32) {
    %c0_i32 = arith.constant 0 : i32
    %c0_i32_0 = arith.constant 0 : i32
    %c0_i32_1 = arith.constant 0 : i32
    return %c0_i32, %c0_i32_0 : i32, i32
  }
  func.func @transform_6(%arg0: i32) -> (i32, i32) {
    %c0_i32 = arith.constant 0 : i32
    %c0_i32_0 = arith.constant 0 : i32
    %c0_i32_1 = arith.constant 0 : i32
    return %c0_i32, %c0_i32_0 : i32, i32
  }
  func.func @transform_7(%arg0: i32) -> (i32, i32) {
    %c0_i32 = arith.constant 0 : i32
    %c0_i32_0 = arith.constant 0 : i32
    return %arg0, %c0_i32 : i32, i32
  }
}

</mosaic_0001>

<llo_original>
// kernel: tile.8
$region0: #{tile.8}
  #allocation0 [shape = 's32[1]{0}', space=sflag, size = 0x4, scoped, tag = 'scoped memory for tile.8']
  %s0 = inlined_call_operand.vmem [shape: f32[20], index: 0, kind: input, shape index: {}]
  %s1 = inlined_call_operand.vmem [shape: f32[32,20], index: 1, kind: output, shape index: {}]
  // Predicated region
  $region2: #{tile.8} parent=0 // pred_check
    _
  $region3: #{tile.8} parent=0 // pred_check_branch
    %3 = sbr.rel (0) target = $region5
  $region4: #{tile.8} parent=0 // pred_region
    _
  $region5: #{tile.8} parent=0 // pred_fallthru
    _
  %v4 = vld [vmem:[%s0] ss:$0 sm:$0xff]
  %5 = vst [vmem:[%s1] sm:$0xff] %v4
  %s6 = scalar_lea.vmem %s1, 8
  %7 = vst [vmem:[%s6] sm:$0xff] %v4
  %s8 = scalar_lea.vmem %s1, 16
  %9 = vst [vmem:[%s8] sm:$0xff] %v4
  %s10 = scalar_lea.vmem %s1, 24
  %11 = vst [vmem:[%s10] sm:$0xff] %v4

// kernel: tile.9
$region0: #{tile.9}
  %s0 = inlined_call_operand.vmem [shape: f32[32,20], index: 0, kind: input, shape index: {}]
  %s1 = inlined_call_operand.vmem [shape: f32[1,640], index: 1, kind: output, shape index: {}]
  $region1: #{tile.9} parent=0
    #allocation0 [shape = 'u8[20480]{0}', space=vmem, size = 0x5000, scoped, tag = 'scoped mem for output reshape']
    %v2 = vld [vmem:[%s0] sm:$0x1]
    %vm3 = vcmask 162816
    %4 = vst.msk [vmem:[#allocation0] sm:$0x1] %vm3, %v2
    %s5 = scalar_lea.vmem %s0, 19
    %v6 = vld [vmem:[%s5] sm:$0x1]
    %s7 = scalar_lea.vmem %s0, 19
    %v8 = vld [vmem:[%s7] sm:$0x1]
    %vm9 = vcmask 31744
    %v10 = vsel %vm9, %v8, %v6
    %11 = vrot.lane.b32.xlu0 %v10, 124
    %v12 = vpop.permute.xlu0 %11
    %vm13 = vcmask 130048
    %s14 = scalar_lea.vmem [#allocation0], 24
    %15 = vst.msk [vmem:[%s14] sm:$0x1] %vm13, %v12
    %vm16 = vcmask 1048544
    %s17 = scalar_lea.vmem [#allocation0], 16
    %18 = vst.msk [vmem:[%s17] sm:$0x1] %vm16, %v12
    %s19 = scalar_lea.vmem %s0, 6
    %v20 = vld [vmem:[%s19] sm:$0x1]
    %s21 = scalar_lea.vmem %s0, 6
    %v22 = vld [vmem:[%s21] sm:$0x1]
    %vm23 = vcmask 64512
    %v24 = vsel %vm23, %v22, %v20
    %25 = vrot.lane.b32.xlu0 %v24, 120
    %v26 = vpop.permute.xlu0 %25
    %vm27 = vcmask 97280
    %s28 = scalar_lea.vmem [#allocation0], 8
    %29 = vst.msk [vmem:[%s28] sm:$0x1] %vm27, %v26
    %vm30 = vcmask 1048512
    %31 = vst.msk [vmem:[#allocation0] sm:$0x1] %vm30, %v26
    %s32 = scalar_lea.vmem %s0, 25
    %v33 = vld [vmem:[%s32] sm:$0x1]
    %s34 = scalar_lea.vmem %s0, 25
    %v35 = vld [vmem:[%s34] sm:$0x1]
    %vm36 = vcmask 97280
    %v37 = vsel %vm36, %v35, %v33
    %38 = vrot.lane.b32.xlu0 %v37, 116
    %v39 = vpop.permute.xlu0 %38
    %vm40 = vcmask 64512
    %s41 = scalar_lea.vmem [#allocation0], 32
    %42 = vst.msk [vmem:[%s41] sm:$0x1] %vm40, %v39
    %vm43 = vcmask 1048480
    %s44 = scalar_lea.vmem [#allocation0], 24
    %45 = vst.msk [vmem:[%s44] sm:$0x1] %vm43, %v39
    %s46 = scalar_lea.vmem %s0, 12
    %v47 = vld [vmem:[%s46] sm:$0x1]
    %s48 = scalar_lea.vmem %s0, 12
    %v49 = vld [vmem:[%s48] sm:$0x1]
    %vm50 = vcmask 130048
    %v51 = vsel %vm50, %v49, %v47
    %52 = vrot.lane.b32.xlu0 %v51, 112
    %v53 = vpop.permute.xlu0 %52
    %vm54 = vcmask 31744
    %s55 = scalar_lea.vmem [#allocation0], 16
    %56 = vst.msk [vmem:[%s55] sm:$0x1] %vm54, %v53
    %vm57 = vcmask 1048448
    %s58 = scalar_lea.vmem [#allocation0], 8
    %59 = vst.msk [vmem:[%s58] sm:$0x1] %vm57, %v53
    %s60 = scalar_lea.vmem %s0, 31
    %v61 = vld [vmem:[%s60] sm:$0x1]
    %62 = vrot.lane.b32.xlu0 %v61, 108
    %v63 = vpop.permute.xlu0 %62
    %vm64 = vcmask 1048416
    %s65 = scalar_lea.vmem [#allocation0], 32
    %66 = vst.msk [vmem:[%s65] sm:$0x1] %vm64, %v63
    %s67 = scalar_lea.vmem %s0, 18
    %v68 = vld [vmem:[%s67] sm:$0x1]
    %69 = vrot.lane.b32.xlu0 %v68, 104
    %v70 = vpop.permute.xlu0 %69
    %vm71 = vcmask 1015616
    %s72 = scalar_lea.vmem [#allocation0], 16
    %73 = vst.msk [vmem:[%s72] sm:$0x1] %vm71, %v70
    %s74 = scalar_lea.vmem %s0, 5
    %v75 = vld [vmem:[%s74] sm:$0x1]
    %76 = vrot.lane.b32.xlu0 %v75, 100
    %v77 = vpop.permute.xlu0 %76
    %vm78 = vcmask 982816
    %79 = vst.msk [vmem:[#allocation0] sm:$0x1] %vm78, %v77
    %s80 = scalar_lea.vmem %s0, 24
    %v81 = vld [vmem:[%s80] sm:$0x1]
    %82 = vrot.lane.b32.xlu0 %v81, 96
    %v83 = vpop.permute.xlu0 %82
    %vm84 = vcmask 950016
    %s85 = scalar_lea.vmem [#allocation0], 24
    %86 = vst.msk [vmem:[%s85] sm:$0x1] %vm84, %v83
    %s87 = scalar_lea.vmem %s0, 11
    %v88 = vld [vmem:[%s87] sm:$0x1]
    %89 = vrot.lane.b32.xlu0 %v88, 92
    %v90 = vpop.permute.xlu0 %89
    %vm91 = vcmask 917216
    %s92 = scalar_lea.vmem [#allocation0], 8
    %93 = vst.msk [vmem:[%s92] sm:$0x1] %vm91, %v90
    %s94 = scalar_lea.vmem %s0, 30
    %v95 = vld [vmem:[%s94] sm:$0x1]
    %96 = vrot.lane.b32.xlu0 %v95, 88
    %v97 = vpop.permute.xlu0 %96
    %vm98 = vcmask 884416
    %s99 = scalar_lea.vmem [#allocation0], 32
    %100 = vst.msk [vmem:[%s99] sm:$0x1] %vm98, %v97
    %s101 = scalar_lea.vmem %s0, 17
    %v102 = vld [vmem:[%s101] sm:$0x1]
    %103 = vrot.lane.b32.xlu0 %v102, 84
    %v104 = vpop.permute.xlu0 %103
    %vm105 = vcmask 851616
    %s106 = scalar_lea.vmem [#allocation0], 16
    %107 = vst.msk [vmem:[%s106] sm:$0x1] %vm105, %v104
    %s108 = scalar_lea.vmem %s0, 4
    %v109 = vld [vmem:[%s108] sm:$0x1]
    %110 = vrot.lane.b32.xlu0 %v109, 80
    %v111 = vpop.permute.xlu0 %110
    %vm112 = vcmask 818816
    %113 = vst.msk [vmem:[#allocation0] sm:$0x1] %vm112, %v111
    %s114 = scalar_lea.vmem %s0, 23
    %v115 = vld [vmem:[%s114] sm:$0x1]
    %116 = vrot.lane.b32.xlu0 %v115, 76
    %v117 = vpop.permute.xlu0 %116
    %vm118 = vcmask 786016
    %s119 = scalar_lea.vmem [#allocation0], 24
    %120 = vst.msk [vmem:[%s119] sm:$0x1] %vm118, %v117
    %s121 = scalar_lea.vmem %s0, 10
    %v122 = vld [vmem:[%s121] sm:$0x1]
    %123 = vrot.lane.b32.xlu0 %v122, 72
    %v124 = vpop.permute.xlu0 %123
    %vm125 = vcmask 753216
    %s126 = scalar_lea.vmem [#allocation0], 8
    %127 = vst.msk [vmem:[%s126] sm:$0x1] %vm125, %v124
    %s128 = scalar_lea.vmem %s0, 29
    %v129 = vld [vmem:[%s128] sm:$0x1]
    %130 = vrot.lane.b32.xlu0 %v129, 68
    %v131 = vpop.permute.xlu0 %130
    %vm132 = vcmask 720416
    %s133 = scalar_lea.vmem [#allocation0], 32
    %134 = vst.msk [vmem:[%s133] sm:$0x1] %vm132, %v131
    %s135 = scalar_lea.vmem %s0, 16
    %v136 = vld [vmem:[%s135] sm:$0x1]
    %137 = vrot.lane.b32.xlu0 %v136, 64
    %v138 = vpop.permute.xlu0 %137
    %vm139 = vcmask 687616
    %s140 = scalar_lea.vmem [#allocation0], 16
    %141 = vst.msk [vmem:[%s140] sm:$0x1] %vm139, %v138
    %s142 = scalar_lea.vmem %s0, 3
    %v143 = vld [vmem:[%s142] sm:$0x1]
    %144 = vrot.lane.b32.xlu0 %v143, 60
    %v145 = vpop.permute.xlu0 %144
    %vm146 = vcmask 654816
    %147 = vst.msk [vmem:[#allocation0] sm:$0x1] %vm146, %v145
    %s148 = scalar_lea.vmem %s0, 22
    %v149 = vld [vmem:[%s148] sm:$0x1]
    %150 = vrot.lane.b32.xlu0 %v149, 56
    %v151 = vpop.permute.xlu0 %150
    %vm152 = vcmask 622016
    %s153 = scalar_lea.vmem [#allocation0], 24
    %154 = vst.msk [vmem:[%s153] sm:$0x1] %vm152, %v151
    %s155 = scalar_lea.vmem %s0, 9
    %v156 = vld [vmem:[%s155] sm:$0x1]
    %157 = vrot.lane.b32.xlu0 %v156, 52
    %v158 = vpop.permute.xlu0 %157
    %vm159 = vcmask 589216
    %s160 = scalar_lea.vmem [#allocation0], 8
    %161 = vst.msk [vmem:[%s160] sm:$0x1] %vm159, %v158
    %s162 = scalar_lea.vmem %s0, 28
    %v163 = vld [vmem:[%s162] sm:$0x1]
    %164 = vrot.lane.b32.xlu0 %v163, 48
    %v165 = vpop.permute.xlu0 %164
    %vm166 = vcmask 556416
    %s167 = scalar_lea.vmem [#allocation0], 32
    %168 = vst.msk [vmem:[%s167] sm:$0x1] %vm166, %v165
    %s169 = scalar_lea.vmem %s0, 15
    %v170 = vld [vmem:[%s169] sm:$0x1]
    %171 = vrot.lane.b32.xlu0 %v170, 44
    %v172 = vpop.permute.xlu0 %171
    %vm173 = vcmask 523616
    %s174 = scalar_lea.vmem [#allocation0], 16
    %175 = vst.msk [vmem:[%s174] sm:$0x1] %vm173, %v172
    %s176 = scalar_lea.vmem %s0, 2
    %v177 = vld [vmem:[%s176] sm:$0x1]
    %178 = vrot.lane.b32.xlu0 %v177, 40
    %v179 = vpop.permute.xlu0 %178
    %vm180 = vcmask 490816
    %181 = vst.msk [vmem:[#allocation0] sm:$0x1] %vm180, %v179
    %s182 = scalar_lea.vmem %s0, 21
    %v183 = vld [vmem:[%s182] sm:$0x1]
    %184 = vrot.lane.b32.xlu0 %v183, 36
    %v185 = vpop.permute.xlu0 %184
    %vm186 = vcmask 458016
    %s187 = scalar_lea.vmem [#allocation0], 24
    %188 = vst.msk [vmem:[%s187] sm:$0x1] %vm186, %v185
    %s189 = scalar_lea.vmem %s0, 8
    %v190 = vld [vmem:[%s189] sm:$0x1]
    %191 = vrot.lane.b32.xlu0 %v190, 32
    %v192 = vpop.permute.xlu0 %191
    %vm193 = vcmask 425216
    %s194 = scalar_lea.vmem [#allocation0], 8
    %195 = vst.msk [vmem:[%s194] sm:$0x1] %vm193, %v192
    %s196 = scalar_lea.vmem %s0, 27
    %v197 = vld [vmem:[%s196] sm:$0x1]
    %198 = vrot.lane.b32.xlu0 %v197, 28
    %v199 = vpop.permute.xlu0 %198
    %vm200 = vcmask 392416
    %s201 = scalar_lea.vmem [#allocation0], 32
    %202 = vst.msk [vmem:[%s201] sm:$0x1] %vm200, %v199
    %s203 = scalar_lea.vmem %s0, 14
    %v204 = vld [vmem:[%s203] sm:$0x1]
    %205 = vrot.lane.b32.xlu0 %v204, 24
    %v206 = vpop.permute.xlu0 %205
    %vm207 = vcmask 359616
    %s208 = scalar_lea.vmem [#allocation0], 16
    %209 = vst.msk [vmem:[%s208] sm:$0x1] %vm207, %v206
    %s210 = scalar_lea.vmem %s0, 1
    %v211 = vld [vmem:[%s210] sm:$0x1]
    %212 = vrot.lane.b32.xlu0 %v211, 20
    %v213 = vpop.permute.xlu0 %212
    %vm214 = vcmask 326816
    %215 = vst.msk [vmem:[#allocation0] sm:$0x1] %vm214, %v213
    %s216 = scalar_lea.vmem %s0, 20
    %v217 = vld [vmem:[%s216] sm:$0x1]
    %218 = vrot.lane.b32.xlu0 %v217, 16
    %v219 = vpop.permute.xlu0 %218
    %vm220 = vcmask 294016
    %s221 = scalar_lea.vmem [#allocation0], 24
    %222 = vst.msk [vmem:[%s221] sm:$0x1] %vm220, %v219
    %s223 = scalar_lea.vmem %s0, 7
    %v224 = vld [vmem:[%s223] sm:$0x1]
    %225 = vrot.lane.b32.xlu0 %v224, 12
    %v226 = vpop.permute.xlu0 %225
    %vm227 = vcmask 261216
    %s228 = scalar_lea.vmem [#allocation0], 8
    %229 = vst.msk [vmem:[%s228] sm:$0x1] %vm227, %v226
    %s230 = scalar_lea.vmem %s0, 26
    %v231 = vld [vmem:[%s230] sm:$0x1]
    %232 = vrot.lane.b32.xlu0 %v231, 8
    %v233 = vpop.permute.xlu0 %232
    %vm234 = vcmask 228416
    %s235 = scalar_lea.vmem [#allocation0], 32
    %236 = vst.msk [vmem:[%s235] sm:$0x1] %vm234, %v233
    %s237 = scalar_lea.vmem %s0, 13
    %v238 = vld [vmem:[%s237] sm:$0x1]
    %239 = vrot.lane.b32.xlu0 %v238, 4
    %v240 = vpop.permute.xlu0 %239
    %vm241 = vcmask 195616
    %s242 = scalar_lea.vmem [#allocation0], 16
    %243 = vst.msk [vmem:[%s242] sm:$0x1] %vm241, %v240
    %s245 = ssub.s32 2, 1
    %v246 = vld [vmem:[#allocation0] sm:%s245]
    %s248 = ssub.s32 2, 1
    %249 = vst [vmem:[%s1] sm:%s248] %v246
    %s250 = scalar_lea.vmem [#allocation0], 8
    %v251 = vld [vmem:[%s250] sm:%s245]
    %s253 = ssub.s32 2, 1
    %s254 = scalar_lea.vmem %s1, 1
    %255 = vst [vmem:[%s254] sm:%s253] %v251
    %s256 = scalar_lea.vmem [#allocation0], 16
    %v257 = vld [vmem:[%s256] sm:%s245]
    %s259 = ssub.s32 2, 1
    %s260 = scalar_lea.vmem %s1, 2
    %261 = vst [vmem:[%s260] sm:%s259] %v257
    %s262 = scalar_lea.vmem [#allocation0], 24
    %v263 = vld [vmem:[%s262] sm:%s245]
    %s265 = ssub.s32 2, 1
    %s266 = scalar_lea.vmem %s1, 3
    %267 = vst [vmem:[%s266] sm:%s265] %v263
    %s268 = scalar_lea.vmem [#allocation0], 32
    %v269 = vld [vmem:[%s268] sm:%s245]
    %s271 = ssub.s32 2, 1
    %s272 = scalar_lea.vmem %s1, 4
    %273 = vst [vmem:[%s272] sm:%s271] %v269

// kernel: cnn_forward.1
$region0: #{cnn_forward.1}
  #allocation0 [shape = 'u32[]', space=smem, size = 0x4, offset = 0x4, fixed_abs, tag = 'smem constant byte address 0x4 - core index']
  #allocation1 [shape = 'u32[72,128]{1,0:T(1,128)}', space=vmem, size = 0x9000, scoped, tag = 'internal scratch']
  #allocation2 [shape = 'f32[256,640]{1,0:T(8,128)}', space=vmem, size = 0xa0000, scoped, tag = 'scratch operand']
  #allocation3 [shape = 'f32[128,640]{1,0:T(8,128)}', space=vmem, size = 0x50000, scoped, tag = 'scratch operand']
  %s0 = inlined_call_operand.vmem [shape: f32[32,16,306], index: 0, kind: input, shape index: {}]
  %s1 = inlined_call_operand.vmem [shape: f32[306,640], index: 1, kind: input, shape index: {}]
  %s2 = inlined_call_operand.vmem [shape: f32[1,640], index: 2, kind: input, shape index: {}]
  %s3 = inlined_call_operand.vmem [shape: f32[16,640,64], index: 3, kind: input, shape index: {}]
  %s4 = inlined_call_operand.vmem [shape: f32[1,64], index: 4, kind: input, shape index: {}]
  %s5 = inlined_call_operand.vmem [shape: f32[64,10], index: 5, kind: input, shape index: {}]
  %s6 = inlined_call_operand.vmem [shape: f32[1,10], index: 6, kind: input, shape index: {}]
  %s7 = inlined_call_operand.vmem [shape: f32[16,10], index: 7, kind: output, shape index: {}]
  %s8 = sld [smem:[#allocation0]]
  $region84: #{cnn_forward.1} parent=0
    _
  %s10 = ssub.s32 1, %s8
  %s11 = scalar_select 0, %s10, %s8
  $region1: #{cnn_forward.1} parent=0
    #allocation4 [shape = 'u8[786432]{0}', space=vmem, size = 0xc0000, scoped, tag = 'input window, operand 0']
    loop: start=0, step=1, limit=4
    $region2: #{cnn_forward.1} parent=1 // loop_pre_header
      _
    $region3: #{cnn_forward.1} parent=1 // loop_header
      %s13 = sphi 0, %s17
      %p14 = scmp.ge.s32.totalorder %s13, 4
      %s23 = sphi 0, %s25
      %s26 = sphi 0, %s23
      %s27 = sphi 0, %s26
      %s43 = sphi 0, %s27
      %s47 = sphi 0, %s47
      %s49 = sphi 0, %s47
      %s50 = sphi 0, %s49
      %s64 = sphi 0, %s50
      %s68 = sphi 0, %s68
      %s70 = sphi 0, %s68
      %s71 = sphi 0, %s70
      %s85 = sphi 0, %s71
      %s89 = sphi 0, %s89
      %s91 = sphi 0, %s89
      %s92 = sphi 0, %s91
      %s106 = sphi 0, %s92
      %s110 = sphi 0, %s110
      %s112 = sphi 0, %s110
      %s113 = sphi 0, %s112
      %s127 = sphi 0, %s113
      %s131 = sphi 0, %s131
      %s133 = sphi 0, %s131
      %s134 = sphi 0, %s133
      %s148 = sphi 0, %s134
      %s152 = sphi 0, %s152
      %s154 = sphi 0, %s152
      %s155 = sphi 0, %s154
      %s169 = sphi 0, %s155
      %s175 = sphi 0, %s177
      %s178 = sphi 0, %s175
      %s179 = sphi 0, %s178
      %s195 = sphi 0, %s179
    $region4: #{cnn_forward.1} parent=1 // loop_header_branch
      %16 = sbr.rel (%p14) target = $region8
    $region5: #{cnn_forward.1} parent=1 // loop_body
      %s18 = ssub.s32 %s13, 1
      %s19 = ssub.s32 %s13, 2
      %s20 = sadd.s32 %s13, 1
      %s21 = ssub.s32 %s13, %s20
      %p22 = scmp.eq.s32.totalorder %s21, 0
      %s24 = sadd.s32 %s23, 1
      %s25 = scalar_select %p22, %s23, %s24
      %p28 = pneg %p22
      %p29 = scmp.eq.s32.totalorder %s13, 1
      %p30 = por %p28, %p29
      %p31 = scmp.ne.s32.totalorder %s23, %s26
      %p32 = scmp.eq.s32.totalorder %s13, 0
      %p33 = por %p31, %p32
      %p34 = scmp.ne.s32.totalorder %s23, %s26
      %p35 = scmp.eq.s32.totalorder %s18, 1
      %p36 = por %p34, %p35
      %p37 = scmp.ne.s32.totalorder %s26, %s27
      %p38 = scmp.eq.s32.totalorder %s18, 0
      %p39 = por %p37, %p38
      %p40 = scmp.ne.s32.totalorder %s26, %s27
      %p41 = scmp.eq.s32.totalorder %s19, 1
      %p42 = por %p40, %p41
      %p44 = scmp.ne.s32.totalorder %s27, %s43
      %p45 = scmp.eq.s32.totalorder %s19, 0
      %p46 = por %p44, %p45
      %s48 = sadd.s32 %s47, 1
      %p51 = scmp.eq.s32.totalorder %s13, 1
      %p52 = scmp.ne.s32.totalorder %s47, %s49
      %p53 = scmp.eq.s32.totalorder %s13, 0
      %p54 = por %p52, %p53
      %p55 = scmp.ne.s32.totalorder %s47, %s49
      %p56 = scmp.eq.s32.totalorder %s18, 1
      %p57 = por %p55, %p56
      %p58 = scmp.ne.s32.totalorder %s49, %s50
      %p59 = scmp.eq.s32.totalorder %s18, 0
      %p60 = por %p58, %p59
      %p61 = scmp.ne.s32.totalorder %s49, %s50
      %p62 = scmp.eq.s32.totalorder %s19, 1
      %p63 = por %p61, %p62
      %p65 = scmp.ne.s32.totalorder %s50, %s64
      %p66 = scmp.eq.s32.totalorder %s19, 0
      %p67 = por %p65, %p66
      %s69 = sadd.s32 %s68, 1
      %p72 = scmp.eq.s32.totalorder %s13, 1
      %p73 = scmp.ne.s32.totalorder %s68, %s70
      %p74 = scmp.eq.s32.totalorder %s13, 0
      %p75 = por %p73, %p74
      %p76 = scmp.ne.s32.totalorder %s68, %s70
      %p77 = scmp.eq.s32.totalorder %s18, 1
      %p78 = por %p76, %p77
      %p79 = scmp.ne.s32.totalorder %s70, %s71
      %p80 = scmp.eq.s32.totalorder %s18, 0
      %p81 = por %p79, %p80
      %p82 = scmp.ne.s32.totalorder %s70, %s71
      %p83 = scmp.eq.s32.totalorder %s19, 1
      %p84 = por %p82, %p83
      %p86 = scmp.ne.s32.totalorder %s71, %s85
      %p87 = scmp.eq.s32.totalorder %s19, 0
      %p88 = por %p86, %p87
      %s90 = sadd.s32 %s89, 1
      %p93 = scmp.eq.s32.totalorder %s13, 1
      %p94 = scmp.ne.s32.totalorder %s89, %s91
      %p95 = scmp.eq.s32.totalorder %s13, 0
      %p96 = por %p94, %p95
      %p97 = scmp.ne.s32.totalorder %s89, %s91
      %p98 = scmp.eq.s32.totalorder %s18, 1
      %p99 = por %p97, %p98
      %p100 = scmp.ne.s32.totalorder %s91, %s92
      %p101 = scmp.eq.s32.totalorder %s18, 0
      %p102 = por %p100, %p101
      %p103 = scmp.ne.s32.totalorder %s91, %s92
      %p104 = scmp.eq.s32.totalorder %s19, 1
      %p105 = por %p103, %p104
      %p107 = scmp.ne.s32.totalorder %s92, %s106
      %p108 = scmp.eq.s32.totalorder %s19, 0
      %p109 = por %p107, %p108
      %s111 = sadd.s32 %s110, 1
      %p114 = scmp.eq.s32.totalorder %s13, 1
      %p115 = scmp.ne.s32.totalorder %s110, %s112
      %p116 = scmp.eq.s32.totalorder %s13, 0
      %p117 = por %p115, %p116
      %p118 = scmp.ne.s32.totalorder %s110, %s112
      %p119 = scmp.eq.s32.totalorder %s18, 1
      %p120 = por %p118, %p119
      %p121 = scmp.ne.s32.totalorder %s112, %s113
      %p122 = scmp.eq.s32.totalorder %s18, 0
      %p123 = por %p121, %p122
      %p124 = scmp.ne.s32.totalorder %s112, %s113
      %p125 = scmp.eq.s32.totalorder %s19, 1
      %p126 = por %p124, %p125
      %p128 = scmp.ne.s32.totalorder %s113, %s127
      %p129 = scmp.eq.s32.totalorder %s19, 0
      %p130 = por %p128, %p129
      %s132 = sadd.s32 %s131, 1
      %p135 = scmp.eq.s32.totalorder %s13, 1
      %p136 = scmp.ne.s32.totalorder %s131, %s133
      %p137 = scmp.eq.s32.totalorder %s13, 0
      %p138 = por %p136, %p137
      %p139 = scmp.ne.s32.totalorder %s131, %s133
      %p140 = scmp.eq.s32.totalorder %s18, 1
      %p141 = por %p139, %p140
      %p142 = scmp.ne.s32.totalorder %s133, %s134
      %p143 = scmp.eq.s32.totalorder %s18, 0
      %p144 = por %p142, %p143
      %p145 = scmp.ne.s32.totalorder %s133, %s134
      %p146 = scmp.eq.s32.totalorder %s19, 1
      %p147 = por %p145, %p146
      %p149 = scmp.ne.s32.totalorder %s134, %s148
      %p150 = scmp.eq.s32.totalorder %s19, 0
      %p151 = por %p149, %p150
      %s153 = sadd.s32 %s152, 1
      %p156 = scmp.eq.s32.totalorder %s13, 1
      %p157 = scmp.ne.s32.totalorder %s152, %s154
      %p158 = scmp.eq.s32.totalorder %s13, 0
      %p159 = por %p157, %p158
      %p160 = scmp.ne.s32.totalorder %s152, %s154
      %p161 = scmp.eq.s32.totalorder %s18, 1
      %p162 = por %p160, %p161
      %p163 = scmp.ne.s32.totalorder %s154, %s155
      %p164 = scmp.eq.s32.totalorder %s18, 0
      %p165 = por %p163, %p164
      %p166 = scmp.ne.s32.totalorder %s154, %s155
      %p167 = scmp.eq.s32.totalorder %s19, 1
      %p168 = por %p166, %p167
      %p170 = scmp.ne.s32.totalorder %s155, %s169
      %p171 = scmp.eq.s32.totalorder %s19, 0
      %p172 = por %p170, %p171
      %s173 = ssub.s32 %s13, %s20
      %p174 = scmp.eq.s32.totalorder %s173, 0
      %s176 = sadd.s32 %s175, 1
      %s177 = scalar_select %p174, %s175, %s176
      %p180 = pneg %p174
      %p181 = scmp.eq.s32.totalorder %s13, 1
      %p182 = por %p180, %p181
      %p183 = scmp.ne.s32.totalorder %s175, %s178
      %p184 = scmp.eq.s32.totalorder %s13, 0
      %p185 = por %p183, %p184
      %p186 = scmp.ne.s32.totalorder %s175, %s178
      %p187 = scmp.eq.s32.totalorder %s18, 1
      %p188 = por %p186, %p187
      %p189 = scmp.ne.s32.totalorder %s178, %s179
      %p190 = scmp.eq.s32.totalorder %s18, 0
      %p191 = por %p189, %p190
      %p192 = scmp.ne.s32.totalorder %s178, %s179
      %p193 = scmp.eq.s32.totalorder %s19, 1
      %p194 = por %p192, %p193
      %p196 = scmp.ne.s32.totalorder %s179, %s195
      %p197 = scmp.eq.s32.totalorder %s19, 0
      %p198 = por %p196, %p197
      %p199 = scmp.le.s32.totalorder 1, %s13
      %p200 = scmp.lt.s32.totalorder %s13, 3
      %p201 = pnand %p199, %p200
      %p202 = pneg %p201
      // Predicated region
      $region9: #{cnn_forward.1} parent=5 // pred_check
        _
      $region10: #{cnn_forward.1} parent=5 // pred_check_branch
        %204 = sbr.rel (%p201) target = $region12
      $region11: #{cnn_forward.1} parent=5 // pred_region
        %s205 = ssub.s32 %s13, 1
        // Predicated region
        $region13: #{cnn_forward.1} parent=11 // pred_check
          %p206 = pneg %p60
        $region14: #{cnn_forward.1} parent=11 // pred_check_branch
          %208 = sbr.rel (%p206) target = $region16
        $region15: #{cnn_forward.1} parent=11 // pred_region
          _
        $region16: #{cnn_forward.1} parent=11 // pred_fallthru
          _
        // Predicated region
        $region17: #{cnn_forward.1} parent=11 // pred_check
          %p209 = pneg %p81
        $region18: #{cnn_forward.1} parent=11 // pred_check_branch
          %211 = sbr.rel (%p209) target = $region20
        $region19: #{cnn_forward.1} parent=11 // pred_region
          _
        $region20: #{cnn_forward.1} parent=11 // pred_fallthru
          _
        // Predicated region
        $region21: #{cnn_forward.1} parent=11 // pred_check
          %p212 = pneg %p102
        $region22: #{cnn_forward.1} parent=11 // pred_check_branch
          %214 = sbr.rel (%p212) target = $region24
        $region23: #{cnn_forward.1} parent=11 // pred_region
          _
        $region24: #{cnn_forward.1} parent=11 // pred_fallthru
          _
        // Predicated region
        $region25: #{cnn_forward.1} parent=11 // pred_check
          %p215 = pneg %p123
        $region26: #{cnn_forward.1} parent=11 // pred_check_branch
          %217 = sbr.rel (%p215) target = $region28
        $region27: #{cnn_forward.1} parent=11 // pred_region
          _
        $region28: #{cnn_forward.1} parent=11 // pred_fallthru
          _
        // Predicated region
        $region29: #{cnn_forward.1} parent=11 // pred_check
          %p218 = pneg %p144
        $region30: #{cnn_forward.1} parent=11 // pred_check_branch
          %220 = sbr.rel (%p218) target = $region32
        $region31: #{cnn_forward.1} parent=11 // pred_region
          _
        $region32: #{cnn_forward.1} parent=11 // pred_fallthru
          _
        // Predicated region
        $region33: #{cnn_forward.1} parent=11 // pred_check
          %p221 = pneg %p165
        $region34: #{cnn_forward.1} parent=11 // pred_check_branch
          %223 = sbr.rel (%p221) target = $region36
        $region35: #{cnn_forward.1} parent=11 // pred_region
          _
        $region36: #{cnn_forward.1} parent=11 // pred_fallthru
          _
      $region12: #{cnn_forward.1} parent=5 // pred_fallthru
        _
      %p224 = scmp.lt.s32.totalorder %s13, 2
      // Predicated region
      $region37: #{cnn_forward.1} parent=5 // pred_check
        %p225 = pneg %p224
      $region38: #{cnn_forward.1} parent=5 // pred_check_branch
        %227 = sbr.rel (%p225) target = $region40
      $region39: #{cnn_forward.1} parent=5 // pred_region
        // Predicated region
        $region41: #{cnn_forward.1} parent=39 // pred_check
          %p228 = pneg %p33
        $region42: #{cnn_forward.1} parent=39 // pred_check_branch
          %230 = sbr.rel (%p228) target = $region44
        $region43: #{cnn_forward.1} parent=39 // pred_region
          %s231 = sand.u32 %s23, 1
          %s232 = sand.u32 %s23, 1
          %s233 = smul.addr %s232, 768
          %s234 = scalar_lea.vmem [#allocation4], %s233
          %s235 = smul.addr %s13, 3
          %s236 = smul.addr %s235, 8
          %s237 = scalar_lea.vmem %s0, %s236
          // Predicated region
          $region45: #{cnn_forward.1} parent=43 // pred_check
            _
          $region46: #{cnn_forward.1} parent=43 // pred_check_branch
            %239 = sbr.rel (0) target = $region48
          $region47: #{cnn_forward.1} parent=43 // pred_region
            // Predicated region
            $region49: #{cnn_forward.1} parent=47 // pred_check
              _
            $region50: #{cnn_forward.1} parent=47 // pred_check_branch
              %241 = sbr.rel (0) target = $region52
            $region51: #{cnn_forward.1} parent=47 // pred_region
              loop: start=0, step=1, limit=1
              $region53: #{cnn_forward.1} parent=51 // loop_pre_header
                _
              $region54: #{cnn_forward.1} parent=51 // loop_header
                %s243 = sphi 0, %s247
                %p244 = scmp.ge.s32.totalorder %s243, 1
                %s248 = sphi %s237, %s237
                %s249 = sphi %s234, %s234
              $region55: #{cnn_forward.1} parent=51 // loop_header_branch
                %246 = sbr.rel (%p244) target = $region59
              $region56: #{cnn_forward.1} parent=51 // loop_body
                %v250 = vld [vmem:[%s248] sm:$0xff]
                %251 = vst [vmem:[%s249] sm:$0xff] %v250
                %v252 = vld [vmem:[%s248 + $0x8] sm:$0xff]
                %253 = vst [vmem:[%s249 + $0x8] sm:$0xff] %v252
                %v254 = vld [vmem:[%s248 + $0x10] sm:$0xff]
                %255 = vst [vmem:[%s249 + $0x10] sm:$0xff] %v254
                %v256 = vld [vmem:[%s248 + $0x30] sm:$0xff]
                %257 = vst [vmem:[%s249 + $0x18] sm:$0xff] %v256
                %v258 = vld [vmem:[%s248 + $0x38] sm:$0xff]
                %259 = vst [vmem:[%s249 + $0x20] sm:$0xff] %v258
                %v260 = vld [vmem:[%s248 + $0x40] sm:$0xff]
                %261 = vst [vmem:[%s249 + $0x28] sm:$0xff] %v260
                %v262 = vld [vmem:[%s248 + $0x60] sm:$0xff]
                %263 = vst [vmem:[%s249 + $0x30] sm:$0xff] %v262
                %v264 = vld [vmem:[%s248 + $0x68] sm:$0xff]
                %265 = vst [vmem:[%s249 + $0x38] sm:$0xff] %v264
                %v266 = vld [vmem:[%s248 + $0x70] sm:$0xff]
                %267 = vst [vmem:[%s249 + $0x40] sm:$0xff] %v266
                %v268 = vld [vmem:[%s248 + $0x90] sm:$0xff]
                %269 = vst [vmem:[%s249 + $0x48] sm:$0xff] %v268
                %v270 = vld [vmem:[%s248 + $0x98] sm:$0xff]
                %271 = vst [vmem:[%s249 + $0x50] sm:$0xff] %v270
                %v272 = vld [vmem:[%s248 + $0xa0] sm:$0xff]
                %273 = vst [vmem:[%s249 + $0x58] sm:$0xff] %v272
                %v274 = vld [vmem:[%s248 + $0xc0] sm:$0xff]
                %275 = vst [vmem:[%s249 + $0x60] sm:$0xff] %v274
                %v276 = vld [vmem:[%s248 + $0xc8] sm:$0xff]
                %277 = vst [vmem:[%s249 + $0x68] sm:$0xff] %v276
                %v278 = vld [vmem:[%s248 + $0xd0] sm:$0xff]
                %279 = vst [vmem:[%s249 + $0x70] sm:$0xff] %v278
                %v280 = vld [vmem:[%s248 + $0xf0] sm:$0xff]
                %281 = vst [vmem:[%s249 + $0x78] sm:$0xff] %v280
                %v282 = vld [vmem:[%s248 + $0xf8] sm:$0xff]
                %283 = vst [vmem:[%s249 + $0x80] sm:$0xff] %v282
                %v284 = vld [vmem:[%s248 + $0x100] sm:$0xff]
                %285 = vst [vmem:[%s249 + $0x88] sm:$0xff] %v284
                %v286 = vld [vmem:[%s248 + $0x120] sm:$0xff]
                %287 = vst [vmem:[%s249 + $0x90] sm:$0xff] %v286
                %v288 = vld [vmem:[%s248 + $0x128] sm:$0xff]
                %289 = vst [vmem:[%s249 + $0x98] sm:$0xff] %v288
                %v290 = vld [vmem:[%s248 + $0x130] sm:$0xff]
                %291 = vst [vmem:[%s249 + $0xa0] sm:$0xff] %v290
                %v292 = vld [vmem:[%s248 + $0x150] sm:$0xff]
                %293 = vst [vmem:[%s249 + $0xa8] sm:$0xff] %v292
                %v294 = vld [vmem:[%s248 + $0x158] sm:$0xff]
                %295 = vst [vmem:[%s249 + $0xb0] sm:$0xff] %v294
                %v296 = vld [vmem:[%s248 + $0x160] sm:$0xff]
                %297 = vst [vmem:[%s249 + $0xb8] sm:$0xff] %v296
                %v298 = vld [vmem:[%s248 + $0x180] sm:$0xff]
                %299 = vst [vmem:[%s249 + $0xc0] sm:$0xff] %v298
                %v300 = vld [vmem:[%s248 + $0x188] sm:$0xff]
                %301 = vst [vmem:[%s249 + $0xc8] sm:$0xff] %v300
                %v302 = vld [vmem:[%s248 + $0x190] sm:$0xff]
                %303 = vst [vmem:[%s249 + $0xd0] sm:$0xff] %v302
                %v304 = vld [vmem:[%s248 + $0x1b0] sm:$0xff]
                %305 = vst [vmem:[%s249 + $0xd8] sm:$0xff] %v304
                %v306 = vld [vmem:[%s248 + $0x1b8] sm:$0xff]
                %307 = vst [vmem:[%s249 + $0xe0] sm:$0xff] %v306
                %v308 = vld [vmem:[%s248 + $0x1c0] sm:$0xff]
                %309 = vst [vmem:[%s249 + $0xe8] sm:$0xff] %v308
                %v310 = vld [vmem:[%s248 + $0x1e0] sm:$0xff]
                %311 = vst [vmem:[%s249 + $0xf0] sm:$0xff] %v310
                %v312 = vld [vmem:[%s248 + $0x1e8] sm:$0xff]
                %313 = vst [vmem:[%s249 + $0xf8] sm:$0xff] %v312
                %v314 = vld [vmem:[%s248 + $0x1f0] sm:$0xff]
                %315 = vst [vmem:[%s249 + $0x100] sm:$0xff] %v314
                %v316 = vld [vmem:[%s248 + $0x210] sm:$0xff]
                %317 = vst [vmem:[%s249 + $0x108] sm:$0xff] %v316
                %v318 = vld [vmem:[%s248 + $0x218] sm:$0xff]
                %319 = vst [vmem:[%s249 + $0x110] sm:$0xff] %v318
                %v320 = vld [vmem:[%s248 + $0x220] sm:$0xff]
                %321 = vst [vmem:[%s249 + $0x118] sm:$0xff] %v320
                %v322 = vld [vmem:[%s248 + $0x240] sm:$0xff]
                %323 = vst [vmem:[%s249 + $0x120] sm:$0xff] %v322
                %v324 = vld [vmem:[%s248 + $0x248] sm:$0xff]
                %325 = vst [vmem:[%s249 + $0x128] sm:$0xff] %v324
                %v326 = vld [vmem:[%s248 + $0x250] sm:$0xff]
                %327 = vst [vmem:[%s249 + $0x130] sm:$0xff] %v326
                %v328 = vld [vmem:[%s248 + $0x270] sm:$0xff]
                %329 = vst [vmem:[%s249 + $0x138] sm:$0xff] %v328
                %v330 = vld [vmem:[%s248 + $0x278] sm:$0xff]
                %331 = vst [vmem:[%s249 + $0x140] sm:$0xff] %v330
                %v332 = vld [vmem:[%s248 + $0x280] sm:$0xff]
                %333 = vst [vmem:[%s249 + $0x148] sm:$0xff] %v332
                %v334 = vld [vmem:[%s248 + $0x2a0] sm:$0xff]
                %335 = vst [vmem:[%s249 + $0x150] sm:$0xff] %v334
                %v336 = vld [vmem:[%s248 + $0x2a8] sm:$0xff]
                %337 = vst [vmem:[%s249 + $0x158] sm:$0xff] %v336
                %v338 = vld [vmem:[%s248 + $0x2b0] sm:$0xff]
                %339 = vst [vmem:[%s249 + $0x160] sm:$0xff] %v338
                %v340 = vld [vmem:[%s248 + $0x2d0] sm:$0xff]
                %341 = vst [vmem:[%s249 + $0x168] sm:$0xff] %v340
                %v342 = vld [vmem:[%s248 + $0x2d8] sm:$0xff]
                %343 = vst [vmem:[%s249 + $0x170] sm:$0xff] %v342
                %v344 = vld [vmem:[%s248 + $0x2e0] sm:$0xff]
                %345 = vst [vmem:[%s249 + $0x178] sm:$0xff] %v344
                %v346 = vld [vmem:[%s248 + $0x300] sm:$0xff]
                %347 = vst [vmem:[%s249 + $0x180] sm:$0xff] %v346
                %v348 = vld [vmem:[%s248 + $0x308] sm:$0xff]
                %349 = vst [vmem:[%s249 + $0x188] sm:$0xff] %v348
                %v350 = vld [vmem:[%s248 + $0x310] sm:$0xff]
                %351 = vst [vmem:[%s249 + $0x190] sm:$0xff] %v350
                %v352 = vld [vmem:[%s248 + $0x330] sm:$0xff]
                %353 = vst [vmem:[%s249 + $0x198] sm:$0xff] %v352
                %v354 = vld [vmem:[%s248 + $0x338] sm:$0xff]
                %355 = vst [vmem:[%s249 + $0x1a0] sm:$0xff] %v354
                %v356 = vld [vmem:[%s248 + $0x340] sm:$0xff]
                %357 = vst [vmem:[%s249 + $0x1a8] sm:$0xff] %v356
                %v358 = vld [vmem:[%s248 + $0x360] sm:$0xff]
                %359 = vst [vmem:[%s249 + $0x1b0] sm:$0xff] %v358
                %v360 = vld [vmem:[%s248 + $0x368] sm:$0xff]
                %361 = vst [vmem:[%s249 + $0x1b8] sm:$0xff] %v360
                %v362 = vld [vmem:[%s248 + $0x370] sm:$0xff]
                %363 = vst [vmem:[%s249 + $0x1c0] sm:$0xff] %v362
                %v364 = vld [vmem:[%s248 + $0x390] sm:$0xff]
                %365 = vst [vmem:[%s249 + $0x1c8] sm:$0xff] %v364
                %v366 = vld [vmem:[%s248 + $0x398] sm:$0xff]
                %367 = vst [vmem:[%s249 + $0x1d0] sm:$0xff] %v366
                %v368 = vld [vmem:[%s248 + $0x3a0] sm:$0xff]
                %369 = vst [vmem:[%s249 + $0x1d8] sm:$0xff] %v368
                %v370 = vld [vmem:[%s248 + $0x3c0] sm:$0xff]
                %371 = vst [vmem:[%s249 + $0x1e0] sm:$0xff] %v370
                %v372 = vld [vmem:[%s248 + $0x3c8] sm:$0xff]
                %373 = vst [vmem:[%s249 + $0x1e8] sm:$0xff] %v372
                %v374 = vld [vmem:[%s248 + $0x3d0] sm:$0xff]
                %375 = vst [vmem:[%s249 + $0x1f0] sm:$0xff] %v374
                %v376 = vld [vmem:[%s248 + $0x3f0] sm:$0xff]
                %377 = vst [vmem:[%s249 + $0x1f8] sm:$0xff] %v376
                %v378 = vld [vmem:[%s248 + $0x3f8] sm:$0xff]
                %379 = vst [vmem:[%s249 + $0x200] sm:$0xff] %v378
                %v380 = vld [vmem:[%s248 + $0x400] sm:$0xff]
                %381 = vst [vmem:[%s249 + $0x208] sm:$0xff] %v380
                %v382 = vld [vmem:[%s248 + $0x420] sm:$0xff]
                %383 = vst [vmem:[%s249 + $0x210] sm:$0xff] %v382
                %v384 = vld [vmem:[%s248 + $0x428] sm:$0xff]
                %385 = vst [vmem:[%s249 + $0x218] sm:$0xff] %v384
                %v386 = vld [vmem:[%s248 + $0x430] sm:$0xff]
                %387 = vst [vmem:[%s249 + $0x220] sm:$0xff] %v386
                %v388 = vld [vmem:[%s248 + $0x450] sm:$0xff]
                %389 = vst [vmem:[%s249 + $0x228] sm:$0xff] %v388
                %v390 = vld [vmem:[%s248 + $0x458] sm:$0xff]
                %391 = vst [vmem:[%s249 + $0x230] sm:$0xff] %v390
                %v392 = vld [vmem:[%s248 + $0x460] sm:$0xff]
                %393 = vst [vmem:[%s249 + $0x238] sm:$0xff] %v392
                %v394 = vld [vmem:[%s248 + $0x480] sm:$0xff]
                %395 = vst [vmem:[%s249 + $0x240] sm:$0xff] %v394
                %v396 = vld [vmem:[%s248 + $0x488] sm:$0xff]
                %397 = vst [vmem:[%s249 + $0x248] sm:$0xff] %v396
                %v398 = vld [vmem:[%s248 + $0x490] sm:$0xff]
                %399 = vst [vmem:[%s249 + $0x250] sm:$0xff] %v398
                %v400 = vld [vmem:[%s248 + $0x4b0] sm:$0xff]
                %401 = vst [vmem:[%s249 + $0x258] sm:$0xff] %v400
                %v402 = vld [vmem:[%s248 + $0x4b8] sm:$0xff]
                %403 = vst [vmem:[%s249 + $0x260] sm:$0xff] %v402
                %v404 = vld [vmem:[%s248 + $0x4c0] sm:$0xff]
                %405 = vst [vmem:[%s249 + $0x268] sm:$0xff] %v404
                %v406 = vld [vmem:[%s248 + $0x4e0] sm:$0xff]
                %407 = vst [vmem:[%s249 + $0x270] sm:$0xff] %v406
                %v408 = vld [vmem:[%s248 + $0x4e8] sm:$0xff]
                %409 = vst [vmem:[%s249 + $0x278] sm:$0xff] %v408
                %v410 = vld [vmem:[%s248 + $0x4f0] sm:$0xff]
                %411 = vst [vmem:[%s249 + $0x280] sm:$0xff] %v410
                %v412 = vld [vmem:[%s248 + $0x510] sm:$0xff]
                %413 = vst [vmem:[%s249 + $0x288] sm:$0xff] %v412
                %v414 = vld [vmem:[%s248 + $0x518] sm:$0xff]
                %415 = vst [vmem:[%s249 + $0x290] sm:$0xff] %v414
                %v416 = vld [vmem:[%s248 + $0x520] sm:$0xff]
                %417 = vst [vmem:[%s249 + $0x298] sm:$0xff] %v416
                %v418 = vld [vmem:[%s248 + $0x540] sm:$0xff]
                %419 = vst [vmem:[%s249 + $0x2a0] sm:$0xff] %v418
                %v420 = vld [vmem:[%s248 + $0x548] sm:$0xff]
                %421 = vst [vmem:[%s249 + $0x2a8] sm:$0xff] %v420
                %v422 = vld [vmem:[%s248 + $0x550] sm:$0xff]
                %423 = vst [vmem:[%s249 + $0x2b0] sm:$0xff] %v422
                %v424 = vld [vmem:[%s248 + $0x570] sm:$0xff]
                %425 = vst [vmem:[%s249 + $0x2b8] sm:$0xff] %v424
                %v426 = vld [vmem:[%s248 + $0x578] sm:$0xff]
                %427 = vst [vmem:[%s249 + $0x2c0] sm:$0xff] %v426
                %v428 = vld [vmem:[%s248 + $0x580] sm:$0xff]
                %429 = vst [vmem:[%s249 + $0x2c8] sm:$0xff] %v428
                %v430 = vld [vmem:[%s248 + $0x5a0] sm:$0xff]
                %431 = vst [vmem:[%s249 + $0x2d0] sm:$0xff] %v430
                %v432 = vld [vmem:[%s248 + $0x5a8] sm:$0xff]
                %433 = vst [vmem:[%s249 + $0x2d8] sm:$0xff] %v432
                %v434 = vld [vmem:[%s248 + $0x5b0] sm:$0xff]
                %435 = vst [vmem:[%s249 + $0x2e0] sm:$0xff] %v434
                %v436 = vld [vmem:[%s248 + $0x5d0] sm:$0xff]
                %437 = vst [vmem:[%s249 + $0x2e8] sm:$0xff] %v436
                %v438 = vld [vmem:[%s248 + $0x5d8] sm:$0xff]
                %439 = vst [vmem:[%s249 + $0x2f0] sm:$0xff] %v438
                %v440 = vld [vmem:[%s248 + $0x5e0] sm:$0xff]
                %441 = vst [vmem:[%s249 + $0x2f8] sm:$0xff] %v440
              $region57: #{cnn_forward.1} parent=51 // loop_footer
                %s247 = sadd.s32 1, %s243
              $region58: #{cnn_forward.1} parent=51 // loop_footer_branch
                %242 = sbr.rel target = $region54
              $region59: #{cnn_forward.1} parent=51 // loop_exit
                _
            $region52: #{cnn_forward.1} parent=47 // pred_fallthru
              _
            // Predicated region
            $region60: #{cnn_forward.1} parent=47 // pred_check
              _
            $region61: #{cnn_forward.1} parent=47 // pred_check_branch
              %443 = sbr.rel target = $region63
            $region62: #{cnn_forward.1} parent=47 // pred_region
              _
            $region63: #{cnn_forward.1} parent=47 // pred_fallthru
              _
          $region48: #{cnn_forward.1} parent=43 // pred_fallthru
            _
          %444 = vnop
        $region44: #{cnn_forward.1} parent=39 // pred_fallthru
          _
      $region40: #{cnn_forward.1} parent=5 // pred_fallthru
        _
      %p445 = scmp.le.s32.totalorder 1, %s13
      %p446 = scmp.lt.s32.totalorder %s13, 3
      %p447 = pnand %p445, %p446
      %p448 = pneg %p447
      // Predicated region
      $region64: #{cnn_forward.1} parent=5 // pred_check
        _
      $region65: #{cnn_forward.1} parent=5 // pred_check_branch
        %450 = sbr.rel (%p447) target = $region67
      $region66: #{cnn_forward.1} parent=5 // pred_region
        %s451 = ssub.s32 %s13, 1
        %s452 = sand.u32 %s26, 1
        %s453 = sand.u32 %s26, 1
        %s454 = smul.addr %s453, 768
        %s455 = scalar_lea.vmem [#allocation4], %s454
        // Predicated region
        $region68: #{cnn_forward.1} parent=66 // pred_check
          %p456 = pneg %p39
        $region69: #{cnn_forward.1} parent=66 // pred_check_branch
          %458 = sbr.rel (%p456) target = $region71
        $region70: #{cnn_forward.1} parent=66 // pred_region
          _
        $region71: #{cnn_forward.1} parent=66 // pred_fallthru
          _
        %s459 = sand.u32 %s26, 1
        %s460 = sand.u32 %s26, 1
        %s461 = smul.addr %s460, 768
        %s462 = scalar_lea.vmem [#allocation4], %s461
        %p463 = pneg %p39
        %p464 = pneg %p36
        %p465 = pneg %p60
        %p466 = pneg %p57
        %p467 = pneg %p81
        %p468 = pneg %p78
        %p469 = pneg %p102
        %p470 = pneg %p99
        %p471 = pneg %p123
        %p472 = pneg %p120
        %p473 = pneg %p144
        %p474 = pneg %p141
        %p475 = pneg %p165
        %p476 = pneg %p162
        %p477 = pneg %p191
        %p478 = pneg %p188
        %p479 = scmp.lt.s32.totalorder %s18, 1
        %s480 = scalar_select %p479, %s18, 1
        %s481 = smul.addr %s480, 8
        %s482 = scalar_lea.vmem %s7, %s481
        %p483 = scmp.lt.s32.totalorder %s18, 1
        %s484 = scalar_select %p483, %s18, 1
        %s485 = smul.addr %s484, 8
        %s486 = scalar_lea.vmem %s7, %s485
        %v487 = vld [vmem:[%s455] sm:$0xff]
        %v488 = vld [vmem:[%s455 + $0x8] sm:$0xff]
        %v489 = vld [vmem:[%s455 + $0x10] sm:$0xff]
        %v490 = vld [vmem:[%s455 + $0x18] sm:$0xff]
        %v491 = vld [vmem:[%s455 + $0x20] sm:$0xff]
        %v492 = vld [vmem:[%s455 + $0x28] sm:$0xff]
        %v493 = vld [vmem:[%s455 + $0x30] sm:$0xff]
        %v494 = vld [vmem:[%s455 + $0x38] sm:$0xff]
        %v495 = vld [vmem:[%s455 + $0x40] sm:$0xff]
        %v496 = vld [vmem:[%s455 + $0x48] sm:$0xff]
        %v497 = vld [vmem:[%s455 + $0x50] sm:$0xff]
        %v498 = vld [vmem:[%s455 + $0x58] sm:$0xff]
        %v499 = vld [vmem:[%s455 + $0x60] sm:$0xff]
        %v500 = vld [vmem:[%s455 + $0x68] sm:$0xff]
        %v501 = vld [vmem:[%s455 + $0x70] sm:$0xff]
        %v502 = vld [vmem:[%s455 + $0x78] sm:$0xff]
        %v503 = vld [vmem:[%s455 + $0x80] sm:$0xff]
        %v504 = vld [vmem:[%s455 + $0x88] sm:$0xff]
        %v505 = vld [vmem:[%s455 + $0x90] sm:$0xff]
        %v506 = vld [vmem:[%s455 + $0x98] sm:$0xff]
        %v507 = vld [vmem:[%s455 + $0xa0] sm:$0xff]
        %v508 = vld [vmem:[%s455 + $0xa8] sm:$0xff]
        %v509 = vld [vmem:[%s455 + $0xb0] sm:$0xff]
        %v510 = vld [vmem:[%s455 + $0xb8] sm:$0xff]
        %v511 = vld [vmem:[%s455 + $0xc0] sm:$0xff]
        %v512 = vld [vmem:[%s455 + $0xc8] sm:$0xff]
        %v513 = vld [vmem:[%s455 + $0xd0] sm:$0xff]
        %v514 = vld [vmem:[%s455 + $0xd8] sm:$0xff]
        %v515 = vld [vmem:[%s455 + $0xe0] sm:$0xff]
        %v516 = vld [vmem:[%s455 + $0xe8] sm:$0xff]
        %v517 = vld [vmem:[%s455 + $0xf0] sm:$0xff]
        %v518 = vld [vmem:[%s455 + $0xf8] sm:$0xff]
        %v519 = vld [vmem:[%s455 + $0x100] sm:$0xff]
        %v520 = vld [vmem:[%s455 + $0x108] sm:$0xff]
        %v521 = vld [vmem:[%s455 + $0x110] sm:$0xff]
        %v522 = vld [vmem:[%s455 + $0x118] sm:$0xff]
        %v523 = vld [vmem:[%s455 + $0x120] sm:$0xff]
        %v524 = vld [vmem:[%s455 + $0x128] sm:$0xff]
        %v525 = vld [vmem:[%s455 + $0x130] sm:$0xff]
        %v526 = vld [vmem:[%s455 + $0x138] sm:$0xff]
        %v527 = vld [vmem:[%s455 + $0x140] sm:$0xff]
        %v528 = vld [vmem:[%s455 + $0x148] sm:$0xff]
        %v529 = vld [vmem:[%s455 + $0x150] sm:$0xff]
        %v530 = vld [vmem:[%s455 + $0x158] sm:$0xff]
        %v531 = vld [vmem:[%s455 + $0x160] sm:$0xff]
        %v532 = vld [vmem:[%s455 + $0x168] sm:$0xff]
        %v533 = vld [vmem:[%s455 + $0x170] sm:$0xff]
        %v534 = vld [vmem:[%s455 + $0x178] sm:$0xff]
        %v535 = vld [vmem:[%s455 + $0x180] sm:$0xff]
        %v536 = vld [vmem:[%s455 + $0x188] sm:$0xff]
        %v537 = vld [vmem:[%s455 + $0x190] sm:$0xff]
        %v538 = vld [vmem:[%s455 + $0x198] sm:$0xff]
        %v539 = vld [vmem:[%s455 + $0x1a0] sm:$0xff]
        %v540 = vld [vmem:[%s455 + $0x1a8] sm:$0xff]
        %v541 = vld [vmem:[%s455 + $0x1b0] sm:$0xff]
        %v542 = vld [vmem:[%s455 + $0x1b8] sm:$0xff]
        %v543 = vld [vmem:[%s455 + $0x1c0] sm:$0xff]
        %v544 = vld [vmem:[%s455 + $0x1c8] sm:$0xff]
        %v545 = vld [vmem:[%s455 + $0x1d0] sm:$0xff]
        %v546 = vld [vmem:[%s455 + $0x1d8] sm:$0xff]
        %v547 = vld [vmem:[%s455 + $0x1e0] sm:$0xff]
        %v548 = vld [vmem:[%s455 + $0x1e8] sm:$0xff]
        %v549 = vld [vmem:[%s455 + $0x1f0] sm:$0xff]
        %v550 = vld [vmem:[%s455 + $0x1f8] sm:$0xff]
        %v551 = vld [vmem:[%s455 + $0x200] sm:$0xff]
        %v552 = vld [vmem:[%s455 + $0x208] sm:$0xff]
        %v553 = vld [vmem:[%s455 + $0x210] sm:$0xff]
        %v554 = vld [vmem:[%s455 + $0x218] sm:$0xff]
        %v555 = vld [vmem:[%s455 + $0x220] sm:$0xff]
        %v556 = vld [vmem:[%s455 + $0x228] sm:$0xff]
        %v557 = vld [vmem:[%s455 + $0x230] sm:$0xff]
        %v558 = vld [vmem:[%s455 + $0x238] sm:$0xff]
        %v559 = vld [vmem:[%s455 + $0x240] sm:$0xff]
        %v560 = vld [vmem:[%s455 + $0x248] sm:$0xff]
        %v561 = vld [vmem:[%s455 + $0x250] sm:$0xff]
        %v562 = vld [vmem:[%s455 + $0x258] sm:$0xff]
        %v563 = vld [vmem:[%s455 + $0x260] sm:$0xff]
        %v564 = vld [vmem:[%s455 + $0x268] sm:$0xff]
        %v565 = vld [vmem:[%s455 + $0x270] sm:$0xff]
        %v566 = vld [vmem:[%s455 + $0x278] sm:$0xff]
        %v567 = vld [vmem:[%s455 + $0x280] sm:$0xff]
        %v568 = vld [vmem:[%s455 + $0x288] sm:$0xff]
        %v569 = vld [vmem:[%s455 + $0x290] sm:$0xff]
        %v570 = vld [vmem:[%s455 + $0x298] sm:$0xff]
        %v571 = vld [vmem:[%s455 + $0x2a0] sm:$0xff]
        %v572 = vld [vmem:[%s455 + $0x2a8] sm:$0xff]
        %v573 = vld [vmem:[%s455 + $0x2b0] sm:$0xff]
        %v574 = vld [vmem:[%s455 + $0x2b8] sm:$0xff]
        %v575 = vld [vmem:[%s455 + $0x2c0] sm:$0xff]
        %v576 = vld [vmem:[%s455 + $0x2c8] sm:$0xff]
        %v577 = vld [vmem:[%s455 + $0x2d0] sm:$0xff]
        %v578 = vld [vmem:[%s455 + $0x2d8] sm:$0xff]
        %v579 = vld [vmem:[%s455 + $0x2e0] sm:$0xff]
        %v580 = vld [vmem:[%s455 + $0x2e8] sm:$0xff]
        %v581 = vld [vmem:[%s455 + $0x2f0] sm:$0xff]
        %v582 = vld [vmem:[%s455 + $0x2f8] sm:$0xff]
        %v583 = vld [vmem:[%s1] sm:$0xff]
        %v584 = vld [vmem:[%s1 + $0x8] sm:$0xff]
        %v585 = vld [vmem:[%s1 + $0x10] sm:$0xff]
        %v586 = vld [vmem:[%s1 + $0x18] sm:$0xff]
        %v587 = vld [vmem:[%s1 + $0x20] sm:$0xff]
        %v588 = vld [vmem:[%s1 + $0x28] sm:$0xff]
        %v589 = vld [vmem:[%s1 + $0x30] sm:$0xff]
        %v590 = vld [vmem:[%s1 + $0x38] sm:$0xff]
        %v591 = vld [vmem:[%s1 + $0x40] sm:$0xff]
        %v592 = vld [vmem:[%s1 + $0x48] sm:$0xff]
        %v593 = vld [vmem:[%s1 + $0x50] sm:$0xff]
        %v594 = vld [vmem:[%s1 + $0x58] sm:$0xff]
        %v595 = vld [vmem:[%s1 + $0x60] sm:$0xff]
        %v596 = vld [vmem:[%s1 + $0x68] sm:$0xff]
        %v597 = vld [vmem:[%s1 + $0x70] sm:$0xff]
        %v598 = vld [vmem:[%s1 + $0x78] sm:$0xff]
        %v599 = vld [vmem:[%s1 + $0x80] sm:$0xff]
        %v600 = vld [vmem:[%s1 + $0x88] sm:$0xff]
        %v601 = vld [vmem:[%s1 + $0x90] sm:$0xff]
        %v602 = vld [vmem:[%s1 + $0x98] sm:$0xff]
        %v603 = vld [vmem:[%s1 + $0xa0] sm:$0xff]
        %v604 = vld [vmem:[%s1 + $0xa8] sm:$0xff]
        %v605 = vld [vmem:[%s1 + $0xb0] sm:$0xff]
        %v606 = vld [vmem:[%s1 + $0xb8] sm:$0xff]
        %v607 = vld [vmem:[%s1 + $0xc0] sm:$0xff]
        %v608 = vld [vmem:[%s1 + $0xc8] sm:$0xff]
        %v609 = vld [vmem:[%s1 + $0xd0] sm:$0xff]
        %v610 = vld [vmem:[%s1 + $0xd8] sm:$0xff]
        %v611 = vld [vmem:[%s1 + $0xe0] sm:$0xff]
        %v612 = vld [vmem:[%s1 + $0xe8] sm:$0xff]
        %v613 = vld [vmem:[%s1 + $0xf0] sm:$0xff]
        %v614 = vld [vmem:[%s1 + $0xf8] sm:$0xff]
        %v615 = vld [vmem:[%s1 + $0x100] sm:$0xff]
        %v616 = vld [vmem:[%s1 + $0x108] sm:$0xff]
        %v617 = vld [vmem:[%s1 + $0x110] sm:$0xff]
        %v618 = vld [vmem:[%s1 + $0x118] sm:$0xff]
        %v619 = vld [vmem:[%s1 + $0x120] sm:$0xff]
        %v620 = vld [vmem:[%s1 + $0x128] sm:$0xff]
        %v621 = vld [vmem:[%s1 + $0x130] sm:$0xff]
        %v622 = vld [vmem:[%s1 + $0x138] sm:$0xff]
        %v623 = vld [vmem:[%s1 + $0x140] sm:$0xff]
        %v624 = vld [vmem:[%s1 + $0x148] sm:$0xff]
        %v625 = vld [vmem:[%s1 + $0x150] sm:$0xff]
        %v626 = vld [vmem:[%s1 + $0x158] sm:$0xff]
        %v627 = vld [vmem:[%s1 + $0x160] sm:$0xff]
        %v628 = vld [vmem:[%s1 + $0x168] sm:$0xff]
        %v629 = vld [vmem:[%s1 + $0x170] sm:$0xff]
        %v630 = vld [vmem:[%s1 + $0x178] sm:$0xff]
        %v631 = vld [vmem:[%s1 + $0x180] sm:$0xff]
        %v632 = vld [vmem:[%s1 + $0x188] sm:$0xff]
        %v633 = vld [vmem:[%s1 + $0x190] sm:$0xff]
        %v634 = vld [vmem:[%s1 + $0x198] sm:$0xff]
        %v635 = vld [vmem:[%s1 + $0x1a0] sm:$0xff]
        %v636 = vld [vmem:[%s1 + $0x1a8] sm:$0xff]
        %v637 = vld [vmem:[%s1 + $0x1b0] sm:$0xff]
        %v638 = vld [vmem:[%s1 + $0x1b8] sm:$0xff]
        %v639 = vld [vmem:[%s1 + $0x1c0] sm:$0xff]
        %v640 = vld [vmem:[%s1 + $0x1c8] sm:$0xff]
        %v641 = vld [vmem:[%s1 + $0x1d0] sm:$0xff]
        %v642 = vld [vmem:[%s1 + $0x1d8] sm:$0xff]
        %v643 = vld [vmem:[%s1 + $0x1e0] sm:$0xff]
        %v644 = vld [vmem:[%s1 + $0x1e8] sm:$0xff]
        %v645 = vld [vmem:[%s1 + $0x1f0] sm:$0xff]
        %v646 = vld [vmem:[%s1 + $0x1f8] sm:$0xff]
        %v647 = vld [vmem:[%s1 + $0x200] sm:$0xff]
        %v648 = vld [vmem:[%s1 + $0x208] sm:$0xff]
        %v649 = vld [vmem:[%s1 + $0x210] sm:$0xff]
        %v650 = vld [vmem:[%s1 + $0x218] sm:$0xff]
        %v651 = vld [vmem:[%s1 + $0x220] sm:$0xff]
        %v652 = vld [vmem:[%s1 + $0x228] sm:$0xff]
        %v653 = vld [vmem:[%s1 + $0x230] sm:$0xff]
        %v654 = vld [vmem:[%s1 + $0x238] sm:$0xff]
        %v655 = vld [vmem:[%s1 + $0x240] sm:$0xff]
        %v656 = vld [vmem:[%s1 + $0x248] sm:$0xff]
        %v657 = vld [vmem:[%s1 + $0x250] sm:$0xff]
        %v658 = vld [vmem:[%s1 + $0x258] sm:$0xff]
        %v659 = vld [vmem:[%s1 + $0x260] sm:$0xff]
        %v660 = vld [vmem:[%s1 + $0x268] sm:$0xff]
        %v661 = vld [vmem:[%s1 + $0x270] sm:$0xff]
        %v662 = vld [vmem:[%s1 + $0x278] sm:$0xff]
        %v663 = vld [vmem:[%s1 + $0x280] sm:$0xff]
        %v664 = vld [vmem:[%s1 + $0x288] sm:$0xff]
        %v665 = vld [vmem:[%s1 + $0x290] sm:$0xff]
        %v666 = vld [vmem:[%s1 + $0x298] sm:$0xff]
        %v667 = vld [vmem:[%s1 + $0x2a0] sm:$0xff]
        %v668 = vld [vmem:[%s1 + $0x2a8] sm:$0xff]
        %v669 = vld [vmem:[%s1 + $0x2b0] sm:$0xff]
        %v670 = vld [vmem:[%s1 + $0x2b8] sm:$0xff]
        %v671 = vld [vmem:[%s1 + $0x2c0] sm:$0xff]
        %v672 = vld [vmem:[%s1 + $0x2c8] sm:$0xff]
        %v673 = vld [vmem:[%s1 + $0x2d0] sm:$0xff]
        %v674 = vld [vmem:[%s1 + $0x2d8] sm:$0xff]
        %v675 = vld [vmem:[%s1 + $0x2e0] sm:$0xff]
        %v676 = vld [vmem:[%s1 + $0x2e8] sm:$0xff]
        %v677 = vld [vmem:[%s1 + $0x2f0] sm:$0xff]
        %v678 = vld [vmem:[%s1 + $0x2f8] sm:$0xff]
        %v679 = vld [vmem:[%s1 + $0x300] sm:$0xff]
        %v680 = vld [vmem:[%s1 + $0x308] sm:$0xff]
        %v681 = vld [vmem:[%s1 + $0x310] sm:$0xff]
        %v682 = vld [vmem:[%s1 + $0x318] sm:$0xff]
        %v683 = vld [vmem:[%s1 + $0x320] sm:$0xff]
        %v684 = vld [vmem:[%s1 + $0x328] sm:$0xff]
        %v685 = vld [vmem:[%s1 + $0x330] sm:$0xff]
        %v686 = vld [vmem:[%s1 + $0x338] sm:$0xff]
        %v687 = vld [vmem:[%s1 + $0x340] sm:$0xff]
        %v688 = vld [vmem:[%s1 + $0x348] sm:$0xff]
        %v689 = vld [vmem:[%s1 + $0x350] sm:$0xff]
        %v690 = vld [vmem:[%s1 + $0x358] sm:$0xff]
        %v691 = vld [vmem:[%s1 + $0x360] sm:$0xff]
        %v692 = vld [vmem:[%s1 + $0x368] sm:$0xff]
        %v693 = vld [vmem:[%s1 + $0x370] sm:$0xff]
        %v694 = vld [vmem:[%s1 + $0x378] sm:$0xff]
        %v695 = vld [vmem:[%s1 + $0x380] sm:$0xff]
        %v696 = vld [vmem:[%s1 + $0x388] sm:$0xff]
        %v697 = vld [vmem:[%s1 + $0x390] sm:$0xff]
        %v698 = vld [vmem:[%s1 + $0x398] sm:$0xff]
        %v699 = vld [vmem:[%s1 + $0x3a0] sm:$0xff]
        %v700 = vld [vmem:[%s1 + $0x3a8] sm:$0xff]
        %v701 = vld [vmem:[%s1 + $0x3b0] sm:$0xff]
        %v702 = vld [vmem:[%s1 + $0x3b8] sm:$0xff]
        %v703 = vld [vmem:[%s1 + $0x3c0] sm:$0xff]
        %v704 = vld [vmem:[%s1 + $0x3c8] sm:$0xff]
        %v705 = vld [vmem:[%s1 + $0x3d0] sm:$0xff]
        %v706 = vld [vmem:[%s1 + $0x3d8] sm:$0xff]
        %v707 = vld [vmem:[%s1 + $0x3e0] sm:$0xff]
        %v708 = vld [vmem:[%s1 + $0x3e8] sm:$0xff]
        %v709 = vld [vmem:[%s1 + $0x3f0] sm:$0xff]
        %v710 = vld [vmem:[%s1 + $0x3f8] sm:$0xff]
        %v711 = vld [vmem:[%s1 + $0x400] sm:$0xff]
        %v712 = vld [vmem:[%s1 + $0x408] sm:$0xff]
        %v713 = vld [vmem:[%s1 + $0x410] sm:$0xff]
        %v714 = vld [vmem:[%s1 + $0x418] sm:$0xff]
        %v715 = vld [vmem:[%s1 + $0x420] sm:$0xff]
        %v716 = vld [vmem:[%s1 + $0x428] sm:$0xff]
        %v717 = vld [vmem:[%s1 + $0x430] sm:$0xff]
        %v718 = vld [vmem:[%s1 + $0x438] sm:$0xff]
        %v719 = vld [vmem:[%s1 + $0x440] sm:$0xff]
        %v720 = vld [vmem:[%s1 + $0x448] sm:$0xff]
        %v721 = vld [vmem:[%s1 + $0x450] sm:$0xff]
        %v722 = vld [vmem:[%s1 + $0x458] sm:$0xff]
        %v723 = vld [vmem:[%s1 + $0x460] sm:$0xff]
        %v724 = vld [vmem:[%s1 + $0x468] sm:$0xff]
        %v725 = vld [vmem:[%s1 + $0x470] sm:$0xff]
        %v726 = vld [vmem:[%s1 + $0x478] sm:$0xff]
        %v727 = vld [vmem:[%s1 + $0x480] sm:$0xff]
        %v728 = vld [vmem:[%s1 + $0x488] sm:$0xff]
        %v729 = vld [vmem:[%s1 + $0x490] sm:$0xff]
        %v730 = vld [vmem:[%s1 + $0x498] sm:$0xff]
        %v731 = vld [vmem:[%s1 + $0x4a0] sm:$0xff]
        %v732 = vld [vmem:[%s1 + $0x4a8] sm:$0xff]
        %v733 = vld [vmem:[%s1 + $0x4b0] sm:$0xff]
        %v734 = vld [vmem:[%s1 + $0x4b8] sm:$0xff]
        %v735 = vld [vmem:[%s1 + $0x4c0] sm:$0xff]
        %v736 = vld [vmem:[%s1 + $0x4c8] sm:$0xff]
        %v737 = vld [vmem:[%s1 + $0x4d0] sm:$0xff]
        %v738 = vld [vmem:[%s1 + $0x4d8] sm:$0xff]
        %v739 = vld [vmem:[%s1 + $0x4e0] sm:$0xff]
        %v740 = vld [vmem:[%s1 + $0x4e8] sm:$0xff]
        %v741 = vld [vmem:[%s1 + $0x4f0] sm:$0xff]
        %v742 = vld [vmem:[%s1 + $0x4f8] sm:$0xff]
        %v743 = vld [vmem:[%s1 + $0x500] sm:$0xff]
        %v744 = vld [vmem:[%s1 + $0x508] sm:$0xff]
        %v745 = vld [vmem:[%s1 + $0x510] sm:$0xff]
        %v746 = vld [vmem:[%s1 + $0x518] sm:$0xff]
        %v747 = vld [vmem:[%s1 + $0x520] sm:$0xff]
        %v748 = vld [vmem:[%s1 + $0x528] sm:$0xff]
        %v749 = vld [vmem:[%s1 + $0x530] sm:$0xff]
        %v750 = vld [vmem:[%s1 + $0x538] sm:$0xff]
        %v751 = vld [vmem:[%s1 + $0x540] sm:$0xff]
        %v752 = vld [vmem:[%s1 + $0x548] sm:$0xff]
        %v753 = vld [vmem:[%s1 + $0x550] sm:$0xff]
        %v754 = vld [vmem:[%s1 + $0x558] sm:$0xff]
        %v755 = vld [vmem:[%s1 + $0x560] sm:$0xff]
        %v756 = vld [vmem:[%s1 + $0x568] sm:$0xff]
        %v757 = vld [vmem:[%s1 + $0x570] sm:$0xff]
        %v758 = vld [vmem:[%s1 + $0x578] sm:$0xff]
        %v759 = vld [vmem:[%s1 + $0x580] sm:$0xff]
        %v760 = vld [vmem:[%s1 + $0x588] sm:$0xff]
        %v761 = vld [vmem:[%s1 + $0x590] sm:$0xff]
        %v762 = vld [vmem:[%s1 + $0x598] sm:$0xff]
        %v763 = vld [vmem:[%s1 + $0x5a0] sm:$0xff]
        %v764 = vld [vmem:[%s1 + $0x5a8] sm:$0xff]
        %v765 = vld [vmem:[%s1 + $0x5b0] sm:$0xff]
        %v766 = vld [vmem:[%s1 + $0x5b8] sm:$0xff]
        %v767 = vld [vmem:[%s1 + $0x5c0] sm:$0xff]
        %v768 = vld [vmem:[%s1 + $0x5c8] sm:$0xff]
        %v769 = vld [vmem:[%s1 + $0x5d0] sm:$0xff]
        %v770 = vld [vmem:[%s1 + $0x5d8] sm:$0xff]
        %v771 = vld [vmem:[%s1 + $0x5e0] sm:$0xff]
        %v772 = vld [vmem:[%s1 + $0x5e8] sm:$0xff]
        %v773 = vld [vmem:[%s1 + $0x5f0] sm:$0x3]
        %v774 = vld [vmem:[%s1 + $0x5f8] sm:$0x3]
        %v775 = vld [vmem:[%s1 + $0x600] sm:$0x3]
        %v776 = vld [vmem:[%s1 + $0x608] sm:$0x3]
        %v777 = vld [vmem:[%s1 + $0x610] sm:$0x3]
        %vm778 = vcmask 408576
        %v780 = vsel %vm778, %v489, 0
        %v783 = vsel %vm778, %v492, 0
        %v786 = vsel %vm778, %v495, 0
        %v789 = vsel %vm778, %v498, 0
        %v792 = vsel %vm778, %v501, 0
        %v795 = vsel %vm778, %v504, 0
        %v798 = vsel %vm778, %v507, 0
        %v801 = vsel %vm778, %v510, 0
        %v804 = vsel %vm778, %v513, 0
        %v807 = vsel %vm778, %v516, 0
        %v810 = vsel %vm778, %v519, 0
        %v813 = vsel %vm778, %v522, 0
        %v816 = vsel %vm778, %v525, 0
        %v819 = vsel %vm778, %v528, 0
        %v822 = vsel %vm778, %v531, 0
        %v825 = vsel %vm778, %v534, 0
        %v828 = vsel %vm778, %v537, 0
        %v831 = vsel %vm778, %v540, 0
        %v834 = vsel %vm778, %v543, 0
        %v837 = vsel %vm778, %v546, 0
        %v840 = vsel %vm778, %v549, 0
        %v843 = vsel %vm778, %v552, 0
        %v846 = vsel %vm778, %v555, 0
        %v849 = vsel %vm778, %v558, 0
        %v852 = vsel %vm778, %v561, 0
        %v855 = vsel %vm778, %v564, 0
        %v858 = vsel %vm778, %v567, 0
        %v861 = vsel %vm778, %v570, 0
        %v864 = vsel %vm778, %v573, 0
        %v867 = vsel %vm778, %v576, 0
        %v870 = vsel %vm778, %v579, 0
        %v873 = vsel %vm778, %v582, 0
        %vm875 = vcmask 1041408
        %v877 = vsel %vm875, %v773, 0
        %v880 = vsel %vm875, %v774, 0
        %v883 = vsel %vm875, %v775, 0
        %v886 = vsel %vm875, %v776, 0
        %v889 = vsel %vm875, %v777, 0
        %891 = vmatpush.msra.mxu0 %v658
        %892 = vmatpush.msra.mxu0 %v653
        %893 = vmatpush.msra.mxu0 %v648
        %894 = vmatpush.msra.mxu0 %v643
        %895 = vmatpush.msra.mxu0 %v638
        %896 = vmatpush.msra.mxu0 %v633
        %897 = vmatpush.msra.mxu0 %v628
        %898 = vmatpush.msra.mxu0 %v623
        %899 = vmatpush.msra.mxu0 %v618
        %900 = vmatpush.msra.mxu0 %v613
        %901 = vmatpush.msra.mxu0 %v608
        %902 = vmatpush.msra.mxu0 %v603
        %903 = vmatpush.msra.mxu0 %v598
        %904 = vmatpush.msra.mxu0 %v593
        %905 = vmatpush.msra.mxu0 %v588
        %906 = vmatpush.msra.mxu0 %v583
        %907 = vmatmul.f32.gmra.mxu0 %v487
        %v908 = vpop.f32.mrf.mxu0
        %v909 = vadd.f32 0.0, %v908
        %910 = vmatmul.f32.gmra.mxu0 %v490
        %v911 = vpop.f32.mrf.mxu0
        %v912 = vadd.f32 0.0, %v911
        %913 = vmatmul.f32.gmra.mxu0 %v493
        %v914 = vpop.f32.mrf.mxu0
        %v915 = vadd.f32 0.0, %v914
        %916 = vmatmul.f32.gmra.mxu0 %v496
        %v917 = vpop.f32.mrf.mxu0
        %v918 = vadd.f32 0.0, %v917
        %919 = vmatmul.f32.gmra.mxu0 %v499
        %v920 = vpop.f32.mrf.mxu0
        %v921 = vadd.f32 0.0, %v920
        %922 = vmatmul.f32.gmra.mxu0 %v502
        %v923 = vpop.f32.mrf.mxu0
        %v924 = vadd.f32 0.0, %v923
        %925 = vmatmul.f32.gmra.mxu0 %v505
        %v926 = vpop.f32.mrf.mxu0
        %v927 = vadd.f32 0.0, %v926
        %928 = vmatmul.f32.gmra.mxu0 %v508
        %v929 = vpop.f32.mrf.mxu0
        %v930 = vadd.f32 0.0, %v929
        %931 = vmatmul.f32.gmra.mxu0 %v511
        %v932 = vpop.f32.mrf.mxu0
        %v933 = vadd.f32 0.0, %v932
        %934 = vmatmul.f32.gmra.mxu0 %v514
        %v935 = vpop.f32.mrf.mxu0
        %v936 = vadd.f32 0.0, %v935
        %937 = vmatmul.f32.gmra.mxu0 %v517
        %v938 = vpop.f32.mrf.mxu0
        %v939 = vadd.f32 0.0, %v938
        %940 = vmatmul.f32.gmra.mxu0 %v520
        %v941 = vpop.f32.mrf.mxu0
        %v942 = vadd.f32 0.0, %v941
        %943 = vmatmul.f32.gmra.mxu0 %v523
        %v944 = vpop.f32.mrf.mxu0
        %v945 = vadd.f32 0.0, %v944
        %946 = vmatmul.f32.gmra.mxu0 %v526
        %v947 = vpop.f32.mrf.mxu0
        %v948 = vadd.f32 0.0, %v947
        %949 = vmatmul.f32.gmra.mxu0 %v529
        %v950 = vpop.f32.mrf.mxu0
        %v951 = vadd.f32 0.0, %v950
        %952 = vmatmul.f32.gmra.mxu0 %v532
        %v953 = vpop.f32.mrf.mxu0
        %v954 = vadd.f32 0.0, %v953
        %955 = vmatmul.f32.gmra.mxu0 %v535
        %v956 = vpop.f32.mrf.mxu0
        %v957 = vadd.f32 0.0, %v956
        %958 = vmatmul.f32.gmra.mxu0 %v538
        %v959 = vpop.f32.mrf.mxu0
        %v960 = vadd.f32 0.0, %v959
        %961 = vmatmul.f32.gmra.mxu0 %v541
        %v962 = vpop.f32.mrf.mxu0
        %v963 = vadd.f32 0.0, %v962
        %964 = vmatmul.f32.gmra.mxu0 %v544
        %v965 = vpop.f32.mrf.mxu0
        %v966 = vadd.f32 0.0, %v965
        %967 = vmatmul.f32.gmra.mxu0 %v547
        %v968 = vpop.f32.mrf.mxu0
        %v969 = vadd.f32 0.0, %v968
        %970 = vmatmul.f32.gmra.mxu0 %v550
        %v971 = vpop.f32.mrf.mxu0
        %v972 = vadd.f32 0.0, %v971
        %973 = vmatmul.f32.gmra.mxu0 %v553
        %v974 = vpop.f32.mrf.mxu0
        %v975 = vadd.f32 0.0, %v974
        %976 = vmatmul.f32.gmra.mxu0 %v556
        %v977 = vpop.f32.mrf.mxu0
        %v978 = vadd.f32 0.0, %v977
        %979 = vmatmul.f32.gmra.mxu0 %v559
        %v980 = vpop.f32.mrf.mxu0
        %v981 = vadd.f32 0.0, %v980
        %982 = vmatmul.f32.gmra.mxu0 %v562
        %v983 = vpop.f32.mrf.mxu0
        %v984 = vadd.f32 0.0, %v983
        %985 = vmatmul.f32.gmra.mxu0 %v565
        %v986 = vpop.f32.mrf.mxu0
        %v987 = vadd.f32 0.0, %v986
        %988 = vmatmul.f32.gmra.mxu0 %v568
        %v989 = vpop.f32.mrf.mxu0
        %v990 = vadd.f32 0.0, %v989
        %991 = vmatmul.f32.gmra.mxu0 %v571
        %v992 = vpop.f32.mrf.mxu0
        %v993 = vadd.f32 0.0, %v992
        %994 = vmatmul.f32.gmra.mxu0 %v574
        %v995 = vpop.f32.mrf.mxu0
        %v996 = vadd.f32 0.0, %v995
        %997 = vmatmul.f32.gmra.mxu0 %v577
        %v998 = vpop.f32.mrf.mxu0
        %v999 = vadd.f32 0.0, %v998
        %1000 = vmatmul.f32.gmra.mxu0 %v580
        %v1001 = vpop.f32.mrf.mxu0
        %v1002 = vadd.f32 0.0, %v1001
        %1003 = vdwg.mxu0
        %1004 = vmatpush.msra.mxu0 %v738
        %1005 = vmatpush.msra.mxu0 %v733
        %1006 = vmatpush.msra.mxu0 %v728
        %1007 = vmatpush.msra.mxu0 %v723
        %1008 = vmatpush.msra.mxu0 %v718
        %1009 = vmatpush.msra.mxu0 %v713
        %1010 = vmatpush.msra.mxu0 %v708
        %1011 = vmatpush.msra.mxu0 %v703
        %1012 = vmatpush.msra.mxu0 %v698
        %1013 = vmatpush.msra.mxu0 %v693
        %1014 = vmatpush.msra.mxu0 %v688
        %1015 = vmatpush.msra.mxu0 %v683
        %1016 = vmatpush.msra.mxu0 %v678
        %1017 = vmatpush.msra.mxu0 %v673
        %1018 = vmatpush.msra.mxu0 %v668
        %1019 = vmatpush.msra.mxu0 %v663
        %1020 = vmatmul.f32.gmra.mxu0 %v488
        %v1021 = vpop.f32.mrf.mxu0
        %v1022 = vadd.f32 %v909, %v1021
        %1023 = vmatmul.f32.gmra.mxu0 %v491
        %v1024 = vpop.f32.mrf.mxu0
        %v1025 = vadd.f32 %v912, %v1024
        %1026 = vmatmul.f32.gmra.mxu0 %v494
        %v1027 = vpop.f32.mrf.mxu0
        %v1028 = vadd.f32 %v915, %v1027
        %1029 = vmatmul.f32.gmra.mxu0 %v497
        %v1030 = vpop.f32.mrf.mxu0
        %v1031 = vadd.f32 %v918, %v1030
        %1032 = vmatmul.f32.gmra.mxu0 %v500
        %v1033 = vpop.f32.mrf.mxu0
        %v1034 = vadd.f32 %v921, %v1033
        %1035 = vmatmul.f32.gmra.mxu0 %v503
        %v1036 = vpop.f32.mrf.mxu0
        %v1037 = vadd.f32 %v924, %v1036
        %1038 = vmatmul.f32.gmra.mxu0 %v506
        %v1039 = vpop.f32.mrf.mxu0
        %v1040 = vadd.f32 %v927, %v1039
        %1041 = vmatmul.f32.gmra.mxu0 %v509
        %v1042 = vpop.f32.mrf.mxu0
        %v1043 = vadd.f32 %v930, %v1042
        %1044 = vmatmul.f32.gmra.mxu0 %v512
        %v1045 = vpop.f32.mrf.mxu0
        %v1046 = vadd.f32 %v933, %v1045
        %1047 = vmatmul.f32.gmra.mxu0 %v515
        %v1048 = vpop.f32.mrf.mxu0
        %v1049 = vadd.f32 %v936, %v1048
        %1050 = vmatmul.f32.gmra.mxu0 %v518
        %v1051 = vpop.f32.mrf.mxu0
        %v1052 = vadd.f32 %v939, %v1051
        %1053 = vmatmul.f32.gmra.mxu0 %v521
        %v1054 = vpop.f32.mrf.mxu0
        %v1055 = vadd.f32 %v942, %v1054
        %1056 = vmatmul.f32.gmra.mxu0 %v524
        %v1057 = vpop.f32.mrf.mxu0
        %v1058 = vadd.f32 %v945, %v1057
        %1059 = vmatmul.f32.gmra.mxu0 %v527
        %v1060 = vpop.f32.mrf.mxu0
        %v1061 = vadd.f32 %v948, %v1060
        %1062 = vmatmul.f32.gmra.mxu0 %v530
        %v1063 = vpop.f32.mrf.mxu0
        %v1064 = vadd.f32 %v951, %v1063
        %1065 = vmatmul.f32.gmra.mxu0 %v533
        %v1066 = vpop.f32.mrf.mxu0
        %v1067 = vadd.f32 %v954, %v1066
        %1068 = vmatmul.f32.gmra.mxu0 %v536
        %v1069 = vpop.f32.mrf.mxu0
        %v1070 = vadd.f32 %v957, %v1069
        %1071 = vmatmul.f32.gmra.mxu0 %v539
        %v1072 = vpop.f32.mrf.mxu0
        %v1073 = vadd.f32 %v960, %v1072
        %1074 = vmatmul.f32.gmra.mxu0 %v542
        %v1075 = vpop.f32.mrf.mxu0
        %v1076 = vadd.f32 %v963, %v1075
        %1077 = vmatmul.f32.gmra.mxu0 %v545
        %v1078 = vpop.f32.mrf.mxu0
        %v1079 = vadd.f32 %v966, %v1078
        %1080 = vmatmul.f32.gmra.mxu0 %v548
        %v1081 = vpop.f32.mrf.mxu0
        %v1082 = vadd.f32 %v969, %v1081
        %1083 = vmatmul.f32.gmra.mxu0 %v551
        %v1084 = vpop.f32.mrf.mxu0
        %v1085 = vadd.f32 %v972, %v1084
        %1086 = vmatmul.f32.gmra.mxu0 %v554
        %v1087 = vpop.f32.mrf.mxu0
        %v1088 = vadd.f32 %v975, %v1087
        %1089 = vmatmul.f32.gmra.mxu0 %v557
        %v1090 = vpop.f32.mrf.mxu0
        %v1091 = vadd.f32 %v978, %v1090
        %1092 = vmatmul.f32.gmra.mxu0 %v560
        %v1093 = vpop.f32.mrf.mxu0
        %v1094 = vadd.f32 %v981, %v1093
        %1095 = vmatmul.f32.gmra.mxu0 %v563
        %v1096 = vpop.f32.mrf.mxu0
        %v1097 = vadd.f32 %v984, %v1096
        %1098 = vmatmul.f32.gmra.mxu0 %v566
        %v1099 = vpop.f32.mrf.mxu0
        %v1100 = vadd.f32 %v987, %v1099
        %1101 = vmatmul.f32.gmra.mxu0 %v569
        %v1102 = vpop.f32.mrf.mxu0
        %v1103 = vadd.f32 %v990, %v1102
        %1104 = vmatmul.f32.gmra.mxu0 %v572
        %v1105 = vpop.f32.mrf.mxu0
        %v1106 = vadd.f32 %v993, %v1105
        %1107 = vmatmul.f32.gmra.mxu0 %v575
        %v1108 = vpop.f32.mrf.mxu0
        %v1109 = vadd.f32 %v996, %v1108
        %1110 = vmatmul.f32.gmra.mxu0 %v578
        %v1111 = vpop.f32.mrf.mxu0
        %v1112 = vadd.f32 %v999, %v1111
        %1113 = vmatmul.f32.gmra.mxu0 %v581
        %v1114 = vpop.f32.mrf.mxu0
        %v1115 = vadd.f32 %v1002, %v1114
        %1116 = vdwg.mxu0
        %1117 = vmatpush.msra.mxu0 0.0
        %1118 = vmatpush.msra.mxu0 0.0
        %1119 = vmatpush.msra.mxu0 0.0
        %1120 = vmatpush.msra.mxu0 0.0
        %1121 = vmatpush.msra.mxu0 0.0
        %1122 = vmatpush.msra.mxu0 0.0
        %1123 = vmatpush.msra.mxu0 0.0
        %1124 = vmatpush.msra.mxu0 0.0
        %1125 = vmatpush.msra.mxu0 0.0
        %1126 = vmatpush.msra.mxu0 %v877
        %1127 = vmatpush.msra.mxu0 %v768
        %1128 = vmatpush.msra.mxu0 %v763
        %1129 = vmatpush.msra.mxu0 %v758
        %1130 = vmatpush.msra.mxu0 %v753
        %1131 = vmatpush.msra.mxu0 %v748
        %1132 = vmatpush.msra.mxu0 %v743
        %1133 = vmatmul.f32.gmra.mxu0 %v780
        %v1134 = vpop.f32.mrf.mxu0
        %v1135 = vadd.f32 %v1022, %v1134
        %1136 = vmatmul.f32.gmra.mxu0 %v783
        %v1137 = vpop.f32.mrf.mxu0
        %v1138 = vadd.f32 %v1025, %v1137
        %1139 = vmatmul.f32.gmra.mxu0 %v786
        %v1140 = vpop.f32.mrf.mxu0
        %v1141 = vadd.f32 %v1028, %v1140
        %1142 = vmatmul.f32.gmra.mxu0 %v789
        %v1143 = vpop.f32.mrf.mxu0
        %v1144 = vadd.f32 %v1031, %v1143
        %1145 = vmatmul.f32.gmra.mxu0 %v792
        %v1146 = vpop.f32.mrf.mxu0
        %v1147 = vadd.f32 %v1034, %v1146
        %1148 = vmatmul.f32.gmra.mxu0 %v795
        %v1149 = vpop.f32.mrf.mxu0
        %v1150 = vadd.f32 %v1037, %v1149
        %1151 = vmatmul.f32.gmra.mxu0 %v798
        %v1152 = vpop.f32.mrf.mxu0
        %v1153 = vadd.f32 %v1040, %v1152
        %1154 = vmatmul.f32.gmra.mxu0 %v801
        %v1155 = vpop.f32.mrf.mxu0
        %v1156 = vadd.f32 %v1043, %v1155
        %1157 = vmatmul.f32.gmra.mxu0 %v804
        %v1158 = vpop.f32.mrf.mxu0
        %v1159 = vadd.f32 %v1046, %v1158
        %1160 = vmatmul.f32.gmra.mxu0 %v807
        %v1161 = vpop.f32.mrf.mxu0
        %v1162 = vadd.f32 %v1049, %v1161
        %1163 = vmatmul.f32.gmra.mxu0 %v810
        %v1164 = vpop.f32.mrf.mxu0
        %v1165 = vadd.f32 %v1052, %v1164
        %1166 = vmatmul.f32.gmra.mxu0 %v813
        %v1167 = vpop.f32.mrf.mxu0
        %v1168 = vadd.f32 %v1055, %v1167
        %1169 = vmatmul.f32.gmra.mxu0 %v816
        %v1170 = vpop.f32.mrf.mxu0
        %v1171 = vadd.f32 %v1058, %v1170
        %1172 = vmatmul.f32.gmra.mxu0 %v819
        %v1173 = vpop.f32.mrf.mxu0
        %v1174 = vadd.f32 %v1061, %v1173
        %1175 = vmatmul.f32.gmra.mxu0 %v822
        %v1176 = vpop.f32.mrf.mxu0
        %v1177 = vadd.f32 %v1064, %v1176
        %1178 = vmatmul.f32.gmra.mxu0 %v825
        %v1179 = vpop.f32.mrf.mxu0
        %v1180 = vadd.f32 %v1067, %v1179
        %1181 = vmatmul.f32.gmra.mxu0 %v828
        %v1182 = vpop.f32.mrf.mxu0
        %v1183 = vadd.f32 %v1070, %v1182
        %1184 = vmatmul.f32.gmra.mxu0 %v831
        %v1185 = vpop.f32.mrf.mxu0
        %v1186 = vadd.f32 %v1073, %v1185
        %1187 = vmatmul.f32.gmra.mxu0 %v834
        %v1188 = vpop.f32.mrf.mxu0
        %v1189 = vadd.f32 %v1076, %v1188
        %1190 = vmatmul.f32.gmra.mxu0 %v837
        %v1191 = vpop.f32.mrf.mxu0
        %v1192 = vadd.f32 %v1079, %v1191
        %1193 = vmatmul.f32.gmra.mxu0 %v840
        %v1194 = vpop.f32.mrf.mxu0
        %v1195 = vadd.f32 %v1082, %v1194
        %1196 = vmatmul.f32.gmra.mxu0 %v843
        %v1197 = vpop.f32.mrf.mxu0
        %v1198 = vadd.f32 %v1085, %v1197
        %1199 = vmatmul.f32.gmra.mxu0 %v846
        %v1200 = vpop.f32.mrf.mxu0
        %v1201 = vadd.f32 %v1088, %v1200
        %1202 = vmatmul.f32.gmra.mxu0 %v849
        %v1203 = vpop.f32.mrf.mxu0
        %v1204 = vadd.f32 %v1091, %v1203
        %1205 = vmatmul.f32.gmra.mxu0 %v852
        %v1206 = vpop.f32.mrf.mxu0
        %v1207 = vadd.f32 %v1094, %v1206
        %1208 = vmatmul.f32.gmra.mxu0 %v855
        %v1209 = vpop.f32.mrf.mxu0
        %v1210 = vadd.f32 %v1097, %v1209
        %1211 = vmatmul.f32.gmra.mxu0 %v858
        %v1212 = vpop.f32.mrf.mxu0
        %v1213 = vadd.f32 %v1100, %v1212
        %1214 = vmatmul.f32.gmra.mxu0 %v861
        %v1215 = vpop.f32.mrf.mxu0
        %v1216 = vadd.f32 %v1103, %v1215
        %1217 = vmatmul.f32.gmra.mxu0 %v864
        %v1218 = vpop.f32.mrf.mxu0
        %v1219 = vadd.f32 %v1106, %v1218
        %1220 = vmatmul.f32.gmra.mxu0 %v867
        %v1221 = vpop.f32.mrf.mxu0
        %v1222 = vadd.f32 %v1109, %v1221
        %1223 = vmatmul.f32.gmra.mxu0 %v870
        %v1224 = vpop.f32.mrf.mxu0
        %v1225 = vadd.f32 %v1112, %v1224
        %1226 = vmatmul.f32.gmra.mxu0 %v873
        %v1227 = vpop.f32.mrf.mxu0
        %v1228 = vadd.f32 %v1115, %v1227
        %1229 = vdwg.mxu0
        %1230 = vmatpush.msra.mxu0 %v659
        %1231 = vmatpush.msra.mxu0 %v654
        %1232 = vmatpush.msra.mxu0 %v649
        %1233 = vmatpush.msra.mxu0 %v644
        %1234 = vmatpush.msra.mxu0 %v639
        %1235 = vmatpush.msra.mxu0 %v634
        %1236 = vmatpush.msra.mxu0 %v629
        %1237 = vmatpush.msra.mxu0 %v624
        %1238 = vmatpush.msra.mxu0 %v619
        %1239 = vmatpush.msra.mxu0 %v614
        %1240 = vmatpush.msra.mxu0 %v609
        %1241 = vmatpush.msra.mxu0 %v604
        %1242 = vmatpush.msra.mxu0 %v599
        %1243 = vmatpush.msra.mxu0 %v594
        %1244 = vmatpush.msra.mxu0 %v589
        %1245 = vmatpush.msra.mxu0 %v584
        %1246 = vmatmul.f32.gmra.mxu0 %v487
        %v1247 = vpop.f32.mrf.mxu0
        %v1248 = vadd.f32 0.0, %v1247
        %1249 = vmatmul.f32.gmra.mxu0 %v490
        %v1250 = vpop.f32.mrf.mxu0
        %v1251 = vadd.f32 0.0, %v1250
        %1252 = vmatmul.f32.gmra.mxu0 %v493
        %v1253 = vpop.f32.mrf.mxu0
        %v1254 = vadd.f32 0.0, %v1253
        %1255 = vmatmul.f32.gmra.mxu0 %v496
        %v1256 = vpop.f32.mrf.mxu0
        %v1257 = vadd.f32 0.0, %v1256
        %1258 = vmatmul.f32.gmra.mxu0 %v499
        %v1259 = vpop.f32.mrf.mxu0
        %v1260 = vadd.f32 0.0, %v1259
        %1261 = vmatmul.f32.gmra.mxu0 %v502
        %v1262 = vpop.f32.mrf.mxu0
        %v1263 = vadd.f32 0.0, %v1262
        %1264 = vmatmul.f32.gmra.mxu0 %v505
        %v1265 = vpop.f32.mrf.mxu0
        %v1266 = vadd.f32 0.0, %v1265
        %1267 = vmatmul.f32.gmra.mxu0 %v508
        %v1268 = vpop.f32.mrf.mxu0
        %v1269 = vadd.f32 0.0, %v1268
        %1270 = vmatmul.f32.gmra.mxu0 %v511
        %v1271 = vpop.f32.mrf.mxu0
        %v1272 = vadd.f32 0.0, %v1271
        %1273 = vmatmul.f32.gmra.mxu0 %v514
        %v1274 = vpop.f32.mrf.mxu0
        %v1275 = vadd.f32 0.0, %v1274
        %1276 = vmatmul.f32.gmra.mxu0 %v517
        %v1277 = vpop.f32.mrf.mxu0
        %v1278 = vadd.f32 0.0, %v1277
        %1279 = vmatmul.f32.gmra.mxu0 %v520
        %v1280 = vpop.f32.mrf.mxu0
        %v1281 = vadd.f32 0.0, %v1280
        %1282 = vmatmul.f32.gmra.mxu0 %v523
        %v1283 = vpop.f32.mrf.mxu0
        %v1284 = vadd.f32 0.0, %v1283
        %1285 = vmatmul.f32.gmra.mxu0 %v526
        %v1286 = vpop.f32.mrf.mxu0
        %v1287 = vadd.f32 0.0, %v1286
        %1288 = vmatmul.f32.gmra.mxu0 %v529
        %v1289 = vpop.f32.mrf.mxu0
        %v1290 = vadd.f32 0.0, %v1289
        %1291 = vmatmul.f32.gmra.mxu0 %v532
        %v1292 = vpop.f32.mrf.mxu0
        %v1293 = vadd.f32 0.0, %v1292
        %1294 = vmatmul.f32.gmra.mxu0 %v535
        %v1295 = vpop.f32.mrf.mxu0
        %v1296 = vadd.f32 0.0, %v1295
        %1297 = vmatmul.f32.gmra.mxu0 %v538
        %v1298 = vpop.f32.mrf.mxu0
        %v1299 = vadd.f32 0.0, %v1298
        %1300 = vmatmul.f32.gmra.mxu0 %v541
        %v1301 = vpop.f32.mrf.mxu0
        %v1302 = vadd.f32 0.0, %v1301
        %1303 = vmatmul.f32.gmra.mxu0 %v544
        %v1304 = vpop.f32.mrf.mxu0
        %v1305 = vadd.f32 0.0, %v1304
        %1306 = vmatmul.f32.gmra.mxu0 %v547
        %v1307 = vpop.f32.mrf.mxu0
        %v1308 = vadd.f32 0.0, %v1307
        %1309 = vmatmul.f32.gmra.mxu0 %v550
        %v1310 = vpop.f32.mrf.mxu0
        %v1311 = vadd.f32 0.0, %v1310
        %1312 = vmatmul.f32.gmra.mxu0 %v553
        %v1313 = vpop.f32.mrf.mxu0
        %v1314 = vadd.f32 0.0, %v1313
        %1315 = vmatmul.f32.gmra.mxu0 %v556
        %v1316 = vpop.f32.mrf.mxu0
        %v1317 = vadd.f32 0.0, %v1316
        %1318 = vmatmul.f32.gmra.mxu0 %v559
        %v1319 = vpop.f32.mrf.mxu0
        %v1320 = vadd.f32 0.0, %v1319
        %1321 = vmatmul.f32.gmra.mxu0 %v562
        %v1322 = vpop.f32.mrf.mxu0
        %v1323 = vadd.f32 0.0, %v1322
        %1324 = vmatmul.f32.gmra.mxu0 %v565
        %v1325 = vpop.f32.mrf.mxu0
        %v1326 = vadd.f32 0.0, %v1325
        %1327 = vmatmul.f32.gmra.mxu0 %v568
        %v1328 = vpop.f32.mrf.mxu0
        %v1329 = vadd.f32 0.0, %v1328
        %1330 = vmatmul.f32.gmra.mxu0 %v571
        %v1331 = vpop.f32.mrf.mxu0
        %v1332 = vadd.f32 0.0, %v1331
        %1333 = vmatmul.f32.gmra.mxu0 %v574
        %v1334 = vpop.f32.mrf.mxu0
        %v1335 = vadd.f32 0.0, %v1334
        %1336 = vmatmul.f32.gmra.mxu0 %v577
        %v1337 = vpop.f32.mrf.mxu0
        %v1338 = vadd.f32 0.0, %v1337
        %1339 = vmatmul.f32.gmra.mxu0 %v580
        %v1340 = vpop.f32.mrf.mxu0
        %v1341 = vadd.f32 0.0, %v1340
        %1342 = vdwg.mxu0
        %1343 = vmatpush.msra.mxu0 %v739
        %1344 = vmatpush.msra.mxu0 %v734
        %1345 = vmatpush.msra.mxu0 %v729
        %1346 = vmatpush.msra.mxu0 %v724
        %1347 = vmatpush.msra.mxu0 %v719
        %1348 = vmatpush.msra.mxu0 %v714
        %1349 = vmatpush.msra.mxu0 %v709
        %1350 = vmatpush.msra.mxu0 %v704
        %1351 = vmatpush.msra.mxu0 %v699
        %1352 = vmatpush.msra.mxu0 %v694
        %1353 = vmatpush.msra.mxu0 %v689
        %1354 = vmatpush.msra.mxu0 %v684
        %1355 = vmatpush.msra.mxu0 %v679
        %1356 = vmatpush.msra.mxu0 %v674
        %1357 = vmatpush.msra.mxu0 %v669
        %1358 = vmatpush.msra.mxu0 %v664
        %1359 = vmatmul.f32.gmra.mxu0 %v488
        %v1360 = vpop.f32.mrf.mxu0
        %v1361 = vadd.f32 %v1248, %v1360
        %1362 = vmatmul.f32.gmra.mxu0 %v491
        %v1363 = vpop.f32.mrf.mxu0
        %v1364 = vadd.f32 %v1251, %v1363
        %1365 = vmatmul.f32.gmra.mxu0 %v494
        %v1366 = vpop.f32.mrf.mxu0
        %v1367 = vadd.f32 %v1254, %v1366
        %1368 = vmatmul.f32.gmra.mxu0 %v497
        %v1369 = vpop.f32.mrf.mxu0
        %v1370 = vadd.f32 %v1257, %v1369
        %1371 = vmatmul.f32.gmra.mxu0 %v500
        %v1372 = vpop.f32.mrf.mxu0
        %v1373 = vadd.f32 %v1260, %v1372
        %1374 = vmatmul.f32.gmra.mxu0 %v503
        %v1375 = vpop.f32.mrf.mxu0
        %v1376 = vadd.f32 %v1263, %v1375
        %1377 = vmatmul.f32.gmra.mxu0 %v506
        %v1378 = vpop.f32.mrf.mxu0
        %v1379 = vadd.f32 %v1266, %v1378
        %1380 = vmatmul.f32.gmra.mxu0 %v509
        %v1381 = vpop.f32.mrf.mxu0
        %v1382 = vadd.f32 %v1269, %v1381
        %1383 = vmatmul.f32.gmra.mxu0 %v512
        %v1384 = vpop.f32.mrf.mxu0
        %v1385 = vadd.f32 %v1272, %v1384
        %1386 = vmatmul.f32.gmra.mxu0 %v515
        %v1387 = vpop.f32.mrf.mxu0
        %v1388 = vadd.f32 %v1275, %v1387
        %1389 = vmatmul.f32.gmra.mxu0 %v518
        %v1390 = vpop.f32.mrf.mxu0
        %v1391 = vadd.f32 %v1278, %v1390
        %1392 = vmatmul.f32.gmra.mxu0 %v521
        %v1393 = vpop.f32.mrf.mxu0
        %v1394 = vadd.f32 %v1281, %v1393
        %1395 = vmatmul.f32.gmra.mxu0 %v524
        %v1396 = vpop.f32.mrf.mxu0
        %v1397 = vadd.f32 %v1284, %v1396
        %1398 = vmatmul.f32.gmra.mxu0 %v527
        %v1399 = vpop.f32.mrf.mxu0
        %v1400 = vadd.f32 %v1287, %v1399
        %1401 = vmatmul.f32.gmra.mxu0 %v530
        %v1402 = vpop.f32.mrf.mxu0
        %v1403 = vadd.f32 %v1290, %v1402
        %1404 = vmatmul.f32.gmra.mxu0 %v533
        %v1405 = vpop.f32.mrf.mxu0
        %v1406 = vadd.f32 %v1293, %v1405
        %1407 = vmatmul.f32.gmra.mxu0 %v536
        %v1408 = vpop.f32.mrf.mxu0
        %v1409 = vadd.f32 %v1296, %v1408
        %1410 = vmatmul.f32.gmra.mxu0 %v539
        %v1411 = vpop.f32.mrf.mxu0
        %v1412 = vadd.f32 %v1299, %v1411
        %1413 = vmatmul.f32.gmra.mxu0 %v542
        %v1414 = vpop.f32.mrf.mxu0
        %v1415 = vadd.f32 %v1302, %v1414
        %1416 = vmatmul.f32.gmra.mxu0 %v545
        %v1417 = vpop.f32.mrf.mxu0
        %v1418 = vadd.f32 %v1305, %v1417
        %1419 = vmatmul.f32.gmra.mxu0 %v548
        %v1420 = vpop.f32.mrf.mxu0
        %v1421 = vadd.f32 %v1308, %v1420
        %1422 = vmatmul.f32.gmra.mxu0 %v551
        %v1423 = vpop.f32.mrf.mxu0
        %v1424 = vadd.f32 %v1311, %v1423
        %1425 = vmatmul.f32.gmra.mxu0 %v554
        %v1426 = vpop.f32.mrf.mxu0
        %v1427 = vadd.f32 %v1314, %v1426
        %1428 = vmatmul.f32.gmra.mxu0 %v557
        %v1429 = vpop.f32.mrf.mxu0
        %v1430 = vadd.f32 %v1317, %v1429
        %1431 = vmatmul.f32.gmra.mxu0 %v560
        %v1432 = vpop.f32.mrf.mxu0
        %v1433 = vadd.f32 %v1320, %v1432
        %1434 = vmatmul.f32.gmra.mxu0 %v563
        %v1435 = vpop.f32.mrf.mxu0
        %v1436 = vadd.f32 %v1323, %v1435
        %1437 = vmatmul.f32.gmra.mxu0 %v566
        %v1438 = vpop.f32.mrf.mxu0
        %v1439 = vadd.f32 %v1326, %v1438
        %1440 = vmatmul.f32.gmra.mxu0 %v569
        %v1441 = vpop.f32.mrf.mxu0
        %v1442 = vadd.f32 %v1329, %v1441
        %1443 = vmatmul.f32.gmra.mxu0 %v572
        %v1444 = vpop.f32.mrf.mxu0
        %v1445 = vadd.f32 %v1332, %v1444
        %1446 = vmatmul.f32.gmra.mxu0 %v575
        %v1447 = vpop.f32.mrf.mxu0
        %v1448 = vadd.f32 %v1335, %v1447
        %1449 = vmatmul.f32.gmra.mxu0 %v578
        %v1450 = vpop.f32.mrf.mxu0
        %v1451 = vadd.f32 %v1338, %v1450
        %1452 = vmatmul.f32.gmra.mxu0 %v581
        %v1453 = vpop.f32.mrf.mxu0
        %v1454 = vadd.f32 %v1341, %v1453
        %1455 = vdwg.mxu0
        %1456 = vmatpush.msra.mxu0 0.0
        %1457 = vmatpush.msra.mxu0 0.0
        %1458 = vmatpush.msra.mxu0 0.0
        %1459 = vmatpush.msra.mxu0 0.0
        %1460 = vmatpush.msra.mxu0 0.0
        %1461 = vmatpush.msra.mxu0 0.0
        %1462 = vmatpush.msra.mxu0 0.0
        %1463 = vmatpush.msra.mxu0 0.0
        %1464 = vmatpush.msra.mxu0 0.0
        %1465 = vmatpush.msra.mxu0 %v880
        %1466 = vmatpush.msra.mxu0 %v769
        %1467 = vmatpush.msra.mxu0 %v764
        %1468 = vmatpush.msra.mxu0 %v759
        %1469 = vmatpush.msra.mxu0 %v754
        %1470 = vmatpush.msra.mxu0 %v749
        %1471 = vmatpush.msra.mxu0 %v744
        %1472 = vmatmul.f32.gmra.mxu0 %v780
        %v1473 = vpop.f32.mrf.mxu0
        %v1474 = vadd.f32 %v1361, %v1473
        %1475 = vmatmul.f32.gmra.mxu0 %v783
        %v1476 = vpop.f32.mrf.mxu0
        %v1477 = vadd.f32 %v1364, %v1476
        %1478 = vmatmul.f32.gmra.mxu0 %v786
        %v1479 = vpop.f32.mrf.mxu0
        %v1480 = vadd.f32 %v1367, %v1479
        %1481 = vmatmul.f32.gmra.mxu0 %v789
        %v1482 = vpop.f32.mrf.mxu0
        %v1483 = vadd.f32 %v1370, %v1482
        %1484 = vmatmul.f32.gmra.mxu0 %v792
        %v1485 = vpop.f32.mrf.mxu0
        %v1486 = vadd.f32 %v1373, %v1485
        %1487 = vmatmul.f32.gmra.mxu0 %v795
        %v1488 = vpop.f32.mrf.mxu0
        %v1489 = vadd.f32 %v1376, %v1488
        %1490 = vmatmul.f32.gmra.mxu0 %v798
        %v1491 = vpop.f32.mrf.mxu0
        %v1492 = vadd.f32 %v1379, %v1491
        %1493 = vmatmul.f32.gmra.mxu0 %v801
        %v1494 = vpop.f32.mrf.mxu0
        %v1495 = vadd.f32 %v1382, %v1494
        %1496 = vmatmul.f32.gmra.mxu0 %v804
        %v1497 = vpop.f32.mrf.mxu0
        %v1498 = vadd.f32 %v1385, %v1497
        %1499 = vmatmul.f32.gmra.mxu0 %v807
        %v1500 = vpop.f32.mrf.mxu0
        %v1501 = vadd.f32 %v1388, %v1500
        %1502 = vmatmul.f32.gmra.mxu0 %v810
        %v1503 = vpop.f32.mrf.mxu0
        %v1504 = vadd.f32 %v1391, %v1503
        %1505 = vmatmul.f32.gmra.mxu0 %v813
        %v1506 = vpop.f32.mrf.mxu0
        %v1507 = vadd.f32 %v1394, %v1506
        %1508 = vmatmul.f32.gmra.mxu0 %v816
        %v1509 = vpop.f32.mrf.mxu0
        %v1510 = vadd.f32 %v1397, %v1509
        %1511 = vmatmul.f32.gmra.mxu0 %v819
        %v1512 = vpop.f32.mrf.mxu0
        %v1513 = vadd.f32 %v1400, %v1512
        %1514 = vmatmul.f32.gmra.mxu0 %v822
        %v1515 = vpop.f32.mrf.mxu0
        %v1516 = vadd.f32 %v1403, %v1515
        %1517 = vmatmul.f32.gmra.mxu0 %v825
        %v1518 = vpop.f32.mrf.mxu0
        %v1519 = vadd.f32 %v1406, %v1518
        %1520 = vmatmul.f32.gmra.mxu0 %v828
        %v1521 = vpop.f32.mrf.mxu0
        %v1522 = vadd.f32 %v1409, %v1521
        %1523 = vmatmul.f32.gmra.mxu0 %v831
        %v1524 = vpop.f32.mrf.mxu0
        %v1525 = vadd.f32 %v1412, %v1524
        %1526 = vmatmul.f32.gmra.mxu0 %v834
        %v1527 = vpop.f32.mrf.mxu0
        %v1528 = vadd.f32 %v1415, %v1527
        %1529 = vmatmul.f32.gmra.mxu0 %v837
        %v1530 = vpop.f32.mrf.mxu0
        %v1531 = vadd.f32 %v1418, %v1530
        %1532 = vmatmul.f32.gmra.mxu0 %v840
        %v1533 = vpop.f32.mrf.mxu0
        %v1534 = vadd.f32 %v1421, %v1533
        %1535 = vmatmul.f32.gmra.mxu0 %v843
        %v1536 = vpop.f32.mrf.mxu0
        %v1537 = vadd.f32 %v1424, %v1536
        %1538 = vmatmul.f32.gmra.mxu0 %v846
        %v1539 = vpop.f32.mrf.mxu0
        %v1540 = vadd.f32 %v1427, %v1539
        %1541 = vmatmul.f32.gmra.mxu0 %v849
        %v1542 = vpop.f32.mrf.mxu0
        %v1543 = vadd.f32 %v1430, %v1542
        %1544 = vmatmul.f32.gmra.mxu0 %v852
        %v1545 = vpop.f32.mrf.mxu0
        %v1546 = vadd.f32 %v1433, %v1545
        %1547 = vmatmul.f32.gmra.mxu0 %v855
        %v1548 = vpop.f32.mrf.mxu0
        %v1549 = vadd.f32 %v1436, %v1548
        %1550 = vmatmul.f32.gmra.mxu0 %v858
        %v1551 = vpop.f32.mrf.mxu0
        %v1552 = vadd.f32 %v1439, %v1551
        %1553 = vmatmul.f32.gmra.mxu0 %v861
        %v1554 = vpop.f32.mrf.mxu0
        %v1555 = vadd.f32 %v1442, %v1554
        %1556 = vmatmul.f32.gmra.mxu0 %v864
        %v1557 = vpop.f32.mrf.mxu0
        %v1558 = vadd.f32 %v1445, %v1557
        %1559 = vmatmul.f32.gmra.mxu0 %v867
        %v1560 = vpop.f32.mrf.mxu0
        %v1561 = vadd.f32 %v1448, %v1560
        %1562 = vmatmul.f32.gmra.mxu0 %v870
        %v1563 = vpop.f32.mrf.mxu0
        %v1564 = vadd.f32 %v1451, %v1563
        %1565 = vmatmul.f32.gmra.mxu0 %v873
        %v1566 = vpop.f32.mrf.mxu0
        %v1567 = vadd.f32 %v1454, %v1566
        %1568 = vdwg.mxu0
        %1569 = vmatpush.msra.mxu0 %v660
        %1570 = vmatpush.msra.mxu0 %v655
        %1571 = vmatpush.msra.mxu0 %v650
        %1572 = vmatpush.msra.mxu0 %v645
        %1573 = vmatpush.msra.mxu0 %v640
        %1574 = vmatpush.msra.mxu0 %v635
        %1575 = vmatpush.msra.mxu0 %v630
        %1576 = vmatpush.msra.mxu0 %v625
        %1577 = vmatpush.msra.mxu0 %v620
        %1578 = vmatpush.msra.mxu0 %v615
        %1579 = vmatpush.msra.mxu0 %v610
        %1580 = vmatpush.msra.mxu0 %v605
        %1581 = vmatpush.msra.mxu0 %v600
        %1582 = vmatpush.msra.mxu0 %v595
        %1583 = vmatpush.msra.mxu0 %v590
        %1584 = vmatpush.msra.mxu0 %v585
        %1585 = vmatmul.f32.gmra.mxu0 %v487
        %v1586 = vpop.f32.mrf.mxu0
        %v1587 = vadd.f32 0.0, %v1586
        %1588 = vmatmul.f32.gmra.mxu0 %v490
        %v1589 = vpop.f32.mrf.mxu0
        %v1590 = vadd.f32 0.0, %v1589
        %1591 = vmatmul.f32.gmra.mxu0 %v493
        %v1592 = vpop.f32.mrf.mxu0
        %v1593 = vadd.f32 0.0, %v1592
        %1594 = vmatmul.f32.gmra.mxu0 %v496
        %v1595 = vpop.f32.mrf.mxu0
        %v1596 = vadd.f32 0.0, %v1595
        %1597 = vmatmul.f32.gmra.mxu0 %v499
        %v1598 = vpop.f32.mrf.mxu0
        %v1599 = vadd.f32 0.0, %v1598
        %1600 = vmatmul.f32.gmra.mxu0 %v502
        %v1601 = vpop.f32.mrf.mxu0
        %v1602 = vadd.f32 0.0, %v1601
        %1603 = vmatmul.f32.gmra.mxu0 %v505
        %v1604 = vpop.f32.mrf.mxu0
        %v1605 = vadd.f32 0.0, %v1604
        %1606 = vmatmul.f32.gmra.mxu0 %v508
        %v1607 = vpop.f32.mrf.mxu0
        %v1608 = vadd.f32 0.0, %v1607
        %1609 = vmatmul.f32.gmra.mxu0 %v511
        %v1610 = vpop.f32.mrf.mxu0
        %v1611 = vadd.f32 0.0, %v1610
        %1612 = vmatmul.f32.gmra.mxu0 %v514
        %v1613 = vpop.f32.mrf.mxu0
        %v1614 = vadd.f32 0.0, %v1613
        %1615 = vmatmul.f32.gmra.mxu0 %v517
        %v1616 = vpop.f32.mrf.mxu0
        %v1617 = vadd.f32 0.0, %v1616
        %1618 = vmatmul.f32.gmra.mxu0 %v520
        %v1619 = vpop.f32.mrf.mxu0
        %v1620 = vadd.f32 0.0, %v1619
        %1621 = vmatmul.f32.gmra.mxu0 %v523
        %v1622 = vpop.f32.mrf.mxu0
        %v1623 = vadd.f32 0.0, %v1622
        %1624 = vmatmul.f32.gmra.mxu0 %v526
        %v1625 = vpop.f32.mrf.mxu0
        %v1626 = vadd.f32 0.0, %v1625
        %1627 = vmatmul.f32.gmra.mxu0 %v529
        %v1628 = vpop.f32.mrf.mxu0
        %v1629 = vadd.f32 0.0, %v1628
        %1630 = vmatmul.f32.gmra.mxu0 %v532
        %v1631 = vpop.f32.mrf.mxu0
        %v1632 = vadd.f32 0.0, %v1631
        %1633 = vmatmul.f32.gmra.mxu0 %v535
        %v1634 = vpop.f32.mrf.mxu0
        %v1635 = vadd.f32 0.0, %v1634
        %1636 = vmatmul.f32.gmra.mxu0 %v538
        %v1637 = vpop.f32.mrf.mxu0
        %v1638 = vadd.f32 0.0, %v1637
        %1639 = vmatmul.f32.gmra.mxu0 %v541
        %v1640 = vpop.f32.mrf.mxu0
        %v1641 = vadd.f32 0.0, %v1640
        %1642 = vmatmul.f32.gmra.mxu0 %v544
        %v1643 = vpop.f32.mrf.mxu0
        %v1644 = vadd.f32 0.0, %v1643
        %1645 = vmatmul.f32.gmra.mxu0 %v547
        %v1646 = vpop.f32.mrf.mxu0
        %v1647 = vadd.f32 0.0, %v1646
        %1648 = vmatmul.f32.gmra.mxu0 %v550
        %v1649 = vpop.f32.mrf.mxu0
        %v1650 = vadd.f32 0.0, %v1649
        %1651 = vmatmul.f32.gmra.mxu0 %v553
        %v1652 = vpop.f32.mrf.mxu0
        %v1653 = vadd.f32 0.0, %v1652
        %1654 = vmatmul.f32.gmra.mxu0 %v556
        %v1655 = vpop.f32.mrf.mxu0
        %v1656 = vadd.f32 0.0, %v1655
        %1657 = vmatmul.f32.gmra.mxu0 %v559
        %v1658 = vpop.f32.mrf.mxu0
        %v1659 = vadd.f32 0.0, %v1658
        %1660 = vmatmul.f32.gmra.mxu0 %v562
        %v1661 = vpop.f32.mrf.mxu0
        %v1662 = vadd.f32 0.0, %v1661
        %1663 = vmatmul.f32.gmra.mxu0 %v565
        %v1664 = vpop.f32.mrf.mxu0
        %v1665 = vadd.f32 0.0, %v1664
        %1666 = vmatmul.f32.gmra.mxu0 %v568
        %v1667 = vpop.f32.mrf.mxu0
        %v1668 = vadd.f32 0.0, %v1667
        %1669 = vmatmul.f32.gmra.mxu0 %v571
        %v1670 = vpop.f32.mrf.mxu0
        %v1671 = vadd.f32 0.0, %v1670
        %1672 = vmatmul.f32.gmra.mxu0 %v574
        %v1673 = vpop.f32.mrf.mxu0
        %v1674 = vadd.f32 0.0, %v1673
        %1675 = vmatmul.f32.gmra.mxu0 %v577
        %v1676 = vpop.f32.mrf.mxu0
        %v1677 = vadd.f32 0.0, %v1676
        %1678 = vmatmul.f32.gmra.mxu0 %v580
        %v1679 = vpop.f32.mrf.mxu0
        %v1680 = vadd.f32 0.0, %v1679
        %1681 = vdwg.mxu0
        %1682 = vmatpush.msra.mxu0 %v740
        %1683 = vmatpush.msra.mxu0 %v735
        %1684 = vmatpush.msra.mxu0 %v730
        %1685 = vmatpush.msra.mxu0 %v725
        %1686 = vmatpush.msra.mxu0 %v720
        %1687 = vmatpush.msra.mxu0 %v715
        %1688 = vmatpush.msra.mxu0 %v710
        %1689 = vmatpush.msra.mxu0 %v705
        %1690 = vmatpush.msra.mxu0 %v700
        %1691 = vmatpush.msra.mxu0 %v695
        %1692 = vmatpush.msra.mxu0 %v690
        %1693 = vmatpush.msra.mxu0 %v685
        %1694 = vmatpush.msra.mxu0 %v680
        %1695 = vmatpush.msra.mxu0 %v675
        %1696 = vmatpush.msra.mxu0 %v670
        %1697 = vmatpush.msra.mxu0 %v665
        %1698 = vmatmul.f32.gmra.mxu0 %v488
        %v1699 = vpop.f32.mrf.mxu0
        %v1700 = vadd.f32 %v1587, %v1699
        %1701 = vmatmul.f32.gmra.mxu0 %v491
        %v1702 = vpop.f32.mrf.mxu0
        %v1703 = vadd.f32 %v1590, %v1702
        %1704 = vmatmul.f32.gmra.mxu0 %v494
        %v1705 = vpop.f32.mrf.mxu0
        %v1706 = vadd.f32 %v1593, %v1705
        %1707 = vmatmul.f32.gmra.mxu0 %v497
        %v1708 = vpop.f32.mrf.mxu0
        %v1709 = vadd.f32 %v1596, %v1708
        %1710 = vmatmul.f32.gmra.mxu0 %v500
        %v1711 = vpop.f32.mrf.mxu0
        %v1712 = vadd.f32 %v1599, %v1711
        %1713 = vmatmul.f32.gmra.mxu0 %v503
        %v1714 = vpop.f32.mrf.mxu0
        %v1715 = vadd.f32 %v1602, %v1714
        %1716 = vmatmul.f32.gmra.mxu0 %v506
        %v1717 = vpop.f32.mrf.mxu0
        %v1718 = vadd.f32 %v1605, %v1717
        %1719 = vmatmul.f32.gmra.mxu0 %v509
        %v1720 = vpop.f32.mrf.mxu0
        %v1721 = vadd.f32 %v1608, %v1720
        %1722 = vmatmul.f32.gmra.mxu0 %v512
        %v1723 = vpop.f32.mrf.mxu0
        %v1724 = vadd.f32 %v1611, %v1723
        %1725 = vmatmul.f32.gmra.mxu0 %v515
        %v1726 = vpop.f32.mrf.mxu0
        %v1727 = vadd.f32 %v1614, %v1726
        %1728 = vmatmul.f32.gmra.mxu0 %v518
        %v1729 = vpop.f32.mrf.mxu0
        %v1730 = vadd.f32 %v1617, %v1729
        %1731 = vmatmul.f32.gmra.mxu0 %v521
        %v1732 = vpop.f32.mrf.mxu0
        %v1733 = vadd.f32 %v1620, %v1732
        %1734 = vmatmul.f32.gmra.mxu0 %v524
        %v1735 = vpop.f32.mrf.mxu0
        %v1736 = vadd.f32 %v1623, %v1735
        %1737 = vmatmul.f32.gmra.mxu0 %v527
        %v1738 = vpop.f32.mrf.mxu0
        %v1739 = vadd.f32 %v1626, %v1738
        %1740 = vmatmul.f32.gmra.mxu0 %v530
        %v1741 = vpop.f32.mrf.mxu0
        %v1742 = vadd.f32 %v1629, %v1741
        %1743 = vmatmul.f32.gmra.mxu0 %v533
        %v1744 = vpop.f32.mrf.mxu0
        %v1745 = vadd.f32 %v1632, %v1744
        %1746 = vmatmul.f32.gmra.mxu0 %v536
        %v1747 = vpop.f32.mrf.mxu0
        %v1748 = vadd.f32 %v1635, %v1747
        %1749 = vmatmul.f32.gmra.mxu0 %v539
        %v1750 = vpop.f32.mrf.mxu0
        %v1751 = vadd.f32 %v1638, %v1750
        %1752 = vmatmul.f32.gmra.mxu0 %v542
        %v1753 = vpop.f32.mrf.mxu0
        %v1754 = vadd.f32 %v1641, %v1753
        %1755 = vmatmul.f32.gmra.mxu0 %v545
        %v1756 = vpop.f32.mrf.mxu0
        %v1757 = vadd.f32 %v1644, %v1756
        %1758 = vmatmul.f32.gmra.mxu0 %v548
        %v1759 = vpop.f32.mrf.mxu0
        %v1760 = vadd.f32 %v1647, %v1759
        %1761 = vmatmul.f32.gmra.mxu0 %v551
        %v1762 = vpop.f32.mrf.mxu0
        %v1763 = vadd.f32 %v1650, %v1762
        %1764 = vmatmul.f32.gmra.mxu0 %v554
        %v1765 = vpop.f32.mrf.mxu0
        %v1766 = vadd.f32 %v1653, %v1765
        %1767 = vmatmul.f32.gmra.mxu0 %v557
        %v1768 = vpop.f32.mrf.mxu0
        %v1769 = vadd.f32 %v1656, %v1768
        %1770 = vmatmul.f32.gmra.mxu0 %v560
        %v1771 = vpop.f32.mrf.mxu0
        %v1772 = vadd.f32 %v1659, %v1771
        %1773 = vmatmul.f32.gmra.mxu0 %v563
        %v1774 = vpop.f32.mrf.mxu0
        %v1775 = vadd.f32 %v1662, %v1774
        %1776 = vmatmul.f32.gmra.mxu0 %v566
        %v1777 = vpop.f32.mrf.mxu0
        %v1778 = vadd.f32 %v1665, %v1777
        %1779 = vmatmul.f32.gmra.mxu0 %v569
        %v1780 = vpop.f32.mrf.mxu0
        %v1781 = vadd.f32 %v1668, %v1780
        %1782 = vmatmul.f32.gmra.mxu0 %v572
        %v1783 = vpop.f32.mrf.mxu0
        %v1784 = vadd.f32 %v1671, %v1783
        %1785 = vmatmul.f32.gmra.mxu0 %v575
        %v1786 = vpop.f32.mrf.mxu0
        %v1787 = vadd.f32 %v1674, %v1786
        %1788 = vmatmul.f32.gmra.mxu0 %v578
        %v1789 = vpop.f32.mrf.mxu0
        %v1790 = vadd.f32 %v1677, %v1789
        %1791 = vmatmul.f32.gmra.mxu0 %v581
        %v1792 = vpop.f32.mrf.mxu0
        %v1793 = vadd.f32 %v1680, %v1792
        %1794 = vdwg.mxu0
        %1795 = vmatpush.msra.mxu0 0.0
        %1796 = vmatpush.msra.mxu0 0.0
        %1797 = vmatpush.msra.mxu0 0.0
        %1798 = vmatpush.msra.mxu0 0.0
        %1799 = vmatpush.msra.mxu0 0.0
        %1800 = vmatpush.msra.mxu0 0.0
        %1801 = vmatpush.msra.mxu0 0.0
        %1802 = vmatpush.msra.mxu0 0.0
        %1803 = vmatpush.msra.mxu0 0.0
        %1804 = vmatpush.msra.mxu0 %v883
        %1805 = vmatpush.msra.mxu0 %v770
        %1806 = vmatpush.msra.mxu0 %v765
        %1807 = vmatpush.msra.mxu0 %v760
        %1808 = vmatpush.msra.mxu0 %v755
        %1809 = vmatpush.msra.mxu0 %v750
        %1810 = vmatpush.msra.mxu0 %v745
        %1811 = vmatmul.f32.gmra.mxu0 %v780
        %v1812 = vpop.f32.mrf.mxu0
        %v1813 = vadd.f32 %v1700, %v1812
        %1814 = vmatmul.f32.gmra.mxu0 %v783
        %v1815 = vpop.f32.mrf.mxu0
        %v1816 = vadd.f32 %v1703, %v1815
        %1817 = vmatmul.f32.gmra.mxu0 %v786
        %v1818 = vpop.f32.mrf.mxu0
        %v1819 = vadd.f32 %v1706, %v1818
        %1820 = vmatmul.f32.gmra.mxu0 %v789
        %v1821 = vpop.f32.mrf.mxu0
        %v1822 = vadd.f32 %v1709, %v1821
        %1823 = vmatmul.f32.gmra.mxu0 %v792
        %v1824 = vpop.f32.mrf.mxu0
        %v1825 = vadd.f32 %v1712, %v1824
        %1826 = vmatmul.f32.gmra.mxu0 %v795
        %v1827 = vpop.f32.mrf.mxu0
        %v1828 = vadd.f32 %v1715, %v1827
        %1829 = vmatmul.f32.gmra.mxu0 %v798
        %v1830 = vpop.f32.mrf.mxu0
        %v1831 = vadd.f32 %v1718, %v1830
        %1832 = vmatmul.f32.gmra.mxu0 %v801
        %v1833 = vpop.f32.mrf.mxu0
        %v1834 = vadd.f32 %v1721, %v1833
        %1835 = vmatmul.f32.gmra.mxu0 %v804
        %v1836 = vpop.f32.mrf.mxu0
        %v1837 = vadd.f32 %v1724, %v1836
        %1838 = vmatmul.f32.gmra.mxu0 %v807
        %v1839 = vpop.f32.mrf.mxu0
        %v1840 = vadd.f32 %v1727, %v1839
        %1841 = vmatmul.f32.gmra.mxu0 %v810
        %v1842 = vpop.f32.mrf.mxu0
        %v1843 = vadd.f32 %v1730, %v1842
        %1844 = vmatmul.f32.gmra.mxu0 %v813
        %v1845 = vpop.f32.mrf.mxu0
        %v1846 = vadd.f32 %v1733, %v1845
        %1847 = vmatmul.f32.gmra.mxu0 %v816
        %v1848 = vpop.f32.mrf.mxu0
        %v1849 = vadd.f32 %v1736, %v1848
        %1850 = vmatmul.f32.gmra.mxu0 %v819
        %v1851 = vpop.f32.mrf.mxu0
        %v1852 = vadd.f32 %v1739, %v1851
        %1853 = vmatmul.f32.gmra.mxu0 %v822
        %v1854 = vpop.f32.mrf.mxu0
        %v1855 = vadd.f32 %v1742, %v1854
        %1856 = vmatmul.f32.gmra.mxu0 %v825
        %v1857 = vpop.f32.mrf.mxu0
        %v1858 = vadd.f32 %v1745, %v1857
        %1859 = vmatmul.f32.gmra.mxu0 %v828
        %v1860 = vpop.f32.mrf.mxu0
        %v1861 = vadd.f32 %v1748, %v1860
        %1862 = vmatmul.f32.gmra.mxu0 %v831
        %v1863 = vpop.f32.mrf.mxu0
        %v1864 = vadd.f32 %v1751, %v1863
        %1865 = vmatmul.f32.gmra.mxu0 %v834
        %v1866 = vpop.f32.mrf.mxu0
        %v1867 = vadd.f32 %v1754, %v1866
        %1868 = vmatmul.f32.gmra.mxu0 %v837
        %v1869 = vpop.f32.mrf.mxu0
        %v1870 = vadd.f32 %v1757, %v1869
        %1871 = vmatmul.f32.gmra.mxu0 %v840
        %v1872 = vpop.f32.mrf.mxu0
        %v1873 = vadd.f32 %v1760, %v1872
        %1874 = vmatmul.f32.gmra.mxu0 %v843
        %v1875 = vpop.f32.mrf.mxu0
        %v1876 = vadd.f32 %v1763, %v1875
        %1877 = vmatmul.f32.gmra.mxu0 %v846
        %v1878 = vpop.f32.mrf.mxu0
        %v1879 = vadd.f32 %v1766, %v1878
        %1880 = vmatmul.f32.gmra.mxu0 %v849
        %v1881 = vpop.f32.mrf.mxu0
        %v1882 = vadd.f32 %v1769, %v1881
        %1883 = vmatmul.f32.gmra.mxu0 %v852
        %v1884 = vpop.f32.mrf.mxu0
        %v1885 = vadd.f32 %v1772, %v1884
        %1886 = vmatmul.f32.gmra.mxu0 %v855
        %v1887 = vpop.f32.mrf.mxu0
        %v1888 = vadd.f32 %v1775, %v1887
        %1889 = vmatmul.f32.gmra.mxu0 %v858
        %v1890 = vpop.f32.mrf.mxu0
        %v1891 = vadd.f32 %v1778, %v1890
        %1892 = vmatmul.f32.gmra.mxu0 %v861
        %v1893 = vpop.f32.mrf.mxu0
        %v1894 = vadd.f32 %v1781, %v1893
        %1895 = vmatmul.f32.gmra.mxu0 %v864
        %v1896 = vpop.f32.mrf.mxu0
        %v1897 = vadd.f32 %v1784, %v1896
        %1898 = vmatmul.f32.gmra.mxu0 %v867
        %v1899 = vpop.f32.mrf.mxu0
        %v1900 = vadd.f32 %v1787, %v1899
        %1901 = vmatmul.f32.gmra.mxu0 %v870
        %v1902 = vpop.f32.mrf.mxu0
        %v1903 = vadd.f32 %v1790, %v1902
        %1904 = vmatmul.f32.gmra.mxu0 %v873
        %v1905 = vpop.f32.mrf.mxu0
        %v1906 = vadd.f32 %v1793, %v1905
        %1907 = vdwg.mxu0
        %1908 = vmatpush.msra.mxu0 %v661
        %1909 = vmatpush.msra.mxu0 %v656
        %1910 = vmatpush.msra.mxu0 %v651
        %1911 = vmatpush.msra.mxu0 %v646
        %1912 = vmatpush.msra.mxu0 %v641
        %1913 = vmatpush.msra.mxu0 %v636
        %1914 = vmatpush.msra.mxu0 %v631
        %1915 = vmatpush.msra.mxu0 %v626
        %1916 = vmatpush.msra.mxu0 %v621
        %1917 = vmatpush.msra.mxu0 %v616
        %1918 = vmatpush.msra.mxu0 %v611
        %1919 = vmatpush.msra.mxu0 %v606
        %1920 = vmatpush.msra.mxu0 %v601
        %1921 = vmatpush.msra.mxu0 %v596
        %1922 = vmatpush.msra.mxu0 %v591
        %1923 = vmatpush.msra.mxu0 %v586
        %1924 = vmatmul.f32.gmra.mxu0 %v487
        %v1925 = vpop.f32.mrf.mxu0
        %v1926 = vadd.f32 0.0, %v1925
        %1927 = vmatmul.f32.gmra.mxu0 %v490
        %v1928 = vpop.f32.mrf.mxu0
        %v1929 = vadd.f32 0.0, %v1928
        %1930 = vmatmul.f32.gmra.mxu0 %v493
        %v1931 = vpop.f32.mrf.mxu0
        %v1932 = vadd.f32 0.0, %v1931
        %1933 = vmatmul.f32.gmra.mxu0 %v496
        %v1934 = vpop.f32.mrf.mxu0
        %v1935 = vadd.f32 0.0, %v1934
        %1936 = vmatmul.f32.gmra.mxu0 %v499
        %v1937 = vpop.f32.mrf.mxu0
        %v1938 = vadd.f32 0.0, %v1937
        %1939 = vmatmul.f32.gmra.mxu0 %v502
        %v1940 = vpop.f32.mrf.mxu0
        %v1941 = vadd.f32 0.0, %v1940
        %1942 = vmatmul.f32.gmra.mxu0 %v505
        %v1943 = vpop.f32.mrf.mxu0
        %v1944 = vadd.f32 0.0, %v1943
        %1945 = vmatmul.f32.gmra.mxu0 %v508
        %v1946 = vpop.f32.mrf.mxu0
        %v1947 = vadd.f32 0.0, %v1946
        %1948 = vmatmul.f32.gmra.mxu0 %v511
        %v1949 = vpop.f32.mrf.mxu0
        %v1950 = vadd.f32 0.0, %v1949
        %1951 = vmatmul.f32.gmra.mxu0 %v514
        %v1952 = vpop.f32.mrf.mxu0
        %v1953 = vadd.f32 0.0, %v1952
        %1954 = vmatmul.f32.gmra.mxu0 %v517
        %v1955 = vpop.f32.mrf.mxu0
        %v1956 = vadd.f32 0.0, %v1955
        %1957 = vmatmul.f32.gmra.mxu0 %v520
        %v1958 = vpop.f32.mrf.mxu0
        %v1959 = vadd.f32 0.0, %v1958
        %1960 = vmatmul.f32.gmra.mxu0 %v523
        %v1961 = vpop.f32.mrf.mxu0
        %v1962 = vadd.f32 0.0, %v1961
        %1963 = vmatmul.f32.gmra.mxu0 %v526
        %v1964 = vpop.f32.mrf.mxu0
        %v1965 = vadd.f32 0.0, %v1964
        %1966 = vmatmul.f32.gmra.mxu0 %v529
        %v1967 = vpop.f32.mrf.mxu0
        %v1968 = vadd.f32 0.0, %v1967
        %1969 = vmatmul.f32.gmra.mxu0 %v532
        %v1970 = vpop.f32.mrf.mxu0
        %v1971 = vadd.f32 0.0, %v1970
        %1972 = vmatmul.f32.gmra.mxu0 %v535
        %v1973 = vpop.f32.mrf.mxu0
        %v1974 = vadd.f32 0.0, %v1973
        %1975 = vmatmul.f32.gmra.mxu0 %v538
        %v1976 = vpop.f32.mrf.mxu0
        %v1977 = vadd.f32 0.0, %v1976
        %1978 = vmatmul.f32.gmra.mxu0 %v541
        %v1979 = vpop.f32.mrf.mxu0
        %v1980 = vadd.f32 0.0, %v1979
        %1981 = vmatmul.f32.gmra.mxu0 %v544
        %v1982 = vpop.f32.mrf.mxu0
        %v1983 = vadd.f32 0.0, %v1982
        %1984 = vmatmul.f32.gmra.mxu0 %v547
        %v1985 = vpop.f32.mrf.mxu0
        %v1986 = vadd.f32 0.0, %v1985
        %1987 = vmatmul.f32.gmra.mxu0 %v550
        %v1988 = vpop.f32.mrf.mxu0
        %v1989 = vadd.f32 0.0, %v1988
        %1990 = vmatmul.f32.gmra.mxu0 %v553
        %v1991 = vpop.f32.mrf.mxu0
        %v1992 = vadd.f32 0.0, %v1991
        %1993 = vmatmul.f32.gmra.mxu0 %v556
        %v1994 = vpop.f32.mrf.mxu0
        %v1995 = vadd.f32 0.0, %v1994
        %1996 = vmatmul.f32.gmra.mxu0 %v559
        %v1997 = vpop.f32.mrf.mxu0
        %v1998 = vadd.f32 0.0, %v1997
        %1999 = vmatmul.f32.gmra.mxu0 %v562
        %v2000 = vpop.f32.mrf.mxu0
        %v2001 = vadd.f32 0.0, %v2000
        %2002 = vmatmul.f32.gmra.mxu0 %v565
        %v2003 = vpop.f32.mrf.mxu0
        %v2004 = vadd.f32 0.0, %v2003
        %2005 = vmatmul.f32.gmra.mxu0 %v568
        %v2006 = vpop.f32.mrf.mxu0
        %v2007 = vadd.f32 0.0, %v2006
        %2008 = vmatmul.f32.gmra.mxu0 %v571
        %v2009 = vpop.f32.mrf.mxu0
        %v2010 = vadd.f32 0.0, %v2009
        %2011 = vmatmul.f32.gmra.mxu0 %v574
        %v2012 = vpop.f32.mrf.mxu0
        %v2013 = vadd.f32 0.0, %v2012
        %2014 = vmatmul.f32.gmra.mxu0 %v577
        %v2015 = vpop.f32.mrf.mxu0
        %v2016 = vadd.f32 0.0, %v2015
        %2017 = vmatmul.f32.gmra.mxu0 %v580
        %v2018 = vpop.f32.mrf.mxu0
        %v2019 = vadd.f32 0.0, %v2018
        %2020 = vdwg.mxu0
        %2021 = vmatpush.msra.mxu0 %v741
        %2022 = vmatpush.msra.mxu0 %v736
        %2023 = vmatpush.msra.mxu0 %v731
        %2024 = vmatpush.msra.mxu0 %v726
        %2025 = vmatpush.msra.mxu0 %v721
        %2026 = vmatpush.msra.mxu0 %v716
        %2027 = vmatpush.msra.mxu0 %v711
        %2028 = vmatpush.msra.mxu0 %v706
        %2029 = vmatpush.msra.mxu0 %v701
        %2030 = vmatpush.msra.mxu0 %v696
        %2031 = vmatpush.msra.mxu0 %v691
        %2032 = vmatpush.msra.mxu0 %v686
        %2033 = vmatpush.msra.mxu0 %v681
        %2034 = vmatpush.msra.mxu0 %v676
        %2035 = vmatpush.msra.mxu0 %v671
        %2036 = vmatpush.msra.mxu0 %v666
        %2037 = vmatmul.f32.gmra.mxu0 %v488
        %v2038 = vpop.f32.mrf.mxu0
        %v2039 = vadd.f32 %v1926, %v2038
        %2040 = vmatmul.f32.gmra.mxu0 %v491
        %v2041 = vpop.f32.mrf.mxu0
        %v2042 = vadd.f32 %v1929, %v2041
        %2043 = vmatmul.f32.gmra.mxu0 %v494
        %v2044 = vpop.f32.mrf.mxu0
        %v2045 = vadd.f32 %v1932, %v2044
        %2046 = vmatmul.f32.gmra.mxu0 %v497
        %v2047 = vpop.f32.mrf.mxu0
        %v2048 = vadd.f32 %v1935, %v2047
        %2049 = vmatmul.f32.gmra.mxu0 %v500
        %v2050 = vpop.f32.mrf.mxu0
        %v2051 = vadd.f32 %v1938, %v2050
        %2052 = vmatmul.f32.gmra.mxu0 %v503
        %v2053 = vpop.f32.mrf.mxu0
        %v2054 = vadd.f32 %v1941, %v2053
        %2055 = vmatmul.f32.gmra.mxu0 %v506
        %v2056 = vpop.f32.mrf.mxu0
        %v2057 = vadd.f32 %v1944, %v2056
        %2058 = vmatmul.f32.gmra.mxu0 %v509
        %v2059 = vpop.f32.mrf.mxu0
        %v2060 = vadd.f32 %v1947, %v2059
        %2061 = vmatmul.f32.gmra.mxu0 %v512
        %v2062 = vpop.f32.mrf.mxu0
        %v2063 = vadd.f32 %v1950, %v2062
        %2064 = vmatmul.f32.gmra.mxu0 %v515
        %v2065 = vpop.f32.mrf.mxu0
        %v2066 = vadd.f32 %v1953, %v2065
        %2067 = vmatmul.f32.gmra.mxu0 %v518
        %v2068 = vpop.f32.mrf.mxu0
        %v2069 = vadd.f32 %v1956, %v2068
        %2070 = vmatmul.f32.gmra.mxu0 %v521
        %v2071 = vpop.f32.mrf.mxu0
        %v2072 = vadd.f32 %v1959, %v2071
        %2073 = vmatmul.f32.gmra.mxu0 %v524
        %v2074 = vpop.f32.mrf.mxu0
        %v2075 = vadd.f32 %v1962, %v2074
        %2076 = vmatmul.f32.gmra.mxu0 %v527
        %v2077 = vpop.f32.mrf.mxu0
        %v2078 = vadd.f32 %v1965, %v2077
        %2079 = vmatmul.f32.gmra.mxu0 %v530
        %v2080 = vpop.f32.mrf.mxu0
        %v2081 = vadd.f32 %v1968, %v2080
        %2082 = vmatmul.f32.gmra.mxu0 %v533
        %v2083 = vpop.f32.mrf.mxu0
        %v2084 = vadd.f32 %v1971, %v2083
        %2085 = vmatmul.f32.gmra.mxu0 %v536
        %v2086 = vpop.f32.mrf.mxu0
        %v2087 = vadd.f32 %v1974, %v2086
        %2088 = vmatmul.f32.gmra.mxu0 %v539
        %v2089 = vpop.f32.mrf.mxu0
        %v2090 = vadd.f32 %v1977, %v2089
        %2091 = vmatmul.f32.gmra.mxu0 %v542
        %v2092 = vpop.f32.mrf.mxu0
        %v2093 = vadd.f32 %v1980, %v2092
        %2094 = vmatmul.f32.gmra.mxu0 %v545
        %v2095 = vpop.f32.mrf.mxu0
        %v2096 = vadd.f32 %v1983, %v2095
        %2097 = vmatmul.f32.gmra.mxu0 %v548
        %v2098 = vpop.f32.mrf.mxu0
        %v2099 = vadd.f32 %v1986, %v2098
        %2100 = vmatmul.f32.gmra.mxu0 %v551
        %v2101 = vpop.f32.mrf.mxu0
        %v2102 = vadd.f32 %v1989, %v2101
        %2103 = vmatmul.f32.gmra.mxu0 %v554
        %v2104 = vpop.f32.mrf.mxu0
        %v2105 = vadd.f32 %v1992, %v2104
        %2106 = vmatmul.f32.gmra.mxu0 %v557
        %v2107 = vpop.f32.mrf.mxu0
        %v2108 = vadd.f32 %v1995, %v2107
        %2109 = vmatmul.f32.gmra.mxu0 %v560
        %v2110 = vpop.f32.mrf.mxu0
        %v2111 = vadd.f32 %v1998, %v2110
        %2112 = vmatmul.f32.gmra.mxu0 %v563
        %v2113 = vpop.f32.mrf.mxu0
        %v2114 = vadd.f32 %v2001, %v2113
        %2115 = vmatmul.f32.gmra.mxu0 %v566
        %v2116 = vpop.f32.mrf.mxu0
        %v2117 = vadd.f32 %v2004, %v2116
        %2118 = vmatmul.f32.gmra.mxu0 %v569
        %v2119 = vpop.f32.mrf.mxu0
        %v2120 = vadd.f32 %v2007, %v2119
        %2121 = vmatmul.f32.gmra.mxu0 %v572
        %v2122 = vpop.f32.mrf.mxu0
        %v2123 = vadd.f32 %v2010, %v2122
        %2124 = vmatmul.f32.gmra.mxu0 %v575
        %v2125 = vpop.f32.mrf.mxu0
        %v2126 = vadd.f32 %v2013, %v2125
        %2127 = vmatmul.f32.gmra.mxu0 %v578
        %v2128 = vpop.f32.mrf.mxu0
        %v2129 = vadd.f32 %v2016, %v2128
        %2130 = vmatmul.f32.gmra.mxu0 %v581
        %v2131 = vpop.f32.mrf.mxu0
        %v2132 = vadd.f32 %v2019, %v2131
        %2133 = vdwg.mxu0
        %2134 = vmatpush.msra.mxu0 0.0
        %2135 = vmatpush.msra.mxu0 0.0
        %2136 = vmatpush.msra.mxu0 0.0
        %2137 = vmatpush.msra.mxu0 0.0
        %2138 = vmatpush.msra.mxu0 0.0
        %2139 = vmatpush.msra.mxu0 0.0
        %2140 = vmatpush.msra.mxu0 0.0
        %2141 = vmatpush.msra.mxu0 0.0
        %2142 = vmatpush.msra.mxu0 0.0
        %2143 = vmatpush.msra.mxu0 %v886
        %2144 = vmatpush.msra.mxu0 %v771
        %2145 = vmatpush.msra.mxu0 %v766
        %2146 = vmatpush.msra.mxu0 %v761
        %2147 = vmatpush.msra.mxu0 %v756
        %2148 = vmatpush.msra.mxu0 %v751
        %2149 = vmatpush.msra.mxu0 %v746
        %2150 = vmatmul.f32.gmra.mxu0 %v780
        %v2151 = vpop.f32.mrf.mxu0
        %v2152 = vadd.f32 %v2039, %v2151
        %2153 = vmatmul.f32.gmra.mxu0 %v783
        %v2154 = vpop.f32.mrf.mxu0
        %v2155 = vadd.f32 %v2042, %v2154
        %2156 = vmatmul.f32.gmra.mxu0 %v786
        %v2157 = vpop.f32.mrf.mxu0
        %v2158 = vadd.f32 %v2045, %v2157
        %2159 = vmatmul.f32.gmra.mxu0 %v789
        %v2160 = vpop.f32.mrf.mxu0
        %v2161 = vadd.f32 %v2048, %v2160
        %2162 = vmatmul.f32.gmra.mxu0 %v792
        %v2163 = vpop.f32.mrf.mxu0
        %v2164 = vadd.f32 %v2051, %v2163
        %2165 = vmatmul.f32.gmra.mxu0 %v795
        %v2166 = vpop.f32.mrf.mxu0
        %v2167 = vadd.f32 %v2054, %v2166
        %2168 = vmatmul.f32.gmra.mxu0 %v798
        %v2169 = vpop.f32.mrf.mxu0
        %v2170 = vadd.f32 %v2057, %v2169
        %2171 = vmatmul.f32.gmra.mxu0 %v801
        %v2172 = vpop.f32.mrf.mxu0
        %v2173 = vadd.f32 %v2060, %v2172
        %2174 = vmatmul.f32.gmra.mxu0 %v804
        %v2175 = vpop.f32.mrf.mxu0
        %v2176 = vadd.f32 %v2063, %v2175
        %2177 = vmatmul.f32.gmra.mxu0 %v807
        %v2178 = vpop.f32.mrf.mxu0
        %v2179 = vadd.f32 %v2066, %v2178
        %2180 = vmatmul.f32.gmra.mxu0 %v810
        %v2181 = vpop.f32.mrf.mxu0
        %v2182 = vadd.f32 %v2069, %v2181
        %2183 = vmatmul.f32.gmra.mxu0 %v813
        %v2184 = vpop.f32.mrf.mxu0
        %v2185 = vadd.f32 %v2072, %v2184
        %2186 = vmatmul.f32.gmra.mxu0 %v816
        %v2187 = vpop.f32.mrf.mxu0
        %v2188 = vadd.f32 %v2075, %v2187
        %2189 = vmatmul.f32.gmra.mxu0 %v819
        %v2190 = vpop.f32.mrf.mxu0
        %v2191 = vadd.f32 %v2078, %v2190
        %2192 = vmatmul.f32.gmra.mxu0 %v822
        %v2193 = vpop.f32.mrf.mxu0
        %v2194 = vadd.f32 %v2081, %v2193
        %2195 = vmatmul.f32.gmra.mxu0 %v825
        %v2196 = vpop.f32.mrf.mxu0
        %v2197 = vadd.f32 %v2084, %v2196
        %2198 = vmatmul.f32.gmra.mxu0 %v828
        %v2199 = vpop.f32.mrf.mxu0
        %v2200 = vadd.f32 %v2087, %v2199
        %2201 = vmatmul.f32.gmra.mxu0 %v831
        %v2202 = vpop.f32.mrf.mxu0
        %v2203 = vadd.f32 %v2090, %v2202
        %2204 = vmatmul.f32.gmra.mxu0 %v834
        %v2205 = vpop.f32.mrf.mxu0
        %v2206 = vadd.f32 %v2093, %v2205
        %2207 = vmatmul.f32.gmra.mxu0 %v837
        %v2208 = vpop.f32.mrf.mxu0
        %v2209 = vadd.f32 %v2096, %v2208
        %2210 = vmatmul.f32.gmra.mxu0 %v840
        %v2211 = vpop.f32.mrf.mxu0
        %v2212 = vadd.f32 %v2099, %v2211
        %2213 = vmatmul.f32.gmra.mxu0 %v843
        %v2214 = vpop.f32.mrf.mxu0
        %v2215 = vadd.f32 %v2102, %v2214
        %2216 = vmatmul.f32.gmra.mxu0 %v846
        %v2217 = vpop.f32.mrf.mxu0
        %v2218 = vadd.f32 %v2105, %v2217
        %2219 = vmatmul.f32.gmra.mxu0 %v849
        %v2220 = vpop.f32.mrf.mxu0
        %v2221 = vadd.f32 %v2108, %v2220
        %2222 = vmatmul.f32.gmra.mxu0 %v852
        %v2223 = vpop.f32.mrf.mxu0
        %v2224 = vadd.f32 %v2111, %v2223
        %2225 = vmatmul.f32.gmra.mxu0 %v855
        %v2226 = vpop.f32.mrf.mxu0
        %v2227 = vadd.f32 %v2114, %v2226
        %2228 = vmatmul.f32.gmra.mxu0 %v858
        %v2229 = vpop.f32.mrf.mxu0
        %v2230 = vadd.f32 %v2117, %v2229
        %2231 = vmatmul.f32.gmra.mxu0 %v861
        %v2232 = vpop.f32.mrf.mxu0
        %v2233 = vadd.f32 %v2120, %v2232
        %2234 = vmatmul.f32.gmra.mxu0 %v864
        %v2235 = vpop.f32.mrf.mxu0
        %v2236 = vadd.f32 %v2123, %v2235
        %2237 = vmatmul.f32.gmra.mxu0 %v867
        %v2238 = vpop.f32.mrf.mxu0
        %v2239 = vadd.f32 %v2126, %v2238
        %2240 = vmatmul.f32.gmra.mxu0 %v870
        %v2241 = vpop.f32.mrf.mxu0
        %v2242 = vadd.f32 %v2129, %v2241
        %2243 = vmatmul.f32.gmra.mxu0 %v873
        %v2244 = vpop.f32.mrf.mxu0
        %v2245 = vadd.f32 %v2132, %v2244
        %2246 = vdwg.mxu0
        %2247 = vmatpush.msra.mxu0 %v662
        %2248 = vmatpush.msra.mxu0 %v657
        %2249 = vmatpush.msra.mxu0 %v652
        %2250 = vmatpush.msra.mxu0 %v647
        %2251 = vmatpush.msra.mxu0 %v642
        %2252 = vmatpush.msra.mxu0 %v637
        %2253 = vmatpush.msra.mxu0 %v632
        %2254 = vmatpush.msra.mxu0 %v627
        %2255 = vmatpush.msra.mxu0 %v622
        %2256 = vmatpush.msra.mxu0 %v617
        %2257 = vmatpush.msra.mxu0 %v612
        %2258 = vmatpush.msra.mxu0 %v607
        %2259 = vmatpush.msra.mxu0 %v602
        %2260 = vmatpush.msra.mxu0 %v597
        %2261 = vmatpush.msra.mxu0 %v592
        %2262 = vmatpush.msra.mxu0 %v587
        %2263 = vmatmul.f32.gmra.mxu0 %v487
        %v2264 = vpop.f32.mrf.mxu0
        %v2265 = vadd.f32 0.0, %v2264
        %2266 = vmatmul.f32.gmra.mxu0 %v490
        %v2267 = vpop.f32.mrf.mxu0
        %v2268 = vadd.f32 0.0, %v2267
        %2269 = vmatmul.f32.gmra.mxu0 %v493
        %v2270 = vpop.f32.mrf.mxu0
        %v2271 = vadd.f32 0.0, %v2270
        %2272 = vmatmul.f32.gmra.mxu0 %v496
        %v2273 = vpop.f32.mrf.mxu0
        %v2274 = vadd.f32 0.0, %v2273
        %2275 = vmatmul.f32.gmra.mxu0 %v499
        %v2276 = vpop.f32.mrf.mxu0
        %v2277 = vadd.f32 0.0, %v2276
        %2278 = vmatmul.f32.gmra.mxu0 %v502
        %v2279 = vpop.f32.mrf.mxu0
        %v2280 = vadd.f32 0.0, %v2279
        %2281 = vmatmul.f32.gmra.mxu0 %v505
        %v2282 = vpop.f32.mrf.mxu0
        %v2283 = vadd.f32 0.0, %v2282
        %2284 = vmatmul.f32.gmra.mxu0 %v508
        %v2285 = vpop.f32.mrf.mxu0
        %v2286 = vadd.f32 0.0, %v2285
        %2287 = vmatmul.f32.gmra.mxu0 %v511
        %v2288 = vpop.f32.mrf.mxu0
        %v2289 = vadd.f32 0.0, %v2288
        %2290 = vmatmul.f32.gmra.mxu0 %v514
        %v2291 = vpop.f32.mrf.mxu0
        %v2292 = vadd.f32 0.0, %v2291
        %2293 = vmatmul.f32.gmra.mxu0 %v517
        %v2294 = vpop.f32.mrf.mxu0
        %v2295 = vadd.f32 0.0, %v2294
        %2296 = vmatmul.f32.gmra.mxu0 %v520
        %v2297 = vpop.f32.mrf.mxu0
        %v2298 = vadd.f32 0.0, %v2297
        %2299 = vmatmul.f32.gmra.mxu0 %v523
        %v2300 = vpop.f32.mrf.mxu0
        %v2301 = vadd.f32 0.0, %v2300
        %2302 = vmatmul.f32.gmra.mxu0 %v526
        %v2303 = vpop.f32.mrf.mxu0
        %v2304 = vadd.f32 0.0, %v2303
        %2305 = vmatmul.f32.gmra.mxu0 %v529
        %v2306 = vpop.f32.mrf.mxu0
        %v2307 = vadd.f32 0.0, %v2306
        %2308 = vmatmul.f32.gmra.mxu0 %v532
        %v2309 = vpop.f32.mrf.mxu0
        %v2310 = vadd.f32 0.0, %v2309
        %2311 = vmatmul.f32.gmra.mxu0 %v535
        %v2312 = vpop.f32.mrf.mxu0
        %v2313 = vadd.f32 0.0, %v2312
        %2314 = vmatmul.f32.gmra.mxu0 %v538
        %v2315 = vpop.f32.mrf.mxu0
        %v2316 = vadd.f32 0.0, %v2315
        %2317 = vmatmul.f32.gmra.mxu0 %v541
        %v2318 = vpop.f32.mrf.mxu0
        %v2319 = vadd.f32 0.0, %v2318
        %2320 = vmatmul.f32.gmra.mxu0 %v544
        %v2321 = vpop.f32.mrf.mxu0
        %v2322 = vadd.f32 0.0, %v2321
        %2323 = vmatmul.f32.gmra.mxu0 %v547
        %v2324 = vpop.f32.mrf.mxu0
        %v2325 = vadd.f32 0.0, %v2324
        %2326 = vmatmul.f32.gmra.mxu0 %v550
        %v2327 = vpop.f32.mrf.mxu0
        %v2328 = vadd.f32 0.0, %v2327
        %2329 = vmatmul.f32.gmra.mxu0 %v553
        %v2330 = vpop.f32.mrf.mxu0
        %v2331 = vadd.f32 0.0, %v2330
        %2332 = vmatmul.f32.gmra.mxu0 %v556
        %v2333 = vpop.f32.mrf.mxu0
        %v2334 = vadd.f32 0.0, %v2333
        %2335 = vmatmul.f32.gmra.mxu0 %v559
        %v2336 = vpop.f32.mrf.mxu0
        %v2337 = vadd.f32 0.0, %v2336
        %2338 = vmatmul.f32.gmra.mxu0 %v562
        %v2339 = vpop.f32.mrf.mxu0
        %v2340 = vadd.f32 0.0, %v2339
        %2341 = vmatmul.f32.gmra.mxu0 %v565
        %v2342 = vpop.f32.mrf.mxu0
        %v2343 = vadd.f32 0.0, %v2342
        %2344 = vmatmul.f32.gmra.mxu0 %v568
        %v2345 = vpop.f32.mrf.mxu0
        %v2346 = vadd.f32 0.0, %v2345
        %2347 = vmatmul.f32.gmra.mxu0 %v571
        %v2348 = vpop.f32.mrf.mxu0
        %v2349 = vadd.f32 0.0, %v2348
        %2350 = vmatmul.f32.gmra.mxu0 %v574
        %v2351 = vpop.f32.mrf.mxu0
        %v2352 = vadd.f32 0.0, %v2351
        %2353 = vmatmul.f32.gmra.mxu0 %v577
        %v2354 = vpop.f32.mrf.mxu0
        %v2355 = vadd.f32 0.0, %v2354
        %2356 = vmatmul.f32.gmra.mxu0 %v580
        %v2357 = vpop.f32.mrf.mxu0
        %v2358 = vadd.f32 0.0, %v2357
        %2359 = vdwg.mxu0
        %2360 = vmatpush.msra.mxu0 %v742
        %2361 = vmatpush.msra.mxu0 %v737
        %2362 = vmatpush.msra.mxu0 %v732
        %2363 = vmatpush.msra.mxu0 %v727
        %2364 = vmatpush.msra.mxu0 %v722
        %2365 = vmatpush.msra.mxu0 %v717
        %2366 = vmatpush.msra.mxu0 %v712
        %2367 = vmatpush.msra.mxu0 %v707
        %2368 = vmatpush.msra.mxu0 %v702
        %2369 = vmatpush.msra.mxu0 %v697
        %2370 = vmatpush.msra.mxu0 %v692
        %2371 = vmatpush.msra.mxu0 %v687
        %2372 = vmatpush.msra.mxu0 %v682
        %2373 = vmatpush.msra.mxu0 %v677
        %2374 = vmatpush.msra.mxu0 %v672
        %2375 = vmatpush.msra.mxu0 %v667
        %2376 = vmatmul.f32.gmra.mxu0 %v488
        %v2377 = vpop.f32.mrf.mxu0
        %v2378 = vadd.f32 %v2265, %v2377
        %2379 = vmatmul.f32.gmra.mxu0 %v491
        %v2380 = vpop.f32.mrf.mxu0
        %v2381 = vadd.f32 %v2268, %v2380
        %2382 = vmatmul.f32.gmra.mxu0 %v494
        %v2383 = vpop.f32.mrf.mxu0
        %v2384 = vadd.f32 %v2271, %v2383
        %2385 = vmatmul.f32.gmra.mxu0 %v497
        %v2386 = vpop.f32.mrf.mxu0
        %v2387 = vadd.f32 %v2274, %v2386
        %2388 = vmatmul.f32.gmra.mxu0 %v500
        %v2389 = vpop.f32.mrf.mxu0
        %v2390 = vadd.f32 %v2277, %v2389
        %2391 = vmatmul.f32.gmra.mxu0 %v503
        %v2392 = vpop.f32.mrf.mxu0
        %v2393 = vadd.f32 %v2280, %v2392
        %2394 = vmatmul.f32.gmra.mxu0 %v506
        %v2395 = vpop.f32.mrf.mxu0
        %v2396 = vadd.f32 %v2283, %v2395
        %2397 = vmatmul.f32.gmra.mxu0 %v509
        %v2398 = vpop.f32.mrf.mxu0
        %v2399 = vadd.f32 %v2286, %v2398
        %2400 = vmatmul.f32.gmra.mxu0 %v512
        %v2401 = vpop.f32.mrf.mxu0
        %v2402 = vadd.f32 %v2289, %v2401
        %2403 = vmatmul.f32.gmra.mxu0 %v515
        %v2404 = vpop.f32.mrf.mxu0
        %v2405 = vadd.f32 %v2292, %v2404
        %2406 = vmatmul.f32.gmra.mxu0 %v518
        %v2407 = vpop.f32.mrf.mxu0
        %v2408 = vadd.f32 %v2295, %v2407
        %2409 = vmatmul.f32.gmra.mxu0 %v521
        %v2410 = vpop.f32.mrf.mxu0
        %v2411 = vadd.f32 %v2298, %v2410
        %2412 = vmatmul.f32.gmra.mxu0 %v524
        %v2413 = vpop.f32.mrf.mxu0
        %v2414 = vadd.f32 %v2301, %v2413
        %2415 = vmatmul.f32.gmra.mxu0 %v527
        %v2416 = vpop.f32.mrf.mxu0
        %v2417 = vadd.f32 %v2304, %v2416
        %2418 = vmatmul.f32.gmra.mxu0 %v530
        %v2419 = vpop.f32.mrf.mxu0
        %v2420 = vadd.f32 %v2307, %v2419
        %2421 = vmatmul.f32.gmra.mxu0 %v533
        %v2422 = vpop.f32.mrf.mxu0
        %v2423 = vadd.f32 %v2310, %v2422
        %2424 = vmatmul.f32.gmra.mxu0 %v536
        %v2425 = vpop.f32.mrf.mxu0
        %v2426 = vadd.f32 %v2313, %v2425
        %2427 = vmatmul.f32.gmra.mxu0 %v539
        %v2428 = vpop.f32.mrf.mxu0
        %v2429 = vadd.f32 %v2316, %v2428
        %2430 = vmatmul.f32.gmra.mxu0 %v542
        %v2431 = vpop.f32.mrf.mxu0
        %v2432 = vadd.f32 %v2319, %v2431
        %2433 = vmatmul.f32.gmra.mxu0 %v545
        %v2434 = vpop.f32.mrf.mxu0
        %v2435 = vadd.f32 %v2322, %v2434
        %2436 = vmatmul.f32.gmra.mxu0 %v548
        %v2437 = vpop.f32.mrf.mxu0
        %v2438 = vadd.f32 %v2325, %v2437
        %2439 = vmatmul.f32.gmra.mxu0 %v551
        %v2440 = vpop.f32.mrf.mxu0
        %v2441 = vadd.f32 %v2328, %v2440
        %2442 = vmatmul.f32.gmra.mxu0 %v554
        %v2443 = vpop.f32.mrf.mxu0
        %v2444 = vadd.f32 %v2331, %v2443
        %2445 = vmatmul.f32.gmra.mxu0 %v557
        %v2446 = vpop.f32.mrf.mxu0
        %v2447 = vadd.f32 %v2334, %v2446
        %2448 = vmatmul.f32.gmra.mxu0 %v560
        %v2449 = vpop.f32.mrf.mxu0
        %v2450 = vadd.f32 %v2337, %v2449
        %2451 = vmatmul.f32.gmra.mxu0 %v563
        %v2452 = vpop.f32.mrf.mxu0
        %v2453 = vadd.f32 %v2340, %v2452
        %2454 = vmatmul.f32.gmra.mxu0 %v566
        %v2455 = vpop.f32.mrf.mxu0
        %v2456 = vadd.f32 %v2343, %v2455
        %2457 = vmatmul.f32.gmra.mxu0 %v569
        %v2458 = vpop.f32.mrf.mxu0
        %v2459 = vadd.f32 %v2346, %v2458
        %2460 = vmatmul.f32.gmra.mxu0 %v572
        %v2461 = vpop.f32.mrf.mxu0
        %v2462 = vadd.f32 %v2349, %v2461
        %2463 = vmatmul.f32.gmra.mxu0 %v575
        %v2464 = vpop.f32.mrf.mxu0
        %v2465 = vadd.f32 %v2352, %v2464
        %2466 = vmatmul.f32.gmra.mxu0 %v578
        %v2467 = vpop.f32.mrf.mxu0
        %v2468 = vadd.f32 %v2355, %v2467
        %2469 = vmatmul.f32.gmra.mxu0 %v581
        %v2470 = vpop.f32.mrf.mxu0
        %v2471 = vadd.f32 %v2358, %v2470
        %2472 = vdwg.mxu0
        %2473 = vmatpush.msra.mxu0 0.0
        %2474 = vmatpush.msra.mxu0 0.0
        %2475 = vmatpush.msra.mxu0 0.0
        %2476 = vmatpush.msra.mxu0 0.0
        %2477 = vmatpush.msra.mxu0 0.0
        %2478 = vmatpush.msra.mxu0 0.0
        %2479 = vmatpush.msra.mxu0 0.0
        %2480 = vmatpush.msra.mxu0 0.0
        %2481 = vmatpush.msra.mxu0 0.0
        %2482 = vmatpush.msra.mxu0 %v889
        %2483 = vmatpush.msra.mxu0 %v772
        %2484 = vmatpush.msra.mxu0 %v767
        %2485 = vmatpush.msra.mxu0 %v762
        %2486 = vmatpush.msra.mxu0 %v757
        %2487 = vmatpush.msra.mxu0 %v752
        %2488 = vmatpush.msra.mxu0 %v747
        %2489 = vmatmul.f32.gmra.mxu0 %v780
        %v2490 = vpop.f32.mrf.mxu0
        %v2491 = vadd.f32 %v2378, %v2490
        %2492 = vmatmul.f32.gmra.mxu0 %v783
        %v2493 = vpop.f32.mrf.mxu0
        %v2494 = vadd.f32 %v2381, %v2493
        %2495 = vmatmul.f32.gmra.mxu0 %v786
        %v2496 = vpop.f32.mrf.mxu0
        %v2497 = vadd.f32 %v2384, %v2496
        %2498 = vmatmul.f32.gmra.mxu0 %v789
        %v2499 = vpop.f32.mrf.mxu0
        %v2500 = vadd.f32 %v2387, %v2499
        %2501 = vmatmul.f32.gmra.mxu0 %v792
        %v2502 = vpop.f32.mrf.mxu0
        %v2503 = vadd.f32 %v2390, %v2502
        %2504 = vmatmul.f32.gmra.mxu0 %v795
        %v2505 = vpop.f32.mrf.mxu0
        %v2506 = vadd.f32 %v2393, %v2505
        %2507 = vmatmul.f32.gmra.mxu0 %v798
        %v2508 = vpop.f32.mrf.mxu0
        %v2509 = vadd.f32 %v2396, %v2508
        %2510 = vmatmul.f32.gmra.mxu0 %v801
        %v2511 = vpop.f32.mrf.mxu0
        %v2512 = vadd.f32 %v2399, %v2511
        %2513 = vmatmul.f32.gmra.mxu0 %v804
        %v2514 = vpop.f32.mrf.mxu0
        %v2515 = vadd.f32 %v2402, %v2514
        %2516 = vmatmul.f32.gmra.mxu0 %v807
        %v2517 = vpop.f32.mrf.mxu0
        %v2518 = vadd.f32 %v2405, %v2517
        %2519 = vmatmul.f32.gmra.mxu0 %v810
        %v2520 = vpop.f32.mrf.mxu0
        %v2521 = vadd.f32 %v2408, %v2520
        %2522 = vmatmul.f32.gmra.mxu0 %v813
        %v2523 = vpop.f32.mrf.mxu0
        %v2524 = vadd.f32 %v2411, %v2523
        %2525 = vmatmul.f32.gmra.mxu0 %v816
        %v2526 = vpop.f32.mrf.mxu0
        %v2527 = vadd.f32 %v2414, %v2526
        %2528 = vmatmul.f32.gmra.mxu0 %v819
        %v2529 = vpop.f32.mrf.mxu0
        %v2530 = vadd.f32 %v2417, %v2529
        %2531 = vmatmul.f32.gmra.mxu0 %v822
        %v2532 = vpop.f32.mrf.mxu0
        %v2533 = vadd.f32 %v2420, %v2532
        %2534 = vmatmul.f32.gmra.mxu0 %v825
        %v2535 = vpop.f32.mrf.mxu0
        %v2536 = vadd.f32 %v2423, %v2535
        %2537 = vmatmul.f32.gmra.mxu0 %v828
        %v2538 = vpop.f32.mrf.mxu0
        %v2539 = vadd.f32 %v2426, %v2538
        %2540 = vmatmul.f32.gmra.mxu0 %v831
        %v2541 = vpop.f32.mrf.mxu0
        %v2542 = vadd.f32 %v2429, %v2541
        %2543 = vmatmul.f32.gmra.mxu0 %v834
        %v2544 = vpop.f32.mrf.mxu0
        %v2545 = vadd.f32 %v2432, %v2544
        %2546 = vmatmul.f32.gmra.mxu0 %v837
        %v2547 = vpop.f32.mrf.mxu0
        %v2548 = vadd.f32 %v2435, %v2547
        %2549 = vmatmul.f32.gmra.mxu0 %v840
        %v2550 = vpop.f32.mrf.mxu0
        %v2551 = vadd.f32 %v2438, %v2550
        %2552 = vmatmul.f32.gmra.mxu0 %v843
        %v2553 = vpop.f32.mrf.mxu0
        %v2554 = vadd.f32 %v2441, %v2553
        %2555 = vmatmul.f32.gmra.mxu0 %v846
        %v2556 = vpop.f32.mrf.mxu0
        %v2557 = vadd.f32 %v2444, %v2556
        %2558 = vmatmul.f32.gmra.mxu0 %v849
        %v2559 = vpop.f32.mrf.mxu0
        %v2560 = vadd.f32 %v2447, %v2559
        %2561 = vmatmul.f32.gmra.mxu0 %v852
        %v2562 = vpop.f32.mrf.mxu0
        %v2563 = vadd.f32 %v2450, %v2562
        %2564 = vmatmul.f32.gmra.mxu0 %v855
        %v2565 = vpop.f32.mrf.mxu0
        %v2566 = vadd.f32 %v2453, %v2565
        %2567 = vmatmul.f32.gmra.mxu0 %v858
        %v2568 = vpop.f32.mrf.mxu0
        %v2569 = vadd.f32 %v2456, %v2568
        %2570 = vmatmul.f32.gmra.mxu0 %v861
        %v2571 = vpop.f32.mrf.mxu0
        %v2572 = vadd.f32 %v2459, %v2571
        %2573 = vmatmul.f32.gmra.mxu0 %v864
        %v2574 = vpop.f32.mrf.mxu0
        %v2575 = vadd.f32 %v2462, %v2574
        %2576 = vmatmul.f32.gmra.mxu0 %v867
        %v2577 = vpop.f32.mrf.mxu0
        %v2578 = vadd.f32 %v2465, %v2577
        %2579 = vmatmul.f32.gmra.mxu0 %v870
        %v2580 = vpop.f32.mrf.mxu0
        %v2581 = vadd.f32 %v2468, %v2580
        %2582 = vmatmul.f32.gmra.mxu0 %v873
        %v2583 = vpop.f32.mrf.mxu0
        %v2584 = vadd.f32 %v2471, %v2583
        %2585 = vdwg.mxu0
        %2586 = vst [vmem:[#allocation2] sm:$0xff] %v1135
        %2587 = vst [vmem:[#allocation2 + $0x8] sm:$0xff] %v1474
        %2588 = vst [vmem:[#allocation2 + $0x10] sm:$0xff] %v1813
        %2589 = vst [vmem:[#allocation2 + $0x18] sm:$0xff] %v2152
        %2590 = vst [vmem:[#allocation2 + $0x20] sm:$0xff] %v2491
        %2591 = vst [vmem:[#allocation2 + $0x28] sm:$0xff] %v1138
        %2592 = vst [vmem:[#allocation2 + $0x30] sm:$0xff] %v1477
        %2593 = vst [vmem:[#allocation2 + $0x38] sm:$0xff] %v1816
        %2594 = vst [vmem:[#allocation2 + $0x40] sm:$0xff] %v2155
        %2595 = vst [vmem:[#allocation2 + $0x48] sm:$0xff] %v2494
        %2596 = vst [vmem:[#allocation2 + $0x50] sm:$0xff] %v1141
        %2597 = vst [vmem:[#allocation2 + $0x58] sm:$0xff] %v1480
        %2598 = vst [vmem:[#allocation2 + $0x60] sm:$0xff] %v1819
        %2599 = vst [vmem:[#allocation2 + $0x68] sm:$0xff] %v2158
        %2600 = vst [vmem:[#allocation2 + $0x70] sm:$0xff] %v2497
        %2601 = vst [vmem:[#allocation2 + $0x78] sm:$0xff] %v1144
        %2602 = vst [vmem:[#allocation2 + $0x80] sm:$0xff] %v1483
        %2603 = vst [vmem:[#allocation2 + $0x88] sm:$0xff] %v1822
        %2604 = vst [vmem:[#allocation2 + $0x90] sm:$0xff] %v2161
        %2605 = vst [vmem:[#allocation2 + $0x98] sm:$0xff] %v2500
        %2606 = vst [vmem:[#allocation2 + $0xa0] sm:$0xff] %v1147
        %2607 = vst [vmem:[#allocation2 + $0xa8] sm:$0xff] %v1486
        %2608 = vst [vmem:[#allocation2 + $0xb0] sm:$0xff] %v1825
        %2609 = vst [vmem:[#allocation2 + $0xb8] sm:$0xff] %v2164
        %2610 = vst [vmem:[#allocation2 + $0xc0] sm:$0xff] %v2503
        %2611 = vst [vmem:[#allocation2 + $0xc8] sm:$0xff] %v1150
        %2612 = vst [vmem:[#allocation2 + $0xd0] sm:$0xff] %v1489
        %2613 = vst [vmem:[#allocation2 + $0xd8] sm:$0xff] %v1828
        %2614 = vst [vmem:[#allocation2 + $0xe0] sm:$0xff] %v2167
        %2615 = vst [vmem:[#allocation2 + $0xe8] sm:$0xff] %v2506
        %2616 = vst [vmem:[#allocation2 + $0xf0] sm:$0xff] %v1153
        %2617 = vst [vmem:[#allocation2 + $0xf8] sm:$0xff] %v1492
        %2618 = vst [vmem:[#allocation2 + $0x100] sm:$0xff] %v1831
        %2619 = vst [vmem:[#allocation2 + $0x108] sm:$0xff] %v2170
        %2620 = vst [vmem:[#allocation2 + $0x110] sm:$0xff] %v2509
        %2621 = vst [vmem:[#allocation2 + $0x118] sm:$0xff] %v1156
        %2622 = vst [vmem:[#allocation2 + $0x120] sm:$0xff] %v1495
        %2623 = vst [vmem:[#allocation2 + $0x128] sm:$0xff] %v1834
        %2624 = vst [vmem:[#allocation2 + $0x130] sm:$0xff] %v2173
        %2625 = vst [vmem:[#allocation2 + $0x138] sm:$0xff] %v2512
        %2626 = vst [vmem:[#allocation2 + $0x140] sm:$0xff] %v1159
        %2627 = vst [vmem:[#allocation2 + $0x148] sm:$0xff] %v1498
        %2628 = vst [vmem:[#allocation2 + $0x150] sm:$0xff] %v1837
        %2629 = vst [vmem:[#allocation2 + $0x158] sm:$0xff] %v2176
        %2630 = vst [vmem:[#allocation2 + $0x160] sm:$0xff] %v2515
        %2631 = vst [vmem:[#allocation2 + $0x168] sm:$0xff] %v1162
        %2632 = vst [vmem:[#allocation2 + $0x170] sm:$0xff] %v1501
        %2633 = vst [vmem:[#allocation2 + $0x178] sm:$0xff] %v1840
        %2634 = vst [vmem:[#allocation2 + $0x180] sm:$0xff] %v2179
        %2635 = vst [vmem:[#allocation2 + $0x188] sm:$0xff] %v2518
        %2636 = vst [vmem:[#allocation2 + $0x190] sm:$0xff] %v1165
        %2637 = vst [vmem:[#allocation2 + $0x198] sm:$0xff] %v1504
        %2638 = vst [vmem:[#allocation2 + $0x1a0] sm:$0xff] %v1843
        %2639 = vst [vmem:[#allocation2 + $0x1a8] sm:$0xff] %v2182
        %2640 = vst [vmem:[#allocation2 + $0x1b0] sm:$0xff] %v2521
        %2641 = vst [vmem:[#allocation2 + $0x1b8] sm:$0xff] %v1168
        %2642 = vst [vmem:[#allocation2 + $0x1c0] sm:$0xff] %v1507
        %2643 = vst [vmem:[#allocation2 + $0x1c8] sm:$0xff] %v1846
        %2644 = vst [vmem:[#allocation2 + $0x1d0] sm:$0xff] %v2185
        %2645 = vst [vmem:[#allocation2 + $0x1d8] sm:$0xff] %v2524
        %2646 = vst [vmem:[#allocation2 + $0x1e0] sm:$0xff] %v1171
        %2647 = vst [vmem:[#allocation2 + $0x1e8] sm:$0xff] %v1510
        %2648 = vst [vmem:[#allocation2 + $0x1f0] sm:$0xff] %v1849
        %2649 = vst [vmem:[#allocation2 + $0x1f8] sm:$0xff] %v2188
        %2650 = vst [vmem:[#allocation2 + $0x200] sm:$0xff] %v2527
        %2651 = vst [vmem:[#allocation2 + $0x208] sm:$0xff] %v1174
        %2652 = vst [vmem:[#allocation2 + $0x210] sm:$0xff] %v1513
        %2653 = vst [vmem:[#allocation2 + $0x218] sm:$0xff] %v1852
        %2654 = vst [vmem:[#allocation2 + $0x220] sm:$0xff] %v2191
        %2655 = vst [vmem:[#allocation2 + $0x228] sm:$0xff] %v2530
        %2656 = vst [vmem:[#allocation2 + $0x230] sm:$0xff] %v1177
        %2657 = vst [vmem:[#allocation2 + $0x238] sm:$0xff] %v1516
        %2658 = vst [vmem:[#allocation2 + $0x240] sm:$0xff] %v1855
        %2659 = vst [vmem:[#allocation2 + $0x248] sm:$0xff] %v2194
        %2660 = vst [vmem:[#allocation2 + $0x250] sm:$0xff] %v2533
        %2661 = vst [vmem:[#allocation2 + $0x258] sm:$0xff] %v1180
        %2662 = vst [vmem:[#allocation2 + $0x260] sm:$0xff] %v1519
        %2663 = vst [vmem:[#allocation2 + $0x268] sm:$0xff] %v1858
        %2664 = vst [vmem:[#allocation2 + $0x270] sm:$0xff] %v2197
        %2665 = vst [vmem:[#allocation2 + $0x278] sm:$0xff] %v2536
        %2666 = vst [vmem:[#allocation2 + $0x280] sm:$0xff] %v1183
        %2667 = vst [vmem:[#allocation2 + $0x288] sm:$0xff] %v1522
        %2668 = vst [vmem:[#allocation2 + $0x290] sm:$0xff] %v1861
        %2669 = vst [vmem:[#allocation2 + $0x298] sm:$0xff] %v2200
        %2670 = vst [vmem:[#allocation2 + $0x2a0] sm:$0xff] %v2539
        %2671 = vst [vmem:[#allocation2 + $0x2a8] sm:$0xff] %v1186
        %2672 = vst [vmem:[#allocation2 + $0x2b0] sm:$0xff] %v1525
        %2673 = vst [vmem:[#allocation2 + $0x2b8] sm:$0xff] %v1864
        %2674 = vst [vmem:[#allocation2 + $0x2c0] sm:$0xff] %v2203
        %2675 = vst [vmem:[#allocation2 + $0x2c8] sm:$0xff] %v2542
        %2676 = vst [vmem:[#allocation2 + $0x2d0] sm:$0xff] %v1189
        %2677 = vst [vmem:[#allocation2 + $0x2d8] sm:$0xff] %v1528
        %2678 = vst [vmem:[#allocation2 + $0x2e0] sm:$0xff] %v1867
        %2679 = vst [vmem:[#allocation2 + $0x2e8] sm:$0xff] %v2206
        %2680 = vst [vmem:[#allocation2 + $0x2f0] sm:$0xff] %v2545
        %2681 = vst [vmem:[#allocation2 + $0x2f8] sm:$0xff] %v1192
        %2682 = vst [vmem:[#allocation2 + $0x300] sm:$0xff] %v1531
        %2683 = vst [vmem:[#allocation2 + $0x308] sm:$0xff] %v1870
        %2684 = vst [vmem:[#allocation2 + $0x310] sm:$0xff] %v2209
        %2685 = vst [vmem:[#allocation2 + $0x318] sm:$0xff] %v2548
        %2686 = vst [vmem:[#allocation2 + $0x320] sm:$0xff] %v1195
        %2687 = vst [vmem:[#allocation2 + $0x328] sm:$0xff] %v1534
        %2688 = vst [vmem:[#allocation2 + $0x330] sm:$0xff] %v1873
        %2689 = vst [vmem:[#allocation2 + $0x338] sm:$0xff] %v2212
        %2690 = vst [vmem:[#allocation2 + $0x340] sm:$0xff] %v2551
        %2691 = vst [vmem:[#allocation2 + $0x348] sm:$0xff] %v1198
        %2692 = vst [vmem:[#allocation2 + $0x350] sm:$0xff] %v1537
        %2693 = vst [vmem:[#allocation2 + $0x358] sm:$0xff] %v1876
        %2694 = vst [vmem:[#allocation2 + $0x360] sm:$0xff] %v2215
        %2695 = vst [vmem:[#allocation2 + $0x368] sm:$0xff] %v2554
        %2696 = vst [vmem:[#allocation2 + $0x370] sm:$0xff] %v1201
        %2697 = vst [vmem:[#allocation2 + $0x378] sm:$0xff] %v1540
        %2698 = vst [vmem:[#allocation2 + $0x380] sm:$0xff] %v1879
        %2699 = vst [vmem:[#allocation2 + $0x388] sm:$0xff] %v2218
        %2700 = vst [vmem:[#allocation2 + $0x390] sm:$0xff] %v2557
        %2701 = vst [vmem:[#allocation2 + $0x398] sm:$0xff] %v1204
        %2702 = vst [vmem:[#allocation2 + $0x3a0] sm:$0xff] %v1543
        %2703 = vst [vmem:[#allocation2 + $0x3a8] sm:$0xff] %v1882
        %2704 = vst [vmem:[#allocation2 + $0x3b0] sm:$0xff] %v2221
        %2705 = vst [vmem:[#allocation2 + $0x3b8] sm:$0xff] %v2560
        %2706 = vst [vmem:[#allocation2 + $0x3c0] sm:$0xff] %v1207
        %2707 = vst [vmem:[#allocation2 + $0x3c8] sm:$0xff] %v1546
        %2708 = vst [vmem:[#allocation2 + $0x3d0] sm:$0xff] %v1885
        %2709 = vst [vmem:[#allocation2 + $0x3d8] sm:$0xff] %v2224
        %2710 = vst [vmem:[#allocation2 + $0x3e0] sm:$0xff] %v2563
        %2711 = vst [vmem:[#allocation2 + $0x3e8] sm:$0xff] %v1210
        %2712 = vst [vmem:[#allocation2 + $0x3f0] sm:$0xff] %v1549
        %2713 = vst [vmem:[#allocation2 + $0x3f8] sm:$0xff] %v1888
        %2714 = vst [vmem:[#allocation2 + $0x400] sm:$0xff] %v2227
        %2715 = vst [vmem:[#allocation2 + $0x408] sm:$0xff] %v2566
        %2716 = vst [vmem:[#allocation2 + $0x410] sm:$0xff] %v1213
        %2717 = vst [vmem:[#allocation2 + $0x418] sm:$0xff] %v1552
        %2718 = vst [vmem:[#allocation2 + $0x420] sm:$0xff] %v1891
        %2719 = vst [vmem:[#allocation2 + $0x428] sm:$0xff] %v2230
        %2720 = vst [vmem:[#allocation2 + $0x430] sm:$0xff] %v2569
        %2721 = vst [vmem:[#allocation2 + $0x438] sm:$0xff] %v1216
        %2722 = vst [vmem:[#allocation2 + $0x440] sm:$0xff] %v1555
        %2723 = vst [vmem:[#allocation2 + $0x448] sm:$0xff] %v1894
        %2724 = vst [vmem:[#allocation2 + $0x450] sm:$0xff] %v2233
        %2725 = vst [vmem:[#allocation2 + $0x458] sm:$0xff] %v2572
        %2726 = vst [vmem:[#allocation2 + $0x460] sm:$0xff] %v1219
        %2727 = vst [vmem:[#allocation2 + $0x468] sm:$0xff] %v1558
        %2728 = vst [vmem:[#allocation2 + $0x470] sm:$0xff] %v1897
        %2729 = vst [vmem:[#allocation2 + $0x478] sm:$0xff] %v2236
        %2730 = vst [vmem:[#allocation2 + $0x480] sm:$0xff] %v2575
        %2731 = vst [vmem:[#allocation2 + $0x488] sm:$0xff] %v1222
        %2732 = vst [vmem:[#allocation2 + $0x490] sm:$0xff] %v1561
        %2733 = vst [vmem:[#allocation2 + $0x498] sm:$0xff] %v1900
        %2734 = vst [vmem:[#allocation2 + $0x4a0] sm:$0xff] %v2239
        %2735 = vst [vmem:[#allocation2 + $0x4a8] sm:$0xff] %v2578
        %2736 = vst [vmem:[#allocation2 + $0x4b0] sm:$0xff] %v1225
        %2737 = vst [vmem:[#allocation2 + $0x4b8] sm:$0xff] %v1564
        %2738 = vst [vmem:[#allocation2 + $0x4c0] sm:$0xff] %v1903
        %2739 = vst [vmem:[#allocation2 + $0x4c8] sm:$0xff] %v2242
        %2740 = vst [vmem:[#allocation2 + $0x4d0] sm:$0xff] %v2581
        %2741 = vst [vmem:[#allocation2 + $0x4d8] sm:$0xff] %v1228
        %2742 = vst [vmem:[#allocation2 + $0x4e0] sm:$0xff] %v1567
        %2743 = vst [vmem:[#allocation2 + $0x4e8] sm:$0xff] %v1906
        %2744 = vst [vmem:[#allocation2 + $0x4f0] sm:$0xff] %v2245
        %2745 = vst [vmem:[#allocation2 + $0x4f8] sm:$0xff] %v2584
        %v2746 = vld [vmem:[#allocation2] sm:$0xff]
        %v2747 = vld [vmem:[#allocation2 + $0x8] sm:$0xff]
        %v2748 = vld [vmem:[#allocation2 + $0x10] sm:$0xff]
        %v2749 = vld [vmem:[#allocation2 + $0x18] sm:$0xff]
        %v2750 = vld [vmem:[#allocation2 + $0x20] sm:$0xff]
        %v2751 = vld [vmem:[#allocation2 + $0x28] sm:$0xff]
        %v2752 = vld [vmem:[#allocation2 + $0x30] sm:$0xff]
        %v2753 = vld [vmem:[#allocation2 + $0x38] sm:$0xff]
        %v2754 = vld [vmem:[#allocation2 + $0x40] sm:$0xff]
        %v2755 = vld [vmem:[#allocation2 + $0x48] sm:$0xff]
        %v2756 = vld [vmem:[#allocation2 + $0x50] sm:$0xff]
        %v2757 = vld [vmem:[#allocation2 + $0x58] sm:$0xff]
        %v2758 = vld [vmem:[#allocation2 + $0x60] sm:$0xff]
        %v2759 = vld [vmem:[#allocation2 + $0x68] sm:$0xff]
        %v2760 = vld [vmem:[#allocation2 + $0x70] sm:$0xff]
        %v2761 = vld [vmem:[#allocation2 + $0x78] sm:$0xff]
        %v2762 = vld [vmem:[#allocation2 + $0x80] sm:$0xff]
        %v2763 = vld [vmem:[#allocation2 + $0x88] sm:$0xff]
        %v2764 = vld [vmem:[#allocation2 + $0x90] sm:$0xff]
        %v2765 = vld [vmem:[#allocation2 + $0x98] sm:$0xff]
        %v2766 = vld [vmem:[#allocation2 + $0xa0] sm:$0xff]
        %v2767 = vld [vmem:[#allocation2 + $0xa8] sm:$0xff]
        %v2768 = vld [vmem:[#allocation2 + $0xb0] sm:$0xff]
        %v2769 = vld [vmem:[#allocation2 + $0xb8] sm:$0xff]
        %v2770 = vld [vmem:[#allocation2 + $0xc0] sm:$0xff]
        %v2771 = vld [vmem:[#allocation2 + $0xc8] sm:$0xff]
        %v2772 = vld [vmem:[#allocation2 + $0xd0] sm:$0xff]
        %v2773 = vld [vmem:[#allocation2 + $0xd8] sm:$0xff]
        %v2774 = vld [vmem:[#allocation2 + $0xe0] sm:$0xff]
        %v2775 = vld [vmem:[#allocation2 + $0xe8] sm:$0xff]
        %v2776 = vld [vmem:[#allocation2 + $0xf0] sm:$0xff]
        %v2777 = vld [vmem:[#allocation2 + $0xf8] sm:$0xff]
        %v2778 = vld [vmem:[#allocation2 + $0x100] sm:$0xff]
        %v2779 = vld [vmem:[#allocation2 + $0x108] sm:$0xff]
        %v2780 = vld [vmem:[#allocation2 + $0x110] sm:$0xff]
        %v2781 = vld [vmem:[#allocation2 + $0x118] sm:$0xff]
        %v2782 = vld [vmem:[#allocation2 + $0x120] sm:$0xff]
        %v2783 = vld [vmem:[#allocation2 + $0x128] sm:$0xff]
        %v2784 = vld [vmem:[#allocation2 + $0x130] sm:$0xff]
        %v2785 = vld [vmem:[#allocation2 + $0x138] sm:$0xff]
        %v2786 = vld [vmem:[#allocation2 + $0x140] sm:$0xff]
        %v2787 = vld [vmem:[#allocation2 + $0x148] sm:$0xff]
        %v2788 = vld [vmem:[#allocation2 + $0x150] sm:$0xff]
        %v2789 = vld [vmem:[#allocation2 + $0x158] sm:$0xff]
        %v2790 = vld [vmem:[#allocation2 + $0x160] sm:$0xff]
        %v2791 = vld [vmem:[#allocation2 + $0x168] sm:$0xff]
        %v2792 = vld [vmem:[#allocation2 + $0x170] sm:$0xff]
        %v2793 = vld [vmem:[#allocation2 + $0x178] sm:$0xff]
        %v2794 = vld [vmem:[#allocation2 + $0x180] sm:$0xff]
        %v2795 = vld [vmem:[#allocation2 + $0x188] sm:$0xff]
        %v2796 = vld [vmem:[#allocation2 + $0x190] sm:$0xff]
        %v2797 = vld [vmem:[#allocation2 + $0x198] sm:$0xff]
        %v2798 = vld [vmem:[#allocation2 + $0x1a0] sm:$0xff]
        %v2799 = vld [vmem:[#allocation2 + $0x1a8] sm:$0xff]
        %v2800 = vld [vmem:[#allocation2 + $0x1b0] sm:$0xff]
        %v2801 = vld [vmem:[#allocation2 + $0x1b8] sm:$0xff]
        %v2802 = vld [vmem:[#allocation2 + $0x1c0] sm:$0xff]
        %v2803 = vld [vmem:[#allocation2 + $0x1c8] sm:$0xff]
        %v2804 = vld [vmem:[#allocation2 + $0x1d0] sm:$0xff]
        %v2805 = vld [vmem:[#allocation2 + $0x1d8] sm:$0xff]
        %v2806 = vld [vmem:[#allocation2 + $0x1e0] sm:$0xff]
        %v2807 = vld [vmem:[#allocation2 + $0x1e8] sm:$0xff]
        %v2808 = vld [vmem:[#allocation2 + $0x1f0] sm:$0xff]
        %v2809 = vld [vmem:[#allocation2 + $0x1f8] sm:$0xff]
        %v2810 = vld [vmem:[#allocation2 + $0x200] sm:$0xff]
        %v2811 = vld [vmem:[#allocation2 + $0x208] sm:$0xff]
        %v2812 = vld [vmem:[#allocation2 + $0x210] sm:$0xff]
        %v2813 = vld [vmem:[#allocation2 + $0x218] sm:$0xff]
        %v2814 = vld [vmem:[#allocation2 + $0x220] sm:$0xff]
        %v2815 = vld [vmem:[#allocation2 + $0x228] sm:$0xff]
        %v2816 = vld [vmem:[#allocation2 + $0x230] sm:$0xff]
        %v2817 = vld [vmem:[#allocation2 + $0x238] sm:$0xff]
        %v2818 = vld [vmem:[#allocation2 + $0x240] sm:$0xff]
        %v2819 = vld [vmem:[#allocation2 + $0x248] sm:$0xff]
        %v2820 = vld [vmem:[#allocation2 + $0x250] sm:$0xff]
        %v2821 = vld [vmem:[#allocation2 + $0x258] sm:$0xff]
        %v2822 = vld [vmem:[#allocation2 + $0x260] sm:$0xff]
        %v2823 = vld [vmem:[#allocation2 + $0x268] sm:$0xff]
        %v2824 = vld [vmem:[#allocation2 + $0x270] sm:$0xff]
        %v2825 = vld [vmem:[#allocation2 + $0x278] sm:$0xff]
        %v2826 = vld [vmem:[#allocation2 + $0x280] sm:$0xff]
        %v2827 = vld [vmem:[#allocation2 + $0x288] sm:$0xff]
        %v2828 = vld [vmem:[#allocation2 + $0x290] sm:$0xff]
        %v2829 = vld [vmem:[#allocation2 + $0x298] sm:$0xff]
        %v2830 = vld [vmem:[#allocation2 + $0x2a0] sm:$0xff]
        %v2831 = vld [vmem:[#allocation2 + $0x2a8] sm:$0xff]
        %v2832 = vld [vmem:[#allocation2 + $0x2b0] sm:$0xff]
        %v2833 = vld [vmem:[#allocation2 + $0x2b8] sm:$0xff]
        %v2834 = vld [vmem:[#allocation2 + $0x2c0] sm:$0xff]
        %v2835 = vld [vmem:[#allocation2 + $0x2c8] sm:$0xff]
        %v2836 = vld [vmem:[#allocation2 + $0x2d0] sm:$0xff]
        %v2837 = vld [vmem:[#allocation2 + $0x2d8] sm:$0xff]
        %v2838 = vld [vmem:[#allocation2 + $0x2e0] sm:$0xff]
        %v2839 = vld [vmem:[#allocation2 + $0x2e8] sm:$0xff]
        %v2840 = vld [vmem:[#allocation2 + $0x2f0] sm:$0xff]
        %v2841 = vld [vmem:[#allocation2 + $0x2f8] sm:$0xff]
        %v2842 = vld [vmem:[#allocation2 + $0x300] sm:$0xff]
        %v2843 = vld [vmem:[#allocation2 + $0x308] sm:$0xff]
        %v2844 = vld [vmem:[#allocation2 + $0x310] sm:$0xff]
        %v2845 = vld [vmem:[#allocation2 + $0x318] sm:$0xff]
        %v2846 = vld [vmem:[#allocation2 + $0x320] sm:$0xff]
        %v2847 = vld [vmem:[#allocation2 + $0x328] sm:$0xff]
        %v2848 = vld [vmem:[#allocation2 + $0x330] sm:$0xff]
        %v2849 = vld [vmem:[#allocation2 + $0x338] sm:$0xff]
        %v2850 = vld [vmem:[#allocation2 + $0x340] sm:$0xff]
        %v2851 = vld [vmem:[#allocation2 + $0x348] sm:$0xff]
        %v2852 = vld [vmem:[#allocation2 + $0x350] sm:$0xff]
        %v2853 = vld [vmem:[#allocation2 + $0x358] sm:$0xff]
        %v2854 = vld [vmem:[#allocation2 + $0x360] sm:$0xff]
        %v2855 = vld [vmem:[#allocation2 + $0x368] sm:$0xff]
        %v2856 = vld [vmem:[#allocation2 + $0x370] sm:$0xff]
        %v2857 = vld [vmem:[#allocation2 + $0x378] sm:$0xff]
        %v2858 = vld [vmem:[#allocation2 + $0x380] sm:$0xff]
        %v2859 = vld [vmem:[#allocation2 + $0x388] sm:$0xff]
        %v2860 = vld [vmem:[#allocation2 + $0x390] sm:$0xff]
        %v2861 = vld [vmem:[#allocation2 + $0x398] sm:$0xff]
        %v2862 = vld [vmem:[#allocation2 + $0x3a0] sm:$0xff]
        %v2863 = vld [vmem:[#allocation2 + $0x3a8] sm:$0xff]
        %v2864 = vld [vmem:[#allocation2 + $0x3b0] sm:$0xff]
        %v2865 = vld [vmem:[#allocation2 + $0x3b8] sm:$0xff]
        %v2866 = vld [vmem:[#allocation2 + $0x3c0] sm:$0xff]
        %v2867 = vld [vmem:[#allocation2 + $0x3c8] sm:$0xff]
        %v2868 = vld [vmem:[#allocation2 + $0x3d0] sm:$0xff]
        %v2869 = vld [vmem:[#allocation2 + $0x3d8] sm:$0xff]
        %v2870 = vld [vmem:[#allocation2 + $0x3e0] sm:$0xff]
        %v2871 = vld [vmem:[#allocation2 + $0x3e8] sm:$0xff]
        %v2872 = vld [vmem:[#allocation2 + $0x3f0] sm:$0xff]
        %v2873 = vld [vmem:[#allocation2 + $0x3f8] sm:$0xff]
        %v2874 = vld [vmem:[#allocation2 + $0x400] sm:$0xff]
        %v2875 = vld [vmem:[#allocation2 + $0x408] sm:$0xff]
        %v2876 = vld [vmem:[#allocation2 + $0x410] sm:$0xff]
        %v2877 = vld [vmem:[#allocation2 + $0x418] sm:$0xff]
        %v2878 = vld [vmem:[#allocation2 + $0x420] sm:$0xff]
        %v2879 = vld [vmem:[#allocation2 + $0x428] sm:$0xff]
        %v2880 = vld [vmem:[#allocation2 + $0x430] sm:$0xff]
        %v2881 = vld [vmem:[#allocation2 + $0x438] sm:$0xff]
        %v2882 = vld [vmem:[#allocation2 + $0x440] sm:$0xff]
        %v2883 = vld [vmem:[#allocation2 + $0x448] sm:$0xff]
        %v2884 = vld [vmem:[#allocation2 + $0x450] sm:$0xff]
        %v2885 = vld [vmem:[#allocation2 + $0x458] sm:$0xff]
        %v2886 = vld [vmem:[#allocation2 + $0x460] sm:$0xff]
        %v2887 = vld [vmem:[#allocation2 + $0x468] sm:$0xff]
        %v2888 = vld [vmem:[#allocation2 + $0x470] sm:$0xff]
        %v2889 = vld [vmem:[#allocation2 + $0x478] sm:$0xff]
        %v2890 = vld [vmem:[#allocation2 + $0x480] sm:$0xff]
        %v2891 = vld [vmem:[#allocation2 + $0x488] sm:$0xff]
        %v2892 = vld [vmem:[#allocation2 + $0x490] sm:$0xff]
        %v2893 = vld [vmem:[#allocation2 + $0x498] sm:$0xff]
        %v2894 = vld [vmem:[#allocation2 + $0x4a0] sm:$0xff]
        %v2895 = vld [vmem:[#allocation2 + $0x4a8] sm:$0xff]
        %v2896 = vld [vmem:[#allocation2 + $0x4b0] sm:$0xff]
        %v2897 = vld [vmem:[#allocation2 + $0x4b8] sm:$0xff]
        %v2898 = vld [vmem:[#allocation2 + $0x4c0] sm:$0xff]
        %v2899 = vld [vmem:[#allocation2 + $0x4c8] sm:$0xff]
        %v2900 = vld [vmem:[#allocation2 + $0x4d0] sm:$0xff]
        %v2901 = vld [vmem:[#allocation2 + $0x4d8] sm:$0xff]
        %v2902 = vld [vmem:[#allocation2 + $0x4e0] sm:$0xff]
        %v2903 = vld [vmem:[#allocation2 + $0x4e8] sm:$0xff]
        %v2904 = vld [vmem:[#allocation2 + $0x4f0] sm:$0xff]
        %v2905 = vld [vmem:[#allocation2 + $0x4f8] sm:$0xff]
        %v2906 = vmax.f32 %v2746, %v2826
        %v2907 = vmax.f32 %v2747, %v2827
        %v2908 = vmax.f32 %v2748, %v2828
        %v2909 = vmax.f32 %v2749, %v2829
        %v2910 = vmax.f32 %v2750, %v2830
        %v2911 = vmax.f32 %v2751, %v2831
        %v2912 = vmax.f32 %v2752, %v2832
        %v2913 = vmax.f32 %v2753, %v2833
        %v2914 = vmax.f32 %v2754, %v2834
        %v2915 = vmax.f32 %v2755, %v2835
        %v2916 = vmax.f32 %v2756, %v2836
        %v2917 = vmax.f32 %v2757, %v2837
        %v2918 = vmax.f32 %v2758, %v2838
        %v2919 = vmax.f32 %v2759, %v2839
        %v2920 = vmax.f32 %v2760, %v2840
        %v2921 = vmax.f32 %v2761, %v2841
        %v2922 = vmax.f32 %v2762, %v2842
        %v2923 = vmax.f32 %v2763, %v2843
        %v2924 = vmax.f32 %v2764, %v2844
        %v2925 = vmax.f32 %v2765, %v2845
        %v2926 = vmax.f32 %v2766, %v2846
        %v2927 = vmax.f32 %v2767, %v2847
        %v2928 = vmax.f32 %v2768, %v2848
        %v2929 = vmax.f32 %v2769, %v2849
        %v2930 = vmax.f32 %v2770, %v2850
        %v2931 = vmax.f32 %v2771, %v2851
        %v2932 = vmax.f32 %v2772, %v2852
        %v2933 = vmax.f32 %v2773, %v2853
        %v2934 = vmax.f32 %v2774, %v2854
        %v2935 = vmax.f32 %v2775, %v2855
        %v2936 = vmax.f32 %v2776, %v2856
        %v2937 = vmax.f32 %v2777, %v2857
        %v2938 = vmax.f32 %v2778, %v2858
        %v2939 = vmax.f32 %v2779, %v2859
        %v2940 = vmax.f32 %v2780, %v2860
        %v2941 = vmax.f32 %v2781, %v2861
        %v2942 = vmax.f32 %v2782, %v2862
        %v2943 = vmax.f32 %v2783, %v2863
        %v2944 = vmax.f32 %v2784, %v2864
        %v2945 = vmax.f32 %v2785, %v2865
        %v2946 = vmax.f32 %v2786, %v2866
        %v2947 = vmax.f32 %v2787, %v2867
        %v2948 = vmax.f32 %v2788, %v2868
        %v2949 = vmax.f32 %v2789, %v2869
        %v2950 = vmax.f32 %v2790, %v2870
        %v2951 = vmax.f32 %v2791, %v2871
        %v2952 = vmax.f32 %v2792, %v2872
        %v2953 = vmax.f32 %v2793, %v2873
        %v2954 = vmax.f32 %v2794, %v2874
        %v2955 = vmax.f32 %v2795, %v2875
        %v2956 = vmax.f32 %v2796, %v2876
        %v2957 = vmax.f32 %v2797, %v2877
        %v2958 = vmax.f32 %v2798, %v2878
        %v2959 = vmax.f32 %v2799, %v2879
        %v2960 = vmax.f32 %v2800, %v2880
        %v2961 = vmax.f32 %v2801, %v2881
        %v2962 = vmax.f32 %v2802, %v2882
        %v2963 = vmax.f32 %v2803, %v2883
        %v2964 = vmax.f32 %v2804, %v2884
        %v2965 = vmax.f32 %v2805, %v2885
        %v2966 = vmax.f32 %v2806, %v2886
        %v2967 = vmax.f32 %v2807, %v2887
        %v2968 = vmax.f32 %v2808, %v2888
        %v2969 = vmax.f32 %v2809, %v2889
        %v2970 = vmax.f32 %v2810, %v2890
        %v2971 = vmax.f32 %v2811, %v2891
        %v2972 = vmax.f32 %v2812, %v2892
        %v2973 = vmax.f32 %v2813, %v2893
        %v2974 = vmax.f32 %v2814, %v2894
        %v2975 = vmax.f32 %v2815, %v2895
        %v2976 = vmax.f32 %v2816, %v2896
        %v2977 = vmax.f32 %v2817, %v2897
        %v2978 = vmax.f32 %v2818, %v2898
        %v2979 = vmax.f32 %v2819, %v2899
        %v2980 = vmax.f32 %v2820, %v2900
        %v2981 = vmax.f32 %v2821, %v2901
        %v2982 = vmax.f32 %v2822, %v2902
        %v2983 = vmax.f32 %v2823, %v2903
        %v2984 = vmax.f32 %v2824, %v2904
        %v2985 = vmax.f32 %v2825, %v2905
        %2986 = vrot.lane.b32.xlu0 %v2906, 108
        %v2987 = vpop.permute.xlu0 %2986
        %2988 = vrot.lane.b32.xlu0 %v2911, 108
        %v2989 = vpop.permute.xlu0 %2988
        %2990 = vrot.lane.b32.xlu0 %v2916, 108
        %v2991 = vpop.permute.xlu0 %2990
        %2992 = vrot.lane.b32.xlu0 %v2921, 108
        %v2993 = vpop.permute.xlu0 %2992
        %2994 = vrot.lane.b32.xlu0 %v2926, 108
        %v2995 = vpop.permute.xlu0 %2994
        %2996 = vrot.lane.b32.xlu0 %v2931, 108
        %v2997 = vpop.permute.xlu0 %2996
        %2998 = vrot.lane.b32.xlu0 %v2936, 108
        %v2999 = vpop.permute.xlu0 %2998
        %3000 = vrot.lane.b32.xlu0 %v2941, 108
        %v3001 = vpop.permute.xlu0 %3000
        %3002 = vrot.lane.b32.xlu0 %v2946, 108
        %v3003 = vpop.permute.xlu0 %3002
        %3004 = vrot.lane.b32.xlu0 %v2951, 108
        %v3005 = vpop.permute.xlu0 %3004
        %3006 = vrot.lane.b32.xlu0 %v2956, 108
        %v3007 = vpop.permute.xlu0 %3006
        %3008 = vrot.lane.b32.xlu0 %v2961, 108
        %v3009 = vpop.permute.xlu0 %3008
        %3010 = vrot.lane.b32.xlu0 %v2966, 108
        %v3011 = vpop.permute.xlu0 %3010
        %3012 = vrot.lane.b32.xlu0 %v2971, 108
        %v3013 = vpop.permute.xlu0 %3012
        %3014 = vrot.lane.b32.xlu0 %v2976, 108
        %v3015 = vpop.permute.xlu0 %3014
        %3016 = vrot.lane.b32.xlu0 %v2981, 108
        %v3017 = vpop.permute.xlu0 %3016
        %3018 = vrot.lane.b32.xlu0 %v2907, 108
        %v3019 = vpop.permute.xlu0 %3018
        %3020 = vrot.lane.b32.xlu0 %v2912, 108
        %v3021 = vpop.permute.xlu0 %3020
        %3022 = vrot.lane.b32.xlu0 %v2917, 108
        %v3023 = vpop.permute.xlu0 %3022
        %3024 = vrot.lane.b32.xlu0 %v2922, 108
        %v3025 = vpop.permute.xlu0 %3024
        %3026 = vrot.lane.b32.xlu0 %v2927, 108
        %v3027 = vpop.permute.xlu0 %3026
        %3028 = vrot.lane.b32.xlu0 %v2932, 108
        %v3029 = vpop.permute.xlu0 %3028
        %3030 = vrot.lane.b32.xlu0 %v2937, 108
        %v3031 = vpop.permute.xlu0 %3030
        %3032 = vrot.lane.b32.xlu0 %v2942, 108
        %v3033 = vpop.permute.xlu0 %3032
        %3034 = vrot.lane.b32.xlu0 %v2947, 108
        %v3035 = vpop.permute.xlu0 %3034
        %3036 = vrot.lane.b32.xlu0 %v2952, 108
        %v3037 = vpop.permute.xlu0 %3036
        %3038 = vrot.lane.b32.xlu0 %v2957, 108
        %v3039 = vpop.permute.xlu0 %3038
        %3040 = vrot.lane.b32.xlu0 %v2962, 108
        %v3041 = vpop.permute.xlu0 %3040
        %3042 = vrot.lane.b32.xlu0 %v2967, 108
        %v3043 = vpop.permute.xlu0 %3042
        %3044 = vrot.lane.b32.xlu0 %v2972, 108
        %v3045 = vpop.permute.xlu0 %3044
        %3046 = vrot.lane.b32.xlu0 %v2977, 108
        %v3047 = vpop.permute.xlu0 %3046
        %3048 = vrot.lane.b32.xlu0 %v2982, 108
        %v3049 = vpop.permute.xlu0 %3048
        %3050 = vrot.lane.b32.xlu0 %v2908, 108
        %v3051 = vpop.permute.xlu0 %3050
        %3052 = vrot.lane.b32.xlu0 %v2913, 108
        %v3053 = vpop.permute.xlu0 %3052
        %3054 = vrot.lane.b32.xlu0 %v2918, 108
        %v3055 = vpop.permute.xlu0 %3054
        %3056 = vrot.lane.b32.xlu0 %v2923, 108
        %v3057 = vpop.permute.xlu0 %3056
        %3058 = vrot.lane.b32.xlu0 %v2928, 108
        %v3059 = vpop.permute.xlu0 %3058
        %3060 = vrot.lane.b32.xlu0 %v2933, 108
        %v3061 = vpop.permute.xlu0 %3060
        %3062 = vrot.lane.b32.xlu0 %v2938, 108
        %v3063 = vpop.permute.xlu0 %3062
        %3064 = vrot.lane.b32.xlu0 %v2943, 108
        %v3065 = vpop.permute.xlu0 %3064
        %3066 = vrot.lane.b32.xlu0 %v2948, 108
        %v3067 = vpop.permute.xlu0 %3066
        %3068 = vrot.lane.b32.xlu0 %v2953, 108
        %v3069 = vpop.permute.xlu0 %3068
        %3070 = vrot.lane.b32.xlu0 %v2958, 108
        %v3071 = vpop.permute.xlu0 %3070
        %3072 = vrot.lane.b32.xlu0 %v2963, 108
        %v3073 = vpop.permute.xlu0 %3072
        %3074 = vrot.lane.b32.xlu0 %v2968, 108
        %v3075 = vpop.permute.xlu0 %3074
        %3076 = vrot.lane.b32.xlu0 %v2973, 108
        %v3077 = vpop.permute.xlu0 %3076
        %3078 = vrot.lane.b32.xlu0 %v2978, 108
        %v3079 = vpop.permute.xlu0 %3078
        %3080 = vrot.lane.b32.xlu0 %v2983, 108
        %v3081 = vpop.permute.xlu0 %3080
        %3082 = vrot.lane.b32.xlu0 %v2909, 108
        %v3083 = vpop.permute.xlu0 %3082
        %3084 = vrot.lane.b32.xlu0 %v2914, 108
        %v3085 = vpop.permute.xlu0 %3084
        %3086 = vrot.lane.b32.xlu0 %v2919, 108
        %v3087 = vpop.permute.xlu0 %3086
        %3088 = vrot.lane.b32.xlu0 %v2924, 108
        %v3089 = vpop.permute.xlu0 %3088
        %3090 = vrot.lane.b32.xlu0 %v2929, 108
        %v3091 = vpop.permute.xlu0 %3090
        %3092 = vrot.lane.b32.xlu0 %v2934, 108
        %v3093 = vpop.permute.xlu0 %3092
        %3094 = vrot.lane.b32.xlu0 %v2939, 108
        %v3095 = vpop.permute.xlu0 %3094
        %3096 = vrot.lane.b32.xlu0 %v2944, 108
        %v3097 = vpop.permute.xlu0 %3096
        %3098 = vrot.lane.b32.xlu0 %v2949, 108
        %v3099 = vpop.permute.xlu0 %3098
        %3100 = vrot.lane.b32.xlu0 %v2954, 108
        %v3101 = vpop.permute.xlu0 %3100
        %3102 = vrot.lane.b32.xlu0 %v2959, 108
        %v3103 = vpop.permute.xlu0 %3102
        %3104 = vrot.lane.b32.xlu0 %v2964, 108
        %v3105 = vpop.permute.xlu0 %3104
        %3106 = vrot.lane.b32.xlu0 %v2969, 108
        %v3107 = vpop.permute.xlu0 %3106
        %3108 = vrot.lane.b32.xlu0 %v2974, 108
        %v3109 = vpop.permute.xlu0 %3108
        %3110 = vrot.lane.b32.xlu0 %v2979, 108
        %v3111 = vpop.permute.xlu0 %3110
        %3112 = vrot.lane.b32.xlu0 %v2984, 108
        %v3113 = vpop.permute.xlu0 %3112
        %3114 = vrot.lane.b32.xlu0 %v2910, 108
        %v3115 = vpop.permute.xlu0 %3114
        %3116 = vrot.lane.b32.xlu0 %v2915, 108
        %v3117 = vpop.permute.xlu0 %3116
        %3118 = vrot.lane.b32.xlu0 %v2920, 108
        %v3119 = vpop.permute.xlu0 %3118
        %3120 = vrot.lane.b32.xlu0 %v2925, 108
        %v3121 = vpop.permute.xlu0 %3120
        %3122 = vrot.lane.b32.xlu0 %v2930, 108
        %v3123 = vpop.permute.xlu0 %3122
        %3124 = vrot.lane.b32.xlu0 %v2935, 108
        %v3125 = vpop.permute.xlu0 %3124
        %3126 = vrot.lane.b32.xlu0 %v2940, 108
        %v3127 = vpop.permute.xlu0 %3126
        %3128 = vrot.lane.b32.xlu0 %v2945, 108
        %v3129 = vpop.permute.xlu0 %3128
        %3130 = vrot.lane.b32.xlu0 %v2950, 108
        %v3131 = vpop.permute.xlu0 %3130
        %3132 = vrot.lane.b32.xlu0 %v2955, 108
        %v3133 = vpop.permute.xlu0 %3132
        %3134 = vrot.lane.b32.xlu0 %v2960, 108
        %v3135 = vpop.permute.xlu0 %3134
        %3136 = vrot.lane.b32.xlu0 %v2965, 108
        %v3137 = vpop.permute.xlu0 %3136
        %3138 = vrot.lane.b32.xlu0 %v2970, 108
        %v3139 = vpop.permute.xlu0 %3138
        %3140 = vrot.lane.b32.xlu0 %v2975, 108
        %v3141 = vpop.permute.xlu0 %3140
        %3142 = vrot.lane.b32.xlu0 %v2980, 108
        %v3143 = vpop.permute.xlu0 %3142
        %3144 = vrot.lane.b32.xlu0 %v2985, 108
        %v3145 = vpop.permute.xlu0 %3144
        %v3146 = vlaneseq
        %v3147 = vand.u32 %v3146, 127
        %vm3148 = vcmp.lt.s32.totalorder %v3147, 108
        %v3149 = vsel %vm3148, %v3083, %v3115
        %v3150 = vsel %vm3148, %v3085, %v3117
        %v3151 = vsel %vm3148, %v3087, %v3119
        %v3152 = vsel %vm3148, %v3089, %v3121
        %v3153 = vsel %vm3148, %v3091, %v3123
        %v3154 = vsel %vm3148, %v3093, %v3125
        %v3155 = vsel %vm3148, %v3095, %v3127
        %v3156 = vsel %vm3148, %v3097, %v3129
        %v3157 = vsel %vm3148, %v3099, %v3131
        %v3158 = vsel %vm3148, %v3101, %v3133
        %v3159 = vsel %vm3148, %v3103, %v3135
        %v3160 = vsel %vm3148, %v3105, %v3137
        %v3161 = vsel %vm3148, %v3107, %v3139
        %v3162 = vsel %vm3148, %v3109, %v3141
        %v3163 = vsel %vm3148, %v3111, %v3143
        %v3164 = vsel %vm3148, %v3113, %v3145
        %v3165 = vsel %vm3148, %v3051, %v3083
        %v3166 = vsel %vm3148, %v3053, %v3085
        %v3167 = vsel %vm3148, %v3055, %v3087
        %v3168 = vsel %vm3148, %v3057, %v3089
        %v3169 = vsel %vm3148, %v3059, %v3091
        %v3170 = vsel %vm3148, %v3061, %v3093
        %v3171 = vsel %vm3148, %v3063, %v3095
        %v3172 = vsel %vm3148, %v3065, %v3097
        %v3173 = vsel %vm3148, %v3067, %v3099
        %v3174 = vsel %vm3148, %v3069, %v3101
        %v3175 = vsel %vm3148, %v3071, %v3103
        %v3176 = vsel %vm3148, %v3073, %v3105
        %v3177 = vsel %vm3148, %v3075, %v3107
        %v3178 = vsel %vm3148, %v3077, %v3109
        %v3179 = vsel %vm3148, %v3079, %v3111
        %v3180 = vsel %vm3148, %v3081, %v3113
        %v3181 = vsel %vm3148, %v3019, %v3051
        %v3182 = vsel %vm3148, %v3021, %v3053
        %v3183 = vsel %vm3148, %v3023, %v3055
        %v3184 = vsel %vm3148, %v3025, %v3057
        %v3185 = vsel %vm3148, %v3027, %v3059
        %v3186 = vsel %vm3148, %v3029, %v3061
        %v3187 = vsel %vm3148, %v3031, %v3063
        %v3188 = vsel %vm3148, %v3033, %v3065
        %v3189 = vsel %vm3148, %v3035, %v3067
        %v3190 = vsel %vm3148, %v3037, %v3069
        %v3191 = vsel %vm3148, %v3039, %v3071
        %v3192 = vsel %vm3148, %v3041, %v3073
        %v3193 = vsel %vm3148, %v3043, %v3075
        %v3194 = vsel %vm3148, %v3045, %v3077
        %v3195 = vsel %vm3148, %v3047, %v3079
        %v3196 = vsel %vm3148, %v3049, %v3081
        %v3197 = vsel %vm3148, %v2987, %v3019
        %v3198 = vsel %vm3148, %v2989, %v3021
        %v3199 = vsel %vm3148, %v2991, %v3023
        %v3200 = vsel %vm3148, %v2993, %v3025
        %v3201 = vsel %vm3148, %v2995, %v3027
        %v3202 = vsel %vm3148, %v2997, %v3029
        %v3203 = vsel %vm3148, %v2999, %v3031
        %v3204 = vsel %vm3148, %v3001, %v3033
        %v3205 = vsel %vm3148, %v3003, %v3035
        %v3206 = vsel %vm3148, %v3005, %v3037
        %v3207 = vsel %vm3148, %v3007, %v3039
        %v3208 = vsel %vm3148, %v3009, %v3041
        %v3209 = vsel %vm3148, %v3011, %v3043
        %v3210 = vsel %vm3148, %v3013, %v3045
        %v3211 = vsel %vm3148, %v3015, %v3047
        %v3212 = vsel %vm3148, %v3017, %v3049
        %v3213 = vsel %vm3148, %v3115, %v2987
        %v3214 = vsel %vm3148, %v3117, %v2989
        %v3215 = vsel %vm3148, %v3119, %v2991
        %v3216 = vsel %vm3148, %v3121, %v2993
        %v3217 = vsel %vm3148, %v3123, %v2995
        %v3218 = vsel %vm3148, %v3125, %v2997
        %v3219 = vsel %vm3148, %v3127, %v2999
        %v3220 = vsel %vm3148, %v3129, %v3001
        %v3221 = vsel %vm3148, %v3131, %v3003
        %v3222 = vsel %vm3148, %v3133, %v3005
        %v3223 = vsel %vm3148, %v3135, %v3007
        %v3224 = vsel %vm3148, %v3137, %v3009
        %v3225 = vsel %vm3148, %v3139, %v3011
        %v3226 = vsel %vm3148, %v3141, %v3013
        %v3227 = vsel %vm3148, %v3143, %v3015
        %v3228 = vsel %vm3148, %v3145, %v3017
        %v3229 = vmax.f32 %v2906, %v3197
        %v3230 = vmax.f32 %v2907, %v3181
        %v3231 = vmax.f32 %v2908, %v3165
        %v3232 = vmax.f32 %v2909, %v3149
        %v3233 = vmax.f32 %v2910, %v3213
        %v3234 = vmax.f32 %v2911, %v3198
        %v3235 = vmax.f32 %v2912, %v3182
        %v3236 = vmax.f32 %v2913, %v3166
        %v3237 = vmax.f32 %v2914, %v3150
        %v3238 = vmax.f32 %v2915, %v3214
        %v3239 = vmax.f32 %v2916, %v3199
        %v3240 = vmax.f32 %v2917, %v3183
        %v3241 = vmax.f32 %v2918, %v3167
        %v3242 = vmax.f32 %v2919, %v3151
        %v3243 = vmax.f32 %v2920, %v3215
        %v3244 = vmax.f32 %v2921, %v3200
        %v3245 = vmax.f32 %v2922, %v3184
        %v3246 = vmax.f32 %v2923, %v3168
        %v3247 = vmax.f32 %v2924, %v3152
        %v3248 = vmax.f32 %v2925, %v3216
        %v3249 = vmax.f32 %v2926, %v3201
        %v3250 = vmax.f32 %v2927, %v3185
        %v3251 = vmax.f32 %v2928, %v3169
        %v3252 = vmax.f32 %v2929, %v3153
        %v3253 = vmax.f32 %v2930, %v3217
        %v3254 = vmax.f32 %v2931, %v3202
        %v3255 = vmax.f32 %v2932, %v3186
        %v3256 = vmax.f32 %v2933, %v3170
        %v3257 = vmax.f32 %v2934, %v3154
        %v3258 = vmax.f32 %v2935, %v3218
        %v3259 = vmax.f32 %v2936, %v3203
        %v3260 = vmax.f32 %v2937, %v3187
        %v3261 = vmax.f32 %v2938, %v3171
        %v3262 = vmax.f32 %v2939, %v3155
        %v3263 = vmax.f32 %v2940, %v3219
        %v3264 = vmax.f32 %v2941, %v3204
        %v3265 = vmax.f32 %v2942, %v3188
        %v3266 = vmax.f32 %v2943, %v3172
        %v3267 = vmax.f32 %v2944, %v3156
        %v3268 = vmax.f32 %v2945, %v3220
        %v3269 = vmax.f32 %v2946, %v3205
        %v3270 = vmax.f32 %v2947, %v3189
        %v3271 = vmax.f32 %v2948, %v3173
        %v3272 = vmax.f32 %v2949, %v3157
        %v3273 = vmax.f32 %v2950, %v3221
        %v3274 = vmax.f32 %v2951, %v3206
        %v3275 = vmax.f32 %v2952, %v3190
        %v3276 = vmax.f32 %v2953, %v3174
        %v3277 = vmax.f32 %v2954, %v3158
        %v3278 = vmax.f32 %v2955, %v3222
        %v3279 = vmax.f32 %v2956, %v3207
        %v3280 = vmax.f32 %v2957, %v3191
        %v3281 = vmax.f32 %v2958, %v3175
        %v3282 = vmax.f32 %v2959, %v3159
        %v3283 = vmax.f32 %v2960, %v3223
        %v3284 = vmax.f32 %v2961, %v3208
        %v3285 = vmax.f32 %v2962, %v3192
        %v3286 = vmax.f32 %v2963, %v3176
        %v3287 = vmax.f32 %v2964, %v3160
        %v3288 = vmax.f32 %v2965, %v3224
        %v3289 = vmax.f32 %v2966, %v3209
        %v3290 = vmax.f32 %v2967, %v3193
        %v3291 = vmax.f32 %v2968, %v3177
        %v3292 = vmax.f32 %v2969, %v3161
        %v3293 = vmax.f32 %v2970, %v3225
        %v3294 = vmax.f32 %v2971, %v3210
        %v3295 = vmax.f32 %v2972, %v3194
        %v3296 = vmax.f32 %v2973, %v3178
        %v3297 = vmax.f32 %v2974, %v3162
        %v3298 = vmax.f32 %v2975, %v3226
        %v3299 = vmax.f32 %v2976, %v3211
        %v3300 = vmax.f32 %v2977, %v3195
        %v3301 = vmax.f32 %v2978, %v3179
        %v3302 = vmax.f32 %v2979, %v3163
        %v3303 = vmax.f32 %v2980, %v3227
        %v3304 = vmax.f32 %v2981, %v3212
        %v3305 = vmax.f32 %v2982, %v3196
        %v3306 = vmax.f32 %v2983, %v3180
        %v3307 = vmax.f32 %v2984, %v3164
        %v3308 = vmax.f32 %v2985, %v3228
        %v3309 = vld [vmem:[%s2] sm:$0x1f]
        %v3311 = vperm.slane %v3309, 0
        %v3312 = vperm.slane %v3309, 1
        %v3313 = vperm.slane %v3309, 2
        %v3314 = vperm.slane %v3309, 3
        %v3315 = vperm.slane %v3309, 4
        %v3321 = vadd.f32 %v3229, %v3311
        %v3322 = vadd.f32 %v3230, %v3312
        %v3323 = vadd.f32 %v3231, %v3313
        %v3324 = vadd.f32 %v3232, %v3314
        %v3325 = vadd.f32 %v3233, %v3315
        %v3326 = vadd.f32 %v3234, %v3311
        %v3327 = vadd.f32 %v3235, %v3312
        %v3328 = vadd.f32 %v3236, %v3313
        %v3329 = vadd.f32 %v3237, %v3314
        %v3330 = vadd.f32 %v3238, %v3315
        %v3331 = vadd.f32 %v3239, %v3311
        %v3332 = vadd.f32 %v3240, %v3312
        %v3333 = vadd.f32 %v3241, %v3313
        %v3334 = vadd.f32 %v3242, %v3314
        %v3335 = vadd.f32 %v3243, %v3315
        %v3336 = vadd.f32 %v3244, %v3311
        %v3337 = vadd.f32 %v3245, %v3312
        %v3338 = vadd.f32 %v3246, %v3313
        %v3339 = vadd.f32 %v3247, %v3314
        %v3340 = vadd.f32 %v3248, %v3315
        %v3341 = vadd.f32 %v3249, %v3311
        %v3342 = vadd.f32 %v3250, %v3312
        %v3343 = vadd.f32 %v3251, %v3313
        %v3344 = vadd.f32 %v3252, %v3314
        %v3345 = vadd.f32 %v3253, %v3315
        %v3346 = vadd.f32 %v3254, %v3311
        %v3347 = vadd.f32 %v3255, %v3312
        %v3348 = vadd.f32 %v3256, %v3313
        %v3349 = vadd.f32 %v3257, %v3314
        %v3350 = vadd.f32 %v3258, %v3315
        %v3351 = vadd.f32 %v3259, %v3311
        %v3352 = vadd.f32 %v3260, %v3312
        %v3353 = vadd.f32 %v3261, %v3313
        %v3354 = vadd.f32 %v3262, %v3314
        %v3355 = vadd.f32 %v3263, %v3315
        %v3356 = vadd.f32 %v3264, %v3311
        %v3357 = vadd.f32 %v3265, %v3312
        %v3358 = vadd.f32 %v3266, %v3313
        %v3359 = vadd.f32 %v3267, %v3314
        %v3360 = vadd.f32 %v3268, %v3315
        %v3361 = vadd.f32 %v3269, %v3311
        %v3362 = vadd.f32 %v3270, %v3312
        %v3363 = vadd.f32 %v3271, %v3313
        %v3364 = vadd.f32 %v3272, %v3314
        %v3365 = vadd.f32 %v3273, %v3315
        %v3366 = vadd.f32 %v3274, %v3311
        %v3367 = vadd.f32 %v3275, %v3312
        %v3368 = vadd.f32 %v3276, %v3313
        %v3369 = vadd.f32 %v3277, %v3314
        %v3370 = vadd.f32 %v3278, %v3315
        %v3371 = vadd.f32 %v3279, %v3311
        %v3372 = vadd.f32 %v3280, %v3312
        %v3373 = vadd.f32 %v3281, %v3313
        %v3374 = vadd.f32 %v3282, %v3314
        %v3375 = vadd.f32 %v3283, %v3315
        %v3376 = vadd.f32 %v3284, %v3311
        %v3377 = vadd.f32 %v3285, %v3312
        %v3378 = vadd.f32 %v3286, %v3313
        %v3379 = vadd.f32 %v3287, %v3314
        %v3380 = vadd.f32 %v3288, %v3315
        %v3381 = vadd.f32 %v3289, %v3311
        %v3382 = vadd.f32 %v3290, %v3312
        %v3383 = vadd.f32 %v3291, %v3313
        %v3384 = vadd.f32 %v3292, %v3314
        %v3385 = vadd.f32 %v3293, %v3315
        %v3386 = vadd.f32 %v3294, %v3311
        %v3387 = vadd.f32 %v3295, %v3312
        %v3388 = vadd.f32 %v3296, %v3313
        %v3389 = vadd.f32 %v3297, %v3314
        %v3390 = vadd.f32 %v3298, %v3315
        %v3391 = vadd.f32 %v3299, %v3311
        %v3392 = vadd.f32 %v3300, %v3312
        %v3393 = vadd.f32 %v3301, %v3313
        %v3394 = vadd.f32 %v3302, %v3314
        %v3395 = vadd.f32 %v3303, %v3315
        %v3396 = vadd.f32 %v3304, %v3311
        %v3397 = vadd.f32 %v3305, %v3312
        %v3398 = vadd.f32 %v3306, %v3313
        %v3399 = vadd.f32 %v3307, %v3314
        %v3400 = vadd.f32 %v3308, %v3315
        %v3401 = vmax.f32 %v3321, 0.0
        %v3402 = vmax.f32 %v3322, 0.0
        %v3403 = vmax.f32 %v3323, 0.0
        %v3404 = vmax.f32 %v3324, 0.0
        %v3405 = vmax.f32 %v3325, 0.0
        %v3406 = vmax.f32 %v3326, 0.0
        %v3407 = vmax.f32 %v3327, 0.0
        %v3408 = vmax.f32 %v3328, 0.0
        %v3409 = vmax.f32 %v3329, 0.0
        %v3410 = vmax.f32 %v3330, 0.0
        %v3411 = vmax.f32 %v3331, 0.0
        %v3412 = vmax.f32 %v3332, 0.0
        %v3413 = vmax.f32 %v3333, 0.0
        %v3414 = vmax.f32 %v3334, 0.0
        %v3415 = vmax.f32 %v3335, 0.0
        %v3416 = vmax.f32 %v3336, 0.0
        %v3417 = vmax.f32 %v3337, 0.0
        %v3418 = vmax.f32 %v3338, 0.0
        %v3419 = vmax.f32 %v3339, 0.0
        %v3420 = vmax.f32 %v3340, 0.0
        %v3421 = vmax.f32 %v3341, 0.0
        %v3422 = vmax.f32 %v3342, 0.0
        %v3423 = vmax.f32 %v3343, 0.0
        %v3424 = vmax.f32 %v3344, 0.0
        %v3425 = vmax.f32 %v3345, 0.0
        %v3426 = vmax.f32 %v3346, 0.0
        %v3427 = vmax.f32 %v3347, 0.0
        %v3428 = vmax.f32 %v3348, 0.0
        %v3429 = vmax.f32 %v3349, 0.0
        %v3430 = vmax.f32 %v3350, 0.0
        %v3431 = vmax.f32 %v3351, 0.0
        %v3432 = vmax.f32 %v3352, 0.0
        %v3433 = vmax.f32 %v3353, 0.0
        %v3434 = vmax.f32 %v3354, 0.0
        %v3435 = vmax.f32 %v3355, 0.0
        %v3436 = vmax.f32 %v3356, 0.0
        %v3437 = vmax.f32 %v3357, 0.0
        %v3438 = vmax.f32 %v3358, 0.0
        %v3439 = vmax.f32 %v3359, 0.0
        %v3440 = vmax.f32 %v3360, 0.0
        %v3441 = vmax.f32 %v3361, 0.0
        %v3442 = vmax.f32 %v3362, 0.0
        %v3443 = vmax.f32 %v3363, 0.0
        %v3444 = vmax.f32 %v3364, 0.0
        %v3445 = vmax.f32 %v3365, 0.0
        %v3446 = vmax.f32 %v3366, 0.0
        %v3447 = vmax.f32 %v3367, 0.0
        %v3448 = vmax.f32 %v3368, 0.0
        %v3449 = vmax.f32 %v3369, 0.0
        %v3450 = vmax.f32 %v3370, 0.0
        %v3451 = vmax.f32 %v3371, 0.0
        %v3452 = vmax.f32 %v3372, 0.0
        %v3453 = vmax.f32 %v3373, 0.0
        %v3454 = vmax.f32 %v3374, 0.0
        %v3455 = vmax.f32 %v3375, 0.0
        %v3456 = vmax.f32 %v3376, 0.0
        %v3457 = vmax.f32 %v3377, 0.0
        %v3458 = vmax.f32 %v3378, 0.0
        %v3459 = vmax.f32 %v3379, 0.0
        %v3460 = vmax.f32 %v3380, 0.0
        %v3461 = vmax.f32 %v3381, 0.0
        %v3462 = vmax.f32 %v3382, 0.0
        %v3463 = vmax.f32 %v3383, 0.0
        %v3464 = vmax.f32 %v3384, 0.0
        %v3465 = vmax.f32 %v3385, 0.0
        %v3466 = vmax.f32 %v3386, 0.0
        %v3467 = vmax.f32 %v3387, 0.0
        %v3468 = vmax.f32 %v3388, 0.0
        %v3469 = vmax.f32 %v3389, 0.0
        %v3470 = vmax.f32 %v3390, 0.0
        %v3471 = vmax.f32 %v3391, 0.0
        %v3472 = vmax.f32 %v3392, 0.0
        %v3473 = vmax.f32 %v3393, 0.0
        %v3474 = vmax.f32 %v3394, 0.0
        %v3475 = vmax.f32 %v3395, 0.0
        %v3476 = vmax.f32 %v3396, 0.0
        %v3477 = vmax.f32 %v3397, 0.0
        %v3478 = vmax.f32 %v3398, 0.0
        %v3479 = vmax.f32 %v3399, 0.0
        %v3480 = vmax.f32 %v3400, 0.0
        %3481 = vst [vmem:[#allocation3] sm:$0xff] %v3401
        %3482 = vst [vmem:[#allocation3 + $0x8] sm:$0xff] %v3402
        %3483 = vst [vmem:[#allocation3 + $0x10] sm:$0xff] %v3403
        %3484 = vst [vmem:[#allocation3 + $0x18] sm:$0xff] %v3404
        %3485 = vst [vmem:[#allocation3 + $0x20] sm:$0xff] %v3405
        %3486 = vst [vmem:[#allocation3 + $0x28] sm:$0xff] %v3406
        %3487 = vst [vmem:[#allocation3 + $0x30] sm:$0xff] %v3407
        %3488 = vst [vmem:[#allocation3 + $0x38] sm:$0xff] %v3408
        %3489 = vst [vmem:[#allocation3 + $0x40] sm:$0xff] %v3409
        %3490 = vst [vmem:[#allocation3 + $0x48] sm:$0xff] %v3410
        %3491 = vst [vmem:[#allocation3 + $0x50] sm:$0xff] %v3411
        %3492 = vst [vmem:[#allocation3 + $0x58] sm:$0xff] %v3412
        %3493 = vst [vmem:[#allocation3 + $0x60] sm:$0xff] %v3413
        %3494 = vst [vmem:[#allocation3 + $0x68] sm:$0xff] %v3414
        %3495 = vst [vmem:[#allocation3 + $0x70] sm:$0xff] %v3415
        %3496 = vst [vmem:[#allocation3 + $0x78] sm:$0xff] %v3416
        %3497 = vst [vmem:[#allocation3 + $0x80] sm:$0xff] %v3417
        %3498 = vst [vmem:[#allocation3 + $0x88] sm:$0xff] %v3418
        %3499 = vst [vmem:[#allocation3 + $0x90] sm:$0xff] %v3419
        %3500 = vst [vmem:[#allocation3 + $0x98] sm:$0xff] %v3420
        %3501 = vst [vmem:[#allocation3 + $0xa0] sm:$0xff] %v3421
        %3502 = vst [vmem:[#allocation3 + $0xa8] sm:$0xff] %v3422
        %3503 = vst [vmem:[#allocation3 + $0xb0] sm:$0xff] %v3423
        %3504 = vst [vmem:[#allocation3 + $0xb8] sm:$0xff] %v3424
        %3505 = vst [vmem:[#allocation3 + $0xc0] sm:$0xff] %v3425
        %3506 = vst [vmem:[#allocation3 + $0xc8] sm:$0xff] %v3426
        %3507 = vst [vmem:[#allocation3 + $0xd0] sm:$0xff] %v3427
        %3508 = vst [vmem:[#allocation3 + $0xd8] sm:$0xff] %v3428
        %3509 = vst [vmem:[#allocation3 + $0xe0] sm:$0xff] %v3429
        %3510 = vst [vmem:[#allocation3 + $0xe8] sm:$0xff] %v3430
        %3511 = vst [vmem:[#allocation3 + $0xf0] sm:$0xff] %v3431
        %3512 = vst [vmem:[#allocation3 + $0xf8] sm:$0xff] %v3432
        %3513 = vst [vmem:[#allocation3 + $0x100] sm:$0xff] %v3433
        %3514 = vst [vmem:[#allocation3 + $0x108] sm:$0xff] %v3434
        %3515 = vst [vmem:[#allocation3 + $0x110] sm:$0xff] %v3435
        %3516 = vst [vmem:[#allocation3 + $0x118] sm:$0xff] %v3436
        %3517 = vst [vmem:[#allocation3 + $0x120] sm:$0xff] %v3437
        %3518 = vst [vmem:[#allocation3 + $0x128] sm:$0xff] %v3438
        %3519 = vst [vmem:[#allocation3 + $0x130] sm:$0xff] %v3439
        %3520 = vst [vmem:[#allocation3 + $0x138] sm:$0xff] %v3440
        %3521 = vst [vmem:[#allocation3 + $0x140] sm:$0xff] %v3441
        %3522 = vst [vmem:[#allocation3 + $0x148] sm:$0xff] %v3442
        %3523 = vst [vmem:[#allocation3 + $0x150] sm:$0xff] %v3443
        %3524 = vst [vmem:[#allocation3 + $0x158] sm:$0xff] %v3444
        %3525 = vst [vmem:[#allocation3 + $0x160] sm:$0xff] %v3445
        %3526 = vst [vmem:[#allocation3 + $0x168] sm:$0xff] %v3446
        %3527 = vst [vmem:[#allocation3 + $0x170] sm:$0xff] %v3447
        %3528 = vst [vmem:[#allocation3 + $0x178] sm:$0xff] %v3448
        %3529 = vst [vmem:[#allocation3 + $0x180] sm:$0xff] %v3449
        %3530 = vst [vmem:[#allocation3 + $0x188] sm:$0xff] %v3450
        %3531 = vst [vmem:[#allocation3 + $0x190] sm:$0xff] %v3451
        %3532 = vst [vmem:[#allocation3 + $0x198] sm:$0xff] %v3452
        %3533 = vst [vmem:[#allocation3 + $0x1a0] sm:$0xff] %v3453
        %3534 = vst [vmem:[#allocation3 + $0x1a8] sm:$0xff] %v3454
        %3535 = vst [vmem:[#allocation3 + $0x1b0] sm:$0xff] %v3455
        %3536 = vst [vmem:[#allocation3 + $0x1b8] sm:$0xff] %v3456
        %3537 = vst [vmem:[#allocation3 + $0x1c0] sm:$0xff] %v3457
        %3538 = vst [vmem:[#allocation3 + $0x1c8] sm:$0xff] %v3458
        %3539 = vst [vmem:[#allocation3 + $0x1d0] sm:$0xff] %v3459
        %3540 = vst [vmem:[#allocation3 + $0x1d8] sm:$0xff] %v3460
        %3541 = vst [vmem:[#allocation3 + $0x1e0] sm:$0xff] %v3461
        %3542 = vst [vmem:[#allocation3 + $0x1e8] sm:$0xff] %v3462
        %3543 = vst [vmem:[#allocation3 + $0x1f0] sm:$0xff] %v3463
        %3544 = vst [vmem:[#allocation3 + $0x1f8] sm:$0xff] %v3464
        %3545 = vst [vmem:[#allocation3 + $0x200] sm:$0xff] %v3465
        %3546 = vst [vmem:[#allocation3 + $0x208] sm:$0xff] %v3466
        %3547 = vst [vmem:[#allocation3 + $0x210] sm:$0xff] %v3467
        %3548 = vst [vmem:[#allocation3 + $0x218] sm:$0xff] %v3468
        %3549 = vst [vmem:[#allocation3 + $0x220] sm:$0xff] %v3469
        %3550 = vst [vmem:[#allocation3 + $0x228] sm:$0xff] %v3470
        %3551 = vst [vmem:[#allocation3 + $0x230] sm:$0xff] %v3471
        %3552 = vst [vmem:[#allocation3 + $0x238] sm:$0xff] %v3472
        %3553 = vst [vmem:[#allocation3 + $0x240] sm:$0xff] %v3473
        %3554 = vst [vmem:[#allocation3 + $0x248] sm:$0xff] %v3474
        %3555 = vst [vmem:[#allocation3 + $0x250] sm:$0xff] %v3475
        %3556 = vst [vmem:[#allocation3 + $0x258] sm:$0xff] %v3476
        %3557 = vst [vmem:[#allocation3 + $0x260] sm:$0xff] %v3477
        %3558 = vst [vmem:[#allocation3 + $0x268] sm:$0xff] %v3478
        %3559 = vst [vmem:[#allocation3 + $0x270] sm:$0xff] %v3479
        %3560 = vst [vmem:[#allocation3 + $0x278] sm:$0xff] %v3480
        %v3561 = vld [vmem:[#allocation3] sm:$0xff]
        %v3562 = vld [vmem:[#allocation3 + $0x8] sm:$0xff]
        %v3563 = vld [vmem:[#allocation3 + $0x10] sm:$0xff]
        %v3564 = vld [vmem:[#allocation3 + $0x18] sm:$0xff]
        %v3565 = vld [vmem:[#allocation3 + $0x20] sm:$0xff]
        %v3566 = vld [vmem:[%s3] sm:$0xff]
        %v3567 = vld [vmem:[%s3 + $0x8] sm:$0xff]
        %v3568 = vld [vmem:[%s3 + $0x10] sm:$0xff]
        %v3569 = vld [vmem:[%s3 + $0x18] sm:$0xff]
        %v3570 = vld [vmem:[%s3 + $0x20] sm:$0xff]
        %v3571 = vld [vmem:[%s3 + $0x28] sm:$0xff]
        %v3572 = vld [vmem:[%s3 + $0x30] sm:$0xff]
        %v3573 = vld [vmem:[%s3 + $0x38] sm:$0xff]
        %v3574 = vld [vmem:[%s3 + $0x40] sm:$0xff]
        %v3575 = vld [vmem:[%s3 + $0x48] sm:$0xff]
        %v3576 = vld [vmem:[%s3 + $0x50] sm:$0xff]
        %v3577 = vld [vmem:[%s3 + $0x58] sm:$0xff]
        %v3578 = vld [vmem:[%s3 + $0x60] sm:$0xff]
        %v3579 = vld [vmem:[%s3 + $0x68] sm:$0xff]
        %v3580 = vld [vmem:[%s3 + $0x70] sm:$0xff]
        %v3581 = vld [vmem:[%s3 + $0x78] sm:$0xff]
        %v3582 = vld [vmem:[%s3 + $0x80] sm:$0xff]
        %v3583 = vld [vmem:[%s3 + $0x88] sm:$0xff]
        %v3584 = vld [vmem:[%s3 + $0x90] sm:$0xff]
        %v3585 = vld [vmem:[%s3 + $0x98] sm:$0xff]
        %v3586 = vld [vmem:[%s3 + $0xa0] sm:$0xff]
        %v3587 = vld [vmem:[%s3 + $0xa8] sm:$0xff]
        %v3588 = vld [vmem:[%s3 + $0xb0] sm:$0xff]
        %v3589 = vld [vmem:[%s3 + $0xb8] sm:$0xff]
        %v3590 = vld [vmem:[%s3 + $0xc0] sm:$0xff]
        %v3591 = vld [vmem:[%s3 + $0xc8] sm:$0xff]
        %v3592 = vld [vmem:[%s3 + $0xd0] sm:$0xff]
        %v3593 = vld [vmem:[%s3 + $0xd8] sm:$0xff]
        %v3594 = vld [vmem:[%s3 + $0xe0] sm:$0xff]
        %v3595 = vld [vmem:[%s3 + $0xe8] sm:$0xff]
        %v3596 = vld [vmem:[%s3 + $0xf0] sm:$0xff]
        %v3597 = vld [vmem:[%s3 + $0xf8] sm:$0xff]
        %v3598 = vld [vmem:[%s3 + $0x100] sm:$0xff]
        %v3599 = vld [vmem:[%s3 + $0x108] sm:$0xff]
        %v3600 = vld [vmem:[%s3 + $0x110] sm:$0xff]
        %v3601 = vld [vmem:[%s3 + $0x118] sm:$0xff]
        %v3602 = vld [vmem:[%s3 + $0x120] sm:$0xff]
        %v3603 = vld [vmem:[%s3 + $0x128] sm:$0xff]
        %v3604 = vld [vmem:[%s3 + $0x130] sm:$0xff]
        %v3605 = vld [vmem:[%s3 + $0x138] sm:$0xff]
        %v3606 = vld [vmem:[%s3 + $0x140] sm:$0xff]
        %v3607 = vld [vmem:[%s3 + $0x148] sm:$0xff]
        %v3608 = vld [vmem:[%s3 + $0x150] sm:$0xff]
        %v3609 = vld [vmem:[%s3 + $0x158] sm:$0xff]
        %v3610 = vld [vmem:[%s3 + $0x160] sm:$0xff]
        %v3611 = vld [vmem:[%s3 + $0x168] sm:$0xff]
        %v3612 = vld [vmem:[%s3 + $0x170] sm:$0xff]
        %v3613 = vld [vmem:[%s3 + $0x178] sm:$0xff]
        %v3614 = vld [vmem:[%s3 + $0x180] sm:$0xff]
        %v3615 = vld [vmem:[%s3 + $0x188] sm:$0xff]
        %v3616 = vld [vmem:[%s3 + $0x190] sm:$0xff]
        %v3617 = vld [vmem:[%s3 + $0x198] sm:$0xff]
        %v3618 = vld [vmem:[%s3 + $0x1a0] sm:$0xff]
        %v3619 = vld [vmem:[%s3 + $0x1a8] sm:$0xff]
        %v3620 = vld [vmem:[%s3 + $0x1b0] sm:$0xff]
        %v3621 = vld [vmem:[%s3 + $0x1b8] sm:$0xff]
        %v3622 = vld [vmem:[%s3 + $0x1c0] sm:$0xff]
        %v3623 = vld [vmem:[%s3 + $0x1c8] sm:$0xff]
        %v3624 = vld [vmem:[%s3 + $0x1d0] sm:$0xff]
        %v3625 = vld [vmem:[%s3 + $0x1d8] sm:$0xff]
        %v3626 = vld [vmem:[%s3 + $0x1e0] sm:$0xff]
        %v3627 = vld [vmem:[%s3 + $0x1e8] sm:$0xff]
        %v3628 = vld [vmem:[%s3 + $0x1f0] sm:$0xff]
        %v3629 = vld [vmem:[%s3 + $0x1f8] sm:$0xff]
        %v3630 = vld [vmem:[%s3 + $0x200] sm:$0xff]
        %v3631 = vld [vmem:[%s3 + $0x208] sm:$0xff]
        %v3632 = vld [vmem:[%s3 + $0x210] sm:$0xff]
        %v3633 = vld [vmem:[%s3 + $0x218] sm:$0xff]
        %v3634 = vld [vmem:[%s3 + $0x220] sm:$0xff]
        %v3635 = vld [vmem:[%s3 + $0x228] sm:$0xff]
        %v3636 = vld [vmem:[%s3 + $0x230] sm:$0xff]
        %v3637 = vld [vmem:[%s3 + $0x238] sm:$0xff]
        %v3638 = vld [vmem:[%s3 + $0x240] sm:$0xff]
        %v3639 = vld [vmem:[%s3 + $0x248] sm:$0xff]
        %v3640 = vld [vmem:[%s3 + $0x250] sm:$0xff]
        %v3641 = vld [vmem:[%s3 + $0x258] sm:$0xff]
        %v3642 = vld [vmem:[%s3 + $0x260] sm:$0xff]
        %v3643 = vld [vmem:[%s3 + $0x268] sm:$0xff]
        %v3644 = vld [vmem:[%s3 + $0x270] sm:$0xff]
        %v3645 = vld [vmem:[%s3 + $0x278] sm:$0xff]
        %v3646 = vld [vmem:[#allocation3 + $0x28] sm:$0xff]
        %v3647 = vld [vmem:[#allocation3 + $0x30] sm:$0xff]
        %v3648 = vld [vmem:[#allocation3 + $0x38] sm:$0xff]
        %v3649 = vld [vmem:[#allocation3 + $0x40] sm:$0xff]
        %v3650 = vld [vmem:[#allocation3 + $0x48] sm:$0xff]
        %s3651 = scalar_lea.vmem %s3, 640
        %v3652 = vld [vmem:[%s3651] sm:$0xff]
        %v3653 = vld [vmem:[%s3651 + $0x8] sm:$0xff]
        %v3654 = vld [vmem:[%s3651 + $0x10] sm:$0xff]
        %v3655 = vld [vmem:[%s3651 + $0x18] sm:$0xff]
        %v3656 = vld [vmem:[%s3651 + $0x20] sm:$0xff]
        %v3657 = vld [vmem:[%s3651 + $0x28] sm:$0xff]
        %v3658 = vld [vmem:[%s3651 + $0x30] sm:$0xff]
        %v3659 = vld [vmem:[%s3651 + $0x38] sm:$0xff]
        %v3660 = vld [vmem:[%s3651 + $0x40] sm:$0xff]
        %v3661 = vld [vmem:[%s3651 + $0x48] sm:$0xff]
        %v3662 = vld [vmem:[%s3651 + $0x50] sm:$0xff]
        %v3663 = vld [vmem:[%s3651 + $0x58] sm:$0xff]
        %v3664 = vld [vmem:[%s3651 + $0x60] sm:$0xff]
        %v3665 = vld [vmem:[%s3651 + $0x68] sm:$0xff]
        %v3666 = vld [vmem:[%s3651 + $0x70] sm:$0xff]
        %v3667 = vld [vmem:[%s3651 + $0x78] sm:$0xff]
        %v3668 = vld [vmem:[%s3651 + $0x80] sm:$0xff]
        %v3669 = vld [vmem:[%s3651 + $0x88] sm:$0xff]
        %v3670 = vld [vmem:[%s3651 + $0x90] sm:$0xff]
        %v3671 = vld [vmem:[%s3651 + $0x98] sm:$0xff]
        %v3672 = vld [vmem:[%s3651 + $0xa0] sm:$0xff]
        %v3673 = vld [vmem:[%s3651 + $0xa8] sm:$0xff]
        %v3674 = vld [vmem:[%s3651 + $0xb0] sm:$0xff]
        %v3675 = vld [vmem:[%s3651 + $0xb8] sm:$0xff]
        %v3676 = vld [vmem:[%s3651 + $0xc0] sm:$0xff]
        %v3677 = vld [vmem:[%s3651 + $0xc8] sm:$0xff]
        %v3678 = vld [vmem:[%s3651 + $0xd0] sm:$0xff]
        %v3679 = vld [vmem:[%s3651 + $0xd8] sm:$0xff]
        %v3680 = vld [vmem:[%s3651 + $0xe0] sm:$0xff]
        %v3681 = vld [vmem:[%s3651 + $0xe8] sm:$0xff]
        %v3682 = vld [vmem:[%s3651 + $0xf0] sm:$0xff]
        %v3683 = vld [vmem:[%s3651 + $0xf8] sm:$0xff]
        %v3684 = vld [vmem:[%s3651 + $0x100] sm:$0xff]
        %v3685 = vld [vmem:[%s3651 + $0x108] sm:$0xff]
        %v3686 = vld [vmem:[%s3651 + $0x110] sm:$0xff]
        %v3687 = vld [vmem:[%s3651 + $0x118] sm:$0xff]
        %v3688 = vld [vmem:[%s3651 + $0x120] sm:$0xff]
        %v3689 = vld [vmem:[%s3651 + $0x128] sm:$0xff]
        %v3690 = vld [vmem:[%s3651 + $0x130] sm:$0xff]
        %v3691 = vld [vmem:[%s3651 + $0x138] sm:$0xff]
        %v3692 = vld [vmem:[%s3651 + $0x140] sm:$0xff]
        %v3693 = vld [vmem:[%s3651 + $0x148] sm:$0xff]
        %v3694 = vld [vmem:[%s3651 + $0x150] sm:$0xff]
        %v3695 = vld [vmem:[%s3651 + $0x158] sm:$0xff]
        %v3696 = vld [vmem:[%s3651 + $0x160] sm:$0xff]
        %v3697 = vld [vmem:[%s3651 + $0x168] sm:$0xff]
        %v3698 = vld [vmem:[%s3651 + $0x170] sm:$0xff]
        %v3699 = vld [vmem:[%s3651 + $0x178] sm:$0xff]
        %v3700 = vld [vmem:[%s3651 + $0x180] sm:$0xff]
        %v3701 = vld [vmem:[%s3651 + $0x188] sm:$0xff]
        %v3702 = vld [vmem:[%s3651 + $0x190] sm:$0xff]
        %v3703 = vld [vmem:[%s3651 + $0x198] sm:$0xff]
        %v3704 = vld [vmem:[%s3651 + $0x1a0] sm:$0xff]
        %v3705 = vld [vmem:[%s3651 + $0x1a8] sm:$0xff]
        %v3706 = vld [vmem:[%s3651 + $0x1b0] sm:$0xff]
        %v3707 = vld [vmem:[%s3651 + $0x1b8] sm:$0xff]
        %v3708 = vld [vmem:[%s3651 + $0x1c0] sm:$0xff]
        %v3709 = vld [vmem:[%s3651 + $0x1c8] sm:$0xff]
        %v3710 = vld [vmem:[%s3651 + $0x1d0] sm:$0xff]
        %v3711 = vld [vmem:[%s3651 + $0x1d8] sm:$0xff]
        %v3712 = vld [vmem:[%s3651 + $0x1e0] sm:$0xff]
        %v3713 = vld [vmem:[%s3651 + $0x1e8] sm:$0xff]
        %v3714 = vld [vmem:[%s3651 + $0x1f0] sm:$0xff]
        %v3715 = vld [vmem:[%s3651 + $0x1f8] sm:$0xff]
        %v3716 = vld [vmem:[%s3651 + $0x200] sm:$0xff]
        %v3717 = vld [vmem:[%s3651 + $0x208] sm:$0xff]
        %v3718 = vld [vmem:[%s3651 + $0x210] sm:$0xff]
        %v3719 = vld [vmem:[%s3651 + $0x218] sm:$0xff]
        %v3720 = vld [vmem:[%s3651 + $0x220] sm:$0xff]
        %v3721 = vld [vmem:[%s3651 + $0x228] sm:$0xff]
        %v3722 = vld [vmem:[%s3651 + $0x230] sm:$0xff]
        %v3723 = vld [vmem:[%s3651 + $0x238] sm:$0xff]
        %v3724 = vld [vmem:[%s3651 + $0x240] sm:$0xff]
        %v3725 = vld [vmem:[%s3651 + $0x248] sm:$0xff]
        %v3726 = vld [vmem:[%s3651 + $0x250] sm:$0xff]
        %v3727 = vld [vmem:[%s3651 + $0x258] sm:$0xff]
        %v3728 = vld [vmem:[%s3651 + $0x260] sm:$0xff]
        %v3729 = vld [vmem:[%s3651 + $0x268] sm:$0xff]
        %v3730 = vld [vmem:[%s3651 + $0x270] sm:$0xff]
        %v3731 = vld [vmem:[%s3651 + $0x278] sm:$0xff]
        %3732 = vmatpush.msra.mxu0 %v3667
        %3733 = vmatpush.msra.mxu0 %v3666
        %3734 = vmatpush.msra.mxu0 %v3665
        %3735 = vmatpush.msra.mxu0 %v3664
        %3736 = vmatpush.msra.mxu0 %v3663
        %3737 = vmatpush.msra.mxu0 %v3662
        %3738 = vmatpush.msra.mxu0 %v3661
        %3739 = vmatpush.msra.mxu0 %v3660
        %3740 = vmatpush.msra.mxu0 %v3659
        %3741 = vmatpush.msra.mxu0 %v3658
        %3742 = vmatpush.msra.mxu0 %v3657
        %3743 = vmatpush.msra.mxu0 %v3656
        %3744 = vmatpush.msra.mxu0 %v3655
        %3745 = vmatpush.msra.mxu0 %v3654
        %3746 = vmatpush.msra.mxu0 %v3653
        %3747 = vmatpush.msra.mxu0 %v3652
        %3748 = vmatmul.f32.gmra.mxu0 %v3646
        %v3749 = vpop.f32.mrf.mxu0
        %v3750 = vadd.f32 0.0, %v3749
        %3751 = vdwg.mxu0
        %3752 = vmatpush.msra.mxu0 %v3683
        %3753 = vmatpush.msra.mxu0 %v3682
        %3754 = vmatpush.msra.mxu0 %v3681
        %3755 = vmatpush.msra.mxu0 %v3680
        %3756 = vmatpush.msra.mxu0 %v3679
        %3757 = vmatpush.msra.mxu0 %v3678
        %3758 = vmatpush.msra.mxu0 %v3677
        %3759 = vmatpush.msra.mxu0 %v3676
        %3760 = vmatpush.msra.mxu0 %v3675
        %3761 = vmatpush.msra.mxu0 %v3674
        %3762 = vmatpush.msra.mxu0 %v3673
        %3763 = vmatpush.msra.mxu0 %v3672
        %3764 = vmatpush.msra.mxu0 %v3671
        %3765 = vmatpush.msra.mxu0 %v3670
        %3766 = vmatpush.msra.mxu0 %v3669
        %3767 = vmatpush.msra.mxu0 %v3668
        %3768 = vmatmul.f32.gmra.mxu0 %v3647
        %v3769 = vpop.f32.mrf.mxu0
        %v3770 = vadd.f32 %v3750, %v3769
        %3771 = vdwg.mxu0
        %3772 = vmatpush.msra.mxu0 %v3699
        %3773 = vmatpush.msra.mxu0 %v3698
        %3774 = vmatpush.msra.mxu0 %v3697
        %3775 = vmatpush.msra.mxu0 %v3696
        %3776 = vmatpush.msra.mxu0 %v3695
        %3777 = vmatpush.msra.mxu0 %v3694
        %3778 = vmatpush.msra.mxu0 %v3693
        %3779 = vmatpush.msra.mxu0 %v3692
        %3780 = vmatpush.msra.mxu0 %v3691
        %3781 = vmatpush.msra.mxu0 %v3690
        %3782 = vmatpush.msra.mxu0 %v3689
        %3783 = vmatpush.msra.mxu0 %v3688
        %3784 = vmatpush.msra.mxu0 %v3687
        %3785 = vmatpush.msra.mxu0 %v3686
        %3786 = vmatpush.msra.mxu0 %v3685
        %3787 = vmatpush.msra.mxu0 %v3684
        %3788 = vmatmul.f32.gmra.mxu0 %v3648
        %v3789 = vpop.f32.mrf.mxu0
        %v3790 = vadd.f32 %v3770, %v3789
        %3791 = vdwg.mxu0
        %3792 = vmatpush.msra.mxu0 %v3715
        %3793 = vmatpush.msra.mxu0 %v3714
        %3794 = vmatpush.msra.mxu0 %v3713
        %3795 = vmatpush.msra.mxu0 %v3712
        %3796 = vmatpush.msra.mxu0 %v3711
        %3797 = vmatpush.msra.mxu0 %v3710
        %3798 = vmatpush.msra.mxu0 %v3709
        %3799 = vmatpush.msra.mxu0 %v3708
        %3800 = vmatpush.msra.mxu0 %v3707
        %3801 = vmatpush.msra.mxu0 %v3706
        %3802 = vmatpush.msra.mxu0 %v3705
        %3803 = vmatpush.msra.mxu0 %v3704
        %3804 = vmatpush.msra.mxu0 %v3703
        %3805 = vmatpush.msra.mxu0 %v3702
        %3806 = vmatpush.msra.mxu0 %v3701
        %3807 = vmatpush.msra.mxu0 %v3700
        %3808 = vmatmul.f32.gmra.mxu0 %v3649
        %v3809 = vpop.f32.mrf.mxu0
        %v3810 = vadd.f32 %v3790, %v3809
        %3811 = vdwg.mxu0
        %3812 = vmatpush.msra.mxu0 %v3731
        %3813 = vmatpush.msra.mxu0 %v3730
        %3814 = vmatpush.msra.mxu0 %v3729
        %3815 = vmatpush.msra.mxu0 %v3728
        %3816 = vmatpush.msra.mxu0 %v3727
        %3817 = vmatpush.msra.mxu0 %v3726
        %3818 = vmatpush.msra.mxu0 %v3725
        %3819 = vmatpush.msra.mxu0 %v3724
        %3820 = vmatpush.msra.mxu0 %v3723
        %3821 = vmatpush.msra.mxu0 %v3722
        %3822 = vmatpush.msra.mxu0 %v3721
        %3823 = vmatpush.msra.mxu0 %v3720
        %3824 = vmatpush.msra.mxu0 %v3719
        %3825 = vmatpush.msra.mxu0 %v3718
        %3826 = vmatpush.msra.mxu0 %v3717
        %3827 = vmatpush.msra.mxu0 %v3716
        %3828 = vmatmul.f32.gmra.mxu0 %v3650
        %v3829 = vpop.f32.mrf.mxu0
        %v3830 = vadd.f32 %v3810, %v3829
        %3831 = vdwg.mxu0
        %3832 = vmatpush.msra.mxu0 %v3581
        %3833 = vmatpush.msra.mxu0 %v3580
        %3834 = vmatpush.msra.mxu0 %v3579
        %3835 = vmatpush.msra.mxu0 %v3578
        %3836 = vmatpush.msra.mxu0 %v3577
        %3837 = vmatpush.msra.mxu0 %v3576
        %3838 = vmatpush.msra.mxu0 %v3575
        %3839 = vmatpush.msra.mxu0 %v3574
        %3840 = vmatpush.msra.mxu0 %v3573
        %3841 = vmatpush.msra.mxu0 %v3572
        %3842 = vmatpush.msra.mxu0 %v3571
        %3843 = vmatpush.msra.mxu0 %v3570
        %3844 = vmatpush.msra.mxu0 %v3569
        %3845 = vmatpush.msra.mxu0 %v3568
        %3846 = vmatpush.msra.mxu0 %v3567
        %3847 = vmatpush.msra.mxu0 %v3566
        %3848 = vmatmul.f32.gmra.mxu0 %v3561
        %v3849 = vpop.f32.mrf.mxu0
        %v3850 = vadd.f32 %v3830, %v3849
        %3851 = vdwg.mxu0
        %3852 = vmatpush.msra.mxu0 %v3597
        %3853 = vmatpush.msra.mxu0 %v3596
        %3854 = vmatpush.msra.mxu0 %v3595
        %3855 = vmatpush.msra.mxu0 %v3594
        %3856 = vmatpush.msra.mxu0 %v3593
        %3857 = vmatpush.msra.mxu0 %v3592
        %3858 = vmatpush.msra.mxu0 %v3591
        %3859 = vmatpush.msra.mxu0 %v3590
        %3860 = vmatpush.msra.mxu0 %v3589
        %3861 = vmatpush.msra.mxu0 %v3588
        %3862 = vmatpush.msra.mxu0 %v3587
        %3863 = vmatpush.msra.mxu0 %v3586
        %3864 = vmatpush.msra.mxu0 %v3585
        %3865 = vmatpush.msra.mxu0 %v3584
        %3866 = vmatpush.msra.mxu0 %v3583
        %3867 = vmatpush.msra.mxu0 %v3582
        %3868 = vmatmul.f32.gmra.mxu0 %v3562
        %v3869 = vpop.f32.mrf.mxu0
        %v3870 = vadd.f32 %v3850, %v3869
        %3871 = vdwg.mxu0
        %3872 = vmatpush.msra.mxu0 %v3613
        %3873 = vmatpush.msra.mxu0 %v3612
        %3874 = vmatpush.msra.mxu0 %v3611
        %3875 = vmatpush.msra.mxu0 %v3610
        %3876 = vmatpush.msra.mxu0 %v3609
        %3877 = vmatpush.msra.mxu0 %v3608
        %3878 = vmatpush.msra.mxu0 %v3607
        %3879 = vmatpush.msra.mxu0 %v3606
        %3880 = vmatpush.msra.mxu0 %v3605
        %3881 = vmatpush.msra.mxu0 %v3604
        %3882 = vmatpush.msra.mxu0 %v3603
        %3883 = vmatpush.msra.mxu0 %v3602
        %3884 = vmatpush.msra.mxu0 %v3601
        %3885 = vmatpush.msra.mxu0 %v3600
        %3886 = vmatpush.msra.mxu0 %v3599
        %3887 = vmatpush.msra.mxu0 %v3598
        %3888 = vmatmul.f32.gmra.mxu0 %v3563
        %v3889 = vpop.f32.mrf.mxu0
        %v3890 = vadd.f32 %v3870, %v3889
        %3891 = vdwg.mxu0
        %3892 = vmatpush.msra.mxu0 %v3629
        %3893 = vmatpush.msra.mxu0 %v3628
        %3894 = vmatpush.msra.mxu0 %v3627
        %3895 = vmatpush.msra.mxu0 %v3626
        %3896 = vmatpush.msra.mxu0 %v3625
        %3897 = vmatpush.msra.mxu0 %v3624
        %3898 = vmatpush.msra.mxu0 %v3623
        %3899 = vmatpush.msra.mxu0 %v3622
        %3900 = vmatpush.msra.mxu0 %v3621
        %3901 = vmatpush.msra.mxu0 %v3620
        %3902 = vmatpush.msra.mxu0 %v3619
        %3903 = vmatpush.msra.mxu0 %v3618
        %3904 = vmatpush.msra.mxu0 %v3617
        %3905 = vmatpush.msra.mxu0 %v3616
        %3906 = vmatpush.msra.mxu0 %v3615
        %3907 = vmatpush.msra.mxu0 %v3614
        %3908 = vmatmul.f32.gmra.mxu0 %v3564
        %v3909 = vpop.f32.mrf.mxu0
        %v3910 = vadd.f32 %v3890, %v3909
        %3911 = vdwg.mxu0
        %3912 = vmatpush.msra.mxu0 %v3645
        %3913 = vmatpush.msra.mxu0 %v3644
        %3914 = vmatpush.msra.mxu0 %v3643
        %3915 = vmatpush.msra.mxu0 %v3642
        %3916 = vmatpush.msra.mxu0 %v3641
        %3917 = vmatpush.msra.mxu0 %v3640
        %3918 = vmatpush.msra.mxu0 %v3639
        %3919 = vmatpush.msra.mxu0 %v3638
        %3920 = vmatpush.msra.mxu0 %v3637
        %3921 = vmatpush.msra.mxu0 %v3636
        %3922 = vmatpush.msra.mxu0 %v3635
        %3923 = vmatpush.msra.mxu0 %v3634
        %3924 = vmatpush.msra.mxu0 %v3633
        %3925 = vmatpush.msra.mxu0 %v3632
        %3926 = vmatpush.msra.mxu0 %v3631
        %3927 = vmatpush.msra.mxu0 %v3630
        %3928 = vmatmul.f32.gmra.mxu0 %v3565
        %v3929 = vpop.f32.mrf.mxu0
        %v3930 = vadd.f32 %v3910, %v3929
        %3931 = vdwg.mxu0
        %v3932 = vld [vmem:[#allocation3 + $0x50] sm:$0xff]
        %v3933 = vld [vmem:[#allocation3 + $0x58] sm:$0xff]
        %v3934 = vld [vmem:[#allocation3 + $0x60] sm:$0xff]
        %v3935 = vld [vmem:[#allocation3 + $0x68] sm:$0xff]
        %v3936 = vld [vmem:[#allocation3 + $0x70] sm:$0xff]
        %s3937 = scalar_lea.vmem %s3, 1280
        %v3938 = vld [vmem:[%s3937] sm:$0xff]
        %v3939 = vld [vmem:[%s3937 + $0x8] sm:$0xff]
        %v3940 = vld [vmem:[%s3937 + $0x10] sm:$0xff]
        %v3941 = vld [vmem:[%s3937 + $0x18] sm:$0xff]
        %v3942 = vld [vmem:[%s3937 + $0x20] sm:$0xff]
        %v3943 = vld [vmem:[%s3937 + $0x28] sm:$0xff]
        %v3944 = vld [vmem:[%s3937 + $0x30] sm:$0xff]
        %v3945 = vld [vmem:[%s3937 + $0x38] sm:$0xff]
        %v3946 = vld [vmem:[%s3937 + $0x40] sm:$0xff]
        %v3947 = vld [vmem:[%s3937 + $0x48] sm:$0xff]
        %v3948 = vld [vmem:[%s3937 + $0x50] sm:$0xff]
        %v3949 = vld [vmem:[%s3937 + $0x58] sm:$0xff]
        %v3950 = vld [vmem:[%s3937 + $0x60] sm:$0xff]
        %v3951 = vld [vmem:[%s3937 + $0x68] sm:$0xff]
        %v3952 = vld [vmem:[%s3937 + $0x70] sm:$0xff]
        %v3953 = vld [vmem:[%s3937 + $0x78] sm:$0xff]
        %v3954 = vld [vmem:[%s3937 + $0x80] sm:$0xff]
        %v3955 = vld [vmem:[%s3937 + $0x88] sm:$0xff]
        %v3956 = vld [vmem:[%s3937 + $0x90] sm:$0xff]
        %v3957 = vld [vmem:[%s3937 + $0x98] sm:$0xff]
        %v3958 = vld [vmem:[%s3937 + $0xa0] sm:$0xff]
        %v3959 = vld [vmem:[%s3937 + $0xa8] sm:$0xff]
        %v3960 = vld [vmem:[%s3937 + $0xb0] sm:$0xff]
        %v3961 = vld [vmem:[%s3937 + $0xb8] sm:$0xff]
        %v3962 = vld [vmem:[%s3937 + $0xc0] sm:$0xff]
        %v3963 = vld [vmem:[%s3937 + $0xc8] sm:$0xff]
        %v3964 = vld [vmem:[%s3937 + $0xd0] sm:$0xff]
        %v3965 = vld [vmem:[%s3937 + $0xd8] sm:$0xff]
        %v3966 = vld [vmem:[%s3937 + $0xe0] sm:$0xff]
        %v3967 = vld [vmem:[%s3937 + $0xe8] sm:$0xff]
        %v3968 = vld [vmem:[%s3937 + $0xf0] sm:$0xff]
        %v3969 = vld [vmem:[%s3937 + $0xf8] sm:$0xff]
        %v3970 = vld [vmem:[%s3937 + $0x100] sm:$0xff]
        %v3971 = vld [vmem:[%s3937 + $0x108] sm:$0xff]
        %v3972 = vld [vmem:[%s3937 + $0x110] sm:$0xff]
        %v3973 = vld [vmem:[%s3937 + $0x118] sm:$0xff]
        %v3974 = vld [vmem:[%s3937 + $0x120] sm:$0xff]
        %v3975 = vld [vmem:[%s3937 + $0x128] sm:$0xff]
        %v3976 = vld [vmem:[%s3937 + $0x130] sm:$0xff]
        %v3977 = vld [vmem:[%s3937 + $0x138] sm:$0xff]
        %v3978 = vld [vmem:[%s3937 + $0x140] sm:$0xff]
        %v3979 = vld [vmem:[%s3937 + $0x148] sm:$0xff]
        %v3980 = vld [vmem:[%s3937 + $0x150] sm:$0xff]
        %v3981 = vld [vmem:[%s3937 + $0x158] sm:$0xff]
        %v3982 = vld [vmem:[%s3937 + $0x160] sm:$0xff]
        %v3983 = vld [vmem:[%s3937 + $0x168] sm:$0xff]
        %v3984 = vld [vmem:[%s3937 + $0x170] sm:$0xff]
        %v3985 = vld [vmem:[%s3937 + $0x178] sm:$0xff]
        %v3986 = vld [vmem:[%s3937 + $0x180] sm:$0xff]
        %v3987 = vld [vmem:[%s3937 + $0x188] sm:$0xff]
        %v3988 = vld [vmem:[%s3937 + $0x190] sm:$0xff]
        %v3989 = vld [vmem:[%s3937 + $0x198] sm:$0xff]
        %v3990 = vld [vmem:[%s3937 + $0x1a0] sm:$0xff]
        %v3991 = vld [vmem:[%s3937 + $0x1a8] sm:$0xff]
        %v3992 = vld [vmem:[%s3937 + $0x1b0] sm:$0xff]
        %v3993 = vld [vmem:[%s3937 + $0x1b8] sm:$0xff]
        %v3994 = vld [vmem:[%s3937 + $0x1c0] sm:$0xff]
        %v3995 = vld [vmem:[%s3937 + $0x1c8] sm:$0xff]
        %v3996 = vld [vmem:[%s3937 + $0x1d0] sm:$0xff]
        %v3997 = vld [vmem:[%s3937 + $0x1d8] sm:$0xff]
        %v3998 = vld [vmem:[%s3937 + $0x1e0] sm:$0xff]
        %v3999 = vld [vmem:[%s3937 + $0x1e8] sm:$0xff]
        %v4000 = vld [vmem:[%s3937 + $0x1f0] sm:$0xff]
        %v4001 = vld [vmem:[%s3937 + $0x1f8] sm:$0xff]
        %v4002 = vld [vmem:[%s3937 + $0x200] sm:$0xff]
        %v4003 = vld [vmem:[%s3937 + $0x208] sm:$0xff]
        %v4004 = vld [vmem:[%s3937 + $0x210] sm:$0xff]
        %v4005 = vld [vmem:[%s3937 + $0x218] sm:$0xff]
        %v4006 = vld [vmem:[%s3937 + $0x220] sm:$0xff]
        %v4007 = vld [vmem:[%s3937 + $0x228] sm:$0xff]
        %v4008 = vld [vmem:[%s3937 + $0x230] sm:$0xff]
        %v4009 = vld [vmem:[%s3937 + $0x238] sm:$0xff]
        %v4010 = vld [vmem:[%s3937 + $0x240] sm:$0xff]
        %v4011 = vld [vmem:[%s3937 + $0x248] sm:$0xff]
        %v4012 = vld [vmem:[%s3937 + $0x250] sm:$0xff]
        %v4013 = vld [vmem:[%s3937 + $0x258] sm:$0xff]
        %v4014 = vld [vmem:[%s3937 + $0x260] sm:$0xff]
        %v4015 = vld [vmem:[%s3937 + $0x268] sm:$0xff]
        %v4016 = vld [vmem:[%s3937 + $0x270] sm:$0xff]
        %v4017 = vld [vmem:[%s3937 + $0x278] sm:$0xff]
        %4018 = vmatpush.msra.mxu0 %v3953
        %4019 = vmatpush.msra.mxu0 %v3952
        %4020 = vmatpush.msra.mxu0 %v3951
        %4021 = vmatpush.msra.mxu0 %v3950
        %4022 = vmatpush.msra.mxu0 %v3949
        %4023 = vmatpush.msra.mxu0 %v3948
        %4024 = vmatpush.msra.mxu0 %v3947
        %4025 = vmatpush.msra.mxu0 %v3946
        %4026 = vmatpush.msra.mxu0 %v3945
        %4027 = vmatpush.msra.mxu0 %v3944
        %4028 = vmatpush.msra.mxu0 %v3943
        %4029 = vmatpush.msra.mxu0 %v3942
        %4030 = vmatpush.msra.mxu0 %v3941
        %4031 = vmatpush.msra.mxu0 %v3940
        %4032 = vmatpush.msra.mxu0 %v3939
        %4033 = vmatpush.msra.mxu0 %v3938
        %4034 = vmatmul.f32.gmra.mxu0 %v3932
        %v4035 = vpop.f32.mrf.mxu0
        %v4036 = vadd.f32 0.0, %v4035
        %4037 = vdwg.mxu0
        %4038 = vmatpush.msra.mxu0 %v3969
        %4039 = vmatpush.msra.mxu0 %v3968
        %4040 = vmatpush.msra.mxu0 %v3967
        %4041 = vmatpush.msra.mxu0 %v3966
        %4042 = vmatpush.msra.mxu0 %v3965
        %4043 = vmatpush.msra.mxu0 %v3964
        %4044 = vmatpush.msra.mxu0 %v3963
        %4045 = vmatpush.msra.mxu0 %v3962
        %4046 = vmatpush.msra.mxu0 %v3961
        %4047 = vmatpush.msra.mxu0 %v3960
        %4048 = vmatpush.msra.mxu0 %v3959
        %4049 = vmatpush.msra.mxu0 %v3958
        %4050 = vmatpush.msra.mxu0 %v3957
        %4051 = vmatpush.msra.mxu0 %v3956
        %4052 = vmatpush.msra.mxu0 %v3955
        %4053 = vmatpush.msra.mxu0 %v3954
        %4054 = vmatmul.f32.gmra.mxu0 %v3933
        %v4055 = vpop.f32.mrf.mxu0
        %v4056 = vadd.f32 %v4036, %v4055
        %4057 = vdwg.mxu0
        %4058 = vmatpush.msra.mxu0 %v3985
        %4059 = vmatpush.msra.mxu0 %v3984
        %4060 = vmatpush.msra.mxu0 %v3983
        %4061 = vmatpush.msra.mxu0 %v3982
        %4062 = vmatpush.msra.mxu0 %v3981
        %4063 = vmatpush.msra.mxu0 %v3980
        %4064 = vmatpush.msra.mxu0 %v3979
        %4065 = vmatpush.msra.mxu0 %v3978
        %4066 = vmatpush.msra.mxu0 %v3977
        %4067 = vmatpush.msra.mxu0 %v3976
        %4068 = vmatpush.msra.mxu0 %v3975
        %4069 = vmatpush.msra.mxu0 %v3974
        %4070 = vmatpush.msra.mxu0 %v3973
        %4071 = vmatpush.msra.mxu0 %v3972
        %4072 = vmatpush.msra.mxu0 %v3971
        %4073 = vmatpush.msra.mxu0 %v3970
        %4074 = vmatmul.f32.gmra.mxu0 %v3934
        %v4075 = vpop.f32.mrf.mxu0
        %v4076 = vadd.f32 %v4056, %v4075
        %4077 = vdwg.mxu0
        %4078 = vmatpush.msra.mxu0 %v4001
        %4079 = vmatpush.msra.mxu0 %v4000
        %4080 = vmatpush.msra.mxu0 %v3999
        %4081 = vmatpush.msra.mxu0 %v3998
        %4082 = vmatpush.msra.mxu0 %v3997
        %4083 = vmatpush.msra.mxu0 %v3996
        %4084 = vmatpush.msra.mxu0 %v3995
        %4085 = vmatpush.msra.mxu0 %v3994
        %4086 = vmatpush.msra.mxu0 %v3993
        %4087 = vmatpush.msra.mxu0 %v3992
        %4088 = vmatpush.msra.mxu0 %v3991
        %4089 = vmatpush.msra.mxu0 %v3990
        %4090 = vmatpush.msra.mxu0 %v3989
        %4091 = vmatpush.msra.mxu0 %v3988
        %4092 = vmatpush.msra.mxu0 %v3987
        %4093 = vmatpush.msra.mxu0 %v3986
        %4094 = vmatmul.f32.gmra.mxu0 %v3935
        %v4095 = vpop.f32.mrf.mxu0
        %v4096 = vadd.f32 %v4076, %v4095
        %4097 = vdwg.mxu0
        %4098 = vmatpush.msra.mxu0 %v4017
        %4099 = vmatpush.msra.mxu0 %v4016
        %4100 = vmatpush.msra.mxu0 %v4015
        %4101 = vmatpush.msra.mxu0 %v4014
        %4102 = vmatpush.msra.mxu0 %v4013
        %4103 = vmatpush.msra.mxu0 %v4012
        %4104 = vmatpush.msra.mxu0 %v4011
        %4105 = vmatpush.msra.mxu0 %v4010
        %4106 = vmatpush.msra.mxu0 %v4009
        %4107 = vmatpush.msra.mxu0 %v4008
        %4108 = vmatpush.msra.mxu0 %v4007
        %4109 = vmatpush.msra.mxu0 %v4006
        %4110 = vmatpush.msra.mxu0 %v4005
        %4111 = vmatpush.msra.mxu0 %v4004
        %4112 = vmatpush.msra.mxu0 %v4003
        %4113 = vmatpush.msra.mxu0 %v4002
        %4114 = vmatmul.f32.gmra.mxu0 %v3936
        %v4115 = vpop.f32.mrf.mxu0
        %v4116 = vadd.f32 %v4096, %v4115
        %4117 = vdwg.mxu0
        %v4118 = vadd.f32 %v3930, %v4116
        %v4119 = vld [vmem:[#allocation3 + $0x78] sm:$0xff]
        %v4120 = vld [vmem:[#allocation3 + $0x80] sm:$0xff]
        %v4121 = vld [vmem:[#allocation3 + $0x88] sm:$0xff]
        %v4122 = vld [vmem:[#allocation3 + $0x90] sm:$0xff]
        %v4123 = vld [vmem:[#allocation3 + $0x98] sm:$0xff]
        %s4124 = scalar_lea.vmem %s3, 1920
        %v4125 = vld [vmem:[%s4124] sm:$0xff]
        %v4126 = vld [vmem:[%s4124 + $0x8] sm:$0xff]
        %v4127 = vld [vmem:[%s4124 + $0x10] sm:$0xff]
        %v4128 = vld [vmem:[%s4124 + $0x18] sm:$0xff]
        %v4129 = vld [vmem:[%s4124 + $0x20] sm:$0xff]
        %v4130 = vld [vmem:[%s4124 + $0x28] sm:$0xff]
        %v4131 = vld [vmem:[%s4124 + $0x30] sm:$0xff]
        %v4132 = vld [vmem:[%s4124 + $0x38] sm:$0xff]
        %v4133 = vld [vmem:[%s4124 + $0x40] sm:$0xff]
        %v4134 = vld [vmem:[%s4124 + $0x48] sm:$0xff]
        %v4135 = vld [vmem:[%s4124 + $0x50] sm:$0xff]
        %v4136 = vld [vmem:[%s4124 + $0x58] sm:$0xff]
        %v4137 = vld [vmem:[%s4124 + $0x60] sm:$0xff]
        %v4138 = vld [vmem:[%s4124 + $0x68] sm:$0xff]
        %v4139 = vld [vmem:[%s4124 + $0x70] sm:$0xff]
        %v4140 = vld [vmem:[%s4124 + $0x78] sm:$0xff]
        %v4141 = vld [vmem:[%s4124 + $0x80] sm:$0xff]
        %v4142 = vld [vmem:[%s4124 + $0x88] sm:$0xff]
        %v4143 = vld [vmem:[%s4124 + $0x90] sm:$0xff]
        %v4144 = vld [vmem:[%s4124 + $0x98] sm:$0xff]
        %v4145 = vld [vmem:[%s4124 + $0xa0] sm:$0xff]
        %v4146 = vld [vmem:[%s4124 + $0xa8] sm:$0xff]
        %v4147 = vld [vmem:[%s4124 + $0xb0] sm:$0xff]
        %v4148 = vld [vmem:[%s4124 + $0xb8] sm:$0xff]
        %v4149 = vld [vmem:[%s4124 + $0xc0] sm:$0xff]
        %v4150 = vld [vmem:[%s4124 + $0xc8] sm:$0xff]
        %v4151 = vld [vmem:[%s4124 + $0xd0] sm:$0xff]
        %v4152 = vld [vmem:[%s4124 + $0xd8] sm:$0xff]
        %v4153 = vld [vmem:[%s4124 + $0xe0] sm:$0xff]
        %v4154 = vld [vmem:[%s4124 + $0xe8] sm:$0xff]
        %v4155 = vld [vmem:[%s4124 + $0xf0] sm:$0xff]
        %v4156 = vld [vmem:[%s4124 + $0xf8] sm:$0xff]
        %v4157 = vld [vmem:[%s4124 + $0x100] sm:$0xff]
        %v4158 = vld [vmem:[%s4124 + $0x108] sm:$0xff]
        %v4159 = vld [vmem:[%s4124 + $0x110] sm:$0xff]
        %v4160 = vld [vmem:[%s4124 + $0x118] sm:$0xff]
        %v4161 = vld [vmem:[%s4124 + $0x120] sm:$0xff]
        %v4162 = vld [vmem:[%s4124 + $0x128] sm:$0xff]
        %v4163 = vld [vmem:[%s4124 + $0x130] sm:$0xff]
        %v4164 = vld [vmem:[%s4124 + $0x138] sm:$0xff]
        %v4165 = vld [vmem:[%s4124 + $0x140] sm:$0xff]
        %v4166 = vld [vmem:[%s4124 + $0x148] sm:$0xff]
        %v4167 = vld [vmem:[%s4124 + $0x150] sm:$0xff]
        %v4168 = vld [vmem:[%s4124 + $0x158] sm:$0xff]
        %v4169 = vld [vmem:[%s4124 + $0x160] sm:$0xff]
        %v4170 = vld [vmem:[%s4124 + $0x168] sm:$0xff]
        %v4171 = vld [vmem:[%s4124 + $0x170] sm:$0xff]
        %v4172 = vld [vmem:[%s4124 + $0x178] sm:$0xff]
        %v4173 = vld [vmem:[%s4124 + $0x180] sm:$0xff]
        %v4174 = vld [vmem:[%s4124 + $0x188] sm:$0xff]
        %v4175 = vld [vmem:[%s4124 + $0x190] sm:$0xff]
        %v4176 = vld [vmem:[%s4124 + $0x198] sm:$0xff]
        %v4177 = vld [vmem:[%s4124 + $0x1a0] sm:$0xff]
        %v4178 = vld [vmem:[%s4124 + $0x1a8] sm:$0xff]
        %v4179 = vld [vmem:[%s4124 + $0x1b0] sm:$0xff]
        %v4180 = vld [vmem:[%s4124 + $0x1b8] sm:$0xff]
        %v4181 = vld [vmem:[%s4124 + $0x1c0] sm:$0xff]
        %v4182 = vld [vmem:[%s4124 + $0x1c8] sm:$0xff]
        %v4183 = vld [vmem:[%s4124 + $0x1d0] sm:$0xff]
        %v4184 = vld [vmem:[%s4124 + $0x1d8] sm:$0xff]
        %v4185 = vld [vmem:[%s4124 + $0x1e0] sm:$0xff]
        %v4186 = vld [vmem:[%s4124 + $0x1e8] sm:$0xff]
        %v4187 = vld [vmem:[%s4124 + $0x1f0] sm:$0xff]
        %v4188 = vld [vmem:[%s4124 + $0x1f8] sm:$0xff]
        %v4189 = vld [vmem:[%s4124 + $0x200] sm:$0xff]
        %v4190 = vld [vmem:[%s4124 + $0x208] sm:$0xff]
        %v4191 = vld [vmem:[%s4124 + $0x210] sm:$0xff]
        %v4192 = vld [vmem:[%s4124 + $0x218] sm:$0xff]
        %v4193 = vld [vmem:[%s4124 + $0x220] sm:$0xff]
        %v4194 = vld [vmem:[%s4124 + $0x228] sm:$0xff]
        %v4195 = vld [vmem:[%s4124 + $0x230] sm:$0xff]
        %v4196 = vld [vmem:[%s4124 + $0x238] sm:$0xff]
        %v4197 = vld [vmem:[%s4124 + $0x240] sm:$0xff]
        %v4198 = vld [vmem:[%s4124 + $0x248] sm:$0xff]
        %v4199 = vld [vmem:[%s4124 + $0x250] sm:$0xff]
        %v4200 = vld [vmem:[%s4124 + $0x258] sm:$0xff]
        %v4201 = vld [vmem:[%s4124 + $0x260] sm:$0xff]
        %v4202 = vld [vmem:[%s4124 + $0x268] sm:$0xff]
        %v4203 = vld [vmem:[%s4124 + $0x270] sm:$0xff]
        %v4204 = vld [vmem:[%s4124 + $0x278] sm:$0xff]
        %4205 = vmatpush.msra.mxu0 %v4140
        %4206 = vmatpush.msra.mxu0 %v4139
        %4207 = vmatpush.msra.mxu0 %v4138
        %4208 = vmatpush.msra.mxu0 %v4137
        %4209 = vmatpush.msra.mxu0 %v4136
        %4210 = vmatpush.msra.mxu0 %v4135
        %4211 = vmatpush.msra.mxu0 %v4134
        %4212 = vmatpush.msra.mxu0 %v4133
        %4213 = vmatpush.msra.mxu0 %v4132
        %4214 = vmatpush.msra.mxu0 %v4131
        %4215 = vmatpush.msra.mxu0 %v4130
        %4216 = vmatpush.msra.mxu0 %v4129
        %4217 = vmatpush.msra.mxu0 %v4128
        %4218 = vmatpush.msra.mxu0 %v4127
        %4219 = vmatpush.msra.mxu0 %v4126
        %4220 = vmatpush.msra.mxu0 %v4125
        %4221 = vmatmul.f32.gmra.mxu0 %v4119
        %v4222 = vpop.f32.mrf.mxu0
        %v4223 = vadd.f32 0.0, %v4222
        %4224 = vdwg.mxu0
        %4225 = vmatpush.msra.mxu0 %v4156
        %4226 = vmatpush.msra.mxu0 %v4155
        %4227 = vmatpush.msra.mxu0 %v4154
        %4228 = vmatpush.msra.mxu0 %v4153
        %4229 = vmatpush.msra.mxu0 %v4152
        %4230 = vmatpush.msra.mxu0 %v4151
        %4231 = vmatpush.msra.mxu0 %v4150
        %4232 = vmatpush.msra.mxu0 %v4149
        %4233 = vmatpush.msra.mxu0 %v4148
        %4234 = vmatpush.msra.mxu0 %v4147
        %4235 = vmatpush.msra.mxu0 %v4146
        %4236 = vmatpush.msra.mxu0 %v4145
        %4237 = vmatpush.msra.mxu0 %v4144
        %4238 = vmatpush.msra.mxu0 %v4143
        %4239 = vmatpush.msra.mxu0 %v4142
        %4240 = vmatpush.msra.mxu0 %v4141
        %4241 = vmatmul.f32.gmra.mxu0 %v4120
        %v4242 = vpop.f32.mrf.mxu0
        %v4243 = vadd.f32 %v4223, %v4242
        %4244 = vdwg.mxu0
        %4245 = vmatpush.msra.mxu0 %v4172
        %4246 = vmatpush.msra.mxu0 %v4171
        %4247 = vmatpush.msra.mxu0 %v4170
        %4248 = vmatpush.msra.mxu0 %v4169
        %4249 = vmatpush.msra.mxu0 %v4168
        %4250 = vmatpush.msra.mxu0 %v4167
        %4251 = vmatpush.msra.mxu0 %v4166
        %4252 = vmatpush.msra.mxu0 %v4165
        %4253 = vmatpush.msra.mxu0 %v4164
        %4254 = vmatpush.msra.mxu0 %v4163
        %4255 = vmatpush.msra.mxu0 %v4162
        %4256 = vmatpush.msra.mxu0 %v4161
        %4257 = vmatpush.msra.mxu0 %v4160
        %4258 = vmatpush.msra.mxu0 %v4159
        %4259 = vmatpush.msra.mxu0 %v4158
        %4260 = vmatpush.msra.mxu0 %v4157
        %4261 = vmatmul.f32.gmra.mxu0 %v4121
        %v4262 = vpop.f32.mrf.mxu0
        %v4263 = vadd.f32 %v4243, %v4262
        %4264 = vdwg.mxu0
        %4265 = vmatpush.msra.mxu0 %v4188
        %4266 = vmatpush.msra.mxu0 %v4187
        %4267 = vmatpush.msra.mxu0 %v4186
        %4268 = vmatpush.msra.mxu0 %v4185
        %4269 = vmatpush.msra.mxu0 %v4184
        %4270 = vmatpush.msra.mxu0 %v4183
        %4271 = vmatpush.msra.mxu0 %v4182
        %4272 = vmatpush.msra.mxu0 %v4181
        %4273 = vmatpush.msra.mxu0 %v4180
        %4274 = vmatpush.msra.mxu0 %v4179
        %4275 = vmatpush.msra.mxu0 %v4178
        %4276 = vmatpush.msra.mxu0 %v4177
        %4277 = vmatpush.msra.mxu0 %v4176
        %4278 = vmatpush.msra.mxu0 %v4175
        %4279 = vmatpush.msra.mxu0 %v4174
        %4280 = vmatpush.msra.mxu0 %v4173
        %4281 = vmatmul.f32.gmra.mxu0 %v4122
        %v4282 = vpop.f32.mrf.mxu0
        %v4283 = vadd.f32 %v4263, %v4282
        %4284 = vdwg.mxu0
        %4285 = vmatpush.msra.mxu0 %v4204
        %4286 = vmatpush.msra.mxu0 %v4203
        %4287 = vmatpush.msra.mxu0 %v4202
        %4288 = vmatpush.msra.mxu0 %v4201
        %4289 = vmatpush.msra.mxu0 %v4200
        %4290 = vmatpush.msra.mxu0 %v4199
        %4291 = vmatpush.msra.mxu0 %v4198
        %4292 = vmatpush.msra.mxu0 %v4197
        %4293 = vmatpush.msra.mxu0 %v4196
        %4294 = vmatpush.msra.mxu0 %v4195
        %4295 = vmatpush.msra.mxu0 %v4194
        %4296 = vmatpush.msra.mxu0 %v4193
        %4297 = vmatpush.msra.mxu0 %v4192
        %4298 = vmatpush.msra.mxu0 %v4191
        %4299 = vmatpush.msra.mxu0 %v4190
        %4300 = vmatpush.msra.mxu0 %v4189
        %4301 = vmatmul.f32.gmra.mxu0 %v4123
        %v4302 = vpop.f32.mrf.mxu0
        %v4303 = vadd.f32 %v4283, %v4302
        %4304 = vdwg.mxu0
        %v4305 = vadd.f32 %v4118, %v4303
        %v4306 = vld [vmem:[#allocation3 + $0xa0] sm:$0xff]
        %v4307 = vld [vmem:[#allocation3 + $0xa8] sm:$0xff]
        %v4308 = vld [vmem:[#allocation3 + $0xb0] sm:$0xff]
        %v4309 = vld [vmem:[#allocation3 + $0xb8] sm:$0xff]
        %v4310 = vld [vmem:[#allocation3 + $0xc0] sm:$0xff]
        %s4311 = scalar_lea.vmem %s3, 2560
        %v4312 = vld [vmem:[%s4311] sm:$0xff]
        %v4313 = vld [vmem:[%s4311 + $0x8] sm:$0xff]
        %v4314 = vld [vmem:[%s4311 + $0x10] sm:$0xff]
        %v4315 = vld [vmem:[%s4311 + $0x18] sm:$0xff]
        %v4316 = vld [vmem:[%s4311 + $0x20] sm:$0xff]
        %v4317 = vld [vmem:[%s4311 + $0x28] sm:$0xff]
        %v4318 = vld [vmem:[%s4311 + $0x30] sm:$0xff]
        %v4319 = vld [vmem:[%s4311 + $0x38] sm:$0xff]
        %v4320 = vld [vmem:[%s4311 + $0x40] sm:$0xff]
        %v4321 = vld [vmem:[%s4311 + $0x48] sm:$0xff]
        %v4322 = vld [vmem:[%s4311 + $0x50] sm:$0xff]
        %v4323 = vld [vmem:[%s4311 + $0x58] sm:$0xff]
        %v4324 = vld [vmem:[%s4311 + $0x60] sm:$0xff]
        %v4325 = vld [vmem:[%s4311 + $0x68] sm:$0xff]
        %v4326 = vld [vmem:[%s4311 + $0x70] sm:$0xff]
        %v4327 = vld [vmem:[%s4311 + $0x78] sm:$0xff]
        %v4328 = vld [vmem:[%s4311 + $0x80] sm:$0xff]
        %v4329 = vld [vmem:[%s4311 + $0x88] sm:$0xff]
        %v4330 = vld [vmem:[%s4311 + $0x90] sm:$0xff]
        %v4331 = vld [vmem:[%s4311 + $0x98] sm:$0xff]
        %v4332 = vld [vmem:[%s4311 + $0xa0] sm:$0xff]
        %v4333 = vld [vmem:[%s4311 + $0xa8] sm:$0xff]
        %v4334 = vld [vmem:[%s4311 + $0xb0] sm:$0xff]
        %v4335 = vld [vmem:[%s4311 + $0xb8] sm:$0xff]
        %v4336 = vld [vmem:[%s4311 + $0xc0] sm:$0xff]
        %v4337 = vld [vmem:[%s4311 + $0xc8] sm:$0xff]
        %v4338 = vld [vmem:[%s4311 + $0xd0] sm:$0xff]
        %v4339 = vld [vmem:[%s4311 + $0xd8] sm:$0xff]
        %v4340 = vld [vmem:[%s4311 + $0xe0] sm:$0xff]
        %v4341 = vld [vmem:[%s4311 + $0xe8] sm:$0xff]
        %v4342 = vld [vmem:[%s4311 + $0xf0] sm:$0xff]
        %v4343 = vld [vmem:[%s4311 + $0xf8] sm:$0xff]
        %v4344 = vld [vmem:[%s4311 + $0x100] sm:$0xff]
        %v4345 = vld [vmem:[%s4311 + $0x108] sm:$0xff]
        %v4346 = vld [vmem:[%s4311 + $0x110] sm:$0xff]
        %v4347 = vld [vmem:[%s4311 + $0x118] sm:$0xff]
        %v4348 = vld [vmem:[%s4311 + $0x120] sm:$0xff]
        %v4349 = vld [vmem:[%s4311 + $0x128] sm:$0xff]
        %v4350 = vld [vmem:[%s4311 + $0x130] sm:$0xff]
        %v4351 = vld [vmem:[%s4311 + $0x138] sm:$0xff]
        %v4352 = vld [vmem:[%s4311 + $0x140] sm:$0xff]
        %v4353 = vld [vmem:[%s4311 + $0x148] sm:$0xff]
        %v4354 = vld [vmem:[%s4311 + $0x150] sm:$0xff]
        %v4355 = vld [vmem:[%s4311 + $0x158] sm:$0xff]
        %v4356 = vld [vmem:[%s4311 + $0x160] sm:$0xff]
        %v4357 = vld [vmem:[%s4311 + $0x168] sm:$0xff]
        %v4358 = vld [vmem:[%s4311 + $0x170] sm:$0xff]
        %v4359 = vld [vmem:[%s4311 + $0x178] sm:$0xff]
        %v4360 = vld [vmem:[%s4311 + $0x180] sm:$0xff]
        %v4361 = vld [vmem:[%s4311 + $0x188] sm:$0xff]
        %v4362 = vld [vmem:[%s4311 + $0x190] sm:$0xff]
        %v4363 = vld [vmem:[%s4311 + $0x198] sm:$0xff]
        %v4364 = vld [vmem:[%s4311 + $0x1a0] sm:$0xff]
        %v4365 = vld [vmem:[%s4311 + $0x1a8] sm:$0xff]
        %v4366 = vld [vmem:[%s4311 + $0x1b0] sm:$0xff]
        %v4367 = vld [vmem:[%s4311 + $0x1b8] sm:$0xff]
        %v4368 = vld [vmem:[%s4311 + $0x1c0] sm:$0xff]
        %v4369 = vld [vmem:[%s4311 + $0x1c8] sm:$0xff]
        %v4370 = vld [vmem:[%s4311 + $0x1d0] sm:$0xff]
        %v4371 = vld [vmem:[%s4311 + $0x1d8] sm:$0xff]
        %v4372 = vld [vmem:[%s4311 + $0x1e0] sm:$0xff]
        %v4373 = vld [vmem:[%s4311 + $0x1e8] sm:$0xff]
        %v4374 = vld [vmem:[%s4311 + $0x1f0] sm:$0xff]
        %v4375 = vld [vmem:[%s4311 + $0x1f8] sm:$0xff]
        %v4376 = vld [vmem:[%s4311 + $0x200] sm:$0xff]
        %v4377 = vld [vmem:[%s4311 + $0x208] sm:$0xff]
        %v4378 = vld [vmem:[%s4311 + $0x210] sm:$0xff]
        %v4379 = vld [vmem:[%s4311 + $0x218] sm:$0xff]
        %v4380 = vld [vmem:[%s4311 + $0x220] sm:$0xff]
        %v4381 = vld [vmem:[%s4311 + $0x228] sm:$0xff]
        %v4382 = vld [vmem:[%s4311 + $0x230] sm:$0xff]
        %v4383 = vld [vmem:[%s4311 + $0x238] sm:$0xff]
        %v4384 = vld [vmem:[%s4311 + $0x240] sm:$0xff]
        %v4385 = vld [vmem:[%s4311 + $0x248] sm:$0xff]
        %v4386 = vld [vmem:[%s4311 + $0x250] sm:$0xff]
        %v4387 = vld [vmem:[%s4311 + $0x258] sm:$0xff]
        %v4388 = vld [vmem:[%s4311 + $0x260] sm:$0xff]
        %v4389 = vld [vmem:[%s4311 + $0x268] sm:$0xff]
        %v4390 = vld [vmem:[%s4311 + $0x270] sm:$0xff]
        %v4391 = vld [vmem:[%s4311 + $0x278] sm:$0xff]
        %4392 = vmatpush.msra.mxu0 %v4327
        %4393 = vmatpush.msra.mxu0 %v4326
        %4394 = vmatpush.msra.mxu0 %v4325
        %4395 = vmatpush.msra.mxu0 %v4324
        %4396 = vmatpush.msra.mxu0 %v4323
        %4397 = vmatpush.msra.mxu0 %v4322
        %4398 = vmatpush.msra.mxu0 %v4321
        %4399 = vmatpush.msra.mxu0 %v4320
        %4400 = vmatpush.msra.mxu0 %v4319
        %4401 = vmatpush.msra.mxu0 %v4318
        %4402 = vmatpush.msra.mxu0 %v4317
        %4403 = vmatpush.msra.mxu0 %v4316
        %4404 = vmatpush.msra.mxu0 %v4315
        %4405 = vmatpush.msra.mxu0 %v4314
        %4406 = vmatpush.msra.mxu0 %v4313
        %4407 = vmatpush.msra.mxu0 %v4312
        %4408 = vmatmul.f32.gmra.mxu0 %v4306
        %v4409 = vpop.f32.mrf.mxu0
        %v4410 = vadd.f32 0.0, %v4409
        %4411 = vdwg.mxu0
        %4412 = vmatpush.msra.mxu0 %v4343
        %4413 = vmatpush.msra.mxu0 %v4342
        %4414 = vmatpush.msra.mxu0 %v4341
        %4415 = vmatpush.msra.mxu0 %v4340
        %4416 = vmatpush.msra.mxu0 %v4339
        %4417 = vmatpush.msra.mxu0 %v4338
        %4418 = vmatpush.msra.mxu0 %v4337
        %4419 = vmatpush.msra.mxu0 %v4336
        %4420 = vmatpush.msra.mxu0 %v4335
        %4421 = vmatpush.msra.mxu0 %v4334
        %4422 = vmatpush.msra.mxu0 %v4333
        %4423 = vmatpush.msra.mxu0 %v4332
        %4424 = vmatpush.msra.mxu0 %v4331
        %4425 = vmatpush.msra.mxu0 %v4330
        %4426 = vmatpush.msra.mxu0 %v4329
        %4427 = vmatpush.msra.mxu0 %v4328
        %4428 = vmatmul.f32.gmra.mxu0 %v4307
        %v4429 = vpop.f32.mrf.mxu0
        %v4430 = vadd.f32 %v4410, %v4429
        %4431 = vdwg.mxu0
        %4432 = vmatpush.msra.mxu0 %v4359
        %4433 = vmatpush.msra.mxu0 %v4358
        %4434 = vmatpush.msra.mxu0 %v4357
        %4435 = vmatpush.msra.mxu0 %v4356
        %4436 = vmatpush.msra.mxu0 %v4355
        %4437 = vmatpush.msra.mxu0 %v4354
        %4438 = vmatpush.msra.mxu0 %v4353
        %4439 = vmatpush.msra.mxu0 %v4352
        %4440 = vmatpush.msra.mxu0 %v4351
        %4441 = vmatpush.msra.mxu0 %v4350
        %4442 = vmatpush.msra.mxu0 %v4349
        %4443 = vmatpush.msra.mxu0 %v4348
        %4444 = vmatpush.msra.mxu0 %v4347
        %4445 = vmatpush.msra.mxu0 %v4346
        %4446 = vmatpush.msra.mxu0 %v4345
        %4447 = vmatpush.msra.mxu0 %v4344
        %4448 = vmatmul.f32.gmra.mxu0 %v4308
        %v4449 = vpop.f32.mrf.mxu0
        %v4450 = vadd.f32 %v4430, %v4449
        %4451 = vdwg.mxu0
        %4452 = vmatpush.msra.mxu0 %v4375
        %4453 = vmatpush.msra.mxu0 %v4374
        %4454 = vmatpush.msra.mxu0 %v4373
        %4455 = vmatpush.msra.mxu0 %v4372
        %4456 = vmatpush.msra.mxu0 %v4371
        %4457 = vmatpush.msra.mxu0 %v4370
        %4458 = vmatpush.msra.mxu0 %v4369
        %4459 = vmatpush.msra.mxu0 %v4368
        %4460 = vmatpush.msra.mxu0 %v4367
        %4461 = vmatpush.msra.mxu0 %v4366
        %4462 = vmatpush.msra.mxu0 %v4365
        %4463 = vmatpush.msra.mxu0 %v4364
        %4464 = vmatpush.msra.mxu0 %v4363
        %4465 = vmatpush.msra.mxu0 %v4362
        %4466 = vmatpush.msra.mxu0 %v4361
        %4467 = vmatpush.msra.mxu0 %v4360
        %4468 = vmatmul.f32.gmra.mxu0 %v4309
        %v4469 = vpop.f32.mrf.mxu0
        %v4470 = vadd.f32 %v4450, %v4469
        %4471 = vdwg.mxu0
        %4472 = vmatpush.msra.mxu0 %v4391
        %4473 = vmatpush.msra.mxu0 %v4390
        %4474 = vmatpush.msra.mxu0 %v4389
        %4475 = vmatpush.msra.mxu0 %v4388
        %4476 = vmatpush.msra.mxu0 %v4387
        %4477 = vmatpush.msra.mxu0 %v4386
        %4478 = vmatpush.msra.mxu0 %v4385
        %4479 = vmatpush.msra.mxu0 %v4384
        %4480 = vmatpush.msra.mxu0 %v4383
        %4481 = vmatpush.msra.mxu0 %v4382
        %4482 = vmatpush.msra.mxu0 %v4381
        %4483 = vmatpush.msra.mxu0 %v4380
        %4484 = vmatpush.msra.mxu0 %v4379
        %4485 = vmatpush.msra.mxu0 %v4378
        %4486 = vmatpush.msra.mxu0 %v4377
        %4487 = vmatpush.msra.mxu0 %v4376
        %4488 = vmatmul.f32.gmra.mxu0 %v4310
        %v4489 = vpop.f32.mrf.mxu0
        %v4490 = vadd.f32 %v4470, %v4489
        %4491 = vdwg.mxu0
        %v4492 = vadd.f32 %v4305, %v4490
        %v4493 = vld [vmem:[#allocation3 + $0xc8] sm:$0xff]
        %v4494 = vld [vmem:[#allocation3 + $0xd0] sm:$0xff]
        %v4495 = vld [vmem:[#allocation3 + $0xd8] sm:$0xff]
        %v4496 = vld [vmem:[#allocation3 + $0xe0] sm:$0xff]
        %v4497 = vld [vmem:[#allocation3 + $0xe8] sm:$0xff]
        %s4498 = scalar_lea.vmem %s3, 3200
        %v4499 = vld [vmem:[%s4498] sm:$0xff]
        %v4500 = vld [vmem:[%s4498 + $0x8] sm:$0xff]
        %v4501 = vld [vmem:[%s4498 + $0x10] sm:$0xff]
        %v4502 = vld [vmem:[%s4498 + $0x18] sm:$0xff]
        %v4503 = vld [vmem:[%s4498 + $0x20] sm:$0xff]
        %v4504 = vld [vmem:[%s4498 + $0x28] sm:$0xff]
        %v4505 = vld [vmem:[%s4498 + $0x30] sm:$0xff]
        %v4506 = vld [vmem:[%s4498 + $0x38] sm:$0xff]
        %v4507 = vld [vmem:[%s4498 + $0x40] sm:$0xff]
        %v4508 = vld [vmem:[%s4498 + $0x48] sm:$0xff]
        %v4509 = vld [vmem:[%s4498 + $0x50] sm:$0xff]
        %v4510 = vld [vmem:[%s4498 + $0x58] sm:$0xff]
        %v4511 = vld [vmem:[%s4498 + $0x60] sm:$0xff]
        %v4512 = vld [vmem:[%s4498 + $0x68] sm:$0xff]
        %v4513 = vld [vmem:[%s4498 + $0x70] sm:$0xff]
        %v4514 = vld [vmem:[%s4498 + $0x78] sm:$0xff]
        %v4515 = vld [vmem:[%s4498 + $0x80] sm:$0xff]
        %v4516 = vld [vmem:[%s4498 + $0x88] sm:$0xff]
        %v4517 = vld [vmem:[%s4498 + $0x90] sm:$0xff]
        %v4518 = vld [vmem:[%s4498 + $0x98] sm:$0xff]
        %v4519 = vld [vmem:[%s4498 + $0xa0] sm:$0xff]
        %v4520 = vld [vmem:[%s4498 + $0xa8] sm:$0xff]
        %v4521 = vld [vmem:[%s4498 + $0xb0] sm:$0xff]
        %v4522 = vld [vmem:[%s4498 + $0xb8] sm:$0xff]
        %v4523 = vld [vmem:[%s4498 + $0xc0] sm:$0xff]
        %v4524 = vld [vmem:[%s4498 + $0xc8] sm:$0xff]
        %v4525 = vld [vmem:[%s4498 + $0xd0] sm:$0xff]
        %v4526 = vld [vmem:[%s4498 + $0xd8] sm:$0xff]
        %v4527 = vld [vmem:[%s4498 + $0xe0] sm:$0xff]
        %v4528 = vld [vmem:[%s4498 + $0xe8] sm:$0xff]
        %v4529 = vld [vmem:[%s4498 + $0xf0] sm:$0xff]
        %v4530 = vld [vmem:[%s4498 + $0xf8] sm:$0xff]
        %v4531 = vld [vmem:[%s4498 + $0x100] sm:$0xff]
        %v4532 = vld [vmem:[%s4498 + $0x108] sm:$0xff]
        %v4533 = vld [vmem:[%s4498 + $0x110] sm:$0xff]
        %v4534 = vld [vmem:[%s4498 + $0x118] sm:$0xff]
        %v4535 = vld [vmem:[%s4498 + $0x120] sm:$0xff]
        %v4536 = vld [vmem:[%s4498 + $0x128] sm:$0xff]
        %v4537 = vld [vmem:[%s4498 + $0x130] sm:$0xff]
        %v4538 = vld [vmem:[%s4498 + $0x138] sm:$0xff]
        %v4539 = vld [vmem:[%s4498 + $0x140] sm:$0xff]
        %v4540 = vld [vmem:[%s4498 + $0x148] sm:$0xff]
        %v4541 = vld [vmem:[%s4498 + $0x150] sm:$0xff]
        %v4542 = vld [vmem:[%s4498 + $0x158] sm:$0xff]
        %v4543 = vld [vmem:[%s4498 + $0x160] sm:$0xff]
        %v4544 = vld [vmem:[%s4498 + $0x168] sm:$0xff]
        %v4545 = vld [vmem:[%s4498 + $0x170] sm:$0xff]
        %v4546 = vld [vmem:[%s4498 + $0x178] sm:$0xff]
        %v4547 = vld [vmem:[%s4498 + $0x180] sm:$0xff]
        %v4548 = vld [vmem:[%s4498 + $0x188] sm:$0xff]
        %v4549 = vld [vmem:[%s4498 + $0x190] sm:$0xff]
        %v4550 = vld [vmem:[%s4498 + $0x198] sm:$0xff]
        %v4551 = vld [vmem:[%s4498 + $0x1a0] sm:$0xff]
        %v4552 = vld [vmem:[%s4498 + $0x1a8] sm:$0xff]
        %v4553 = vld [vmem:[%s4498 + $0x1b0] sm:$0xff]
        %v4554 = vld [vmem:[%s4498 + $0x1b8] sm:$0xff]
        %v4555 = vld [vmem:[%s4498 + $0x1c0] sm:$0xff]
        %v4556 = vld [vmem:[%s4498 + $0x1c8] sm:$0xff]
        %v4557 = vld [vmem:[%s4498 + $0x1d0] sm:$0xff]
        %v4558 = vld [vmem:[%s4498 + $0x1d8] sm:$0xff]
        %v4559 = vld [vmem:[%s4498 + $0x1e0] sm:$0xff]
        %v4560 = vld [vmem:[%s4498 + $0x1e8] sm:$0xff]
        %v4561 = vld [vmem:[%s4498 + $0x1f0] sm:$0xff]
        %v4562 = vld [vmem:[%s4498 + $0x1f8] sm:$0xff]
        %v4563 = vld [vmem:[%s4498 + $0x200] sm:$0xff]
        %v4564 = vld [vmem:[%s4498 + $0x208] sm:$0xff]
        %v4565 = vld [vmem:[%s4498 + $0x210] sm:$0xff]
        %v4566 = vld [vmem:[%s4498 + $0x218] sm:$0xff]
        %v4567 = vld [vmem:[%s4498 + $0x220] sm:$0xff]
        %v4568 = vld [vmem:[%s4498 + $0x228] sm:$0xff]
        %v4569 = vld [vmem:[%s4498 + $0x230] sm:$0xff]
        %v4570 = vld [vmem:[%s4498 + $0x238] sm:$0xff]
        %v4571 = vld [vmem:[%s4498 + $0x240] sm:$0xff]
        %v4572 = vld [vmem:[%s4498 + $0x248] sm:$0xff]
        %v4573 = vld [vmem:[%s4498 + $0x250] sm:$0xff]
        %v4574 = vld [vmem:[%s4498 + $0x258] sm:$0xff]
        %v4575 = vld [vmem:[%s4498 + $0x260] sm:$0xff]
        %v4576 = vld [vmem:[%s4498 + $0x268] sm:$0xff]
        %v4577 = vld [vmem:[%s4498 + $0x270] sm:$0xff]
        %v4578 = vld [vmem:[%s4498 + $0x278] sm:$0xff]
        %4579 = vmatpush.msra.mxu0 %v4514
        %4580 = vmatpush.msra.mxu0 %v4513
        %4581 = vmatpush.msra.mxu0 %v4512
        %4582 = vmatpush.msra.mxu0 %v4511
        %4583 = vmatpush.msra.mxu0 %v4510
        %4584 = vmatpush.msra.mxu0 %v4509
        %4585 = vmatpush.msra.mxu0 %v4508
        %4586 = vmatpush.msra.mxu0 %v4507
        %4587 = vmatpush.msra.mxu0 %v4506
        %4588 = vmatpush.msra.mxu0 %v4505
        %4589 = vmatpush.msra.mxu0 %v4504
        %4590 = vmatpush.msra.mxu0 %v4503
        %4591 = vmatpush.msra.mxu0 %v4502
        %4592 = vmatpush.msra.mxu0 %v4501
        %4593 = vmatpush.msra.mxu0 %v4500
        %4594 = vmatpush.msra.mxu0 %v4499
        %4595 = vmatmul.f32.gmra.mxu0 %v4493
        %v4596 = vpop.f32.mrf.mxu0
        %v4597 = vadd.f32 0.0, %v4596
        %4598 = vdwg.mxu0
        %4599 = vmatpush.msra.mxu0 %v4530
        %4600 = vmatpush.msra.mxu0 %v4529
        %4601 = vmatpush.msra.mxu0 %v4528
        %4602 = vmatpush.msra.mxu0 %v4527
        %4603 = vmatpush.msra.mxu0 %v4526
        %4604 = vmatpush.msra.mxu0 %v4525
        %4605 = vmatpush.msra.mxu0 %v4524
        %4606 = vmatpush.msra.mxu0 %v4523
        %4607 = vmatpush.msra.mxu0 %v4522
        %4608 = vmatpush.msra.mxu0 %v4521
        %4609 = vmatpush.msra.mxu0 %v4520
        %4610 = vmatpush.msra.mxu0 %v4519
        %4611 = vmatpush.msra.mxu0 %v4518
        %4612 = vmatpush.msra.mxu0 %v4517
        %4613 = vmatpush.msra.mxu0 %v4516
        %4614 = vmatpush.msra.mxu0 %v4515
        %4615 = vmatmul.f32.gmra.mxu0 %v4494
        %v4616 = vpop.f32.mrf.mxu0
        %v4617 = vadd.f32 %v4597, %v4616
        %4618 = vdwg.mxu0
        %4619 = vmatpush.msra.mxu0 %v4546
        %4620 = vmatpush.msra.mxu0 %v4545
        %4621 = vmatpush.msra.mxu0 %v4544
        %4622 = vmatpush.msra.mxu0 %v4543
        %4623 = vmatpush.msra.mxu0 %v4542
        %4624 = vmatpush.msra.mxu0 %v4541
        %4625 = vmatpush.msra.mxu0 %v4540
        %4626 = vmatpush.msra.mxu0 %v4539
        %4627 = vmatpush.msra.mxu0 %v4538
        %4628 = vmatpush.msra.mxu0 %v4537
        %4629 = vmatpush.msra.mxu0 %v4536
        %4630 = vmatpush.msra.mxu0 %v4535
        %4631 = vmatpush.msra.mxu0 %v4534
        %4632 = vmatpush.msra.mxu0 %v4533
        %4633 = vmatpush.msra.mxu0 %v4532
        %4634 = vmatpush.msra.mxu0 %v4531
        %4635 = vmatmul.f32.gmra.mxu0 %v4495
        %v4636 = vpop.f32.mrf.mxu0
        %v4637 = vadd.f32 %v4617, %v4636
        %4638 = vdwg.mxu0
        %4639 = vmatpush.msra.mxu0 %v4562
        %4640 = vmatpush.msra.mxu0 %v4561
        %4641 = vmatpush.msra.mxu0 %v4560
        %4642 = vmatpush.msra.mxu0 %v4559
        %4643 = vmatpush.msra.mxu0 %v4558
        %4644 = vmatpush.msra.mxu0 %v4557
        %4645 = vmatpush.msra.mxu0 %v4556
        %4646 = vmatpush.msra.mxu0 %v4555
        %4647 = vmatpush.msra.mxu0 %v4554
        %4648 = vmatpush.msra.mxu0 %v4553
        %4649 = vmatpush.msra.mxu0 %v4552
        %4650 = vmatpush.msra.mxu0 %v4551
        %4651 = vmatpush.msra.mxu0 %v4550
        %4652 = vmatpush.msra.mxu0 %v4549
        %4653 = vmatpush.msra.mxu0 %v4548
        %4654 = vmatpush.msra.mxu0 %v4547
        %4655 = vmatmul.f32.gmra.mxu0 %v4496
        %v4656 = vpop.f32.mrf.mxu0
        %v4657 = vadd.f32 %v4637, %v4656
        %4658 = vdwg.mxu0
        %4659 = vmatpush.msra.mxu0 %v4578
        %4660 = vmatpush.msra.mxu0 %v4577
        %4661 = vmatpush.msra.mxu0 %v4576
        %4662 = vmatpush.msra.mxu0 %v4575
        %4663 = vmatpush.msra.mxu0 %v4574
        %4664 = vmatpush.msra.mxu0 %v4573
        %4665 = vmatpush.msra.mxu0 %v4572
        %4666 = vmatpush.msra.mxu0 %v4571
        %4667 = vmatpush.msra.mxu0 %v4570
        %4668 = vmatpush.msra.mxu0 %v4569
        %4669 = vmatpush.msra.mxu0 %v4568
        %4670 = vmatpush.msra.mxu0 %v4567
        %4671 = vmatpush.msra.mxu0 %v4566
        %4672 = vmatpush.msra.mxu0 %v4565
        %4673 = vmatpush.msra.mxu0 %v4564
        %4674 = vmatpush.msra.mxu0 %v4563
        %4675 = vmatmul.f32.gmra.mxu0 %v4497
        %v4676 = vpop.f32.mrf.mxu0
        %v4677 = vadd.f32 %v4657, %v4676
        %4678 = vdwg.mxu0
        %v4679 = vadd.f32 %v4492, %v4677
        %v4680 = vld [vmem:[#allocation3 + $0xf0] sm:$0xff]
        %v4681 = vld [vmem:[#allocation3 + $0xf8] sm:$0xff]
        %v4682 = vld [vmem:[#allocation3 + $0x100] sm:$0xff]
        %v4683 = vld [vmem:[#allocation3 + $0x108] sm:$0xff]
        %v4684 = vld [vmem:[#allocation3 + $0x110] sm:$0xff]
        %s4685 = scalar_lea.vmem %s3, 3840
        %v4686 = vld [vmem:[%s4685] sm:$0xff]
        %v4687 = vld [vmem:[%s4685 + $0x8] sm:$0xff]
        %v4688 = vld [vmem:[%s4685 + $0x10] sm:$0xff]
        %v4689 = vld [vmem:[%s4685 + $0x18] sm:$0xff]
        %v4690 = vld [vmem:[%s4685 + $0x20] sm:$0xff]
        %v4691 = vld [vmem:[%s4685 + $0x28] sm:$0xff]
        %v4692 = vld [vmem:[%s4685 + $0x30] sm:$0xff]
        %v4693 = vld [vmem:[%s4685 + $0x38] sm:$0xff]
        %v4694 = vld [vmem:[%s4685 + $0x40] sm:$0xff]
        %v4695 = vld [vmem:[%s4685 + $0x48] sm:$0xff]
        %v4696 = vld [vmem:[%s4685 + $0x50] sm:$0xff]
        %v4697 = vld [vmem:[%s4685 + $0x58] sm:$0xff]
        %v4698 = vld [vmem:[%s4685 + $0x60] sm:$0xff]
        %v4699 = vld [vmem:[%s4685 + $0x68] sm:$0xff]
        %v4700 = vld [vmem:[%s4685 + $0x70] sm:$0xff]
        %v4701 = vld [vmem:[%s4685 + $0x78] sm:$0xff]
        %v4702 = vld [vmem:[%s4685 + $0x80] sm:$0xff]
        %v4703 = vld [vmem:[%s4685 + $0x88] sm:$0xff]
        %v4704 = vld [vmem:[%s4685 + $0x90] sm:$0xff]
        %v4705 = vld [vmem:[%s4685 + $0x98] sm:$0xff]
        %v4706 = vld [vmem:[%s4685 + $0xa0] sm:$0xff]
        %v4707 = vld [vmem:[%s4685 + $0xa8] sm:$0xff]
        %v4708 = vld [vmem:[%s4685 + $0xb0] sm:$0xff]
        %v4709 = vld [vmem:[%s4685 + $0xb8] sm:$0xff]
        %v4710 = vld [vmem:[%s4685 + $0xc0] sm:$0xff]
        %v4711 = vld [vmem:[%s4685 + $0xc8] sm:$0xff]
        %v4712 = vld [vmem:[%s4685 + $0xd0] sm:$0xff]
        %v4713 = vld [vmem:[%s4685 + $0xd8] sm:$0xff]
        %v4714 = vld [vmem:[%s4685 + $0xe0] sm:$0xff]
        %v4715 = vld [vmem:[%s4685 + $0xe8] sm:$0xff]
        %v4716 = vld [vmem:[%s4685 + $0xf0] sm:$0xff]
        %v4717 = vld [vmem:[%s4685 + $0xf8] sm:$0xff]
        %v4718 = vld [vmem:[%s4685 + $0x100] sm:$0xff]
        %v4719 = vld [vmem:[%s4685 + $0x108] sm:$0xff]
        %v4720 = vld [vmem:[%s4685 + $0x110] sm:$0xff]
        %v4721 = vld [vmem:[%s4685 + $0x118] sm:$0xff]
        %v4722 = vld [vmem:[%s4685 + $0x120] sm:$0xff]
        %v4723 = vld [vmem:[%s4685 + $0x128] sm:$0xff]
        %v4724 = vld [vmem:[%s4685 + $0x130] sm:$0xff]
        %v4725 = vld [vmem:[%s4685 + $0x138] sm:$0xff]
        %v4726 = vld [vmem:[%s4685 + $0x140] sm:$0xff]
        %v4727 = vld [vmem:[%s4685 + $0x148] sm:$0xff]
        %v4728 = vld [vmem:[%s4685 + $0x150] sm:$0xff]
        %v4729 = vld [vmem:[%s4685 + $0x158] sm:$0xff]
        %v4730 = vld [vmem:[%s4685 + $0x160] sm:$0xff]
        %v4731 = vld [vmem:[%s4685 + $0x168] sm:$0xff]
        %v4732 = vld [vmem:[%s4685 + $0x170] sm:$0xff]
        %v4733 = vld [vmem:[%s4685 + $0x178] sm:$0xff]
        %v4734 = vld [vmem:[%s4685 + $0x180] sm:$0xff]
        %v4735 = vld [vmem:[%s4685 + $0x188] sm:$0xff]
        %v4736 = vld [vmem:[%s4685 + $0x190] sm:$0xff]
        %v4737 = vld [vmem:[%s4685 + $0x198] sm:$0xff]
        %v4738 = vld [vmem:[%s4685 + $0x1a0] sm:$0xff]
        %v4739 = vld [vmem:[%s4685 + $0x1a8] sm:$0xff]
        %v4740 = vld [vmem:[%s4685 + $0x1b0] sm:$0xff]
        %v4741 = vld [vmem:[%s4685 + $0x1b8] sm:$0xff]
        %v4742 = vld [vmem:[%s4685 + $0x1c0] sm:$0xff]
        %v4743 = vld [vmem:[%s4685 + $0x1c8] sm:$0xff]
        %v4744 = vld [vmem:[%s4685 + $0x1d0] sm:$0xff]
        %v4745 = vld [vmem:[%s4685 + $0x1d8] sm:$0xff]
        %v4746 = vld [vmem:[%s4685 + $0x1e0] sm:$0xff]
        %v4747 = vld [vmem:[%s4685 + $0x1e8] sm:$0xff]
        %v4748 = vld [vmem:[%s4685 + $0x1f0] sm:$0xff]
        %v4749 = vld [vmem:[%s4685 + $0x1f8] sm:$0xff]
        %v4750 = vld [vmem:[%s4685 + $0x200] sm:$0xff]
        %v4751 = vld [vmem:[%s4685 + $0x208] sm:$0xff]
        %v4752 = vld [vmem:[%s4685 + $0x210] sm:$0xff]
        %v4753 = vld [vmem:[%s4685 + $0x218] sm:$0xff]
        %v4754 = vld [vmem:[%s4685 + $0x220] sm:$0xff]
        %v4755 = vld [vmem:[%s4685 + $0x228] sm:$0xff]
        %v4756 = vld [vmem:[%s4685 + $0x230] sm:$0xff]
        %v4757 = vld [vmem:[%s4685 + $0x238] sm:$0xff]
        %v4758 = vld [vmem:[%s4685 + $0x240] sm:$0xff]
        %v4759 = vld [vmem:[%s4685 + $0x248] sm:$0xff]
        %v4760 = vld [vmem:[%s4685 + $0x250] sm:$0xff]
        %v4761 = vld [vmem:[%s4685 + $0x258] sm:$0xff]
        %v4762 = vld [vmem:[%s4685 + $0x260] sm:$0xff]
        %v4763 = vld [vmem:[%s4685 + $0x268] sm:$0xff]
        %v4764 = vld [vmem:[%s4685 + $0x270] sm:$0xff]
        %v4765 = vld [vmem:[%s4685 + $0x278] sm:$0xff]
        %4766 = vmatpush.msra.mxu0 %v4701
        %4767 = vmatpush.msra.mxu0 %v4700
        %4768 = vmatpush.msra.mxu0 %v4699
        %4769 = vmatpush.msra.mxu0 %v4698
        %4770 = vmatpush.msra.mxu0 %v4697
        %4771 = vmatpush.msra.mxu0 %v4696
        %4772 = vmatpush.msra.mxu0 %v4695
        %4773 = vmatpush.msra.mxu0 %v4694
        %4774 = vmatpush.msra.mxu0 %v4693
        %4775 = vmatpush.msra.mxu0 %v4692
        %4776 = vmatpush.msra.mxu0 %v4691
        %4777 = vmatpush.msra.mxu0 %v4690
        %4778 = vmatpush.msra.mxu0 %v4689
        %4779 = vmatpush.msra.mxu0 %v4688
        %4780 = vmatpush.msra.mxu0 %v4687
        %4781 = vmatpush.msra.mxu0 %v4686
        %4782 = vmatmul.f32.gmra.mxu0 %v4680
        %v4783 = vpop.f32.mrf.mxu0
        %v4784 = vadd.f32 0.0, %v4783
        %4785 = vdwg.mxu0
        %4786 = vmatpush.msra.mxu0 %v4717
        %4787 = vmatpush.msra.mxu0 %v4716
        %4788 = vmatpush.msra.mxu0 %v4715
        %4789 = vmatpush.msra.mxu0 %v4714
        %4790 = vmatpush.msra.mxu0 %v4713
        %4791 = vmatpush.msra.mxu0 %v4712
        %4792 = vmatpush.msra.mxu0 %v4711
        %4793 = vmatpush.msra.mxu0 %v4710
        %4794 = vmatpush.msra.mxu0 %v4709
        %4795 = vmatpush.msra.mxu0 %v4708
        %4796 = vmatpush.msra.mxu0 %v4707
        %4797 = vmatpush.msra.mxu0 %v4706
        %4798 = vmatpush.msra.mxu0 %v4705
        %4799 = vmatpush.msra.mxu0 %v4704
        %4800 = vmatpush.msra.mxu0 %v4703
        %4801 = vmatpush.msra.mxu0 %v4702
        %4802 = vmatmul.f32.gmra.mxu0 %v4681
        %v4803 = vpop.f32.mrf.mxu0
        %v4804 = vadd.f32 %v4784, %v4803
        %4805 = vdwg.mxu0
        %4806 = vmatpush.msra.mxu0 %v4733
        %4807 = vmatpush.msra.mxu0 %v4732
        %4808 = vmatpush.msra.mxu0 %v4731
        %4809 = vmatpush.msra.mxu0 %v4730
        %4810 = vmatpush.msra.mxu0 %v4729
        %4811 = vmatpush.msra.mxu0 %v4728
        %4812 = vmatpush.msra.mxu0 %v4727
        %4813 = vmatpush.msra.mxu0 %v4726
        %4814 = vmatpush.msra.mxu0 %v4725
        %4815 = vmatpush.msra.mxu0 %v4724
        %4816 = vmatpush.msra.mxu0 %v4723
        %4817 = vmatpush.msra.mxu0 %v4722
        %4818 = vmatpush.msra.mxu0 %v4721
        %4819 = vmatpush.msra.mxu0 %v4720
        %4820 = vmatpush.msra.mxu0 %v4719
        %4821 = vmatpush.msra.mxu0 %v4718
        %4822 = vmatmul.f32.gmra.mxu0 %v4682
        %v4823 = vpop.f32.mrf.mxu0
        %v4824 = vadd.f32 %v4804, %v4823
        %4825 = vdwg.mxu0
        %4826 = vmatpush.msra.mxu0 %v4749
        %4827 = vmatpush.msra.mxu0 %v4748
        %4828 = vmatpush.msra.mxu0 %v4747
        %4829 = vmatpush.msra.mxu0 %v4746
        %4830 = vmatpush.msra.mxu0 %v4745
        %4831 = vmatpush.msra.mxu0 %v4744
        %4832 = vmatpush.msra.mxu0 %v4743
        %4833 = vmatpush.msra.mxu0 %v4742
        %4834 = vmatpush.msra.mxu0 %v4741
        %4835 = vmatpush.msra.mxu0 %v4740
        %4836 = vmatpush.msra.mxu0 %v4739
        %4837 = vmatpush.msra.mxu0 %v4738
        %4838 = vmatpush.msra.mxu0 %v4737
        %4839 = vmatpush.msra.mxu0 %v4736
        %4840 = vmatpush.msra.mxu0 %v4735
        %4841 = vmatpush.msra.mxu0 %v4734
        %4842 = vmatmul.f32.gmra.mxu0 %v4683
        %v4843 = vpop.f32.mrf.mxu0
        %v4844 = vadd.f32 %v4824, %v4843
        %4845 = vdwg.mxu0
        %4846 = vmatpush.msra.mxu0 %v4765
        %4847 = vmatpush.msra.mxu0 %v4764
        %4848 = vmatpush.msra.mxu0 %v4763
        %4849 = vmatpush.msra.mxu0 %v4762
        %4850 = vmatpush.msra.mxu0 %v4761
        %4851 = vmatpush.msra.mxu0 %v4760
        %4852 = vmatpush.msra.mxu0 %v4759
        %4853 = vmatpush.msra.mxu0 %v4758
        %4854 = vmatpush.msra.mxu0 %v4757
        %4855 = vmatpush.msra.mxu0 %v4756
        %4856 = vmatpush.msra.mxu0 %v4755
        %4857 = vmatpush.msra.mxu0 %v4754
        %4858 = vmatpush.msra.mxu0 %v4753
        %4859 = vmatpush.msra.mxu0 %v4752
        %4860 = vmatpush.msra.mxu0 %v4751
        %4861 = vmatpush.msra.mxu0 %v4750
        %4862 = vmatmul.f32.gmra.mxu0 %v4684
        %v4863 = vpop.f32.mrf.mxu0
        %v4864 = vadd.f32 %v4844, %v4863
        %4865 = vdwg.mxu0
        %v4866 = vadd.f32 %v4679, %v4864
        %v4867 = vld [vmem:[#allocation3 + $0x118] sm:$0xff]
        %v4868 = vld [vmem:[#allocation3 + $0x120] sm:$0xff]
        %v4869 = vld [vmem:[#allocation3 + $0x128] sm:$0xff]
        %v4870 = vld [vmem:[#allocation3 + $0x130] sm:$0xff]
        %v4871 = vld [vmem:[#allocation3 + $0x138] sm:$0xff]
        %s4872 = scalar_lea.vmem %s3, 4480
        %v4873 = vld [vmem:[%s4872] sm:$0xff]
        %v4874 = vld [vmem:[%s4872 + $0x8] sm:$0xff]
        %v4875 = vld [vmem:[%s4872 + $0x10] sm:$0xff]
        %v4876 = vld [vmem:[%s4872 + $0x18] sm:$0xff]
        %v4877 = vld [vmem:[%s4872 + $0x20] sm:$0xff]
        %v4878 = vld [vmem:[%s4872 + $0x28] sm:$0xff]
        %v4879 = vld [vmem:[%s4872 + $0x30] sm:$0xff]
        %v4880 = vld [vmem:[%s4872 + $0x38] sm:$0xff]
        %v4881 = vld [vmem:[%s4872 + $0x40] sm:$0xff]
        %v4882 = vld [vmem:[%s4872 + $0x48] sm:$0xff]
        %v4883 = vld [vmem:[%s4872 + $0x50] sm:$0xff]
        %v4884 = vld [vmem:[%s4872 + $0x58] sm:$0xff]
        %v4885 = vld [vmem:[%s4872 + $0x60] sm:$0xff]
        %v4886 = vld [vmem:[%s4872 + $0x68] sm:$0xff]
        %v4887 = vld [vmem:[%s4872 + $0x70] sm:$0xff]
        %v4888 = vld [vmem:[%s4872 + $0x78] sm:$0xff]
        %v4889 = vld [vmem:[%s4872 + $0x80] sm:$0xff]
        %v4890 = vld [vmem:[%s4872 + $0x88] sm:$0xff]
        %v4891 = vld [vmem:[%s4872 + $0x90] sm:$0xff]
        %v4892 = vld [vmem:[%s4872 + $0x98] sm:$0xff]
        %v4893 = vld [vmem:[%s4872 + $0xa0] sm:$0xff]
        %v4894 = vld [vmem:[%s4872 + $0xa8] sm:$0xff]
        %v4895 = vld [vmem:[%s4872 + $0xb0] sm:$0xff]
        %v4896 = vld [vmem:[%s4872 + $0xb8] sm:$0xff]
        %v4897 = vld [vmem:[%s4872 + $0xc0] sm:$0xff]
        %v4898 = vld [vmem:[%s4872 + $0xc8] sm:$0xff]
        %v4899 = vld [vmem:[%s4872 + $0xd0] sm:$0xff]
        %v4900 = vld [vmem:[%s4872 + $0xd8] sm:$0xff]
        %v4901 = vld [vmem:[%s4872 + $0xe0] sm:$0xff]
        %v4902 = vld [vmem:[%s4872 + $0xe8] sm:$0xff]
        %v4903 = vld [vmem:[%s4872 + $0xf0] sm:$0xff]
        %v4904 = vld [vmem:[%s4872 + $0xf8] sm:$0xff]
        %v4905 = vld [vmem:[%s4872 + $0x100] sm:$0xff]
        %v4906 = vld [vmem:[%s4872 + $0x108] sm:$0xff]
        %v4907 = vld [vmem:[%s4872 + $0x110] sm:$0xff]
        %v4908 = vld [vmem:[%s4872 + $0x118] sm:$0xff]
        %v4909 = vld [vmem:[%s4872 + $0x120] sm:$0xff]
        %v4910 = vld [vmem:[%s4872 + $0x128] sm:$0xff]
        %v4911 = vld [vmem:[%s4872 + $0x130] sm:$0xff]
        %v4912 = vld [vmem:[%s4872 + $0x138] sm:$0xff]
        %v4913 = vld [vmem:[%s4872 + $0x140] sm:$0xff]
        %v4914 = vld [vmem:[%s4872 + $0x148] sm:$0xff]
        %v4915 = vld [vmem:[%s4872 + $0x150] sm:$0xff]
        %v4916 = vld [vmem:[%s4872 + $0x158] sm:$0xff]
        %v4917 = vld [vmem:[%s4872 + $0x160] sm:$0xff]
        %v4918 = vld [vmem:[%s4872 + $0x168] sm:$0xff]
        %v4919 = vld [vmem:[%s4872 + $0x170] sm:$0xff]
        %v4920 = vld [vmem:[%s4872 + $0x178] sm:$0xff]
        %v4921 = vld [vmem:[%s4872 + $0x180] sm:$0xff]
        %v4922 = vld [vmem:[%s4872 + $0x188] sm:$0xff]
        %v4923 = vld [vmem:[%s4872 + $0x190] sm:$0xff]
        %v4924 = vld [vmem:[%s4872 + $0x198] sm:$0xff]
        %v4925 = vld [vmem:[%s4872 + $0x1a0] sm:$0xff]
        %v4926 = vld [vmem:[%s4872 + $0x1a8] sm:$0xff]
        %v4927 = vld [vmem:[%s4872 + $0x1b0] sm:$0xff]
        %v4928 = vld [vmem:[%s4872 + $0x1b8] sm:$0xff]
        %v4929 = vld [vmem:[%s4872 + $0x1c0] sm:$0xff]
        %v4930 = vld [vmem:[%s4872 + $0x1c8] sm:$0xff]
        %v4931 = vld [vmem:[%s4872 + $0x1d0] sm:$0xff]
        %v4932 = vld [vmem:[%s4872 + $0x1d8] sm:$0xff]
        %v4933 = vld [vmem:[%s4872 + $0x1e0] sm:$0xff]
        %v4934 = vld [vmem:[%s4872 + $0x1e8] sm:$0xff]
        %v4935 = vld [vmem:[%s4872 + $0x1f0] sm:$0xff]
        %v4936 = vld [vmem:[%s4872 + $0x1f8] sm:$0xff]
        %v4937 = vld [vmem:[%s4872 + $0x200] sm:$0xff]
        %v4938 = vld [vmem:[%s4872 + $0x208] sm:$0xff]
        %v4939 = vld [vmem:[%s4872 + $0x210] sm:$0xff]
        %v4940 = vld [vmem:[%s4872 + $0x218] sm:$0xff]
        %v4941 = vld [vmem:[%s4872 + $0x220] sm:$0xff]
        %v4942 = vld [vmem:[%s4872 + $0x228] sm:$0xff]
        %v4943 = vld [vmem:[%s4872 + $0x230] sm:$0xff]
        %v4944 = vld [vmem:[%s4872 + $0x238] sm:$0xff]
        %v4945 = vld [vmem:[%s4872 + $0x240] sm:$0xff]
        %v4946 = vld [vmem:[%s4872 + $0x248] sm:$0xff]
        %v4947 = vld [vmem:[%s4872 + $0x250] sm:$0xff]
        %v4948 = vld [vmem:[%s4872 + $0x258] sm:$0xff]
        %v4949 = vld [vmem:[%s4872 + $0x260] sm:$0xff]
        %v4950 = vld [vmem:[%s4872 + $0x268] sm:$0xff]
        %v4951 = vld [vmem:[%s4872 + $0x270] sm:$0xff]
        %v4952 = vld [vmem:[%s4872 + $0x278] sm:$0xff]
        %4953 = vmatpush.msra.mxu0 %v4888
        %4954 = vmatpush.msra.mxu0 %v4887
        %4955 = vmatpush.msra.mxu0 %v4886
        %4956 = vmatpush.msra.mxu0 %v4885
        %4957 = vmatpush.msra.mxu0 %v4884
        %4958 = vmatpush.msra.mxu0 %v4883
        %4959 = vmatpush.msra.mxu0 %v4882
        %4960 = vmatpush.msra.mxu0 %v4881
        %4961 = vmatpush.msra.mxu0 %v4880
        %4962 = vmatpush.msra.mxu0 %v4879
        %4963 = vmatpush.msra.mxu0 %v4878
        %4964 = vmatpush.msra.mxu0 %v4877
        %4965 = vmatpush.msra.mxu0 %v4876
        %4966 = vmatpush.msra.mxu0 %v4875
        %4967 = vmatpush.msra.mxu0 %v4874
        %4968 = vmatpush.msra.mxu0 %v4873
        %4969 = vmatmul.f32.gmra.mxu0 %v4867
        %v4970 = vpop.f32.mrf.mxu0
        %v4971 = vadd.f32 0.0, %v4970
        %4972 = vdwg.mxu0
        %4973 = vmatpush.msra.mxu0 %v4904
        %4974 = vmatpush.msra.mxu0 %v4903
        %4975 = vmatpush.msra.mxu0 %v4902
        %4976 = vmatpush.msra.mxu0 %v4901
        %4977 = vmatpush.msra.mxu0 %v4900
        %4978 = vmatpush.msra.mxu0 %v4899
        %4979 = vmatpush.msra.mxu0 %v4898
        %4980 = vmatpush.msra.mxu0 %v4897
        %4981 = vmatpush.msra.mxu0 %v4896
        %4982 = vmatpush.msra.mxu0 %v4895
        %4983 = vmatpush.msra.mxu0 %v4894
        %4984 = vmatpush.msra.mxu0 %v4893
        %4985 = vmatpush.msra.mxu0 %v4892
        %4986 = vmatpush.msra.mxu0 %v4891
        %4987 = vmatpush.msra.mxu0 %v4890
        %4988 = vmatpush.msra.mxu0 %v4889
        %4989 = vmatmul.f32.gmra.mxu0 %v4868
        %v4990 = vpop.f32.mrf.mxu0
        %v4991 = vadd.f32 %v4971, %v4990
        %4992 = vdwg.mxu0
        %4993 = vmatpush.msra.mxu0 %v4920
        %4994 = vmatpush.msra.mxu0 %v4919
        %4995 = vmatpush.msra.mxu0 %v4918
        %4996 = vmatpush.msra.mxu0 %v4917
        %4997 = vmatpush.msra.mxu0 %v4916
        %4998 = vmatpush.msra.mxu0 %v4915
        %4999 = vmatpush.msra.mxu0 %v4914
        %5000 = vmatpush.msra.mxu0 %v4913
        %5001 = vmatpush.msra.mxu0 %v4912
        %5002 = vmatpush.msra.mxu0 %v4911
        %5003 = vmatpush.msra.mxu0 %v4910
        %5004 = vmatpush.msra.mxu0 %v4909
        %5005 = vmatpush.msra.mxu0 %v4908
        %5006 = vmatpush.msra.mxu0 %v4907
        %5007 = vmatpush.msra.mxu0 %v4906
        %5008 = vmatpush.msra.mxu0 %v4905
        %5009 = vmatmul.f32.gmra.mxu0 %v4869
        %v5010 = vpop.f32.mrf.mxu0
        %v5011 = vadd.f32 %v4991, %v5010
        %5012 = vdwg.mxu0
        %5013 = vmatpush.msra.mxu0 %v4936
        %5014 = vmatpush.msra.mxu0 %v4935
        %5015 = vmatpush.msra.mxu0 %v4934
        %5016 = vmatpush.msra.mxu0 %v4933
        %5017 = vmatpush.msra.mxu0 %v4932
        %5018 = vmatpush.msra.mxu0 %v4931
        %5019 = vmatpush.msra.mxu0 %v4930
        %5020 = vmatpush.msra.mxu0 %v4929
        %5021 = vmatpush.msra.mxu0 %v4928
        %5022 = vmatpush.msra.mxu0 %v4927
        %5023 = vmatpush.msra.mxu0 %v4926
        %5024 = vmatpush.msra.mxu0 %v4925
        %5025 = vmatpush.msra.mxu0 %v4924
        %5026 = vmatpush.msra.mxu0 %v4923
        %5027 = vmatpush.msra.mxu0 %v4922
        %5028 = vmatpush.msra.mxu0 %v4921
        %5029 = vmatmul.f32.gmra.mxu0 %v4870
        %v5030 = vpop.f32.mrf.mxu0
        %v5031 = vadd.f32 %v5011, %v5030
        %5032 = vdwg.mxu0
        %5033 = vmatpush.msra.mxu0 %v4952
        %5034 = vmatpush.msra.mxu0 %v4951
        %5035 = vmatpush.msra.mxu0 %v4950
        %5036 = vmatpush.msra.mxu0 %v4949
        %5037 = vmatpush.msra.mxu0 %v4948
        %5038 = vmatpush.msra.mxu0 %v4947
        %5039 = vmatpush.msra.mxu0 %v4946
        %5040 = vmatpush.msra.mxu0 %v4945
        %5041 = vmatpush.msra.mxu0 %v4944
        %5042 = vmatpush.msra.mxu0 %v4943
        %5043 = vmatpush.msra.mxu0 %v4942
        %5044 = vmatpush.msra.mxu0 %v4941
        %5045 = vmatpush.msra.mxu0 %v4940
        %5046 = vmatpush.msra.mxu0 %v4939
        %5047 = vmatpush.msra.mxu0 %v4938
        %5048 = vmatpush.msra.mxu0 %v4937
        %5049 = vmatmul.f32.gmra.mxu0 %v4871
        %v5050 = vpop.f32.mrf.mxu0
        %v5051 = vadd.f32 %v5031, %v5050
        %5052 = vdwg.mxu0
        %v5053 = vadd.f32 %v4866, %v5051
        %v5054 = vld [vmem:[#allocation3 + $0x140] sm:$0xff]
        %v5055 = vld [vmem:[#allocation3 + $0x148] sm:$0xff]
        %v5056 = vld [vmem:[#allocation3 + $0x150] sm:$0xff]
        %v5057 = vld [vmem:[#allocation3 + $0x158] sm:$0xff]
        %v5058 = vld [vmem:[#allocation3 + $0x160] sm:$0xff]
        %s5059 = scalar_lea.vmem %s3, 5120
        %v5060 = vld [vmem:[%s5059] sm:$0xff]
        %v5061 = vld [vmem:[%s5059 + $0x8] sm:$0xff]
        %v5062 = vld [vmem:[%s5059 + $0x10] sm:$0xff]
        %v5063 = vld [vmem:[%s5059 + $0x18] sm:$0xff]
        %v5064 = vld [vmem:[%s5059 + $0x20] sm:$0xff]
        %v5065 = vld [vmem:[%s5059 + $0x28] sm:$0xff]
        %v5066 = vld [vmem:[%s5059 + $0x30] sm:$0xff]
        %v5067 = vld [vmem:[%s5059 + $0x38] sm:$0xff]
        %v5068 = vld [vmem:[%s5059 + $0x40] sm:$0xff]
        %v5069 = vld [vmem:[%s5059 + $0x48] sm:$0xff]
        %v5070 = vld [vmem:[%s5059 + $0x50] sm:$0xff]
        %v5071 = vld [vmem:[%s5059 + $0x58] sm:$0xff]
        %v5072 = vld [vmem:[%s5059 + $0x60] sm:$0xff]
        %v5073 = vld [vmem:[%s5059 + $0x68] sm:$0xff]
        %v5074 = vld [vmem:[%s5059 + $0x70] sm:$0xff]
        %v5075 = vld [vmem:[%s5059 + $0x78] sm:$0xff]
        %v5076 = vld [vmem:[%s5059 + $0x80] sm:$0xff]
        %v5077 = vld [vmem:[%s5059 + $0x88] sm:$0xff]
        %v5078 = vld [vmem:[%s5059 + $0x90] sm:$0xff]
        %v5079 = vld [vmem:[%s5059 + $0x98] sm:$0xff]
        %v5080 = vld [vmem:[%s5059 + $0xa0] sm:$0xff]
        %v5081 = vld [vmem:[%s5059 + $0xa8] sm:$0xff]
        %v5082 = vld [vmem:[%s5059 + $0xb0] sm:$0xff]
        %v5083 = vld [vmem:[%s5059 + $0xb8] sm:$0xff]
        %v5084 = vld [vmem:[%s5059 + $0xc0] sm:$0xff]
        %v5085 = vld [vmem:[%s5059 + $0xc8] sm:$0xff]
        %v5086 = vld [vmem:[%s5059 + $0xd0] sm:$0xff]
        %v5087 = vld [vmem:[%s5059 + $0xd8] sm:$0xff]
        %v5088 = vld [vmem:[%s5059 + $0xe0] sm:$0xff]
        %v5089 = vld [vmem:[%s5059 + $0xe8] sm:$0xff]
        %v5090 = vld [vmem:[%s5059 + $0xf0] sm:$0xff]
        %v5091 = vld [vmem:[%s5059 + $0xf8] sm:$0xff]
        %v5092 = vld [vmem:[%s5059 + $0x100] sm:$0xff]
        %v5093 = vld [vmem:[%s5059 + $0x108] sm:$0xff]
        %v5094 = vld [vmem:[%s5059 + $0x110] sm:$0xff]
        %v5095 = vld [vmem:[%s5059 + $0x118] sm:$0xff]
        %v5096 = vld [vmem:[%s5059 + $0x120] sm:$0xff]
        %v5097 = vld [vmem:[%s5059 + $0x128] sm:$0xff]
        %v5098 = vld [vmem:[%s5059 + $0x130] sm:$0xff]
        %v5099 = vld [vmem:[%s5059 + $0x138] sm:$0xff]
        %v5100 = vld [vmem:[%s5059 + $0x140] sm:$0xff]
        %v5101 = vld [vmem:[%s5059 + $0x148] sm:$0xff]
        %v5102 = vld [vmem:[%s5059 + $0x150] sm:$0xff]
        %v5103 = vld [vmem:[%s5059 + $0x158] sm:$0xff]
        %v5104 = vld [vmem:[%s5059 + $0x160] sm:$0xff]
        %v5105 = vld [vmem:[%s5059 + $0x168] sm:$0xff]
        %v5106 = vld [vmem:[%s5059 + $0x170] sm:$0xff]
        %v5107 = vld [vmem:[%s5059 + $0x178] sm:$0xff]
        %v5108 = vld [vmem:[%s5059 + $0x180] sm:$0xff]
        %v5109 = vld [vmem:[%s5059 + $0x188] sm:$0xff]
        %v5110 = vld [vmem:[%s5059 + $0x190] sm:$0xff]
        %v5111 = vld [vmem:[%s5059 + $0x198] sm:$0xff]
        %v5112 = vld [vmem:[%s5059 + $0x1a0] sm:$0xff]
        %v5113 = vld [vmem:[%s5059 + $0x1a8] sm:$0xff]
        %v5114 = vld [vmem:[%s5059 + $0x1b0] sm:$0xff]
        %v5115 = vld [vmem:[%s5059 + $0x1b8] sm:$0xff]
        %v5116 = vld [vmem:[%s5059 + $0x1c0] sm:$0xff]
        %v5117 = vld [vmem:[%s5059 + $0x1c8] sm:$0xff]
        %v5118 = vld [vmem:[%s5059 + $0x1d0] sm:$0xff]
        %v5119 = vld [vmem:[%s5059 + $0x1d8] sm:$0xff]
        %v5120 = vld [vmem:[%s5059 + $0x1e0] sm:$0xff]
        %v5121 = vld [vmem:[%s5059 + $0x1e8] sm:$0xff]
        %v5122 = vld [vmem:[%s5059 + $0x1f0] sm:$0xff]
        %v5123 = vld [vmem:[%s5059 + $0x1f8] sm:$0xff]
        %v5124 = vld [vmem:[%s5059 + $0x200] sm:$0xff]
        %v5125 = vld [vmem:[%s5059 + $0x208] sm:$0xff]
        %v5126 = vld [vmem:[%s5059 + $0x210] sm:$0xff]
        %v5127 = vld [vmem:[%s5059 + $0x218] sm:$0xff]
        %v5128 = vld [vmem:[%s5059 + $0x220] sm:$0xff]
        %v5129 = vld [vmem:[%s5059 + $0x228] sm:$0xff]
        %v5130 = vld [vmem:[%s5059 + $0x230] sm:$0xff]
        %v5131 = vld [vmem:[%s5059 + $0x238] sm:$0xff]
        %v5132 = vld [vmem:[%s5059 + $0x240] sm:$0xff]
        %v5133 = vld [vmem:[%s5059 + $0x248] sm:$0xff]
        %v5134 = vld [vmem:[%s5059 + $0x250] sm:$0xff]
        %v5135 = vld [vmem:[%s5059 + $0x258] sm:$0xff]
        %v5136 = vld [vmem:[%s5059 + $0x260] sm:$0xff]
        %v5137 = vld [vmem:[%s5059 + $0x268] sm:$0xff]
        %v5138 = vld [vmem:[%s5059 + $0x270] sm:$0xff]
        %v5139 = vld [vmem:[%s5059 + $0x278] sm:$0xff]
        %5140 = vmatpush.msra.mxu0 %v5075
        %5141 = vmatpush.msra.mxu0 %v5074
        %5142 = vmatpush.msra.mxu0 %v5073
        %5143 = vmatpush.msra.mxu0 %v5072
        %5144 = vmatpush.msra.mxu0 %v5071
        %5145 = vmatpush.msra.mxu0 %v5070
        %5146 = vmatpush.msra.mxu0 %v5069
        %5147 = vmatpush.msra.mxu0 %v5068
        %5148 = vmatpush.msra.mxu0 %v5067
        %5149 = vmatpush.msra.mxu0 %v5066
        %5150 = vmatpush.msra.mxu0 %v5065
        %5151 = vmatpush.msra.mxu0 %v5064
        %5152 = vmatpush.msra.mxu0 %v5063
        %5153 = vmatpush.msra.mxu0 %v5062
        %5154 = vmatpush.msra.mxu0 %v5061
        %5155 = vmatpush.msra.mxu0 %v5060
        %5156 = vmatmul.f32.gmra.mxu0 %v5054
        %v5157 = vpop.f32.mrf.mxu0
        %v5158 = vadd.f32 0.0, %v5157
        %5159 = vdwg.mxu0
        %5160 = vmatpush.msra.mxu0 %v5091
        %5161 = vmatpush.msra.mxu0 %v5090
        %5162 = vmatpush.msra.mxu0 %v5089
        %5163 = vmatpush.msra.mxu0 %v5088
        %5164 = vmatpush.msra.mxu0 %v5087
        %5165 = vmatpush.msra.mxu0 %v5086
        %5166 = vmatpush.msra.mxu0 %v5085
        %5167 = vmatpush.msra.mxu0 %v5084
        %5168 = vmatpush.msra.mxu0 %v5083
        %5169 = vmatpush.msra.mxu0 %v5082
        %5170 = vmatpush.msra.mxu0 %v5081
        %5171 = vmatpush.msra.mxu0 %v5080
        %5172 = vmatpush.msra.mxu0 %v5079
        %5173 = vmatpush.msra.mxu0 %v5078
        %5174 = vmatpush.msra.mxu0 %v5077
        %5175 = vmatpush.msra.mxu0 %v5076
        %5176 = vmatmul.f32.gmra.mxu0 %v5055
        %v5177 = vpop.f32.mrf.mxu0
        %v5178 = vadd.f32 %v5158, %v5177
        %5179 = vdwg.mxu0
        %5180 = vmatpush.msra.mxu0 %v5107
        %5181 = vmatpush.msra.mxu0 %v5106
        %5182 = vmatpush.msra.mxu0 %v5105
        %5183 = vmatpush.msra.mxu0 %v5104
        %5184 = vmatpush.msra.mxu0 %v5103
        %5185 = vmatpush.msra.mxu0 %v5102
        %5186 = vmatpush.msra.mxu0 %v5101
        %5187 = vmatpush.msra.mxu0 %v5100
        %5188 = vmatpush.msra.mxu0 %v5099
        %5189 = vmatpush.msra.mxu0 %v5098
        %5190 = vmatpush.msra.mxu0 %v5097
        %5191 = vmatpush.msra.mxu0 %v5096
        %5192 = vmatpush.msra.mxu0 %v5095
        %5193 = vmatpush.msra.mxu0 %v5094
        %5194 = vmatpush.msra.mxu0 %v5093
        %5195 = vmatpush.msra.mxu0 %v5092
        %5196 = vmatmul.f32.gmra.mxu0 %v5056
        %v5197 = vpop.f32.mrf.mxu0
        %v5198 = vadd.f32 %v5178, %v5197
        %5199 = vdwg.mxu0
        %5200 = vmatpush.msra.mxu0 %v5123
        %5201 = vmatpush.msra.mxu0 %v5122
        %5202 = vmatpush.msra.mxu0 %v5121
        %5203 = vmatpush.msra.mxu0 %v5120
        %5204 = vmatpush.msra.mxu0 %v5119
        %5205 = vmatpush.msra.mxu0 %v5118
        %5206 = vmatpush.msra.mxu0 %v5117
        %5207 = vmatpush.msra.mxu0 %v5116
        %5208 = vmatpush.msra.mxu0 %v5115
        %5209 = vmatpush.msra.mxu0 %v5114
        %5210 = vmatpush.msra.mxu0 %v5113
        %5211 = vmatpush.msra.mxu0 %v5112
        %5212 = vmatpush.msra.mxu0 %v5111
        %5213 = vmatpush.msra.mxu0 %v5110
        %5214 = vmatpush.msra.mxu0 %v5109
        %5215 = vmatpush.msra.mxu0 %v5108
        %5216 = vmatmul.f32.gmra.mxu0 %v5057
        %v5217 = vpop.f32.mrf.mxu0
        %v5218 = vadd.f32 %v5198, %v5217
        %5219 = vdwg.mxu0
        %5220 = vmatpush.msra.mxu0 %v5139
        %5221 = vmatpush.msra.mxu0 %v5138
        %5222 = vmatpush.msra.mxu0 %v5137
        %5223 = vmatpush.msra.mxu0 %v5136
        %5224 = vmatpush.msra.mxu0 %v5135
        %5225 = vmatpush.msra.mxu0 %v5134
        %5226 = vmatpush.msra.mxu0 %v5133
        %5227 = vmatpush.msra.mxu0 %v5132
        %5228 = vmatpush.msra.mxu0 %v5131
        %5229 = vmatpush.msra.mxu0 %v5130
        %5230 = vmatpush.msra.mxu0 %v5129
        %5231 = vmatpush.msra.mxu0 %v5128
        %5232 = vmatpush.msra.mxu0 %v5127
        %5233 = vmatpush.msra.mxu0 %v5126
        %5234 = vmatpush.msra.mxu0 %v5125
        %5235 = vmatpush.msra.mxu0 %v5124
        %5236 = vmatmul.f32.gmra.mxu0 %v5058
        %v5237 = vpop.f32.mrf.mxu0
        %v5238 = vadd.f32 %v5218, %v5237
        %5239 = vdwg.mxu0
        %v5240 = vadd.f32 %v5053, %v5238
        %v5241 = vld [vmem:[#allocation3 + $0x168] sm:$0xff]
        %v5242 = vld [vmem:[#allocation3 + $0x170] sm:$0xff]
        %v5243 = vld [vmem:[#allocation3 + $0x178] sm:$0xff]
        %v5244 = vld [vmem:[#allocation3 + $0x180] sm:$0xff]
        %v5245 = vld [vmem:[#allocation3 + $0x188] sm:$0xff]
        %s5246 = scalar_lea.vmem %s3, 5760
        %v5247 = vld [vmem:[%s5246] sm:$0xff]
        %v5248 = vld [vmem:[%s5246 + $0x8] sm:$0xff]
        %v5249 = vld [vmem:[%s5246 + $0x10] sm:$0xff]
        %v5250 = vld [vmem:[%s5246 + $0x18] sm:$0xff]
        %v5251 = vld [vmem:[%s5246 + $0x20] sm:$0xff]
        %v5252 = vld [vmem:[%s5246 + $0x28] sm:$0xff]
        %v5253 = vld [vmem:[%s5246 + $0x30] sm:$0xff]
        %v5254 = vld [vmem:[%s5246 + $0x38] sm:$0xff]
        %v5255 = vld [vmem:[%s5246 + $0x40] sm:$0xff]
        %v5256 = vld [vmem:[%s5246 + $0x48] sm:$0xff]
        %v5257 = vld [vmem:[%s5246 + $0x50] sm:$0xff]
        %v5258 = vld [vmem:[%s5246 + $0x58] sm:$0xff]
        %v5259 = vld [vmem:[%s5246 + $0x60] sm:$0xff]
        %v5260 = vld [vmem:[%s5246 + $0x68] sm:$0xff]
        %v5261 = vld [vmem:[%s5246 + $0x70] sm:$0xff]
        %v5262 = vld [vmem:[%s5246 + $0x78] sm:$0xff]
        %v5263 = vld [vmem:[%s5246 + $0x80] sm:$0xff]
        %v5264 = vld [vmem:[%s5246 + $0x88] sm:$0xff]
        %v5265 = vld [vmem:[%s5246 + $0x90] sm:$0xff]
        %v5266 = vld [vmem:[%s5246 + $0x98] sm:$0xff]
        %v5267 = vld [vmem:[%s5246 + $0xa0] sm:$0xff]
        %v5268 = vld [vmem:[%s5246 + $0xa8] sm:$0xff]
        %v5269 = vld [vmem:[%s5246 + $0xb0] sm:$0xff]
        %v5270 = vld [vmem:[%s5246 + $0xb8] sm:$0xff]
        %v5271 = vld [vmem:[%s5246 + $0xc0] sm:$0xff]
        %v5272 = vld [vmem:[%s5246 + $0xc8] sm:$0xff]
        %v5273 = vld [vmem:[%s5246 + $0xd0] sm:$0xff]
        %v5274 = vld [vmem:[%s5246 + $0xd8] sm:$0xff]
        %v5275 = vld [vmem:[%s5246 + $0xe0] sm:$0xff]
        %v5276 = vld [vmem:[%s5246 + $0xe8] sm:$0xff]
        %v5277 = vld [vmem:[%s5246 + $0xf0] sm:$0xff]
        %v5278 = vld [vmem:[%s5246 + $0xf8] sm:$0xff]
        %v5279 = vld [vmem:[%s5246 + $0x100] sm:$0xff]
        %v5280 = vld [vmem:[%s5246 + $0x108] sm:$0xff]
        %v5281 = vld [vmem:[%s5246 + $0x110] sm:$0xff]
        %v5282 = vld [vmem:[%s5246 + $0x118] sm:$0xff]
        %v5283 = vld [vmem:[%s5246 + $0x120] sm:$0xff]
        %v5284 = vld [vmem:[%s5246 + $0x128] sm:$0xff]
        %v5285 = vld [vmem:[%s5246 + $0x130] sm:$0xff]
        %v5286 = vld [vmem:[%s5246 + $0x138] sm:$0xff]
        %v5287 = vld [vmem:[%s5246 + $0x140] sm:$0xff]
        %v5288 = vld [vmem:[%s5246 + $0x148] sm:$0xff]
        %v5289 = vld [vmem:[%s5246 + $0x150] sm:$0xff]
        %v5290 = vld [vmem:[%s5246 + $0x158] sm:$0xff]
        %v5291 = vld [vmem:[%s5246 + $0x160] sm:$0xff]
        %v5292 = vld [vmem:[%s5246 + $0x168] sm:$0xff]
        %v5293 = vld [vmem:[%s5246 + $0x170] sm:$0xff]
        %v5294 = vld [vmem:[%s5246 + $0x178] sm:$0xff]
        %v5295 = vld [vmem:[%s5246 + $0x180] sm:$0xff]
        %v5296 = vld [vmem:[%s5246 + $0x188] sm:$0xff]
        %v5297 = vld [vmem:[%s5246 + $0x190] sm:$0xff]
        %v5298 = vld [vmem:[%s5246 + $0x198] sm:$0xff]
        %v5299 = vld [vmem:[%s5246 + $0x1a0] sm:$0xff]
        %v5300 = vld [vmem:[%s5246 + $0x1a8] sm:$0xff]
        %v5301 = vld [vmem:[%s5246 + $0x1b0] sm:$0xff]
        %v5302 = vld [vmem:[%s5246 + $0x1b8] sm:$0xff]
        %v5303 = vld [vmem:[%s5246 + $0x1c0] sm:$0xff]
        %v5304 = vld [vmem:[%s5246 + $0x1c8] sm:$0xff]
        %v5305 = vld [vmem:[%s5246 + $0x1d0] sm:$0xff]
        %v5306 = vld [vmem:[%s5246 + $0x1d8] sm:$0xff]
        %v5307 = vld [vmem:[%s5246 + $0x1e0] sm:$0xff]
        %v5308 = vld [vmem:[%s5246 + $0x1e8] sm:$0xff]
        %v5309 = vld [vmem:[%s5246 + $0x1f0] sm:$0xff]
        %v5310 = vld [vmem:[%s5246 + $0x1f8] sm:$0xff]
        %v5311 = vld [vmem:[%s5246 + $0x200] sm:$0xff]
        %v5312 = vld [vmem:[%s5246 + $0x208] sm:$0xff]
        %v5313 = vld [vmem:[%s5246 + $0x210] sm:$0xff]
        %v5314 = vld [vmem:[%s5246 + $0x218] sm:$0xff]
        %v5315 = vld [vmem:[%s5246 + $0x220] sm:$0xff]
        %v5316 = vld [vmem:[%s5246 + $0x228] sm:$0xff]
        %v5317 = vld [vmem:[%s5246 + $0x230] sm:$0xff]
        %v5318 = vld [vmem:[%s5246 + $0x238] sm:$0xff]
        %v5319 = vld [vmem:[%s5246 + $0x240] sm:$0xff]
        %v5320 = vld [vmem:[%s5246 + $0x248] sm:$0xff]
        %v5321 = vld [vmem:[%s5246 + $0x250] sm:$0xff]
        %v5322 = vld [vmem:[%s5246 + $0x258] sm:$0xff]
        %v5323 = vld [vmem:[%s5246 + $0x260] sm:$0xff]
        %v5324 = vld [vmem:[%s5246 + $0x268] sm:$0xff]
        %v5325 = vld [vmem:[%s5246 + $0x270] sm:$0xff]
        %v5326 = vld [vmem:[%s5246 + $0x278] sm:$0xff]
        %5327 = vmatpush.msra.mxu0 %v5262
        %5328 = vmatpush.msra.mxu0 %v5261
        %5329 = vmatpush.msra.mxu0 %v5260
        %5330 = vmatpush.msra.mxu0 %v5259
        %5331 = vmatpush.msra.mxu0 %v5258
        %5332 = vmatpush.msra.mxu0 %v5257
        %5333 = vmatpush.msra.mxu0 %v5256
        %5334 = vmatpush.msra.mxu0 %v5255
        %5335 = vmatpush.msra.mxu0 %v5254
        %5336 = vmatpush.msra.mxu0 %v5253
        %5337 = vmatpush.msra.mxu0 %v5252
        %5338 = vmatpush.msra.mxu0 %v5251
        %5339 = vmatpush.msra.mxu0 %v5250
        %5340 = vmatpush.msra.mxu0 %v5249
        %5341 = vmatpush.msra.mxu0 %v5248
        %5342 = vmatpush.msra.mxu0 %v5247
        %5343 = vmatmul.f32.gmra.mxu0 %v5241
        %v5344 = vpop.f32.mrf.mxu0
        %v5345 = vadd.f32 0.0, %v5344
        %5346 = vdwg.mxu0
        %5347 = vmatpush.msra.mxu0 %v5278
        %5348 = vmatpush.msra.mxu0 %v5277
        %5349 = vmatpush.msra.mxu0 %v5276
        %5350 = vmatpush.msra.mxu0 %v5275
        %5351 = vmatpush.msra.mxu0 %v5274
        %5352 = vmatpush.msra.mxu0 %v5273
        %5353 = vmatpush.msra.mxu0 %v5272
        %5354 = vmatpush.msra.mxu0 %v5271
        %5355 = vmatpush.msra.mxu0 %v5270
        %5356 = vmatpush.msra.mxu0 %v5269
        %5357 = vmatpush.msra.mxu0 %v5268
        %5358 = vmatpush.msra.mxu0 %v5267
        %5359 = vmatpush.msra.mxu0 %v5266
        %5360 = vmatpush.msra.mxu0 %v5265
        %5361 = vmatpush.msra.mxu0 %v5264
        %5362 = vmatpush.msra.mxu0 %v5263
        %5363 = vmatmul.f32.gmra.mxu0 %v5242
        %v5364 = vpop.f32.mrf.mxu0
        %v5365 = vadd.f32 %v5345, %v5364
        %5366 = vdwg.mxu0
        %5367 = vmatpush.msra.mxu0 %v5294
        %5368 = vmatpush.msra.mxu0 %v5293
        %5369 = vmatpush.msra.mxu0 %v5292
        %5370 = vmatpush.msra.mxu0 %v5291
        %5371 = vmatpush.msra.mxu0 %v5290
        %5372 = vmatpush.msra.mxu0 %v5289
        %5373 = vmatpush.msra.mxu0 %v5288
        %5374 = vmatpush.msra.mxu0 %v5287
        %5375 = vmatpush.msra.mxu0 %v5286
        %5376 = vmatpush.msra.mxu0 %v5285
        %5377 = vmatpush.msra.mxu0 %v5284
        %5378 = vmatpush.msra.mxu0 %v5283
        %5379 = vmatpush.msra.mxu0 %v5282
        %5380 = vmatpush.msra.mxu0 %v5281
        %5381 = vmatpush.msra.mxu0 %v5280
        %5382 = vmatpush.msra.mxu0 %v5279
        %5383 = vmatmul.f32.gmra.mxu0 %v5243
        %v5384 = vpop.f32.mrf.mxu0
        %v5385 = vadd.f32 %v5365, %v5384
        %5386 = vdwg.mxu0
        %5387 = vmatpush.msra.mxu0 %v5310
        %5388 = vmatpush.msra.mxu0 %v5309
        %5389 = vmatpush.msra.mxu0 %v5308
        %5390 = vmatpush.msra.mxu0 %v5307
        %5391 = vmatpush.msra.mxu0 %v5306
        %5392 = vmatpush.msra.mxu0 %v5305
        %5393 = vmatpush.msra.mxu0 %v5304
        %5394 = vmatpush.msra.mxu0 %v5303
        %5395 = vmatpush.msra.mxu0 %v5302
        %5396 = vmatpush.msra.mxu0 %v5301
        %5397 = vmatpush.msra.mxu0 %v5300
        %5398 = vmatpush.msra.mxu0 %v5299
        %5399 = vmatpush.msra.mxu0 %v5298
        %5400 = vmatpush.msra.mxu0 %v5297
        %5401 = vmatpush.msra.mxu0 %v5296
        %5402 = vmatpush.msra.mxu0 %v5295
        %5403 = vmatmul.f32.gmra.mxu0 %v5244
        %v5404 = vpop.f32.mrf.mxu0
        %v5405 = vadd.f32 %v5385, %v5404
        %5406 = vdwg.mxu0
        %5407 = vmatpush.msra.mxu0 %v5326
        %5408 = vmatpush.msra.mxu0 %v5325
        %5409 = vmatpush.msra.mxu0 %v5324
        %5410 = vmatpush.msra.mxu0 %v5323
        %5411 = vmatpush.msra.mxu0 %v5322
        %5412 = vmatpush.msra.mxu0 %v5321
        %5413 = vmatpush.msra.mxu0 %v5320
        %5414 = vmatpush.msra.mxu0 %v5319
        %5415 = vmatpush.msra.mxu0 %v5318
        %5416 = vmatpush.msra.mxu0 %v5317
        %5417 = vmatpush.msra.mxu0 %v5316
        %5418 = vmatpush.msra.mxu0 %v5315
        %5419 = vmatpush.msra.mxu0 %v5314
        %5420 = vmatpush.msra.mxu0 %v5313
        %5421 = vmatpush.msra.mxu0 %v5312
        %5422 = vmatpush.msra.mxu0 %v5311
        %5423 = vmatmul.f32.gmra.mxu0 %v5245
        %v5424 = vpop.f32.mrf.mxu0
        %v5425 = vadd.f32 %v5405, %v5424
        %5426 = vdwg.mxu0
        %v5427 = vadd.f32 %v5240, %v5425
        %v5428 = vld [vmem:[#allocation3 + $0x190] sm:$0xff]
        %v5429 = vld [vmem:[#allocation3 + $0x198] sm:$0xff]
        %v5430 = vld [vmem:[#allocation3 + $0x1a0] sm:$0xff]
        %v5431 = vld [vmem:[#allocation3 + $0x1a8] sm:$0xff]
        %v5432 = vld [vmem:[#allocation3 + $0x1b0] sm:$0xff]
        %s5433 = scalar_lea.vmem %s3, 6400
        %v5434 = vld [vmem:[%s5433] sm:$0xff]
        %v5435 = vld [vmem:[%s5433 + $0x8] sm:$0xff]
        %v5436 = vld [vmem:[%s5433 + $0x10] sm:$0xff]
        %v5437 = vld [vmem:[%s5433 + $0x18] sm:$0xff]
        %v5438 = vld [vmem:[%s5433 + $0x20] sm:$0xff]
        %v5439 = vld [vmem:[%s5433 + $0x28] sm:$0xff]
        %v5440 = vld [vmem:[%s5433 + $0x30] sm:$0xff]
        %v5441 = vld [vmem:[%s5433 + $0x38] sm:$0xff]
        %v5442 = vld [vmem:[%s5433 + $0x40] sm:$0xff]
        %v5443 = vld [vmem:[%s5433 + $0x48] sm:$0xff]
        %v5444 = vld [vmem:[%s5433 + $0x50] sm:$0xff]
        %v5445 = vld [vmem:[%s5433 + $0x58] sm:$0xff]
        %v5446 = vld [vmem:[%s5433 + $0x60] sm:$0xff]
        %v5447 = vld [vmem:[%s5433 + $0x68] sm:$0xff]
        %v5448 = vld [vmem:[%s5433 + $0x70] sm:$0xff]
        %v5449 = vld [vmem:[%s5433 + $0x78] sm:$0xff]
        %v5450 = vld [vmem:[%s5433 + $0x80] sm:$0xff]
        %v5451 = vld [vmem:[%s5433 + $0x88] sm:$0xff]
        %v5452 = vld [vmem:[%s5433 + $0x90] sm:$0xff]
        %v5453 = vld [vmem:[%s5433 + $0x98] sm:$0xff]
        %v5454 = vld [vmem:[%s5433 + $0xa0] sm:$0xff]
        %v5455 = vld [vmem:[%s5433 + $0xa8] sm:$0xff]
        %v5456 = vld [vmem:[%s5433 + $0xb0] sm:$0xff]
        %v5457 = vld [vmem:[%s5433 + $0xb8] sm:$0xff]
        %v5458 = vld [vmem:[%s5433 + $0xc0] sm:$0xff]
        %v5459 = vld [vmem:[%s5433 + $0xc8] sm:$0xff]
        %v5460 = vld [vmem:[%s5433 + $0xd0] sm:$0xff]
        %v5461 = vld [vmem:[%s5433 + $0xd8] sm:$0xff]
        %v5462 = vld [vmem:[%s5433 + $0xe0] sm:$0xff]
        %v5463 = vld [vmem:[%s5433 + $0xe8] sm:$0xff]
        %v5464 = vld [vmem:[%s5433 + $0xf0] sm:$0xff]
        %v5465 = vld [vmem:[%s5433 + $0xf8] sm:$0xff]
        %v5466 = vld [vmem:[%s5433 + $0x100] sm:$0xff]
        %v5467 = vld [vmem:[%s5433 + $0x108] sm:$0xff]
        %v5468 = vld [vmem:[%s5433 + $0x110] sm:$0xff]
        %v5469 = vld [vmem:[%s5433 + $0x118] sm:$0xff]
        %v5470 = vld [vmem:[%s5433 + $0x120] sm:$0xff]
        %v5471 = vld [vmem:[%s5433 + $0x128] sm:$0xff]
        %v5472 = vld [vmem:[%s5433 + $0x130] sm:$0xff]
        %v5473 = vld [vmem:[%s5433 + $0x138] sm:$0xff]
        %v5474 = vld [vmem:[%s5433 + $0x140] sm:$0xff]
        %v5475 = vld [vmem:[%s5433 + $0x148] sm:$0xff]
        %v5476 = vld [vmem:[%s5433 + $0x150] sm:$0xff]
        %v5477 = vld [vmem:[%s5433 + $0x158] sm:$0xff]
        %v5478 = vld [vmem:[%s5433 + $0x160] sm:$0xff]
        %v5479 = vld [vmem:[%s5433 + $0x168] sm:$0xff]
        %v5480 = vld [vmem:[%s5433 + $0x170] sm:$0xff]
        %v5481 = vld [vmem:[%s5433 + $0x178] sm:$0xff]
        %v5482 = vld [vmem:[%s5433 + $0x180] sm:$0xff]
        %v5483 = vld [vmem:[%s5433 + $0x188] sm:$0xff]
        %v5484 = vld [vmem:[%s5433 + $0x190] sm:$0xff]
        %v5485 = vld [vmem:[%s5433 + $0x198] sm:$0xff]
        %v5486 = vld [vmem:[%s5433 + $0x1a0] sm:$0xff]
        %v5487 = vld [vmem:[%s5433 + $0x1a8] sm:$0xff]
        %v5488 = vld [vmem:[%s5433 + $0x1b0] sm:$0xff]
        %v5489 = vld [vmem:[%s5433 + $0x1b8] sm:$0xff]
        %v5490 = vld [vmem:[%s5433 + $0x1c0] sm:$0xff]
        %v5491 = vld [vmem:[%s5433 + $0x1c8] sm:$0xff]
        %v5492 = vld [vmem:[%s5433 + $0x1d0] sm:$0xff]
        %v5493 = vld [vmem:[%s5433 + $0x1d8] sm:$0xff]
        %v5494 = vld [vmem:[%s5433 + $0x1e0] sm:$0xff]
        %v5495 = vld [vmem:[%s5433 + $0x1e8] sm:$0xff]
        %v5496 = vld [vmem:[%s5433 + $0x1f0] sm:$0xff]
        %v5497 = vld [vmem:[%s5433 + $0x1f8] sm:$0xff]
        %v5498 = vld [vmem:[%s5433 + $0x200] sm:$0xff]
        %v5499 = vld [vmem:[%s5433 + $0x208] sm:$0xff]
        %v5500 = vld [vmem:[%s5433 + $0x210] sm:$0xff]
        %v5501 = vld [vmem:[%s5433 + $0x218] sm:$0xff]
        %v5502 = vld [vmem:[%s5433 + $0x220] sm:$0xff]
        %v5503 = vld [vmem:[%s5433 + $0x228] sm:$0xff]
        %v5504 = vld [vmem:[%s5433 + $0x230] sm:$0xff]
        %v5505 = vld [vmem:[%s5433 + $0x238] sm:$0xff]
        %v5506 = vld [vmem:[%s5433 + $0x240] sm:$0xff]
        %v5507 = vld [vmem:[%s5433 + $0x248] sm:$0xff]
        %v5508 = vld [vmem:[%s5433 + $0x250] sm:$0xff]
        %v5509 = vld [vmem:[%s5433 + $0x258] sm:$0xff]
        %v5510 = vld [vmem:[%s5433 + $0x260] sm:$0xff]
        %v5511 = vld [vmem:[%s5433 + $0x268] sm:$0xff]
        %v5512 = vld [vmem:[%s5433 + $0x270] sm:$0xff]
        %v5513 = vld [vmem:[%s5433 + $0x278] sm:$0xff]
        %5514 = vmatpush.msra.mxu0 %v5449
        %5515 = vmatpush.msra.mxu0 %v5448
        %5516 = vmatpush.msra.mxu0 %v5447
        %5517 = vmatpush.msra.mxu0 %v5446
        %5518 = vmatpush.msra.mxu0 %v5445
        %5519 = vmatpush.msra.mxu0 %v5444
        %5520 = vmatpush.msra.mxu0 %v5443
        %5521 = vmatpush.msra.mxu0 %v5442
        %5522 = vmatpush.msra.mxu0 %v5441
        %5523 = vmatpush.msra.mxu0 %v5440
        %5524 = vmatpush.msra.mxu0 %v5439
        %5525 = vmatpush.msra.mxu0 %v5438
        %5526 = vmatpush.msra.mxu0 %v5437
        %5527 = vmatpush.msra.mxu0 %v5436
        %5528 = vmatpush.msra.mxu0 %v5435
        %5529 = vmatpush.msra.mxu0 %v5434
        %5530 = vmatmul.f32.gmra.mxu0 %v5428
        %v5531 = vpop.f32.mrf.mxu0
        %v5532 = vadd.f32 0.0, %v5531
        %5533 = vdwg.mxu0
        %5534 = vmatpush.msra.mxu0 %v5465
        %5535 = vmatpush.msra.mxu0 %v5464
        %5536 = vmatpush.msra.mxu0 %v5463
        %5537 = vmatpush.msra.mxu0 %v5462
        %5538 = vmatpush.msra.mxu0 %v5461
        %5539 = vmatpush.msra.mxu0 %v5460
        %5540 = vmatpush.msra.mxu0 %v5459
        %5541 = vmatpush.msra.mxu0 %v5458
        %5542 = vmatpush.msra.mxu0 %v5457
        %5543 = vmatpush.msra.mxu0 %v5456
        %5544 = vmatpush.msra.mxu0 %v5455
        %5545 = vmatpush.msra.mxu0 %v5454
        %5546 = vmatpush.msra.mxu0 %v5453
        %5547 = vmatpush.msra.mxu0 %v5452
        %5548 = vmatpush.msra.mxu0 %v5451
        %5549 = vmatpush.msra.mxu0 %v5450
        %5550 = vmatmul.f32.gmra.mxu0 %v5429
        %v5551 = vpop.f32.mrf.mxu0
        %v5552 = vadd.f32 %v5532, %v5551
        %5553 = vdwg.mxu0
        %5554 = vmatpush.msra.mxu0 %v5481
        %5555 = vmatpush.msra.mxu0 %v5480
        %5556 = vmatpush.msra.mxu0 %v5479
        %5557 = vmatpush.msra.mxu0 %v5478
        %5558 = vmatpush.msra.mxu0 %v5477
        %5559 = vmatpush.msra.mxu0 %v5476
        %5560 = vmatpush.msra.mxu0 %v5475
        %5561 = vmatpush.msra.mxu0 %v5474
        %5562 = vmatpush.msra.mxu0 %v5473
        %5563 = vmatpush.msra.mxu0 %v5472
        %5564 = vmatpush.msra.mxu0 %v5471
        %5565 = vmatpush.msra.mxu0 %v5470
        %5566 = vmatpush.msra.mxu0 %v5469
        %5567 = vmatpush.msra.mxu0 %v5468
        %5568 = vmatpush.msra.mxu0 %v5467
        %5569 = vmatpush.msra.mxu0 %v5466
        %5570 = vmatmul.f32.gmra.mxu0 %v5430
        %v5571 = vpop.f32.mrf.mxu0
        %v5572 = vadd.f32 %v5552, %v5571
        %5573 = vdwg.mxu0
        %5574 = vmatpush.msra.mxu0 %v5497
        %5575 = vmatpush.msra.mxu0 %v5496
        %5576 = vmatpush.msra.mxu0 %v5495
        %5577 = vmatpush.msra.mxu0 %v5494
        %5578 = vmatpush.msra.mxu0 %v5493
        %5579 = vmatpush.msra.mxu0 %v5492
        %5580 = vmatpush.msra.mxu0 %v5491
        %5581 = vmatpush.msra.mxu0 %v5490
        %5582 = vmatpush.msra.mxu0 %v5489
        %5583 = vmatpush.msra.mxu0 %v5488
        %5584 = vmatpush.msra.mxu0 %v5487
        %5585 = vmatpush.msra.mxu0 %v5486
        %5586 = vmatpush.msra.mxu0 %v5485
        %5587 = vmatpush.msra.mxu0 %v5484
        %5588 = vmatpush.msra.mxu0 %v5483
        %5589 = vmatpush.msra.mxu0 %v5482
        %5590 = vmatmul.f32.gmra.mxu0 %v5431
        %v5591 = vpop.f32.mrf.mxu0
        %v5592 = vadd.f32 %v5572, %v5591
        %5593 = vdwg.mxu0
        %5594 = vmatpush.msra.mxu0 %v5513
        %5595 = vmatpush.msra.mxu0 %v5512
        %5596 = vmatpush.msra.mxu0 %v5511
        %5597 = vmatpush.msra.mxu0 %v5510
        %5598 = vmatpush.msra.mxu0 %v5509
        %5599 = vmatpush.msra.mxu0 %v5508
        %5600 = vmatpush.msra.mxu0 %v5507
        %5601 = vmatpush.msra.mxu0 %v5506
        %5602 = vmatpush.msra.mxu0 %v5505
        %5603 = vmatpush.msra.mxu0 %v5504
        %5604 = vmatpush.msra.mxu0 %v5503
        %5605 = vmatpush.msra.mxu0 %v5502
        %5606 = vmatpush.msra.mxu0 %v5501
        %5607 = vmatpush.msra.mxu0 %v5500
        %5608 = vmatpush.msra.mxu0 %v5499
        %5609 = vmatpush.msra.mxu0 %v5498
        %5610 = vmatmul.f32.gmra.mxu0 %v5432
        %v5611 = vpop.f32.mrf.mxu0
        %v5612 = vadd.f32 %v5592, %v5611
        %5613 = vdwg.mxu0
        %v5614 = vadd.f32 %v5427, %v5612
        %v5615 = vld [vmem:[#allocation3 + $0x1b8] sm:$0xff]
        %v5616 = vld [vmem:[#allocation3 + $0x1c0] sm:$0xff]
        %v5617 = vld [vmem:[#allocation3 + $0x1c8] sm:$0xff]
        %v5618 = vld [vmem:[#allocation3 + $0x1d0] sm:$0xff]
        %v5619 = vld [vmem:[#allocation3 + $0x1d8] sm:$0xff]
        %s5620 = scalar_lea.vmem %s3, 7040
        %v5621 = vld [vmem:[%s5620] sm:$0xff]
        %v5622 = vld [vmem:[%s5620 + $0x8] sm:$0xff]
        %v5623 = vld [vmem:[%s5620 + $0x10] sm:$0xff]
        %v5624 = vld [vmem:[%s5620 + $0x18] sm:$0xff]
        %v5625 = vld [vmem:[%s5620 + $0x20] sm:$0xff]
        %v5626 = vld [vmem:[%s5620 + $0x28] sm:$0xff]
        %v5627 = vld [vmem:[%s5620 + $0x30] sm:$0xff]
        %v5628 = vld [vmem:[%s5620 + $0x38] sm:$0xff]
        %v5629 = vld [vmem:[%s5620 + $0x40] sm:$0xff]
        %v5630 = vld [vmem:[%s5620 + $0x48] sm:$0xff]
        %v5631 = vld [vmem:[%s5620 + $0x50] sm:$0xff]
        %v5632 = vld [vmem:[%s5620 + $0x58] sm:$0xff]
        %v5633 = vld [vmem:[%s5620 + $0x60] sm:$0xff]
        %v5634 = vld [vmem:[%s5620 + $0x68] sm:$0xff]
        %v5635 = vld [vmem:[%s5620 + $0x70] sm:$0xff]
        %v5636 = vld [vmem:[%s5620 + $0x78] sm:$0xff]
        %v5637 = vld [vmem:[%s5620 + $0x80] sm:$0xff]
        %v5638 = vld [vmem:[%s5620 + $0x88] sm:$0xff]
        %v5639 = vld [vmem:[%s5620 + $0x90] sm:$0xff]
        %v5640 = vld [vmem:[%s5620 + $0x98] sm:$0xff]
        %v5641 = vld [vmem:[%s5620 + $0xa0] sm:$0xff]
        %v5642 = vld [vmem:[%s5620 + $0xa8] sm:$0xff]
        %v5643 = vld [vmem:[%s5620 + $0xb0] sm:$0xff]
        %v5644 = vld [vmem:[%s5620 + $0xb8] sm:$0xff]
        %v5645 = vld [vmem:[%s5620 + $0xc0] sm:$0xff]
        %v5646 = vld [vmem:[%s5620 + $0xc8] sm:$0xff]
        %v5647 = vld [vmem:[%s5620 + $0xd0] sm:$0xff]
        %v5648 = vld [vmem:[%s5620 + $0xd8] sm:$0xff]
        %v5649 = vld [vmem:[%s5620 + $0xe0] sm:$0xff]
        %v5650 = vld [vmem:[%s5620 + $0xe8] sm:$0xff]
        %v5651 = vld [vmem:[%s5620 + $0xf0] sm:$0xff]
        %v5652 = vld [vmem:[%s5620 + $0xf8] sm:$0xff]
        %v5653 = vld [vmem:[%s5620 + $0x100] sm:$0xff]
        %v5654 = vld [vmem:[%s5620 + $0x108] sm:$0xff]
        %v5655 = vld [vmem:[%s5620 + $0x110] sm:$0xff]
        %v5656 = vld [vmem:[%s5620 + $0x118] sm:$0xff]
        %v5657 = vld [vmem:[%s5620 + $0x120] sm:$0xff]
        %v5658 = vld [vmem:[%s5620 + $0x128] sm:$0xff]
        %v5659 = vld [vmem:[%s5620 + $0x130] sm:$0xff]
        %v5660 = vld [vmem:[%s5620 + $0x138] sm:$0xff]
        %v5661 = vld [vmem:[%s5620 + $0x140] sm:$0xff]
        %v5662 = vld [vmem:[%s5620 + $0x148] sm:$0xff]
        %v5663 = vld [vmem:[%s5620 + $0x150] sm:$0xff]
        %v5664 = vld [vmem:[%s5620 + $0x158] sm:$0xff]
        %v5665 = vld [vmem:[%s5620 + $0x160] sm:$0xff]
        %v5666 = vld [vmem:[%s5620 + $0x168] sm:$0xff]
        %v5667 = vld [vmem:[%s5620 + $0x170] sm:$0xff]
        %v5668 = vld [vmem:[%s5620 + $0x178] sm:$0xff]
        %v5669 = vld [vmem:[%s5620 + $0x180] sm:$0xff]
        %v5670 = vld [vmem:[%s5620 + $0x188] sm:$0xff]
        %v5671 = vld [vmem:[%s5620 + $0x190] sm:$0xff]
        %v5672 = vld [vmem:[%s5620 + $0x198] sm:$0xff]
        %v5673 = vld [vmem:[%s5620 + $0x1a0] sm:$0xff]
        %v5674 = vld [vmem:[%s5620 + $0x1a8] sm:$0xff]
        %v5675 = vld [vmem:[%s5620 + $0x1b0] sm:$0xff]
        %v5676 = vld [vmem:[%s5620 + $0x1b8] sm:$0xff]
        %v5677 = vld [vmem:[%s5620 + $0x1c0] sm:$0xff]
        %v5678 = vld [vmem:[%s5620 + $0x1c8] sm:$0xff]
        %v5679 = vld [vmem:[%s5620 + $0x1d0] sm:$0xff]
        %v5680 = vld [vmem:[%s5620 + $0x1d8] sm:$0xff]
        %v5681 = vld [vmem:[%s5620 + $0x1e0] sm:$0xff]
        %v5682 = vld [vmem:[%s5620 + $0x1e8] sm:$0xff]
        %v5683 = vld [vmem:[%s5620 + $0x1f0] sm:$0xff]
        %v5684 = vld [vmem:[%s5620 + $0x1f8] sm:$0xff]
        %v5685 = vld [vmem:[%s5620 + $0x200] sm:$0xff]
        %v5686 = vld [vmem:[%s5620 + $0x208] sm:$0xff]
        %v5687 = vld [vmem:[%s5620 + $0x210] sm:$0xff]
        %v5688 = vld [vmem:[%s5620 + $0x218] sm:$0xff]
        %v5689 = vld [vmem:[%s5620 + $0x220] sm:$0xff]
        %v5690 = vld [vmem:[%s5620 + $0x228] sm:$0xff]
        %v5691 = vld [vmem:[%s5620 + $0x230] sm:$0xff]
        %v5692 = vld [vmem:[%s5620 + $0x238] sm:$0xff]
        %v5693 = vld [vmem:[%s5620 + $0x240] sm:$0xff]
        %v5694 = vld [vmem:[%s5620 + $0x248] sm:$0xff]
        %v5695 = vld [vmem:[%s5620 + $0x250] sm:$0xff]
        %v5696 = vld [vmem:[%s5620 + $0x258] sm:$0xff]
        %v5697 = vld [vmem:[%s5620 + $0x260] sm:$0xff]
        %v5698 = vld [vmem:[%s5620 + $0x268] sm:$0xff]
        %v5699 = vld [vmem:[%s5620 + $0x270] sm:$0xff]
        %v5700 = vld [vmem:[%s5620 + $0x278] sm:$0xff]
        %5701 = vmatpush.msra.mxu0 %v5636
        %5702 = vmatpush.msra.mxu0 %v5635
        %5703 = vmatpush.msra.mxu0 %v5634
        %5704 = vmatpush.msra.mxu0 %v5633
        %5705 = vmatpush.msra.mxu0 %v5632
        %5706 = vmatpush.msra.mxu0 %v5631
        %5707 = vmatpush.msra.mxu0 %v5630
        %5708 = vmatpush.msra.mxu0 %v5629
        %5709 = vmatpush.msra.mxu0 %v5628
        %5710 = vmatpush.msra.mxu0 %v5627
        %5711 = vmatpush.msra.mxu0 %v5626
        %5712 = vmatpush.msra.mxu0 %v5625
        %5713 = vmatpush.msra.mxu0 %v5624
        %5714 = vmatpush.msra.mxu0 %v5623
        %5715 = vmatpush.msra.mxu0 %v5622
        %5716 = vmatpush.msra.mxu0 %v5621
        %5717 = vmatmul.f32.gmra.mxu0 %v5615
        %v5718 = vpop.f32.mrf.mxu0
        %v5719 = vadd.f32 0.0, %v5718
        %5720 = vdwg.mxu0
        %5721 = vmatpush.msra.mxu0 %v5652
        %5722 = vmatpush.msra.mxu0 %v5651
        %5723 = vmatpush.msra.mxu0 %v5650
        %5724 = vmatpush.msra.mxu0 %v5649
        %5725 = vmatpush.msra.mxu0 %v5648
        %5726 = vmatpush.msra.mxu0 %v5647
        %5727 = vmatpush.msra.mxu0 %v5646
        %5728 = vmatpush.msra.mxu0 %v5645
        %5729 = vmatpush.msra.mxu0 %v5644
        %5730 = vmatpush.msra.mxu0 %v5643
        %5731 = vmatpush.msra.mxu0 %v5642
        %5732 = vmatpush.msra.mxu0 %v5641
        %5733 = vmatpush.msra.mxu0 %v5640
        %5734 = vmatpush.msra.mxu0 %v5639
        %5735 = vmatpush.msra.mxu0 %v5638
        %5736 = vmatpush.msra.mxu0 %v5637
        %5737 = vmatmul.f32.gmra.mxu0 %v5616
        %v5738 = vpop.f32.mrf.mxu0
        %v5739 = vadd.f32 %v5719, %v5738
        %5740 = vdwg.mxu0
        %5741 = vmatpush.msra.mxu0 %v5668
        %5742 = vmatpush.msra.mxu0 %v5667
        %5743 = vmatpush.msra.mxu0 %v5666
        %5744 = vmatpush.msra.mxu0 %v5665
        %5745 = vmatpush.msra.mxu0 %v5664
        %5746 = vmatpush.msra.mxu0 %v5663
        %5747 = vmatpush.msra.mxu0 %v5662
        %5748 = vmatpush.msra.mxu0 %v5661
        %5749 = vmatpush.msra.mxu0 %v5660
        %5750 = vmatpush.msra.mxu0 %v5659
        %5751 = vmatpush.msra.mxu0 %v5658
        %5752 = vmatpush.msra.mxu0 %v5657
        %5753 = vmatpush.msra.mxu0 %v5656
        %5754 = vmatpush.msra.mxu0 %v5655
        %5755 = vmatpush.msra.mxu0 %v5654
        %5756 = vmatpush.msra.mxu0 %v5653
        %5757 = vmatmul.f32.gmra.mxu0 %v5617
        %v5758 = vpop.f32.mrf.mxu0
        %v5759 = vadd.f32 %v5739, %v5758
        %5760 = vdwg.mxu0
        %5761 = vmatpush.msra.mxu0 %v5684
        %5762 = vmatpush.msra.mxu0 %v5683
        %5763 = vmatpush.msra.mxu0 %v5682
        %5764 = vmatpush.msra.mxu0 %v5681
        %5765 = vmatpush.msra.mxu0 %v5680
        %5766 = vmatpush.msra.mxu0 %v5679
        %5767 = vmatpush.msra.mxu0 %v5678
        %5768 = vmatpush.msra.mxu0 %v5677
        %5769 = vmatpush.msra.mxu0 %v5676
        %5770 = vmatpush.msra.mxu0 %v5675
        %5771 = vmatpush.msra.mxu0 %v5674
        %5772 = vmatpush.msra.mxu0 %v5673
        %5773 = vmatpush.msra.mxu0 %v5672
        %5774 = vmatpush.msra.mxu0 %v5671
        %5775 = vmatpush.msra.mxu0 %v5670
        %5776 = vmatpush.msra.mxu0 %v5669
        %5777 = vmatmul.f32.gmra.mxu0 %v5618
        %v5778 = vpop.f32.mrf.mxu0
        %v5779 = vadd.f32 %v5759, %v5778
        %5780 = vdwg.mxu0
        %5781 = vmatpush.msra.mxu0 %v5700
        %5782 = vmatpush.msra.mxu0 %v5699
        %5783 = vmatpush.msra.mxu0 %v5698
        %5784 = vmatpush.msra.mxu0 %v5697
        %5785 = vmatpush.msra.mxu0 %v5696
        %5786 = vmatpush.msra.mxu0 %v5695
        %5787 = vmatpush.msra.mxu0 %v5694
        %5788 = vmatpush.msra.mxu0 %v5693
        %5789 = vmatpush.msra.mxu0 %v5692
        %5790 = vmatpush.msra.mxu0 %v5691
        %5791 = vmatpush.msra.mxu0 %v5690
        %5792 = vmatpush.msra.mxu0 %v5689
        %5793 = vmatpush.msra.mxu0 %v5688
        %5794 = vmatpush.msra.mxu0 %v5687
        %5795 = vmatpush.msra.mxu0 %v5686
        %5796 = vmatpush.msra.mxu0 %v5685
        %5797 = vmatmul.f32.gmra.mxu0 %v5619
        %v5798 = vpop.f32.mrf.mxu0
        %v5799 = vadd.f32 %v5779, %v5798
        %5800 = vdwg.mxu0
        %v5801 = vadd.f32 %v5614, %v5799
        %v5802 = vld [vmem:[#allocation3 + $0x1e0] sm:$0xff]
        %v5803 = vld [vmem:[#allocation3 + $0x1e8] sm:$0xff]
        %v5804 = vld [vmem:[#allocation3 + $0x1f0] sm:$0xff]
        %v5805 = vld [vmem:[#allocation3 + $0x1f8] sm:$0xff]
        %v5806 = vld [vmem:[#allocation3 + $0x200] sm:$0xff]
        %s5807 = scalar_lea.vmem %s3, 7680
        %v5808 = vld [vmem:[%s5807] sm:$0xff]
        %v5809 = vld [vmem:[%s5807 + $0x8] sm:$0xff]
        %v5810 = vld [vmem:[%s5807 + $0x10] sm:$0xff]
        %v5811 = vld [vmem:[%s5807 + $0x18] sm:$0xff]
        %v5812 = vld [vmem:[%s5807 + $0x20] sm:$0xff]
        %v5813 = vld [vmem:[%s5807 + $0x28] sm:$0xff]
        %v5814 = vld [vmem:[%s5807 + $0x30] sm:$0xff]
        %v5815 = vld [vmem:[%s5807 + $0x38] sm:$0xff]
        %v5816 = vld [vmem:[%s5807 + $0x40] sm:$0xff]
        %v5817 = vld [vmem:[%s5807 + $0x48] sm:$0xff]
        %v5818 = vld [vmem:[%s5807 + $0x50] sm:$0xff]
        %v5819 = vld [vmem:[%s5807 + $0x58] sm:$0xff]
        %v5820 = vld [vmem:[%s5807 + $0x60] sm:$0xff]
        %v5821 = vld [vmem:[%s5807 + $0x68] sm:$0xff]
        %v5822 = vld [vmem:[%s5807 + $0x70] sm:$0xff]
        %v5823 = vld [vmem:[%s5807 + $0x78] sm:$0xff]
        %v5824 = vld [vmem:[%s5807 + $0x80] sm:$0xff]
        %v5825 = vld [vmem:[%s5807 + $0x88] sm:$0xff]
        %v5826 = vld [vmem:[%s5807 + $0x90] sm:$0xff]
        %v5827 = vld [vmem:[%s5807 + $0x98] sm:$0xff]
        %v5828 = vld [vmem:[%s5807 + $0xa0] sm:$0xff]
        %v5829 = vld [vmem:[%s5807 + $0xa8] sm:$0xff]
        %v5830 = vld [vmem:[%s5807 + $0xb0] sm:$0xff]
        %v5831 = vld [vmem:[%s5807 + $0xb8] sm:$0xff]
        %v5832 = vld [vmem:[%s5807 + $0xc0] sm:$0xff]
        %v5833 = vld [vmem:[%s5807 + $0xc8] sm:$0xff]
        %v5834 = vld [vmem:[%s5807 + $0xd0] sm:$0xff]
        %v5835 = vld [vmem:[%s5807 + $0xd8] sm:$0xff]
        %v5836 = vld [vmem:[%s5807 + $0xe0] sm:$0xff]
        %v5837 = vld [vmem:[%s5807 + $0xe8] sm:$0xff]
        %v5838 = vld [vmem:[%s5807 + $0xf0] sm:$0xff]
        %v5839 = vld [vmem:[%s5807 + $0xf8] sm:$0xff]
        %v5840 = vld [vmem:[%s5807 + $0x100] sm:$0xff]
        %v5841 = vld [vmem:[%s5807 + $0x108] sm:$0xff]
        %v5842 = vld [vmem:[%s5807 + $0x110] sm:$0xff]
        %v5843 = vld [vmem:[%s5807 + $0x118] sm:$0xff]
        %v5844 = vld [vmem:[%s5807 + $0x120] sm:$0xff]
        %v5845 = vld [vmem:[%s5807 + $0x128] sm:$0xff]
        %v5846 = vld [vmem:[%s5807 + $0x130] sm:$0xff]
        %v5847 = vld [vmem:[%s5807 + $0x138] sm:$0xff]
        %v5848 = vld [vmem:[%s5807 + $0x140] sm:$0xff]
        %v5849 = vld [vmem:[%s5807 + $0x148] sm:$0xff]
        %v5850 = vld [vmem:[%s5807 + $0x150] sm:$0xff]
        %v5851 = vld [vmem:[%s5807 + $0x158] sm:$0xff]
        %v5852 = vld [vmem:[%s5807 + $0x160] sm:$0xff]
        %v5853 = vld [vmem:[%s5807 + $0x168] sm:$0xff]
        %v5854 = vld [vmem:[%s5807 + $0x170] sm:$0xff]
        %v5855 = vld [vmem:[%s5807 + $0x178] sm:$0xff]
        %v5856 = vld [vmem:[%s5807 + $0x180] sm:$0xff]
        %v5857 = vld [vmem:[%s5807 + $0x188] sm:$0xff]
        %v5858 = vld [vmem:[%s5807 + $0x190] sm:$0xff]
        %v5859 = vld [vmem:[%s5807 + $0x198] sm:$0xff]
        %v5860 = vld [vmem:[%s5807 + $0x1a0] sm:$0xff]
        %v5861 = vld [vmem:[%s5807 + $0x1a8] sm:$0xff]
        %v5862 = vld [vmem:[%s5807 + $0x1b0] sm:$0xff]
        %v5863 = vld [vmem:[%s5807 + $0x1b8] sm:$0xff]
        %v5864 = vld [vmem:[%s5807 + $0x1c0] sm:$0xff]
        %v5865 = vld [vmem:[%s5807 + $0x1c8] sm:$0xff]
        %v5866 = vld [vmem:[%s5807 + $0x1d0] sm:$0xff]
        %v5867 = vld [vmem:[%s5807 + $0x1d8] sm:$0xff]
        %v5868 = vld [vmem:[%s5807 + $0x1e0] sm:$0xff]
        %v5869 = vld [vmem:[%s5807 + $0x1e8] sm:$0xff]
        %v5870 = vld [vmem:[%s5807 + $0x1f0] sm:$0xff]
        %v5871 = vld [vmem:[%s5807 + $0x1f8] sm:$0xff]
        %v5872 = vld [vmem:[%s5807 + $0x200] sm:$0xff]
        %v5873 = vld [vmem:[%s5807 + $0x208] sm:$0xff]
        %v5874 = vld [vmem:[%s5807 + $0x210] sm:$0xff]
        %v5875 = vld [vmem:[%s5807 + $0x218] sm:$0xff]
        %v5876 = vld [vmem:[%s5807 + $0x220] sm:$0xff]
        %v5877 = vld [vmem:[%s5807 + $0x228] sm:$0xff]
        %v5878 = vld [vmem:[%s5807 + $0x230] sm:$0xff]
        %v5879 = vld [vmem:[%s5807 + $0x238] sm:$0xff]
        %v5880 = vld [vmem:[%s5807 + $0x240] sm:$0xff]
        %v5881 = vld [vmem:[%s5807 + $0x248] sm:$0xff]
        %v5882 = vld [vmem:[%s5807 + $0x250] sm:$0xff]
        %v5883 = vld [vmem:[%s5807 + $0x258] sm:$0xff]
        %v5884 = vld [vmem:[%s5807 + $0x260] sm:$0xff]
        %v5885 = vld [vmem:[%s5807 + $0x268] sm:$0xff]
        %v5886 = vld [vmem:[%s5807 + $0x270] sm:$0xff]
        %v5887 = vld [vmem:[%s5807 + $0x278] sm:$0xff]
        %5888 = vmatpush.msra.mxu0 %v5823
        %5889 = vmatpush.msra.mxu0 %v5822
        %5890 = vmatpush.msra.mxu0 %v5821
        %5891 = vmatpush.msra.mxu0 %v5820
        %5892 = vmatpush.msra.mxu0 %v5819
        %5893 = vmatpush.msra.mxu0 %v5818
        %5894 = vmatpush.msra.mxu0 %v5817
        %5895 = vmatpush.msra.mxu0 %v5816
        %5896 = vmatpush.msra.mxu0 %v5815
        %5897 = vmatpush.msra.mxu0 %v5814
        %5898 = vmatpush.msra.mxu0 %v5813
        %5899 = vmatpush.msra.mxu0 %v5812
        %5900 = vmatpush.msra.mxu0 %v5811
        %5901 = vmatpush.msra.mxu0 %v5810
        %5902 = vmatpush.msra.mxu0 %v5809
        %5903 = vmatpush.msra.mxu0 %v5808
        %5904 = vmatmul.f32.gmra.mxu0 %v5802
        %v5905 = vpop.f32.mrf.mxu0
        %v5906 = vadd.f32 0.0, %v5905
        %5907 = vdwg.mxu0
        %5908 = vmatpush.msra.mxu0 %v5839
        %5909 = vmatpush.msra.mxu0 %v5838
        %5910 = vmatpush.msra.mxu0 %v5837
        %5911 = vmatpush.msra.mxu0 %v5836
        %5912 = vmatpush.msra.mxu0 %v5835
        %5913 = vmatpush.msra.mxu0 %v5834
        %5914 = vmatpush.msra.mxu0 %v5833
        %5915 = vmatpush.msra.mxu0 %v5832
        %5916 = vmatpush.msra.mxu0 %v5831
        %5917 = vmatpush.msra.mxu0 %v5830
        %5918 = vmatpush.msra.mxu0 %v5829
        %5919 = vmatpush.msra.mxu0 %v5828
        %5920 = vmatpush.msra.mxu0 %v5827
        %5921 = vmatpush.msra.mxu0 %v5826
        %5922 = vmatpush.msra.mxu0 %v5825
        %5923 = vmatpush.msra.mxu0 %v5824
        %5924 = vmatmul.f32.gmra.mxu0 %v5803
        %v5925 = vpop.f32.mrf.mxu0
        %v5926 = vadd.f32 %v5906, %v5925
        %5927 = vdwg.mxu0
        %5928 = vmatpush.msra.mxu0 %v5855
        %5929 = vmatpush.msra.mxu0 %v5854
        %5930 = vmatpush.msra.mxu0 %v5853
        %5931 = vmatpush.msra.mxu0 %v5852
        %5932 = vmatpush.msra.mxu0 %v5851
        %5933 = vmatpush.msra.mxu0 %v5850
        %5934 = vmatpush.msra.mxu0 %v5849
        %5935 = vmatpush.msra.mxu0 %v5848
        %5936 = vmatpush.msra.mxu0 %v5847
        %5937 = vmatpush.msra.mxu0 %v5846
        %5938 = vmatpush.msra.mxu0 %v5845
        %5939 = vmatpush.msra.mxu0 %v5844
        %5940 = vmatpush.msra.mxu0 %v5843
        %5941 = vmatpush.msra.mxu0 %v5842
        %5942 = vmatpush.msra.mxu0 %v5841
        %5943 = vmatpush.msra.mxu0 %v5840
        %5944 = vmatmul.f32.gmra.mxu0 %v5804
        %v5945 = vpop.f32.mrf.mxu0
        %v5946 = vadd.f32 %v5926, %v5945
        %5947 = vdwg.mxu0
        %5948 = vmatpush.msra.mxu0 %v5871
        %5949 = vmatpush.msra.mxu0 %v5870
        %5950 = vmatpush.msra.mxu0 %v5869
        %5951 = vmatpush.msra.mxu0 %v5868
        %5952 = vmatpush.msra.mxu0 %v5867
        %5953 = vmatpush.msra.mxu0 %v5866
        %5954 = vmatpush.msra.mxu0 %v5865
        %5955 = vmatpush.msra.mxu0 %v5864
        %5956 = vmatpush.msra.mxu0 %v5863
        %5957 = vmatpush.msra.mxu0 %v5862
        %5958 = vmatpush.msra.mxu0 %v5861
        %5959 = vmatpush.msra.mxu0 %v5860
        %5960 = vmatpush.msra.mxu0 %v5859
        %5961 = vmatpush.msra.mxu0 %v5858
        %5962 = vmatpush.msra.mxu0 %v5857
        %5963 = vmatpush.msra.mxu0 %v5856
        %5964 = vmatmul.f32.gmra.mxu0 %v5805
        %v5965 = vpop.f32.mrf.mxu0
        %v5966 = vadd.f32 %v5946, %v5965
        %5967 = vdwg.mxu0
        %5968 = vmatpush.msra.mxu0 %v5887
        %5969 = vmatpush.msra.mxu0 %v5886
        %5970 = vmatpush.msra.mxu0 %v5885
        %5971 = vmatpush.msra.mxu0 %v5884
        %5972 = vmatpush.msra.mxu0 %v5883
        %5973 = vmatpush.msra.mxu0 %v5882
        %5974 = vmatpush.msra.mxu0 %v5881
        %5975 = vmatpush.msra.mxu0 %v5880
        %5976 = vmatpush.msra.mxu0 %v5879
        %5977 = vmatpush.msra.mxu0 %v5878
        %5978 = vmatpush.msra.mxu0 %v5877
        %5979 = vmatpush.msra.mxu0 %v5876
        %5980 = vmatpush.msra.mxu0 %v5875
        %5981 = vmatpush.msra.mxu0 %v5874
        %5982 = vmatpush.msra.mxu0 %v5873
        %5983 = vmatpush.msra.mxu0 %v5872
        %5984 = vmatmul.f32.gmra.mxu0 %v5806
        %v5985 = vpop.f32.mrf.mxu0
        %v5986 = vadd.f32 %v5966, %v5985
        %5987 = vdwg.mxu0
        %v5988 = vadd.f32 %v5801, %v5986
        %v5989 = vld [vmem:[#allocation3 + $0x208] sm:$0xff]
        %v5990 = vld [vmem:[#allocation3 + $0x210] sm:$0xff]
        %v5991 = vld [vmem:[#allocation3 + $0x218] sm:$0xff]
        %v5992 = vld [vmem:[#allocation3 + $0x220] sm:$0xff]
        %v5993 = vld [vmem:[#allocation3 + $0x228] sm:$0xff]
        %s5994 = scalar_lea.vmem %s3, 8320
        %v5995 = vld [vmem:[%s5994] sm:$0xff]
        %v5996 = vld [vmem:[%s5994 + $0x8] sm:$0xff]
        %v5997 = vld [vmem:[%s5994 + $0x10] sm:$0xff]
        %v5998 = vld [vmem:[%s5994 + $0x18] sm:$0xff]
        %v5999 = vld [vmem:[%s5994 + $0x20] sm:$0xff]
        %v6000 = vld [vmem:[%s5994 + $0x28] sm:$0xff]
        %v6001 = vld [vmem:[%s5994 + $0x30] sm:$0xff]
        %v6002 = vld [vmem:[%s5994 + $0x38] sm:$0xff]
        %v6003 = vld [vmem:[%s5994 + $0x40] sm:$0xff]
        %v6004 = vld [vmem:[%s5994 + $0x48] sm:$0xff]
        %v6005 = vld [vmem:[%s5994 + $0x50] sm:$0xff]
        %v6006 = vld [vmem:[%s5994 + $0x58] sm:$0xff]
        %v6007 = vld [vmem:[%s5994 + $0x60] sm:$0xff]
        %v6008 = vld [vmem:[%s5994 + $0x68] sm:$0xff]
        %v6009 = vld [vmem:[%s5994 + $0x70] sm:$0xff]
        %v6010 = vld [vmem:[%s5994 + $0x78] sm:$0xff]
        %v6011 = vld [vmem:[%s5994 + $0x80] sm:$0xff]
        %v6012 = vld [vmem:[%s5994 + $0x88] sm:$0xff]
        %v6013 = vld [vmem:[%s5994 + $0x90] sm:$0xff]
        %v6014 = vld [vmem:[%s5994 + $0x98] sm:$0xff]
        %v6015 = vld [vmem:[%s5994 + $0xa0] sm:$0xff]
        %v6016 = vld [vmem:[%s5994 + $0xa8] sm:$0xff]
        %v6017 = vld [vmem:[%s5994 + $0xb0] sm:$0xff]
        %v6018 = vld [vmem:[%s5994 + $0xb8] sm:$0xff]
        %v6019 = vld [vmem:[%s5994 + $0xc0] sm:$0xff]
        %v6020 = vld [vmem:[%s5994 + $0xc8] sm:$0xff]
        %v6021 = vld [vmem:[%s5994 + $0xd0] sm:$0xff]
        %v6022 = vld [vmem:[%s5994 + $0xd8] sm:$0xff]
        %v6023 = vld [vmem:[%s5994 + $0xe0] sm:$0xff]
        %v6024 = vld [vmem:[%s5994 + $0xe8] sm:$0xff]
        %v6025 = vld [vmem:[%s5994 + $0xf0] sm:$0xff]
        %v6026 = vld [vmem:[%s5994 + $0xf8] sm:$0xff]
        %v6027 = vld [vmem:[%s5994 + $0x100] sm:$0xff]
        %v6028 = vld [vmem:[%s5994 + $0x108] sm:$0xff]
        %v6029 = vld [vmem:[%s5994 + $0x110] sm:$0xff]
        %v6030 = vld [vmem:[%s5994 + $0x118] sm:$0xff]
        %v6031 = vld [vmem:[%s5994 + $0x120] sm:$0xff]
        %v6032 = vld [vmem:[%s5994 + $0x128] sm:$0xff]
        %v6033 = vld [vmem:[%s5994 + $0x130] sm:$0xff]
        %v6034 = vld [vmem:[%s5994 + $0x138] sm:$0xff]
        %v6035 = vld [vmem:[%s5994 + $0x140] sm:$0xff]
        %v6036 = vld [vmem:[%s5994 + $0x148] sm:$0xff]
        %v6037 = vld [vmem:[%s5994 + $0x150] sm:$0xff]
        %v6038 = vld [vmem:[%s5994 + $0x158] sm:$0xff]
        %v6039 = vld [vmem:[%s5994 + $0x160] sm:$0xff]
        %v6040 = vld [vmem:[%s5994 + $0x168] sm:$0xff]
        %v6041 = vld [vmem:[%s5994 + $0x170] sm:$0xff]
        %v6042 = vld [vmem:[%s5994 + $0x178] sm:$0xff]
        %v6043 = vld [vmem:[%s5994 + $0x180] sm:$0xff]
        %v6044 = vld [vmem:[%s5994 + $0x188] sm:$0xff]
        %v6045 = vld [vmem:[%s5994 + $0x190] sm:$0xff]
        %v6046 = vld [vmem:[%s5994 + $0x198] sm:$0xff]
        %v6047 = vld [vmem:[%s5994 + $0x1a0] sm:$0xff]
        %v6048 = vld [vmem:[%s5994 + $0x1a8] sm:$0xff]
        %v6049 = vld [vmem:[%s5994 + $0x1b0] sm:$0xff]
        %v6050 = vld [vmem:[%s5994 + $0x1b8] sm:$0xff]
        %v6051 = vld [vmem:[%s5994 + $0x1c0] sm:$0xff]
        %v6052 = vld [vmem:[%s5994 + $0x1c8] sm:$0xff]
        %v6053 = vld [vmem:[%s5994 + $0x1d0] sm:$0xff]
        %v6054 = vld [vmem:[%s5994 + $0x1d8] sm:$0xff]
        %v6055 = vld [vmem:[%s5994 + $0x1e0] sm:$0xff]
        %v6056 = vld [vmem:[%s5994 + $0x1e8] sm:$0xff]
        %v6057 = vld [vmem:[%s5994 + $0x1f0] sm:$0xff]
        %v6058 = vld [vmem:[%s5994 + $0x1f8] sm:$0xff]
        %v6059 = vld [vmem:[%s5994 + $0x200] sm:$0xff]
        %v6060 = vld [vmem:[%s5994 + $0x208] sm:$0xff]
        %v6061 = vld [vmem:[%s5994 + $0x210] sm:$0xff]
        %v6062 = vld [vmem:[%s5994 + $0x218] sm:$0xff]
        %v6063 = vld [vmem:[%s5994 + $0x220] sm:$0xff]
        %v6064 = vld [vmem:[%s5994 + $0x228] sm:$0xff]
        %v6065 = vld [vmem:[%s5994 + $0x230] sm:$0xff]
        %v6066 = vld [vmem:[%s5994 + $0x238] sm:$0xff]
        %v6067 = vld [vmem:[%s5994 + $0x240] sm:$0xff]
        %v6068 = vld [vmem:[%s5994 + $0x248] sm:$0xff]
        %v6069 = vld [vmem:[%s5994 + $0x250] sm:$0xff]
        %v6070 = vld [vmem:[%s5994 + $0x258] sm:$0xff]
        %v6071 = vld [vmem:[%s5994 + $0x260] sm:$0xff]
        %v6072 = vld [vmem:[%s5994 + $0x268] sm:$0xff]
        %v6073 = vld [vmem:[%s5994 + $0x270] sm:$0xff]
        %v6074 = vld [vmem:[%s5994 + $0x278] sm:$0xff]
        %6075 = vmatpush.msra.mxu0 %v6010
        %6076 = vmatpush.msra.mxu0 %v6009
        %6077 = vmatpush.msra.mxu0 %v6008
        %6078 = vmatpush.msra.mxu0 %v6007
        %6079 = vmatpush.msra.mxu0 %v6006
        %6080 = vmatpush.msra.mxu0 %v6005
        %6081 = vmatpush.msra.mxu0 %v6004
        %6082 = vmatpush.msra.mxu0 %v6003
        %6083 = vmatpush.msra.mxu0 %v6002
        %6084 = vmatpush.msra.mxu0 %v6001
        %6085 = vmatpush.msra.mxu0 %v6000
        %6086 = vmatpush.msra.mxu0 %v5999
        %6087 = vmatpush.msra.mxu0 %v5998
        %6088 = vmatpush.msra.mxu0 %v5997
        %6089 = vmatpush.msra.mxu0 %v5996
        %6090 = vmatpush.msra.mxu0 %v5995
        %6091 = vmatmul.f32.gmra.mxu0 %v5989
        %v6092 = vpop.f32.mrf.mxu0
        %v6093 = vadd.f32 0.0, %v6092
        %6094 = vdwg.mxu0
        %6095 = vmatpush.msra.mxu0 %v6026
        %6096 = vmatpush.msra.mxu0 %v6025
        %6097 = vmatpush.msra.mxu0 %v6024
        %6098 = vmatpush.msra.mxu0 %v6023
        %6099 = vmatpush.msra.mxu0 %v6022
        %6100 = vmatpush.msra.mxu0 %v6021
        %6101 = vmatpush.msra.mxu0 %v6020
        %6102 = vmatpush.msra.mxu0 %v6019
        %6103 = vmatpush.msra.mxu0 %v6018
        %6104 = vmatpush.msra.mxu0 %v6017
        %6105 = vmatpush.msra.mxu0 %v6016
        %6106 = vmatpush.msra.mxu0 %v6015
        %6107 = vmatpush.msra.mxu0 %v6014
        %6108 = vmatpush.msra.mxu0 %v6013
        %6109 = vmatpush.msra.mxu0 %v6012
        %6110 = vmatpush.msra.mxu0 %v6011
        %6111 = vmatmul.f32.gmra.mxu0 %v5990
        %v6112 = vpop.f32.mrf.mxu0
        %v6113 = vadd.f32 %v6093, %v6112
        %6114 = vdwg.mxu0
        %6115 = vmatpush.msra.mxu0 %v6042
        %6116 = vmatpush.msra.mxu0 %v6041
        %6117 = vmatpush.msra.mxu0 %v6040
        %6118 = vmatpush.msra.mxu0 %v6039
        %6119 = vmatpush.msra.mxu0 %v6038
        %6120 = vmatpush.msra.mxu0 %v6037
        %6121 = vmatpush.msra.mxu0 %v6036
        %6122 = vmatpush.msra.mxu0 %v6035
        %6123 = vmatpush.msra.mxu0 %v6034
        %6124 = vmatpush.msra.mxu0 %v6033
        %6125 = vmatpush.msra.mxu0 %v6032
        %6126 = vmatpush.msra.mxu0 %v6031
        %6127 = vmatpush.msra.mxu0 %v6030
        %6128 = vmatpush.msra.mxu0 %v6029
        %6129 = vmatpush.msra.mxu0 %v6028
        %6130 = vmatpush.msra.mxu0 %v6027
        %6131 = vmatmul.f32.gmra.mxu0 %v5991
        %v6132 = vpop.f32.mrf.mxu0
        %v6133 = vadd.f32 %v6113, %v6132
        %6134 = vdwg.mxu0
        %6135 = vmatpush.msra.mxu0 %v6058
        %6136 = vmatpush.msra.mxu0 %v6057
        %6137 = vmatpush.msra.mxu0 %v6056
        %6138 = vmatpush.msra.mxu0 %v6055
        %6139 = vmatpush.msra.mxu0 %v6054
        %6140 = vmatpush.msra.mxu0 %v6053
        %6141 = vmatpush.msra.mxu0 %v6052
        %6142 = vmatpush.msra.mxu0 %v6051
        %6143 = vmatpush.msra.mxu0 %v6050
        %6144 = vmatpush.msra.mxu0 %v6049
        %6145 = vmatpush.msra.mxu0 %v6048
        %6146 = vmatpush.msra.mxu0 %v6047
        %6147 = vmatpush.msra.mxu0 %v6046
        %6148 = vmatpush.msra.mxu0 %v6045
        %6149 = vmatpush.msra.mxu0 %v6044
        %6150 = vmatpush.msra.mxu0 %v6043
        %6151 = vmatmul.f32.gmra.mxu0 %v5992
        %v6152 = vpop.f32.mrf.mxu0
        %v6153 = vadd.f32 %v6133, %v6152
        %6154 = vdwg.mxu0
        %6155 = vmatpush.msra.mxu0 %v6074
        %6156 = vmatpush.msra.mxu0 %v6073
        %6157 = vmatpush.msra.mxu0 %v6072
        %6158 = vmatpush.msra.mxu0 %v6071
        %6159 = vmatpush.msra.mxu0 %v6070
        %6160 = vmatpush.msra.mxu0 %v6069
        %6161 = vmatpush.msra.mxu0 %v6068
        %6162 = vmatpush.msra.mxu0 %v6067
        %6163 = vmatpush.msra.mxu0 %v6066
        %6164 = vmatpush.msra.mxu0 %v6065
        %6165 = vmatpush.msra.mxu0 %v6064
        %6166 = vmatpush.msra.mxu0 %v6063
        %6167 = vmatpush.msra.mxu0 %v6062
        %6168 = vmatpush.msra.mxu0 %v6061
        %6169 = vmatpush.msra.mxu0 %v6060
        %6170 = vmatpush.msra.mxu0 %v6059
        %6171 = vmatmul.f32.gmra.mxu0 %v5993
        %v6172 = vpop.f32.mrf.mxu0
        %v6173 = vadd.f32 %v6153, %v6172
        %6174 = vdwg.mxu0
        %v6175 = vadd.f32 %v5988, %v6173
        %v6176 = vld [vmem:[#allocation3 + $0x230] sm:$0xff]
        %v6177 = vld [vmem:[#allocation3 + $0x238] sm:$0xff]
        %v6178 = vld [vmem:[#allocation3 + $0x240] sm:$0xff]
        %v6179 = vld [vmem:[#allocation3 + $0x248] sm:$0xff]
        %v6180 = vld [vmem:[#allocation3 + $0x250] sm:$0xff]
        %s6181 = scalar_lea.vmem %s3, 8960
        %v6182 = vld [vmem:[%s6181] sm:$0xff]
        %v6183 = vld [vmem:[%s6181 + $0x8] sm:$0xff]
        %v6184 = vld [vmem:[%s6181 + $0x10] sm:$0xff]
        %v6185 = vld [vmem:[%s6181 + $0x18] sm:$0xff]
        %v6186 = vld [vmem:[%s6181 + $0x20] sm:$0xff]
        %v6187 = vld [vmem:[%s6181 + $0x28] sm:$0xff]
        %v6188 = vld [vmem:[%s6181 + $0x30] sm:$0xff]
        %v6189 = vld [vmem:[%s6181 + $0x38] sm:$0xff]
        %v6190 = vld [vmem:[%s6181 + $0x40] sm:$0xff]
        %v6191 = vld [vmem:[%s6181 + $0x48] sm:$0xff]
        %v6192 = vld [vmem:[%s6181 + $0x50] sm:$0xff]
        %v6193 = vld [vmem:[%s6181 + $0x58] sm:$0xff]
        %v6194 = vld [vmem:[%s6181 + $0x60] sm:$0xff]
        %v6195 = vld [vmem:[%s6181 + $0x68] sm:$0xff]
        %v6196 = vld [vmem:[%s6181 + $0x70] sm:$0xff]
        %v6197 = vld [vmem:[%s6181 + $0x78] sm:$0xff]
        %v6198 = vld [vmem:[%s6181 + $0x80] sm:$0xff]
        %v6199 = vld [vmem:[%s6181 + $0x88] sm:$0xff]
        %v6200 = vld [vmem:[%s6181 + $0x90] sm:$0xff]
        %v6201 = vld [vmem:[%s6181 + $0x98] sm:$0xff]
        %v6202 = vld [vmem:[%s6181 + $0xa0] sm:$0xff]
        %v6203 = vld [vmem:[%s6181 + $0xa8] sm:$0xff]
        %v6204 = vld [vmem:[%s6181 + $0xb0] sm:$0xff]
        %v6205 = vld [vmem:[%s6181 + $0xb8] sm:$0xff]
        %v6206 = vld [vmem:[%s6181 + $0xc0] sm:$0xff]
        %v6207 = vld [vmem:[%s6181 + $0xc8] sm:$0xff]
        %v6208 = vld [vmem:[%s6181 + $0xd0] sm:$0xff]
        %v6209 = vld [vmem:[%s6181 + $0xd8] sm:$0xff]
        %v6210 = vld [vmem:[%s6181 + $0xe0] sm:$0xff]
        %v6211 = vld [vmem:[%s6181 + $0xe8] sm:$0xff]
        %v6212 = vld [vmem:[%s6181 + $0xf0] sm:$0xff]
        %v6213 = vld [vmem:[%s6181 + $0xf8] sm:$0xff]
        %v6214 = vld [vmem:[%s6181 + $0x100] sm:$0xff]
        %v6215 = vld [vmem:[%s6181 + $0x108] sm:$0xff]
        %v6216 = vld [vmem:[%s6181 + $0x110] sm:$0xff]
        %v6217 = vld [vmem:[%s6181 + $0x118] sm:$0xff]
        %v6218 = vld [vmem:[%s6181 + $0x120] sm:$0xff]
        %v6219 = vld [vmem:[%s6181 + $0x128] sm:$0xff]
        %v6220 = vld [vmem:[%s6181 + $0x130] sm:$0xff]
        %v6221 = vld [vmem:[%s6181 + $0x138] sm:$0xff]
        %v6222 = vld [vmem:[%s6181 + $0x140] sm:$0xff]
        %v6223 = vld [vmem:[%s6181 + $0x148] sm:$0xff]
        %v6224 = vld [vmem:[%s6181 + $0x150] sm:$0xff]
        %v6225 = vld [vmem:[%s6181 + $0x158] sm:$0xff]
        %v6226 = vld [vmem:[%s6181 + $0x160] sm:$0xff]
        %v6227 = vld [vmem:[%s6181 + $0x168] sm:$0xff]
        %v6228 = vld [vmem:[%s6181 + $0x170] sm:$0xff]
        %v6229 = vld [vmem:[%s6181 + $0x178] sm:$0xff]
        %v6230 = vld [vmem:[%s6181 + $0x180] sm:$0xff]
        %v6231 = vld [vmem:[%s6181 + $0x188] sm:$0xff]
        %v6232 = vld [vmem:[%s6181 + $0x190] sm:$0xff]
        %v6233 = vld [vmem:[%s6181 + $0x198] sm:$0xff]
        %v6234 = vld [vmem:[%s6181 + $0x1a0] sm:$0xff]
        %v6235 = vld [vmem:[%s6181 + $0x1a8] sm:$0xff]
        %v6236 = vld [vmem:[%s6181 + $0x1b0] sm:$0xff]
        %v6237 = vld [vmem:[%s6181 + $0x1b8] sm:$0xff]
        %v6238 = vld [vmem:[%s6181 + $0x1c0] sm:$0xff]
        %v6239 = vld [vmem:[%s6181 + $0x1c8] sm:$0xff]
        %v6240 = vld [vmem:[%s6181 + $0x1d0] sm:$0xff]
        %v6241 = vld [vmem:[%s6181 + $0x1d8] sm:$0xff]
        %v6242 = vld [vmem:[%s6181 + $0x1e0] sm:$0xff]
        %v6243 = vld [vmem:[%s6181 + $0x1e8] sm:$0xff]
        %v6244 = vld [vmem:[%s6181 + $0x1f0] sm:$0xff]
        %v6245 = vld [vmem:[%s6181 + $0x1f8] sm:$0xff]
        %v6246 = vld [vmem:[%s6181 + $0x200] sm:$0xff]
        %v6247 = vld [vmem:[%s6181 + $0x208] sm:$0xff]
        %v6248 = vld [vmem:[%s6181 + $0x210] sm:$0xff]
        %v6249 = vld [vmem:[%s6181 + $0x218] sm:$0xff]
        %v6250 = vld [vmem:[%s6181 + $0x220] sm:$0xff]
        %v6251 = vld [vmem:[%s6181 + $0x228] sm:$0xff]
        %v6252 = vld [vmem:[%s6181 + $0x230] sm:$0xff]
        %v6253 = vld [vmem:[%s6181 + $0x238] sm:$0xff]
        %v6254 = vld [vmem:[%s6181 + $0x240] sm:$0xff]
        %v6255 = vld [vmem:[%s6181 + $0x248] sm:$0xff]
        %v6256 = vld [vmem:[%s6181 + $0x250] sm:$0xff]
        %v6257 = vld [vmem:[%s6181 + $0x258] sm:$0xff]
        %v6258 = vld [vmem:[%s6181 + $0x260] sm:$0xff]
        %v6259 = vld [vmem:[%s6181 + $0x268] sm:$0xff]
        %v6260 = vld [vmem:[%s6181 + $0x270] sm:$0xff]
        %v6261 = vld [vmem:[%s6181 + $0x278] sm:$0xff]
        %6262 = vmatpush.msra.mxu0 %v6197
        %6263 = vmatpush.msra.mxu0 %v6196
        %6264 = vmatpush.msra.mxu0 %v6195
        %6265 = vmatpush.msra.mxu0 %v6194
        %6266 = vmatpush.msra.mxu0 %v6193
        %6267 = vmatpush.msra.mxu0 %v6192
        %6268 = vmatpush.msra.mxu0 %v6191
        %6269 = vmatpush.msra.mxu0 %v6190
        %6270 = vmatpush.msra.mxu0 %v6189
        %6271 = vmatpush.msra.mxu0 %v6188
        %6272 = vmatpush.msra.mxu0 %v6187
        %6273 = vmatpush.msra.mxu0 %v6186
        %6274 = vmatpush.msra.mxu0 %v6185
        %6275 = vmatpush.msra.mxu0 %v6184
        %6276 = vmatpush.msra.mxu0 %v6183
        %6277 = vmatpush.msra.mxu0 %v6182
        %6278 = vmatmul.f32.gmra.mxu0 %v6176
        %v6279 = vpop.f32.mrf.mxu0
        %v6280 = vadd.f32 0.0, %v6279
        %6281 = vdwg.mxu0
        %6282 = vmatpush.msra.mxu0 %v6213
        %6283 = vmatpush.msra.mxu0 %v6212
        %6284 = vmatpush.msra.mxu0 %v6211
        %6285 = vmatpush.msra.mxu0 %v6210
        %6286 = vmatpush.msra.mxu0 %v6209
        %6287 = vmatpush.msra.mxu0 %v6208
        %6288 = vmatpush.msra.mxu0 %v6207
        %6289 = vmatpush.msra.mxu0 %v6206
        %6290 = vmatpush.msra.mxu0 %v6205
        %6291 = vmatpush.msra.mxu0 %v6204
        %6292 = vmatpush.msra.mxu0 %v6203
        %6293 = vmatpush.msra.mxu0 %v6202
        %6294 = vmatpush.msra.mxu0 %v6201
        %6295 = vmatpush.msra.mxu0 %v6200
        %6296 = vmatpush.msra.mxu0 %v6199
        %6297 = vmatpush.msra.mxu0 %v6198
        %6298 = vmatmul.f32.gmra.mxu0 %v6177
        %v6299 = vpop.f32.mrf.mxu0
        %v6300 = vadd.f32 %v6280, %v6299
        %6301 = vdwg.mxu0
        %6302 = vmatpush.msra.mxu0 %v6229
        %6303 = vmatpush.msra.mxu0 %v6228
        %6304 = vmatpush.msra.mxu0 %v6227
        %6305 = vmatpush.msra.mxu0 %v6226
        %6306 = vmatpush.msra.mxu0 %v6225
        %6307 = vmatpush.msra.mxu0 %v6224
        %6308 = vmatpush.msra.mxu0 %v6223
        %6309 = vmatpush.msra.mxu0 %v6222
        %6310 = vmatpush.msra.mxu0 %v6221
        %6311 = vmatpush.msra.mxu0 %v6220
        %6312 = vmatpush.msra.mxu0 %v6219
        %6313 = vmatpush.msra.mxu0 %v6218
        %6314 = vmatpush.msra.mxu0 %v6217
        %6315 = vmatpush.msra.mxu0 %v6216
        %6316 = vmatpush.msra.mxu0 %v6215
        %6317 = vmatpush.msra.mxu0 %v6214
        %6318 = vmatmul.f32.gmra.mxu0 %v6178
        %v6319 = vpop.f32.mrf.mxu0
        %v6320 = vadd.f32 %v6300, %v6319
        %6321 = vdwg.mxu0
        %6322 = vmatpush.msra.mxu0 %v6245
        %6323 = vmatpush.msra.mxu0 %v6244
        %6324 = vmatpush.msra.mxu0 %v6243
        %6325 = vmatpush.msra.mxu0 %v6242
        %6326 = vmatpush.msra.mxu0 %v6241
        %6327 = vmatpush.msra.mxu0 %v6240
        %6328 = vmatpush.msra.mxu0 %v6239
        %6329 = vmatpush.msra.mxu0 %v6238
        %6330 = vmatpush.msra.mxu0 %v6237
        %6331 = vmatpush.msra.mxu0 %v6236
        %6332 = vmatpush.msra.mxu0 %v6235
        %6333 = vmatpush.msra.mxu0 %v6234
        %6334 = vmatpush.msra.mxu0 %v6233
        %6335 = vmatpush.msra.mxu0 %v6232
        %6336 = vmatpush.msra.mxu0 %v6231
        %6337 = vmatpush.msra.mxu0 %v6230
        %6338 = vmatmul.f32.gmra.mxu0 %v6179
        %v6339 = vpop.f32.mrf.mxu0
        %v6340 = vadd.f32 %v6320, %v6339
        %6341 = vdwg.mxu0
        %6342 = vmatpush.msra.mxu0 %v6261
        %6343 = vmatpush.msra.mxu0 %v6260
        %6344 = vmatpush.msra.mxu0 %v6259
        %6345 = vmatpush.msra.mxu0 %v6258
        %6346 = vmatpush.msra.mxu0 %v6257
        %6347 = vmatpush.msra.mxu0 %v6256
        %6348 = vmatpush.msra.mxu0 %v6255
        %6349 = vmatpush.msra.mxu0 %v6254
        %6350 = vmatpush.msra.mxu0 %v6253
        %6351 = vmatpush.msra.mxu0 %v6252
        %6352 = vmatpush.msra.mxu0 %v6251
        %6353 = vmatpush.msra.mxu0 %v6250
        %6354 = vmatpush.msra.mxu0 %v6249
        %6355 = vmatpush.msra.mxu0 %v6248
        %6356 = vmatpush.msra.mxu0 %v6247
        %6357 = vmatpush.msra.mxu0 %v6246
        %6358 = vmatmul.f32.gmra.mxu0 %v6180
        %v6359 = vpop.f32.mrf.mxu0
        %v6360 = vadd.f32 %v6340, %v6359
        %6361 = vdwg.mxu0
        %v6362 = vadd.f32 %v6175, %v6360
        %v6363 = vld [vmem:[#allocation3 + $0x258] sm:$0xff]
        %v6364 = vld [vmem:[#allocation3 + $0x260] sm:$0xff]
        %v6365 = vld [vmem:[#allocation3 + $0x268] sm:$0xff]
        %v6366 = vld [vmem:[#allocation3 + $0x270] sm:$0xff]
        %v6367 = vld [vmem:[#allocation3 + $0x278] sm:$0xff]
        %s6368 = scalar_lea.vmem %s3, 9600
        %v6369 = vld [vmem:[%s6368] sm:$0xff]
        %v6370 = vld [vmem:[%s6368 + $0x8] sm:$0xff]
        %v6371 = vld [vmem:[%s6368 + $0x10] sm:$0xff]
        %v6372 = vld [vmem:[%s6368 + $0x18] sm:$0xff]
        %v6373 = vld [vmem:[%s6368 + $0x20] sm:$0xff]
        %v6374 = vld [vmem:[%s6368 + $0x28] sm:$0xff]
        %v6375 = vld [vmem:[%s6368 + $0x30] sm:$0xff]
        %v6376 = vld [vmem:[%s6368 + $0x38] sm:$0xff]
        %v6377 = vld [vmem:[%s6368 + $0x40] sm:$0xff]
        %v6378 = vld [vmem:[%s6368 + $0x48] sm:$0xff]
        %v6379 = vld [vmem:[%s6368 + $0x50] sm:$0xff]
        %v6380 = vld [vmem:[%s6368 + $0x58] sm:$0xff]
        %v6381 = vld [vmem:[%s6368 + $0x60] sm:$0xff]
        %v6382 = vld [vmem:[%s6368 + $0x68] sm:$0xff]
        %v6383 = vld [vmem:[%s6368 + $0x70] sm:$0xff]
        %v6384 = vld [vmem:[%s6368 + $0x78] sm:$0xff]
        %v6385 = vld [vmem:[%s6368 + $0x80] sm:$0xff]
        %v6386 = vld [vmem:[%s6368 + $0x88] sm:$0xff]
        %v6387 = vld [vmem:[%s6368 + $0x90] sm:$0xff]
        %v6388 = vld [vmem:[%s6368 + $0x98] sm:$0xff]
        %v6389 = vld [vmem:[%s6368 + $0xa0] sm:$0xff]
        %v6390 = vld [vmem:[%s6368 + $0xa8] sm:$0xff]
        %v6391 = vld [vmem:[%s6368 + $0xb0] sm:$0xff]
        %v6392 = vld [vmem:[%s6368 + $0xb8] sm:$0xff]
        %v6393 = vld [vmem:[%s6368 + $0xc0] sm:$0xff]
        %v6394 = vld [vmem:[%s6368 + $0xc8] sm:$0xff]
        %v6395 = vld [vmem:[%s6368 + $0xd0] sm:$0xff]
        %v6396 = vld [vmem:[%s6368 + $0xd8] sm:$0xff]
        %v6397 = vld [vmem:[%s6368 + $0xe0] sm:$0xff]
        %v6398 = vld [vmem:[%s6368 + $0xe8] sm:$0xff]
        %v6399 = vld [vmem:[%s6368 + $0xf0] sm:$0xff]
        %v6400 = vld [vmem:[%s6368 + $0xf8] sm:$0xff]
        %v6401 = vld [vmem:[%s6368 + $0x100] sm:$0xff]
        %v6402 = vld [vmem:[%s6368 + $0x108] sm:$0xff]
        %v6403 = vld [vmem:[%s6368 + $0x110] sm:$0xff]
        %v6404 = vld [vmem:[%s6368 + $0x118] sm:$0xff]
        %v6405 = vld [vmem:[%s6368 + $0x120] sm:$0xff]
        %v6406 = vld [vmem:[%s6368 + $0x128] sm:$0xff]
        %v6407 = vld [vmem:[%s6368 + $0x130] sm:$0xff]
        %v6408 = vld [vmem:[%s6368 + $0x138] sm:$0xff]
        %v6409 = vld [vmem:[%s6368 + $0x140] sm:$0xff]
        %v6410 = vld [vmem:[%s6368 + $0x148] sm:$0xff]
        %v6411 = vld [vmem:[%s6368 + $0x150] sm:$0xff]
        %v6412 = vld [vmem:[%s6368 + $0x158] sm:$0xff]
        %v6413 = vld [vmem:[%s6368 + $0x160] sm:$0xff]
        %v6414 = vld [vmem:[%s6368 + $0x168] sm:$0xff]
        %v6415 = vld [vmem:[%s6368 + $0x170] sm:$0xff]
        %v6416 = vld [vmem:[%s6368 + $0x178] sm:$0xff]
        %v6417 = vld [vmem:[%s6368 + $0x180] sm:$0xff]
        %v6418 = vld [vmem:[%s6368 + $0x188] sm:$0xff]
        %v6419 = vld [vmem:[%s6368 + $0x190] sm:$0xff]
        %v6420 = vld [vmem:[%s6368 + $0x198] sm:$0xff]
        %v6421 = vld [vmem:[%s6368 + $0x1a0] sm:$0xff]
        %v6422 = vld [vmem:[%s6368 + $0x1a8] sm:$0xff]
        %v6423 = vld [vmem:[%s6368 + $0x1b0] sm:$0xff]
        %v6424 = vld [vmem:[%s6368 + $0x1b8] sm:$0xff]
        %v6425 = vld [vmem:[%s6368 + $0x1c0] sm:$0xff]
        %v6426 = vld [vmem:[%s6368 + $0x1c8] sm:$0xff]
        %v6427 = vld [vmem:[%s6368 + $0x1d0] sm:$0xff]
        %v6428 = vld [vmem:[%s6368 + $0x1d8] sm:$0xff]
        %v6429 = vld [vmem:[%s6368 + $0x1e0] sm:$0xff]
        %v6430 = vld [vmem:[%s6368 + $0x1e8] sm:$0xff]
        %v6431 = vld [vmem:[%s6368 + $0x1f0] sm:$0xff]
        %v6432 = vld [vmem:[%s6368 + $0x1f8] sm:$0xff]
        %v6433 = vld [vmem:[%s6368 + $0x200] sm:$0xff]
        %v6434 = vld [vmem:[%s6368 + $0x208] sm:$0xff]
        %v6435 = vld [vmem:[%s6368 + $0x210] sm:$0xff]
        %v6436 = vld [vmem:[%s6368 + $0x218] sm:$0xff]
        %v6437 = vld [vmem:[%s6368 + $0x220] sm:$0xff]
        %v6438 = vld [vmem:[%s6368 + $0x228] sm:$0xff]
        %v6439 = vld [vmem:[%s6368 + $0x230] sm:$0xff]
        %v6440 = vld [vmem:[%s6368 + $0x238] sm:$0xff]
        %v6441 = vld [vmem:[%s6368 + $0x240] sm:$0xff]
        %v6442 = vld [vmem:[%s6368 + $0x248] sm:$0xff]
        %v6443 = vld [vmem:[%s6368 + $0x250] sm:$0xff]
        %v6444 = vld [vmem:[%s6368 + $0x258] sm:$0xff]
        %v6445 = vld [vmem:[%s6368 + $0x260] sm:$0xff]
        %v6446 = vld [vmem:[%s6368 + $0x268] sm:$0xff]
        %v6447 = vld [vmem:[%s6368 + $0x270] sm:$0xff]
        %v6448 = vld [vmem:[%s6368 + $0x278] sm:$0xff]
        %6449 = vmatpush.msra.mxu0 %v6384
        %6450 = vmatpush.msra.mxu0 %v6383
        %6451 = vmatpush.msra.mxu0 %v6382
        %6452 = vmatpush.msra.mxu0 %v6381
        %6453 = vmatpush.msra.mxu0 %v6380
        %6454 = vmatpush.msra.mxu0 %v6379
        %6455 = vmatpush.msra.mxu0 %v6378
        %6456 = vmatpush.msra.mxu0 %v6377
        %6457 = vmatpush.msra.mxu0 %v6376
        %6458 = vmatpush.msra.mxu0 %v6375
        %6459 = vmatpush.msra.mxu0 %v6374
        %6460 = vmatpush.msra.mxu0 %v6373
        %6461 = vmatpush.msra.mxu0 %v6372
        %6462 = vmatpush.msra.mxu0 %v6371
        %6463 = vmatpush.msra.mxu0 %v6370
        %6464 = vmatpush.msra.mxu0 %v6369
        %6465 = vmatmul.f32.gmra.mxu0 %v6363
        %v6466 = vpop.f32.mrf.mxu0
        %v6467 = vadd.f32 0.0, %v6466
        %6468 = vdwg.mxu0
        %6469 = vmatpush.msra.mxu0 %v6400
        %6470 = vmatpush.msra.mxu0 %v6399
        %6471 = vmatpush.msra.mxu0 %v6398
        %6472 = vmatpush.msra.mxu0 %v6397
        %6473 = vmatpush.msra.mxu0 %v6396
        %6474 = vmatpush.msra.mxu0 %v6395
        %6475 = vmatpush.msra.mxu0 %v6394
        %6476 = vmatpush.msra.mxu0 %v6393
        %6477 = vmatpush.msra.mxu0 %v6392
        %6478 = vmatpush.msra.mxu0 %v6391
        %6479 = vmatpush.msra.mxu0 %v6390
        %6480 = vmatpush.msra.mxu0 %v6389
        %6481 = vmatpush.msra.mxu0 %v6388
        %6482 = vmatpush.msra.mxu0 %v6387
        %6483 = vmatpush.msra.mxu0 %v6386
        %6484 = vmatpush.msra.mxu0 %v6385
        %6485 = vmatmul.f32.gmra.mxu0 %v6364
        %v6486 = vpop.f32.mrf.mxu0
        %v6487 = vadd.f32 %v6467, %v6486
        %6488 = vdwg.mxu0
        %6489 = vmatpush.msra.mxu0 %v6416
        %6490 = vmatpush.msra.mxu0 %v6415
        %6491 = vmatpush.msra.mxu0 %v6414
        %6492 = vmatpush.msra.mxu0 %v6413
        %6493 = vmatpush.msra.mxu0 %v6412
        %6494 = vmatpush.msra.mxu0 %v6411
        %6495 = vmatpush.msra.mxu0 %v6410
        %6496 = vmatpush.msra.mxu0 %v6409
        %6497 = vmatpush.msra.mxu0 %v6408
        %6498 = vmatpush.msra.mxu0 %v6407
        %6499 = vmatpush.msra.mxu0 %v6406
        %6500 = vmatpush.msra.mxu0 %v6405
        %6501 = vmatpush.msra.mxu0 %v6404
        %6502 = vmatpush.msra.mxu0 %v6403
        %6503 = vmatpush.msra.mxu0 %v6402
        %6504 = vmatpush.msra.mxu0 %v6401
        %6505 = vmatmul.f32.gmra.mxu0 %v6365
        %v6506 = vpop.f32.mrf.mxu0
        %v6507 = vadd.f32 %v6487, %v6506
        %6508 = vdwg.mxu0
        %6509 = vmatpush.msra.mxu0 %v6432
        %6510 = vmatpush.msra.mxu0 %v6431
        %6511 = vmatpush.msra.mxu0 %v6430
        %6512 = vmatpush.msra.mxu0 %v6429
        %6513 = vmatpush.msra.mxu0 %v6428
        %6514 = vmatpush.msra.mxu0 %v6427
        %6515 = vmatpush.msra.mxu0 %v6426
        %6516 = vmatpush.msra.mxu0 %v6425
        %6517 = vmatpush.msra.mxu0 %v6424
        %6518 = vmatpush.msra.mxu0 %v6423
        %6519 = vmatpush.msra.mxu0 %v6422
        %6520 = vmatpush.msra.mxu0 %v6421
        %6521 = vmatpush.msra.mxu0 %v6420
        %6522 = vmatpush.msra.mxu0 %v6419
        %6523 = vmatpush.msra.mxu0 %v6418
        %6524 = vmatpush.msra.mxu0 %v6417
        %6525 = vmatmul.f32.gmra.mxu0 %v6366
        %v6526 = vpop.f32.mrf.mxu0
        %v6527 = vadd.f32 %v6507, %v6526
        %6528 = vdwg.mxu0
        %6529 = vmatpush.msra.mxu0 %v6448
        %6530 = vmatpush.msra.mxu0 %v6447
        %6531 = vmatpush.msra.mxu0 %v6446
        %6532 = vmatpush.msra.mxu0 %v6445
        %6533 = vmatpush.msra.mxu0 %v6444
        %6534 = vmatpush.msra.mxu0 %v6443
        %6535 = vmatpush.msra.mxu0 %v6442
        %6536 = vmatpush.msra.mxu0 %v6441
        %6537 = vmatpush.msra.mxu0 %v6440
        %6538 = vmatpush.msra.mxu0 %v6439
        %6539 = vmatpush.msra.mxu0 %v6438
        %6540 = vmatpush.msra.mxu0 %v6437
        %6541 = vmatpush.msra.mxu0 %v6436
        %6542 = vmatpush.msra.mxu0 %v6435
        %6543 = vmatpush.msra.mxu0 %v6434
        %6544 = vmatpush.msra.mxu0 %v6433
        %6545 = vmatmul.f32.gmra.mxu0 %v6367
        %v6546 = vpop.f32.mrf.mxu0
        %v6547 = vadd.f32 %v6527, %v6546
        %6548 = vdwg.mxu0
        %v6549 = vadd.f32 %v6362, %v6547
        %v6550 = vld [vmem:[%s4] sm:$0x1]
        %v6552 = vperm.slane %v6550, 0
        %v6554 = vadd.f32 %v6549, %v6552
        %v6555 = vmax.f32 %v6554, 0.0
        %v6556 = vld [vmem:[%s5] sm:$0xff]
        %v6557 = vld [vmem:[%s5 + $0x8] sm:$0xff]
        %v6558 = vld [vmem:[%s5 + $0x10] sm:$0xff]
        %v6559 = vld [vmem:[%s5 + $0x18] sm:$0xff]
        %v6560 = vld [vmem:[%s5 + $0x20] sm:$0xff]
        %v6561 = vld [vmem:[%s5 + $0x28] sm:$0xff]
        %v6562 = vld [vmem:[%s5 + $0x30] sm:$0xff]
        %v6563 = vld [vmem:[%s5 + $0x38] sm:$0xff]
        %v6564 = vld [vmem:[%s6] sm:$0x1]
        %v6566 = vperm.slane %v6564, 0
        %vm6568 = vcmask 523264
        %v6570 = vsel %vm6568, %v6555, 0
        %6572 = vmatpush.msra.mxu0 0.0
        %6573 = vmatpush.msra.mxu0 0.0
        %6574 = vmatpush.msra.mxu0 0.0
        %6575 = vmatpush.msra.mxu0 0.0
        %6576 = vmatpush.msra.mxu0 0.0
        %6577 = vmatpush.msra.mxu0 0.0
        %6578 = vmatpush.msra.mxu0 0.0
        %6579 = vmatpush.msra.mxu0 0.0
        %6580 = vmatpush.msra.mxu0 %v6563
        %6581 = vmatpush.msra.mxu0 %v6562
        %6582 = vmatpush.msra.mxu0 %v6561
        %6583 = vmatpush.msra.mxu0 %v6560
        %6584 = vmatpush.msra.mxu0 %v6559
        %6585 = vmatpush.msra.mxu0 %v6558
        %6586 = vmatpush.msra.mxu0 %v6557
        %6587 = vmatpush.msra.mxu0 %v6556
        %6588 = vmatmul.f32.gmra.mxu0 %v6570
        %v6589 = vpop.f32.mrf.mxu0
        %v6590 = vadd.f32 %v6566, %v6589
        %6591 = vdwg.mxu0
        %vm6592 = vcmask 80896
        %6593 = vst.msk [vmem:[%s486] sm:$0xff] %vm6592, %v6590
        %p6594 = scmp.lt.s32.totalorder %s18, 1
        %s6595 = scalar_select %p6594, %s18, 1
        %s6596 = smul.addr %s6595, 8
        %s6597 = scalar_lea.vmem %s7, %s6596
        // Predicated region
        $region72: #{cnn_forward.1} parent=66 // pred_check
          %p6598 = pneg %p188
        $region73: #{cnn_forward.1} parent=66 // pred_check_branch
          %6600 = sbr.rel (%p6598) target = $region75
        $region74: #{cnn_forward.1} parent=66 // pred_region
          _
        $region75: #{cnn_forward.1} parent=66 // pred_fallthru
          _
      $region67: #{cnn_forward.1} parent=5 // pred_fallthru
        _
      %p6601 = scmp.le.s32.totalorder 2, %s13
      // Predicated region
      $region76: #{cnn_forward.1} parent=5 // pred_check
        %p6602 = pneg %p6601
      $region77: #{cnn_forward.1} parent=5 // pred_check_branch
        %6604 = sbr.rel (%p6602) target = $region79
      $region78: #{cnn_forward.1} parent=5 // pred_region
        %s6605 = ssub.s32 %s13, 2
        // Predicated region
        $region80: #{cnn_forward.1} parent=78 // pred_check
          %p6606 = pneg %p194
        $region81: #{cnn_forward.1} parent=78 // pred_check_branch
          %6608 = sbr.rel (%p6606) target = $region83
        $region82: #{cnn_forward.1} parent=78 // pred_region
          %p6609 = scmp.lt.s32.totalorder %s19, 1
          %s6610 = scalar_select %p6609, %s19, 1
          %s6611 = smul.addr %s6610, 8
          %s6612 = scalar_lea.vmem %s7, %s6611
        $region83: #{cnn_forward.1} parent=78 // pred_fallthru
          _
      $region79: #{cnn_forward.1} parent=5 // pred_fallthru
        _
    $region6: #{cnn_forward.1} parent=1 // loop_footer
      %s17 = sadd.s32 1, %s13
    $region7: #{cnn_forward.1} parent=1 // loop_footer_branch
      %12 = sbr.rel target = $region3
    $region8: #{cnn_forward.1} parent=1 // loop_exit
      _

</llo_original>
